<compile_context>
chip_gen: v6e
topology: v6e:2x2x1
jax: 0.10.0
libtpu: 0.0.40
codegen_flags: <defaults>
</compile_context>

<pallas_src>
import jax
import jax.numpy as jnp
import numpy as np
from jax.experimental import pallas as pl
from jax.experimental.pallas import tpu as pltpu


# ---------------------------------------------------------------------------
# Host-side weight preprocessing (tiny, done once per forward under jit)
# ---------------------------------------------------------------------------
def _banded_valid(w, w_in):
    """Fold a (KH, KW, Cin, Cout) conv weight into KH banded matrices for a VALID conv.

    m[i, (c + j)*Cin + k, c*Cout + o] = w[i, j, k, o] for c in [0, w_in - KW + 1),
    so y_slab[r, :] = sum_i x_slab[r + i, :] @ m[i].
    """
    kh, kw, cin, cout = w.shape
    wout = w_in - kw + 1
    eye = jnp.eye(wout, dtype=w.dtype)
    blk = jnp.einsum("ab,ijkl->ijakbl", eye, w).reshape(kh, kw, wout * cin, wout * cout)
    m = jnp.zeros((kh, w_in * cin, wout * cout), w.dtype)
    for j in range(kw):
        m = m.at[:, j * cin:(j + wout) * cin, :].add(blk[:, j])
    return m


def _banded_pad_fold(w, w_in):
    """Banded matrices for ZeroPad2d((0,1,0,1)) followed by a VALID conv.

    Output width == input width; the j-th column tap only contributes where c + j < w_in
    (this realizes the right zero-pad column).  The bottom zero-pad row is realized by
    the producer layer writing zeros into its row `w_in` (see the row masks in the kernel).
    """
    kh, kw, cin, cout = w.shape
    wout = w_in
    eye = jnp.eye(wout, dtype=w.dtype)
    blk = jnp.einsum("ab,ijkl->ijakbl", eye, w).reshape(kh, kw, wout * cin, wout * cout)
    m = jnp.zeros((kh, w_in * cin, wout * cout), w.dtype)
    for j in range(kw):
        valid = w_in - j
        m = m.at[:, j * cin:(j + valid) * cin, :valid * cout].add(
            blk[:, j, :valid * cin, :valid * cout])
    return m


# ---------------------------------------------------------------------------
# Pallas wrapper: full forward in one pallas_call
# ---------------------------------------------------------------------------
def cnn_forward(x_nchw, params, *, block_batch=8):
    """Full CNN forward. x_nchw: (N, C, H, W) as in PyTorch. Returns (N, 1) float32."""
    n, c, h, w = x_nchw.shape
    assert h == w, "Non-square pictures not implemented (matches the module)"
    f = params["w1"].shape[-1]
    h1 = h - 4                      # conv1 / conv2 output height & width (12)
    h3 = h - 8                      # conv3 / conv4 output height & width (8)
    hp = ((h + 7) // 8) * 8         # per-image row stride (sublane aligned)
    # Images per grid step: fill the MXU M dim, but keep >= 2 grid blocks when possible
    # so both v7x TensorCores get work (zero cost on v5e/v6e).
    bb = max(1, min(block_batch, (n + 1) // 2))
    n_pad = ((n + bb - 1) // bb) * bb
    nb = n_pad // bb
    rows = bb * hp                  # matmul M per grid step
    slack = 8                       # extra scratch rows touched by the shifted loads

    # --- input: NCHW -> NHWC -> (n, HP, W*C) lane-dense slab, bf16 ---
    x_slab = jnp.transpose(x_nchw, (0, 2, 3, 1)).reshape(n, h, w * c)
    x_slab = jnp.pad(x_slab, ((0, n_pad - n), (0, hp - h), (0, 0))).astype(jnp.bfloat16)

    # --- banded conv matrices (bf16); ZeroPad2d folded into layers 2 & 4 ---
    m1 = _banded_valid(params["w1"], w).astype(jnp.bfloat16)        # (5, w*c,   h1*f)
    m2 = _banded_pad_fold(params["w2"], h1).astype(jnp.bfloat16)    # (2, h1*f,  h1*f)
    m3 = _banded_valid(params["w3"], h1).astype(jnp.bfloat16)       # (5, h1*f,  h3*f)
    m4 = _banded_pad_fold(params["w4"], h3).astype(jnp.bfloat16)    # (2, h3*f,  h3*f)

    # --- conv biases tiled across output width, packed into ONE (4, h1*f) f32 array ---
    bias = jnp.zeros((4, h1 * f), jnp.float32)
    bias = bias.at[0, :h1 * f].set(jnp.tile(params["b1"].reshape(f), h1))
    bias = bias.at[1, :h1 * f].set(jnp.tile(params["b2"].reshape(f), h1))
    bias = bias.at[2, :h3 * f].set(jnp.tile(params["b3"].reshape(f), h3))
    bias = bias.at[3, :h3 * f].set(jnp.tile(params["b4"].reshape(f), h3))

    # --- FC weight permuted to slab order (matches torch NCHW flatten), zero-padded to
    #     HP rows per image and tiled over the B images of a block -> (rows, h3*f) f32 ---
    wfc = params["wfc"].reshape(f, h3, h3).transpose(1, 2, 0).reshape(h3, h3 * f)
    wfc = jnp.tile(jnp.pad(wfc, ((0, hp - h3), (0, 0))), (bb, 1)).astype(jnp.float32)
    bfc = params["bfc"].reshape(1, 1).astype(jnp.float32)

    def kernel(x_ref, m1_ref, m2_ref, m3_ref, m4_ref, b_ref, wfc_ref, bfc_ref,
               o_ref, a0_ref, a1_ref, a2_ref, a3_ref):
        # Row index within each image (0..hp-1), as a (rows, 1) column for masking.
        row = jax.lax.broadcasted_iota(jnp.int32, (bb, hp, 1), 1).reshape(rows, 1)

        # The shifted loads below read up to `slack` rows past the B*HP valid rows;
        # keep those rows at zero so everything stays finite/deterministic.  (They only
        # ever feed rows that the masks zero anyway.)
        for ref in (a0_ref, a1_ref, a2_ref, a3_ref):
            ref[pl.ds(rows, slack), :] = jnp.zeros((slack, ref.shape[1]), ref.dtype)

        # Stage the (B, HP, W*C) input block as one flat (B*HP, W*C) slab so every conv
        # layer reads its kh row-shifted inputs directly from VMEM refs (no in-register
        # sublane relayouts).
        a0_ref[pl.ds(0, rows), :] = x_ref[...].reshape(rows, w * c)

        def conv_relu(src_ref, m_ref, b, valid_rows=None):
            kh = m_ref.shape[0]
            acc = jnp.dot(src_ref[pl.ds(0, rows), :], m_ref[0],
                          preferred_element_type=jnp.float32)
            for i in range(1, kh):
                acc = acc + jnp.dot(src_ref[pl.ds(i, rows), :], m_ref[i],
                                    preferred_element_type=jnp.float32)
            y = jnp.maximum(acc + b, 0.0)
            if valid_rows is not None:
                # Zero rows past the valid output height; row `valid_rows` becomes the
                # zero bottom-pad row read by the following (pad-folded) 2x2 conv.
                y = jnp.where(row < valid_rows, y, 0.0)
            return y

        # Conv1 5x5 + ReLU (rows >= h1 zeroed -> bottom pad row for conv2).
        y = conv_relu(a0_ref, m1_ref, b_ref[0:1, :h1 * f], valid_rows=h1)
        a1_ref[pl.ds(0, rows), :] = y.astype(jnp.bfloat16)
        # ZeroPad2d((0,1,0,1)) + Conv2 2x2 + ReLU (pad folded into m2).
        y = conv_relu(a1_ref, m2_ref, b_ref[1:2, :h1 * f])
        a2_ref[pl.ds(0, rows), :] = y.astype(jnp.bfloat16)
        # Conv3 5x5 + ReLU (rows >= h3 zeroed -> bottom pad row for conv4).
        y = conv_relu(a2_ref, m3_ref, b_ref[2:3, :h3 * f], valid_rows=h3)
        a3_ref[pl.ds(0, rows), :] = y.astype(jnp.bfloat16)
        # ZeroPad2d + Conv4 2x2 + ReLU; invalid rows masked before the FC reduce.
        y = conv_relu(a3_ref, m4_ref, b_ref[3:4, :h3 * f], valid_rows=h3)

        # FC head (output width 1): VPU multiply with the pre-permuted, pre-tiled FC
        # weight slab, lane reduce, then per-image sublane reduce.  One lane-dense
        # (1, 1, B) store per grid step.
        prod = (y * wfc_ref[...]).reshape(bb, hp, h3 * f)
        per_img = jnp.sum(jnp.sum(prod, axis=2), axis=1)            # (B,)
        res = per_img.reshape(1, bb) + bfc_ref[...]                  # (1, B)
        o_ref[...] = res.reshape(1, 1, bb).astype(o_ref.dtype)

    out = pl.pallas_call(
        kernel,
        out_shape=jax.ShapeDtypeStruct((nb, 1, bb), jnp.float32),
        grid=(nb,),
        in_specs=[
            pl.BlockSpec((bb, hp, w * c), lambda i: (i, 0, 0)),
            # Constant-index weight blocks: DMA'd once, revisited on later steps.
            pl.BlockSpec(m1.shape, lambda i: (0, 0, 0)),
            pl.BlockSpec(m2.shape, lambda i: (0, 0, 0)),
            pl.BlockSpec(m3.shape, lambda i: (0, 0, 0)),
            pl.BlockSpec(m4.shape, lambda i: (0, 0, 0)),
            pl.BlockSpec(bias.shape, lambda i: (0, 0)),
            pl.BlockSpec(wfc.shape, lambda i: (0, 0)),
            pl.BlockSpec(bfc.shape, lambda i: (0, 0)),
        ],
        out_specs=pl.BlockSpec((1, 1, bb), lambda i: (i, 0, 0)),
        scratch_shapes=[
            pltpu.VMEM((rows + slack, w * c), jnp.bfloat16),    # staged input slab
            pltpu.VMEM((rows + slack, h1 * f), jnp.bfloat16),   # conv1 output
            pltpu.VMEM((rows + slack, h1 * f), jnp.bfloat16),   # conv2 output
            pltpu.VMEM((rows + slack, h3 * f), jnp.bfloat16),   # conv3 output
        ],
        compiler_params=pltpu.CompilerParams(
            dimension_semantics=("parallel",),
        ),
    )(x_slab, m1, m2, m3, m4, bias, wfc, bfc)
    return out.reshape(n_pad, 1)[:n]


# ---------------------------------------------------------------------------
# Pure-JAX reference (correctness cross-check)
# ---------------------------------------------------------------------------
def _pad_right_bottom_ref(x):
    return jnp.pad(x, ((0, 0), (0, 1), (0, 1), (0, 0)))


def _conv_ref(x, w, b):
    y = jax.lax.conv_general_dilated(
        x, w, window_strides=(1, 1), padding="VALID",
        dimension_numbers=("NHWC", "HWIO", "NHWC"),
        precision=jax.lax.Precision.HIGHEST)
    return jax.nn.relu(y + b.reshape(1, 1, 1, -1))


def cnn_forward_ref(x_nchw, params):
    x = jnp.transpose(x_nchw, (0, 2, 3, 1))
    x = _conv_ref(x, params["w1"], params["b1"])
    x = _pad_right_bottom_ref(x)
    x = _conv_ref(x, params["w2"], params["b2"])
    x = _conv_ref(x, params["w3"], params["b3"])
    x = _pad_right_bottom_ref(x)
    x = _conv_ref(x, params["w4"], params["b4"])
    x = jnp.transpose(x, (0, 3, 1, 2)).reshape(x.shape[0], -1)
    y = jnp.dot(x, params["wfc"], precision=jax.lax.Precision.HIGHEST)
    return y + params["bfc"]


# ---------------------------------------------------------------------------
# Main
# ---------------------------------------------------------------------------
if __name__ == "__main__":
    # Small shapes consistent with the module (image 16x16, 4 channels, 32 filters,
    # 4 hidden conv layers): 16 -5x5-> 12 -pad-> 13 -2x2-> 12 -5x5-> 8 -pad-> 9 -2x2-> 8.
    # Batch 16 so two grid blocks of 8 images each exercise the batched-MXU path.
    N, C, H, W = 16, 4, 16, 16
    F = 32
    final_spatial = H - 8
    D = F * final_spatial * final_spatial

    key = jax.random.PRNGKey(0)
    keys = jax.random.split(key, 11)
    scale = 0.05
    params = {
        "w1": scale * jax.random.normal(keys[0], (5, 5, C, F), jnp.float32),
        "b1": scale * jax.random.normal(keys[1], (1, F), jnp.float32),
        "w2": scale * jax.random.normal(keys[2], (2, 2, F, F), jnp.float32),
        "b2": scale * jax.random.normal(keys[3], (1, F), jnp.float32),
        "w3": scale * jax.random.normal(keys[4], (5, 5, F, F), jnp.float32),
        "b3": scale * jax.random.normal(keys[5], (1, F), jnp.float32),
        "w4": scale * jax.random.normal(keys[6], (2, 2, F, F), jnp.float32),
        "b4": scale * jax.random.normal(keys[7], (1, F), jnp.float32),
        "wfc": scale * jax.random.normal(keys[8], (D, 1), jnp.float32),
        "bfc": scale * jax.random.normal(keys[9], (1, 1), jnp.float32),
    }
    x = jax.random.normal(keys[10], (N, C, H, W), jnp.float32)

    out = jax.block_until_ready(jax.jit(cnn_forward)(x, params))
    ref = jax.block_until_ready(cnn_forward_ref(x, params))
    assert out.shape == (N, 1), out.shape
    # Kernel runs bf16 MXU passes vs. the HIGHEST-precision f32 reference.
    np.testing.assert_allclose(np.asarray(out), np.asarray(ref), rtol=2e-2, atol=2e-2)

    print("KERNEL_OK")
</pallas_src>

<mosaic_0001>
module attributes {stable_mosaic.version = 11 : i64} {
  func.func @kernel(%arg0: i32, %arg1: memref<8x16x64xbf16, #tpu.memory_space<vmem>>, %arg2: memref<5x64x384xbf16, #tpu.memory_space<vmem>>, %arg3: memref<2x384x384xbf16, #tpu.memory_space<vmem>>, %arg4: memref<5x384x256xbf16, #tpu.memory_space<vmem>>, %arg5: memref<2x256x256xbf16, #tpu.memory_space<vmem>>, %arg6: memref<4x384xf32, #tpu.memory_space<vmem>>, %arg7: memref<128x256xf32, #tpu.memory_space<vmem>>, %arg8: memref<1x1xf32, #tpu.memory_space<vmem>>, %arg9: memref<1x1x8xf32, #tpu.memory_space<vmem>>, %arg10: memref<136x64xbf16, #tpu.memory_space<vmem>>, %arg11: memref<136x384xbf16, #tpu.memory_space<vmem>>, %arg12: memref<136x384xbf16, #tpu.memory_space<vmem>>, %arg13: memref<136x256xbf16, #tpu.memory_space<vmem>>) attributes {dimension_semantics = [#tpu.dimension_semantics<parallel>], iteration_bounds = array<i64: 2>, scalar_prefetch = 0 : i64, scratch_operands = 4 : i64, tpu.core_type = #tpu.core_type<tc>, window_params = [{transform_indices = @transform_0, window_bounds = array<i64: 8, 16, 64>}, {pipeline_mode = #tpu.pipeline_mode<synchronous>, transform_indices = @transform_1, window_bounds = array<i64: 5, 64, 384>}, {pipeline_mode = #tpu.pipeline_mode<synchronous>, transform_indices = @transform_2, window_bounds = array<i64: 2, 384, 384>}, {pipeline_mode = #tpu.pipeline_mode<synchronous>, transform_indices = @transform_3, window_bounds = array<i64: 5, 384, 256>}, {pipeline_mode = #tpu.pipeline_mode<synchronous>, transform_indices = @transform_4, window_bounds = array<i64: 2, 256, 256>}, {pipeline_mode = #tpu.pipeline_mode<synchronous>, transform_indices = @transform_5, window_bounds = array<i64: 4, 384>}, {pipeline_mode = #tpu.pipeline_mode<synchronous>, transform_indices = @transform_6, window_bounds = array<i64: 128, 256>}, {pipeline_mode = #tpu.pipeline_mode<synchronous>, transform_indices = @transform_7, window_bounds = array<i64: 1, 1>}, {transform_indices = @transform_8, window_bounds = array<i64: 1, 1, 8>}]} {
    %0 = tpu.iota {dimensions = array<i32: 1>} : vector<8x16x1xi32>
    %1 = vector.shape_cast %0 : vector<8x16x1xi32> to vector<128x1xi32>
    %cst = arith.constant 0.000000e+00 : bf16
    %2 = vector.broadcast %cst : bf16 to vector<8x64xbf16>
    %c128 = arith.constant 128 : index
    %c0 = arith.constant 0 : index
    %3 = vector.load %arg10[%c128, %c0] : memref<136x64xbf16, #tpu.memory_space<vmem>>, vector<8x64xbf16>
    tpu.vector_store %arg10[%c128, %c0], %2 {strides = array<i32>} : memref<136x64xbf16, #tpu.memory_space<vmem>>, vector<8x64xbf16>,
    %cst_0 = arith.constant 0.000000e+00 : bf16
    %4 = vector.broadcast %cst_0 : bf16 to vector<8x384xbf16>
    %c128_1 = arith.constant 128 : index
    %c0_2 = arith.constant 0 : index
    %5 = vector.load %arg11[%c128_1, %c0_2] : memref<136x384xbf16, #tpu.memory_space<vmem>>, vector<8x384xbf16>
    tpu.vector_store %arg11[%c128_1, %c0_2], %4 {strides = array<i32>} : memref<136x384xbf16, #tpu.memory_space<vmem>>, vector<8x384xbf16>,
    %cst_3 = arith.constant 0.000000e+00 : bf16
    %6 = vector.broadcast %cst_3 : bf16 to vector<8x384xbf16>
    %c128_4 = arith.constant 128 : index
    %c0_5 = arith.constant 0 : index
    %7 = vector.load %arg12[%c128_4, %c0_5] : memref<136x384xbf16, #tpu.memory_space<vmem>>, vector<8x384xbf16>
    tpu.vector_store %arg12[%c128_4, %c0_5], %6 {strides = array<i32>} : memref<136x384xbf16, #tpu.memory_space<vmem>>, vector<8x384xbf16>,
    %cst_6 = arith.constant 0.000000e+00 : bf16
    %8 = vector.broadcast %cst_6 : bf16 to vector<8x256xbf16>
    %c128_7 = arith.constant 128 : index
    %c0_8 = arith.constant 0 : index
    %9 = vector.load %arg13[%c128_7, %c0_8] : memref<136x256xbf16, #tpu.memory_space<vmem>>, vector<8x256xbf16>
    tpu.vector_store %arg13[%c128_7, %c0_8], %8 {strides = array<i32>} : memref<136x256xbf16, #tpu.memory_space<vmem>>, vector<8x256xbf16>,
    %c0_9 = arith.constant 0 : index
    %c0_10 = arith.constant 0 : index
    %c0_11 = arith.constant 0 : index
    %10 = vector.load %arg1[%c0_9, %c0_10, %c0_11] : memref<8x16x64xbf16, #tpu.memory_space<vmem>>, vector<8x16x64xbf16>
    %11 = vector.shape_cast %10 : vector<8x16x64xbf16> to vector<128x64xbf16>
    %c0_12 = arith.constant 0 : index
    %c0_13 = arith.constant 0 : index
    %12 = vector.load %arg10[%c0_12, %c0_13] : memref<136x64xbf16, #tpu.memory_space<vmem>>, vector<128x64xbf16>
    tpu.vector_store %arg10[%c0_12, %c0_13], %11 {strides = array<i32>} : memref<136x64xbf16, #tpu.memory_space<vmem>>, vector<128x64xbf16>,
    %c0_14 = arith.constant 0 : index
    %c0_15 = arith.constant 0 : index
    %13 = vector.load %arg6[%c0_14, %c0_15] : memref<4x384xf32, #tpu.memory_space<vmem>>, vector<1x384xf32>
    %c0_16 = arith.constant 0 : index
    %c0_17 = arith.constant 0 : index
    %14 = vector.load %arg10[%c0_16, %c0_17] : memref<136x64xbf16, #tpu.memory_space<vmem>>, vector<128x64xbf16>
    %c0_18 = arith.constant 0 : index
    %c0_19 = arith.constant 0 : index
    %c0_20 = arith.constant 0 : index
    %15 = vector.load %arg2[%c0_18, %c0_19, %c0_20] : memref<5x64x384xbf16, #tpu.memory_space<vmem>>, vector<1x64x384xbf16>
    %16 = vector.shape_cast %15 : vector<1x64x384xbf16> to vector<64x384xbf16>
    %cst_21 = arith.constant dense<0.000000e+00> : vector<128x384xf32>
    %17 = tpu.matmul %14, %16, %cst_21 {dimension_numbers = #tpu.dot_dimension_numbers<[1], [0], [0], [1], [0, 0, 1, 1], [], []>} : vector<128x64xbf16>, vector<64x384xbf16>, vector<128x384xf32> -> vector<128x384xf32>
    %c1 = arith.constant 1 : index
    %c0_22 = arith.constant 0 : index
    %18 = vector.load %arg10[%c1, %c0_22] : memref<136x64xbf16, #tpu.memory_space<vmem>>, vector<128x64xbf16>
    %c1_23 = arith.constant 1 : index
    %c0_24 = arith.constant 0 : index
    %c0_25 = arith.constant 0 : index
    %19 = vector.load %arg2[%c1_23, %c0_24, %c0_25] : memref<5x64x384xbf16, #tpu.memory_space<vmem>>, vector<1x64x384xbf16>
    %20 = vector.shape_cast %19 : vector<1x64x384xbf16> to vector<64x384xbf16>
    %cst_26 = arith.constant dense<0.000000e+00> : vector<128x384xf32>
    %21 = tpu.matmul %18, %20, %cst_26 {dimension_numbers = #tpu.dot_dimension_numbers<[1], [0], [0], [1], [0, 0, 1, 1], [], []>} : vector<128x64xbf16>, vector<64x384xbf16>, vector<128x384xf32> -> vector<128x384xf32>
    %22 = arith.addf %17, %21 : vector<128x384xf32>
    %c2 = arith.constant 2 : index
    %c0_27 = arith.constant 0 : index
    %23 = vector.load %arg10[%c2, %c0_27] : memref<136x64xbf16, #tpu.memory_space<vmem>>, vector<128x64xbf16>
    %c2_28 = arith.constant 2 : index
    %c0_29 = arith.constant 0 : index
    %c0_30 = arith.constant 0 : index
    %24 = vector.load %arg2[%c2_28, %c0_29, %c0_30] : memref<5x64x384xbf16, #tpu.memory_space<vmem>>, vector<1x64x384xbf16>
    %25 = vector.shape_cast %24 : vector<1x64x384xbf16> to vector<64x384xbf16>
    %cst_31 = arith.constant dense<0.000000e+00> : vector<128x384xf32>
    %26 = tpu.matmul %23, %25, %cst_31 {dimension_numbers = #tpu.dot_dimension_numbers<[1], [0], [0], [1], [0, 0, 1, 1], [], []>} : vector<128x64xbf16>, vector<64x384xbf16>, vector<128x384xf32> -> vector<128x384xf32>
    %27 = arith.addf %22, %26 : vector<128x384xf32>
    %c3 = arith.constant 3 : index
    %c0_32 = arith.constant 0 : index
    %28 = vector.load %arg10[%c3, %c0_32] : memref<136x64xbf16, #tpu.memory_space<vmem>>, vector<128x64xbf16>
    %c3_33 = arith.constant 3 : index
    %c0_34 = arith.constant 0 : index
    %c0_35 = arith.constant 0 : index
    %29 = vector.load %arg2[%c3_33, %c0_34, %c0_35] : memref<5x64x384xbf16, #tpu.memory_space<vmem>>, vector<1x64x384xbf16>
    %30 = vector.shape_cast %29 : vector<1x64x384xbf16> to vector<64x384xbf16>
    %cst_36 = arith.constant dense<0.000000e+00> : vector<128x384xf32>
    %31 = tpu.matmul %28, %30, %cst_36 {dimension_numbers = #tpu.dot_dimension_numbers<[1], [0], [0], [1], [0, 0, 1, 1], [], []>} : vector<128x64xbf16>, vector<64x384xbf16>, vector<128x384xf32> -> vector<128x384xf32>
    %32 = arith.addf %27, %31 : vector<128x384xf32>
    %c4 = arith.constant 4 : index
    %c0_37 = arith.constant 0 : index
    %33 = vector.load %arg10[%c4, %c0_37] : memref<136x64xbf16, #tpu.memory_space<vmem>>, vector<128x64xbf16>
    %c4_38 = arith.constant 4 : index
    %c0_39 = arith.constant 0 : index
    %c0_40 = arith.constant 0 : index
    %34 = vector.load %arg2[%c4_38, %c0_39, %c0_40] : memref<5x64x384xbf16, #tpu.memory_space<vmem>>, vector<1x64x384xbf16>
    %35 = vector.shape_cast %34 : vector<1x64x384xbf16> to vector<64x384xbf16>
    %cst_41 = arith.constant dense<0.000000e+00> : vector<128x384xf32>
    %36 = tpu.matmul %33, %35, %cst_41 {dimension_numbers = #tpu.dot_dimension_numbers<[1], [0], [0], [1], [0, 0, 1, 1], [], []>} : vector<128x64xbf16>, vector<64x384xbf16>, vector<128x384xf32> -> vector<128x384xf32>
    %37 = arith.addf %32, %36 : vector<128x384xf32>
    %38 = vector.broadcast %13 : vector<1x384xf32> to vector<128x384xf32>
    %39 = arith.addf %37, %38 : vector<128x384xf32>
    %cst_42 = arith.constant 0.000000e+00 : f32
    %40 = vector.broadcast %cst_42 : f32 to vector<128x384xf32>
    %41 = arith.maximumf %39, %40 : vector<128x384xf32>
    %c12_i32 = arith.constant 12 : i32
    %42 = vector.broadcast %c12_i32 : i32 to vector<128x1xi32>
    %43 = arith.cmpi slt, %1, %42 : vector<128x1xi32>
    %cst_43 = arith.constant 0.000000e+00 : f32
    %44 = vector.shape_cast %43 : vector<128x1xi1> to vector<128x1xi1>
    %45 = vector.broadcast %44 : vector<128x1xi1> to vector<128x384xi1>
    %46 = vector.broadcast %cst_43 : f32 to vector<128x384xf32>
    %47 = arith.select %45, %41, %46 : vector<128x384xi1>, vector<128x384xf32>
    %48 = arith.truncf %47 : vector<128x384xf32> to vector<128x384xbf16>
    %c0_44 = arith.constant 0 : index
    %c0_45 = arith.constant 0 : index
    %49 = vector.load %arg11[%c0_44, %c0_45] : memref<136x384xbf16, #tpu.memory_space<vmem>>, vector<128x384xbf16>
    tpu.vector_store %arg11[%c0_44, %c0_45], %48 {strides = array<i32>} : memref<136x384xbf16, #tpu.memory_space<vmem>>, vector<128x384xbf16>,
    %c1_46 = arith.constant 1 : index
    %c0_47 = arith.constant 0 : index
    %50 = vector.load %arg6[%c1_46, %c0_47] : memref<4x384xf32, #tpu.memory_space<vmem>>, vector<1x384xf32>
    %c0_48 = arith.constant 0 : index
    %c0_49 = arith.constant 0 : index
    %51 = vector.load %arg11[%c0_48, %c0_49] : memref<136x384xbf16, #tpu.memory_space<vmem>>, vector<128x384xbf16>
    %c0_50 = arith.constant 0 : index
    %c0_51 = arith.constant 0 : index
    %c0_52 = arith.constant 0 : index
    %52 = vector.load %arg3[%c0_50, %c0_51, %c0_52] : memref<2x384x384xbf16, #tpu.memory_space<vmem>>, vector<1x384x384xbf16>
    %53 = vector.shape_cast %52 : vector<1x384x384xbf16> to vector<384x384xbf16>
    %cst_53 = arith.constant dense<0.000000e+00> : vector<128x384xf32>
    %54 = tpu.matmul %51, %53, %cst_53 {dimension_numbers = #tpu.dot_dimension_numbers<[1], [0], [0], [1], [0, 0, 1, 1], [], []>} : vector<128x384xbf16>, vector<384x384xbf16>, vector<128x384xf32> -> vector<128x384xf32>
    %c1_54 = arith.constant 1 : index
    %c0_55 = arith.constant 0 : index
    %55 = vector.load %arg11[%c1_54, %c0_55] : memref<136x384xbf16, #tpu.memory_space<vmem>>, vector<128x384xbf16>
    %c1_56 = arith.constant 1 : index
    %c0_57 = arith.constant 0 : index
    %c0_58 = arith.constant 0 : index
    %56 = vector.load %arg3[%c1_56, %c0_57, %c0_58] : memref<2x384x384xbf16, #tpu.memory_space<vmem>>, vector<1x384x384xbf16>
    %57 = vector.shape_cast %56 : vector<1x384x384xbf16> to vector<384x384xbf16>
    %cst_59 = arith.constant dense<0.000000e+00> : vector<128x384xf32>
    %58 = tpu.matmul %55, %57, %cst_59 {dimension_numbers = #tpu.dot_dimension_numbers<[1], [0], [0], [1], [0, 0, 1, 1], [], []>} : vector<128x384xbf16>, vector<384x384xbf16>, vector<128x384xf32> -> vector<128x384xf32>
    %59 = arith.addf %54, %58 : vector<128x384xf32>
    %60 = vector.broadcast %50 : vector<1x384xf32> to vector<128x384xf32>
    %61 = arith.addf %59, %60 : vector<128x384xf32>
    %cst_60 = arith.constant 0.000000e+00 : f32
    %62 = vector.broadcast %cst_60 : f32 to vector<128x384xf32>
    %63 = arith.maximumf %61, %62 : vector<128x384xf32>
    %64 = arith.truncf %63 : vector<128x384xf32> to vector<128x384xbf16>
    %c0_61 = arith.constant 0 : index
    %c0_62 = arith.constant 0 : index
    %65 = vector.load %arg12[%c0_61, %c0_62] : memref<136x384xbf16, #tpu.memory_space<vmem>>, vector<128x384xbf16>
    tpu.vector_store %arg12[%c0_61, %c0_62], %64 {strides = array<i32>} : memref<136x384xbf16, #tpu.memory_space<vmem>>, vector<128x384xbf16>,
    %c2_63 = arith.constant 2 : index
    %c0_64 = arith.constant 0 : index
    %66 = vector.load %arg6[%c2_63, %c0_64] : memref<4x384xf32, #tpu.memory_space<vmem>>, vector<1x256xf32>
    %c0_65 = arith.constant 0 : index
    %c0_66 = arith.constant 0 : index
    %67 = vector.load %arg12[%c0_65, %c0_66] : memref<136x384xbf16, #tpu.memory_space<vmem>>, vector<128x384xbf16>
    %c0_67 = arith.constant 0 : index
    %c0_68 = arith.constant 0 : index
    %c0_69 = arith.constant 0 : index
    %68 = vector.load %arg4[%c0_67, %c0_68, %c0_69] : memref<5x384x256xbf16, #tpu.memory_space<vmem>>, vector<1x384x256xbf16>
    %69 = vector.shape_cast %68 : vector<1x384x256xbf16> to vector<384x256xbf16>
    %cst_70 = arith.constant dense<0.000000e+00> : vector<128x256xf32>
    %70 = tpu.matmul %67, %69, %cst_70 {dimension_numbers = #tpu.dot_dimension_numbers<[1], [0], [0], [1], [0, 0, 1, 1], [], []>} : vector<128x384xbf16>, vector<384x256xbf16>, vector<128x256xf32> -> vector<128x256xf32>
    %c1_71 = arith.constant 1 : index
    %c0_72 = arith.constant 0 : index
    %71 = vector.load %arg12[%c1_71, %c0_72] : memref<136x384xbf16, #tpu.memory_space<vmem>>, vector<128x384xbf16>
    %c1_73 = arith.constant 1 : index
    %c0_74 = arith.constant 0 : index
    %c0_75 = arith.constant 0 : index
    %72 = vector.load %arg4[%c1_73, %c0_74, %c0_75] : memref<5x384x256xbf16, #tpu.memory_space<vmem>>, vector<1x384x256xbf16>
    %73 = vector.shape_cast %72 : vector<1x384x256xbf16> to vector<384x256xbf16>
    %cst_76 = arith.constant dense<0.000000e+00> : vector<128x256xf32>
    %74 = tpu.matmul %71, %73, %cst_76 {dimension_numbers = #tpu.dot_dimension_numbers<[1], [0], [0], [1], [0, 0, 1, 1], [], []>} : vector<128x384xbf16>, vector<384x256xbf16>, vector<128x256xf32> -> vector<128x256xf32>
    %75 = arith.addf %70, %74 : vector<128x256xf32>
    %c2_77 = arith.constant 2 : index
    %c0_78 = arith.constant 0 : index
    %76 = vector.load %arg12[%c2_77, %c0_78] : memref<136x384xbf16, #tpu.memory_space<vmem>>, vector<128x384xbf16>
    %c2_79 = arith.constant 2 : index
    %c0_80 = arith.constant 0 : index
    %c0_81 = arith.constant 0 : index
    %77 = vector.load %arg4[%c2_79, %c0_80, %c0_81] : memref<5x384x256xbf16, #tpu.memory_space<vmem>>, vector<1x384x256xbf16>
    %78 = vector.shape_cast %77 : vector<1x384x256xbf16> to vector<384x256xbf16>
    %cst_82 = arith.constant dense<0.000000e+00> : vector<128x256xf32>
    %79 = tpu.matmul %76, %78, %cst_82 {dimension_numbers = #tpu.dot_dimension_numbers<[1], [0], [0], [1], [0, 0, 1, 1], [], []>} : vector<128x384xbf16>, vector<384x256xbf16>, vector<128x256xf32> -> vector<128x256xf32>
    %80 = arith.addf %75, %79 : vector<128x256xf32>
    %c3_83 = arith.constant 3 : index
    %c0_84 = arith.constant 0 : index
    %81 = vector.load %arg12[%c3_83, %c0_84] : memref<136x384xbf16, #tpu.memory_space<vmem>>, vector<128x384xbf16>
    %c3_85 = arith.constant 3 : index
    %c0_86 = arith.constant 0 : index
    %c0_87 = arith.constant 0 : index
    %82 = vector.load %arg4[%c3_85, %c0_86, %c0_87] : memref<5x384x256xbf16, #tpu.memory_space<vmem>>, vector<1x384x256xbf16>
    %83 = vector.shape_cast %82 : vector<1x384x256xbf16> to vector<384x256xbf16>
    %cst_88 = arith.constant dense<0.000000e+00> : vector<128x256xf32>
    %84 = tpu.matmul %81, %83, %cst_88 {dimension_numbers = #tpu.dot_dimension_numbers<[1], [0], [0], [1], [0, 0, 1, 1], [], []>} : vector<128x384xbf16>, vector<384x256xbf16>, vector<128x256xf32> -> vector<128x256xf32>
    %85 = arith.addf %80, %84 : vector<128x256xf32>
    %c4_89 = arith.constant 4 : index
    %c0_90 = arith.constant 0 : index
    %86 = vector.load %arg12[%c4_89, %c0_90] : memref<136x384xbf16, #tpu.memory_space<vmem>>, vector<128x384xbf16>
    %c4_91 = arith.constant 4 : index
    %c0_92 = arith.constant 0 : index
    %c0_93 = arith.constant 0 : index
    %87 = vector.load %arg4[%c4_91, %c0_92, %c0_93] : memref<5x384x256xbf16, #tpu.memory_space<vmem>>, vector<1x384x256xbf16>
    %88 = vector.shape_cast %87 : vector<1x384x256xbf16> to vector<384x256xbf16>
    %cst_94 = arith.constant dense<0.000000e+00> : vector<128x256xf32>
    %89 = tpu.matmul %86, %88, %cst_94 {dimension_numbers = #tpu.dot_dimension_numbers<[1], [0], [0], [1], [0, 0, 1, 1], [], []>} : vector<128x384xbf16>, vector<384x256xbf16>, vector<128x256xf32> -> vector<128x256xf32>
    %90 = arith.addf %85, %89 : vector<128x256xf32>
    %91 = vector.broadcast %66 : vector<1x256xf32> to vector<128x256xf32>
    %92 = arith.addf %90, %91 : vector<128x256xf32>
    %cst_95 = arith.constant 0.000000e+00 : f32
    %93 = vector.broadcast %cst_95 : f32 to vector<128x256xf32>
    %94 = arith.maximumf %92, %93 : vector<128x256xf32>
    %c8_i32 = arith.constant 8 : i32
    %95 = vector.broadcast %c8_i32 : i32 to vector<128x1xi32>
    %96 = arith.cmpi slt, %1, %95 : vector<128x1xi32>
    %cst_96 = arith.constant 0.000000e+00 : f32
    %97 = vector.shape_cast %96 : vector<128x1xi1> to vector<128x1xi1>
    %98 = vector.broadcast %97 : vector<128x1xi1> to vector<128x256xi1>
    %99 = vector.broadcast %cst_96 : f32 to vector<128x256xf32>
    %100 = arith.select %98, %94, %99 : vector<128x256xi1>, vector<128x256xf32>
    %101 = arith.truncf %100 : vector<128x256xf32> to vector<128x256xbf16>
    %c0_97 = arith.constant 0 : index
    %c0_98 = arith.constant 0 : index
    %102 = vector.load %arg13[%c0_97, %c0_98] : memref<136x256xbf16, #tpu.memory_space<vmem>>, vector<128x256xbf16>
    tpu.vector_store %arg13[%c0_97, %c0_98], %101 {strides = array<i32>} : memref<136x256xbf16, #tpu.memory_space<vmem>>, vector<128x256xbf16>,
    %c3_99 = arith.constant 3 : index
    %c0_100 = arith.constant 0 : index
    %103 = vector.load %arg6[%c3_99, %c0_100] : memref<4x384xf32, #tpu.memory_space<vmem>>, vector<1x256xf32>
    %c0_101 = arith.constant 0 : index
    %c0_102 = arith.constant 0 : index
    %104 = vector.load %arg13[%c0_101, %c0_102] : memref<136x256xbf16, #tpu.memory_space<vmem>>, vector<128x256xbf16>
    %c0_103 = arith.constant 0 : index
    %c0_104 = arith.constant 0 : index
    %c0_105 = arith.constant 0 : index
    %105 = vector.load %arg5[%c0_103, %c0_104, %c0_105] : memref<2x256x256xbf16, #tpu.memory_space<vmem>>, vector<1x256x256xbf16>
    %106 = vector.shape_cast %105 : vector<1x256x256xbf16> to vector<256x256xbf16>
    %cst_106 = arith.constant dense<0.000000e+00> : vector<128x256xf32>
    %107 = tpu.matmul %104, %106, %cst_106 {dimension_numbers = #tpu.dot_dimension_numbers<[1], [0], [0], [1], [0, 0, 1, 1], [], []>} : vector<128x256xbf16>, vector<256x256xbf16>, vector<128x256xf32> -> vector<128x256xf32>
    %c1_107 = arith.constant 1 : index
    %c0_108 = arith.constant 0 : index
    %108 = vector.load %arg13[%c1_107, %c0_108] : memref<136x256xbf16, #tpu.memory_space<vmem>>, vector<128x256xbf16>
    %c1_109 = arith.constant 1 : index
    %c0_110 = arith.constant 0 : index
    %c0_111 = arith.constant 0 : index
    %109 = vector.load %arg5[%c1_109, %c0_110, %c0_111] : memref<2x256x256xbf16, #tpu.memory_space<vmem>>, vector<1x256x256xbf16>
    %110 = vector.shape_cast %109 : vector<1x256x256xbf16> to vector<256x256xbf16>
    %cst_112 = arith.constant dense<0.000000e+00> : vector<128x256xf32>
    %111 = tpu.matmul %108, %110, %cst_112 {dimension_numbers = #tpu.dot_dimension_numbers<[1], [0], [0], [1], [0, 0, 1, 1], [], []>} : vector<128x256xbf16>, vector<256x256xbf16>, vector<128x256xf32> -> vector<128x256xf32>
    %112 = arith.addf %107, %111 : vector<128x256xf32>
    %113 = vector.broadcast %103 : vector<1x256xf32> to vector<128x256xf32>
    %114 = arith.addf %112, %113 : vector<128x256xf32>
    %cst_113 = arith.constant 0.000000e+00 : f32
    %115 = vector.broadcast %cst_113 : f32 to vector<128x256xf32>
    %116 = arith.maximumf %114, %115 : vector<128x256xf32>
    %c8_i32_114 = arith.constant 8 : i32
    %117 = vector.broadcast %c8_i32_114 : i32 to vector<128x1xi32>
    %118 = arith.cmpi slt, %1, %117 : vector<128x1xi32>
    %cst_115 = arith.constant 0.000000e+00 : f32
    %119 = vector.shape_cast %118 : vector<128x1xi1> to vector<128x1xi1>
    %120 = vector.broadcast %119 : vector<128x1xi1> to vector<128x256xi1>
    %121 = vector.broadcast %cst_115 : f32 to vector<128x256xf32>
    %122 = arith.select %120, %116, %121 : vector<128x256xi1>, vector<128x256xf32>
    %c0_116 = arith.constant 0 : index
    %c0_117 = arith.constant 0 : index
    %123 = vector.load %arg7[%c0_116, %c0_117] : memref<128x256xf32, #tpu.memory_space<vmem>>, vector<128x256xf32>
    %124 = arith.mulf %122, %123 : vector<128x256xf32>
    %125 = vector.shape_cast %124 : vector<128x256xf32> to vector<8x16x256xf32>
    %cst_118 = arith.constant dense<0.000000e+00> : vector<8x16xf32>
    %126 = vector.multi_reduction <add>, %125, %cst_118 [2] : vector<8x16x256xf32> to vector<8x16xf32>
    %cst_119 = arith.constant dense<0.000000e+00> : vector<8xf32>
    %127 = vector.multi_reduction <add>, %126, %cst_119 [1] : vector<8x16xf32> to vector<8xf32>
    %128 = vector.shape_cast %127 : vector<8xf32> to vector<1x8xf32>
    %c0_120 = arith.constant 0 : index
    %c0_121 = arith.constant 0 : index
    %129 = vector.load %arg8[%c0_120, %c0_121] : memref<1x1xf32, #tpu.memory_space<vmem>>, vector<1x1xf32>
    %130 = vector.broadcast %129 : vector<1x1xf32> to vector<1x8xf32>
    %131 = arith.addf %128, %130 : vector<1x8xf32>
    %132 = vector.shape_cast %131 : vector<1x8xf32> to vector<1x1x8xf32>
    %c0_122 = arith.constant 0 : index
    %c0_123 = arith.constant 0 : index
    %c0_124 = arith.constant 0 : index
    %133 = vector.load %arg9[%c0_122, %c0_123, %c0_124] : memref<1x1x8xf32, #tpu.memory_space<vmem>>, vector<1x1x8xf32>
    tpu.vector_store %arg9[%c0_122, %c0_123, %c0_124], %132 {strides = array<i32>} : memref<1x1x8xf32, #tpu.memory_space<vmem>>, vector<1x1x8xf32>,
    return
  }
  func.func @transform_0(%arg0: i32) -> (i32, i32, i32) {
    %c0_i32 = arith.constant 0 : i32
    %c0_i32_0 = arith.constant 0 : i32
    %c0_i32_1 = arith.constant 0 : i32
    return %arg0, %c0_i32, %c0_i32_0 : i32, i32, i32
  }
  func.func @transform_1(%arg0: i32) -> (i32, i32, i32) {
    %c0_i32 = arith.constant 0 : i32
    %c0_i32_0 = arith.constant 0 : i32
    %c0_i32_1 = arith.constant 0 : i32
    %c0_i32_2 = arith.constant 0 : i32
    return %c0_i32, %c0_i32_0, %c0_i32_1 : i32, i32, i32
  }
  func.func @transform_2(%arg0: i32) -> (i32, i32, i32) {
    %c0_i32 = arith.constant 0 : i32
    %c0_i32_0 = arith.constant 0 : i32
    %c0_i32_1 = arith.constant 0 : i32
    %c0_i32_2 = arith.constant 0 : i32
    return %c0_i32, %c0_i32_0, %c0_i32_1 : i32, i32, i32
  }
  func.func @transform_3(%arg0: i32) -> (i32, i32, i32) {
    %c0_i32 = arith.constant 0 : i32
    %c0_i32_0 = arith.constant 0 : i32
    %c0_i32_1 = arith.constant 0 : i32
    %c0_i32_2 = arith.constant 0 : i32
    return %c0_i32, %c0_i32_0, %c0_i32_1 : i32, i32, i32
  }
  func.func @transform_4(%arg0: i32) -> (i32, i32, i32) {
    %c0_i32 = arith.constant 0 : i32
    %c0_i32_0 = arith.constant 0 : i32
    %c0_i32_1 = arith.constant 0 : i32
    %c0_i32_2 = arith.constant 0 : i32
    return %c0_i32, %c0_i32_0, %c0_i32_1 : i32, i32, i32
  }
  func.func @transform_5(%arg0: i32) -> (i32, i32) {
    %c0_i32 = arith.constant 0 : i32
    %c0_i32_0 = arith.constant 0 : i32
    %c0_i32_1 = arith.constant 0 : i32
    return %c0_i32, %c0_i32_0 : i32, i32
  }
  func.func @transform_6(%arg0: i32) -> (i32, i32) {
    %c0_i32 = arith.constant 0 : i32
    %c0_i32_0 = arith.constant 0 : i32
    %c0_i32_1 = arith.constant 0 : i32
    return %c0_i32, %c0_i32_0 : i32, i32
  }
  func.func @transform_7(%arg0: i32) -> (i32, i32) {
    %c0_i32 = arith.constant 0 : i32
    %c0_i32_0 = arith.constant 0 : i32
    %c0_i32_1 = arith.constant 0 : i32
    return %c0_i32, %c0_i32_0 : i32, i32
  }
  func.func @transform_8(%arg0: i32) -> (i32, i32, i32) {
    %c0_i32 = arith.constant 0 : i32
    %c0_i32_0 = arith.constant 0 : i32
    %c0_i32_1 = arith.constant 0 : i32
    return %arg0, %c0_i32, %c0_i32_0 : i32, i32, i32
  }
}

</mosaic_0001>

<llo_original>
// kernel: tile.23
$region0: #{tile.23}
  #allocation0 [shape = 's32[1]{0}', space=sflag, size = 0x4, scoped, tag = 'scoped memory for tile.23']
  %s0 = inlined_call_operand.vmem [shape: f32[32], index: 0, kind: input, shape index: {}]
  %s1 = inlined_call_operand.vmem [shape: f32[12,32], index: 1, kind: output, shape index: {}]
  // Predicated region
  $region2: #{tile.23} parent=0 // pred_check
    _
  $region3: #{tile.23} parent=0 // pred_check_branch
    %3 = sbr.rel (0) target = $region5
  $region4: #{tile.23} parent=0 // pred_region
    _
  $region5: #{tile.23} parent=0 // pred_fallthru
    _
  %v4 = vld [vmem:[%s0] ss:$0 sm:$0xff]
  %5 = vst [vmem:[%s1] sm:$0xff] %v4
  %s6 = scalar_lea.vmem %s1, 8
  %7 = vst [vmem:[%s6] sm:$0xff] %v4

// kernel: tile.31
$region0: #{tile.31}
  #allocation0 [shape = 's32[1]{0}', space=sflag, size = 0x4, scoped, tag = 'scoped memory for tile.31']
  %s0 = inlined_call_operand.vmem [shape: f32[32], index: 0, kind: input, shape index: {}]
  %s1 = inlined_call_operand.vmem [shape: f32[8,32], index: 1, kind: output, shape index: {}]
  // Predicated region
  $region2: #{tile.31} parent=0 // pred_check
    _
  $region3: #{tile.31} parent=0 // pred_check_branch
    %3 = sbr.rel (0) target = $region5
  $region4: #{tile.31} parent=0 // pred_region
    _
  $region5: #{tile.31} parent=0 // pred_fallthru
    _
  %v4 = vld [vmem:[%s0] ss:$0 sm:$0xff]
  %5 = vst [vmem:[%s1] sm:$0xff] %v4

// kernel: cnn_forward.1
$region0: #{cnn_forward.1}
  #allocation0 [shape = 'u32[]', space=smem, size = 0x4, offset = 0x4, fixed_abs, tag = 'smem constant byte address 0x4 - core index']
  #allocation1 [shape = 'u32[144,128]{1,0:T(1,128)}', space=vmem, size = 0x12000, scoped, tag = 'internal scratch']
  #allocation2 [shape = 'bf16[136,64]{1,0:T(8,128)(2,1)}', space=vmem, size = 0x8800, scoped, tag = 'scratch operand']
  #allocation3 [shape = 'bf16[136,384]{1,0:T(8,128)(2,1)}', space=vmem, size = 0x19800, scoped, tag = 'scratch operand']
  #allocation4 [shape = 'bf16[136,384]{1,0:T(8,128)(2,1)}', space=vmem, size = 0x19800, scoped, tag = 'scratch operand']
  #allocation5 [shape = 'bf16[136,256]{1,0:T(8,128)(2,1)}', space=vmem, size = 0x11000, scoped, tag = 'scratch operand']
  #allocation6 [shape = 'f32[1,1]{1,0:T(1,128)S(1)}', space=vmem, size = 0x200, scoped, tag = 'scoped memory for cnn_forward.1']
  %s0 = inlined_call_operand.vmem [shape: bf16[16,16,64], index: 0, kind: input, shape index: {}]
  %s1 = inlined_call_operand.vmem [shape: bf16[5,64,384], index: 1, kind: input, shape index: {}]
  %s2 = inlined_call_operand.vmem [shape: bf16[2,384,384], index: 2, kind: input, shape index: {}]
  %s3 = inlined_call_operand.vmem [shape: bf16[5,384,256], index: 3, kind: input, shape index: {}]
  %s4 = inlined_call_operand.vmem [shape: bf16[2,256,256], index: 4, kind: input, shape index: {}]
  %s5 = inlined_call_operand.vmem [shape: f32[4,384], index: 5, kind: input, shape index: {}]
  %s6 = inlined_call_operand.vmem [shape: f32[128,256], index: 6, kind: input, shape index: {}]
  %s7 = inlined_call_operand.<no memory space> [shape: f32[1,1], index: 7, kind: input, shape index: {}]
  %s8 = inlined_call_operand.vmem [shape: f32[2,1,8], index: 8, kind: output, shape index: {}]
  %s9 = sld [smem:[#allocation0]]
  $region65: #{cnn_forward.1} parent=0
    _
  %s11 = ssub.s32 1, %s9
  %s12 = scalar_select 0, %s11, %s9
  %v13 = vstv %s7
  %14 = vst [vmem:[#allocation6] sm:$0x1] %v13
  loop: start=0, step=1, limit=4
  $region2: #{cnn_forward.1} parent=0 // loop_pre_header
    _
  $region3: #{cnn_forward.1} parent=0 // loop_header
    %s16 = sphi 0, %s20
    %p17 = scmp.ge.s32.totalorder %s16, 4
    %s26 = sphi 0, %s28
    %s29 = sphi 0, %s26
    %s30 = sphi 0, %s29
    %s46 = sphi 0, %s30
    %s50 = sphi 0, %s50
    %s52 = sphi 0, %s50
    %s53 = sphi 0, %s52
    %s67 = sphi 0, %s53
    %s71 = sphi 0, %s71
    %s73 = sphi 0, %s71
    %s74 = sphi 0, %s73
    %s88 = sphi 0, %s74
    %s92 = sphi 0, %s92
    %s94 = sphi 0, %s92
    %s95 = sphi 0, %s94
    %s109 = sphi 0, %s95
    %s113 = sphi 0, %s113
    %s115 = sphi 0, %s113
    %s116 = sphi 0, %s115
    %s130 = sphi 0, %s116
    %s134 = sphi 0, %s134
    %s136 = sphi 0, %s134
    %s137 = sphi 0, %s136
    %s151 = sphi 0, %s137
    %s155 = sphi 0, %s155
    %s157 = sphi 0, %s155
    %s158 = sphi 0, %s157
    %s172 = sphi 0, %s158
    %s176 = sphi 0, %s176
    %s178 = sphi 0, %s176
    %s179 = sphi 0, %s178
    %s193 = sphi 0, %s179
    %s199 = sphi 0, %s201
    %s202 = sphi 0, %s199
    %s203 = sphi 0, %s202
    %s219 = sphi 0, %s203
  $region4: #{cnn_forward.1} parent=0 // loop_header_branch
    %19 = sbr.rel (%p17) target = $region8
  $region5: #{cnn_forward.1} parent=0 // loop_body
    %s21 = ssub.s32 %s16, 1
    %s22 = ssub.s32 %s16, 2
    %s23 = sadd.s32 %s16, 1
    %s24 = ssub.s32 %s16, %s23
    %p25 = scmp.eq.s32.totalorder %s24, 0
    %s27 = sadd.s32 %s26, 1
    %s28 = scalar_select %p25, %s26, %s27
    %p31 = pneg %p25
    %p32 = scmp.eq.s32.totalorder %s16, 1
    %p33 = por %p31, %p32
    %p34 = scmp.ne.s32.totalorder %s26, %s29
    %p35 = scmp.eq.s32.totalorder %s16, 0
    %p36 = por %p34, %p35
    %p37 = scmp.ne.s32.totalorder %s26, %s29
    %p38 = scmp.eq.s32.totalorder %s21, 1
    %p39 = por %p37, %p38
    %p40 = scmp.ne.s32.totalorder %s29, %s30
    %p41 = scmp.eq.s32.totalorder %s21, 0
    %p42 = por %p40, %p41
    %p43 = scmp.ne.s32.totalorder %s29, %s30
    %p44 = scmp.eq.s32.totalorder %s22, 1
    %p45 = por %p43, %p44
    %p47 = scmp.ne.s32.totalorder %s30, %s46
    %p48 = scmp.eq.s32.totalorder %s22, 0
    %p49 = por %p47, %p48
    %s51 = sadd.s32 %s50, 1
    %p54 = scmp.eq.s32.totalorder %s16, 1
    %p55 = scmp.ne.s32.totalorder %s50, %s52
    %p56 = scmp.eq.s32.totalorder %s16, 0
    %p57 = por %p55, %p56
    %p58 = scmp.ne.s32.totalorder %s50, %s52
    %p59 = scmp.eq.s32.totalorder %s21, 1
    %p60 = por %p58, %p59
    %p61 = scmp.ne.s32.totalorder %s52, %s53
    %p62 = scmp.eq.s32.totalorder %s21, 0
    %p63 = por %p61, %p62
    %p64 = scmp.ne.s32.totalorder %s52, %s53
    %p65 = scmp.eq.s32.totalorder %s22, 1
    %p66 = por %p64, %p65
    %p68 = scmp.ne.s32.totalorder %s53, %s67
    %p69 = scmp.eq.s32.totalorder %s22, 0
    %p70 = por %p68, %p69
    %s72 = sadd.s32 %s71, 1
    %p75 = scmp.eq.s32.totalorder %s16, 1
    %p76 = scmp.ne.s32.totalorder %s71, %s73
    %p77 = scmp.eq.s32.totalorder %s16, 0
    %p78 = por %p76, %p77
    %p79 = scmp.ne.s32.totalorder %s71, %s73
    %p80 = scmp.eq.s32.totalorder %s21, 1
    %p81 = por %p79, %p80
    %p82 = scmp.ne.s32.totalorder %s73, %s74
    %p83 = scmp.eq.s32.totalorder %s21, 0
    %p84 = por %p82, %p83
    %p85 = scmp.ne.s32.totalorder %s73, %s74
    %p86 = scmp.eq.s32.totalorder %s22, 1
    %p87 = por %p85, %p86
    %p89 = scmp.ne.s32.totalorder %s74, %s88
    %p90 = scmp.eq.s32.totalorder %s22, 0
    %p91 = por %p89, %p90
    %s93 = sadd.s32 %s92, 1
    %p96 = scmp.eq.s32.totalorder %s16, 1
    %p97 = scmp.ne.s32.totalorder %s92, %s94
    %p98 = scmp.eq.s32.totalorder %s16, 0
    %p99 = por %p97, %p98
    %p100 = scmp.ne.s32.totalorder %s92, %s94
    %p101 = scmp.eq.s32.totalorder %s21, 1
    %p102 = por %p100, %p101
    %p103 = scmp.ne.s32.totalorder %s94, %s95
    %p104 = scmp.eq.s32.totalorder %s21, 0
    %p105 = por %p103, %p104
    %p106 = scmp.ne.s32.totalorder %s94, %s95
    %p107 = scmp.eq.s32.totalorder %s22, 1
    %p108 = por %p106, %p107
    %p110 = scmp.ne.s32.totalorder %s95, %s109
    %p111 = scmp.eq.s32.totalorder %s22, 0
    %p112 = por %p110, %p111
    %s114 = sadd.s32 %s113, 1
    %p117 = scmp.eq.s32.totalorder %s16, 1
    %p118 = scmp.ne.s32.totalorder %s113, %s115
    %p119 = scmp.eq.s32.totalorder %s16, 0
    %p120 = por %p118, %p119
    %p121 = scmp.ne.s32.totalorder %s113, %s115
    %p122 = scmp.eq.s32.totalorder %s21, 1
    %p123 = por %p121, %p122
    %p124 = scmp.ne.s32.totalorder %s115, %s116
    %p125 = scmp.eq.s32.totalorder %s21, 0
    %p126 = por %p124, %p125
    %p127 = scmp.ne.s32.totalorder %s115, %s116
    %p128 = scmp.eq.s32.totalorder %s22, 1
    %p129 = por %p127, %p128
    %p131 = scmp.ne.s32.totalorder %s116, %s130
    %p132 = scmp.eq.s32.totalorder %s22, 0
    %p133 = por %p131, %p132
    %s135 = sadd.s32 %s134, 1
    %p138 = scmp.eq.s32.totalorder %s16, 1
    %p139 = scmp.ne.s32.totalorder %s134, %s136
    %p140 = scmp.eq.s32.totalorder %s16, 0
    %p141 = por %p139, %p140
    %p142 = scmp.ne.s32.totalorder %s134, %s136
    %p143 = scmp.eq.s32.totalorder %s21, 1
    %p144 = por %p142, %p143
    %p145 = scmp.ne.s32.totalorder %s136, %s137
    %p146 = scmp.eq.s32.totalorder %s21, 0
    %p147 = por %p145, %p146
    %p148 = scmp.ne.s32.totalorder %s136, %s137
    %p149 = scmp.eq.s32.totalorder %s22, 1
    %p150 = por %p148, %p149
    %p152 = scmp.ne.s32.totalorder %s137, %s151
    %p153 = scmp.eq.s32.totalorder %s22, 0
    %p154 = por %p152, %p153
    %s156 = sadd.s32 %s155, 1
    %p159 = scmp.eq.s32.totalorder %s16, 1
    %p160 = scmp.ne.s32.totalorder %s155, %s157
    %p161 = scmp.eq.s32.totalorder %s16, 0
    %p162 = por %p160, %p161
    %p163 = scmp.ne.s32.totalorder %s155, %s157
    %p164 = scmp.eq.s32.totalorder %s21, 1
    %p165 = por %p163, %p164
    %p166 = scmp.ne.s32.totalorder %s157, %s158
    %p167 = scmp.eq.s32.totalorder %s21, 0
    %p168 = por %p166, %p167
    %p169 = scmp.ne.s32.totalorder %s157, %s158
    %p170 = scmp.eq.s32.totalorder %s22, 1
    %p171 = por %p169, %p170
    %p173 = scmp.ne.s32.totalorder %s158, %s172
    %p174 = scmp.eq.s32.totalorder %s22, 0
    %p175 = por %p173, %p174
    %s177 = sadd.s32 %s176, 1
    %p180 = scmp.eq.s32.totalorder %s16, 1
    %p181 = scmp.ne.s32.totalorder %s176, %s178
    %p182 = scmp.eq.s32.totalorder %s16, 0
    %p183 = por %p181, %p182
    %p184 = scmp.ne.s32.totalorder %s176, %s178
    %p185 = scmp.eq.s32.totalorder %s21, 1
    %p186 = por %p184, %p185
    %p187 = scmp.ne.s32.totalorder %s178, %s179
    %p188 = scmp.eq.s32.totalorder %s21, 0
    %p189 = por %p187, %p188
    %p190 = scmp.ne.s32.totalorder %s178, %s179
    %p191 = scmp.eq.s32.totalorder %s22, 1
    %p192 = por %p190, %p191
    %p194 = scmp.ne.s32.totalorder %s179, %s193
    %p195 = scmp.eq.s32.totalorder %s22, 0
    %p196 = por %p194, %p195
    %s197 = ssub.s32 %s16, %s23
    %p198 = scmp.eq.s32.totalorder %s197, 0
    %s200 = sadd.s32 %s199, 1
    %s201 = scalar_select %p198, %s199, %s200
    %p204 = pneg %p198
    %p205 = scmp.eq.s32.totalorder %s16, 1
    %p206 = por %p204, %p205
    %p207 = scmp.ne.s32.totalorder %s199, %s202
    %p208 = scmp.eq.s32.totalorder %s16, 0
    %p209 = por %p207, %p208
    %p210 = scmp.ne.s32.totalorder %s199, %s202
    %p211 = scmp.eq.s32.totalorder %s21, 1
    %p212 = por %p210, %p211
    %p213 = scmp.ne.s32.totalorder %s202, %s203
    %p214 = scmp.eq.s32.totalorder %s21, 0
    %p215 = por %p213, %p214
    %p216 = scmp.ne.s32.totalorder %s202, %s203
    %p217 = scmp.eq.s32.totalorder %s22, 1
    %p218 = por %p216, %p217
    %p220 = scmp.ne.s32.totalorder %s203, %s219
    %p221 = scmp.eq.s32.totalorder %s22, 0
    %p222 = por %p220, %p221
    %p223 = scmp.le.s32.totalorder 1, %s16
    %p224 = scmp.lt.s32.totalorder %s16, 3
    %p225 = pnand %p223, %p224
    %p226 = pneg %p225
    // Predicated region
    $region9: #{cnn_forward.1} parent=5 // pred_check
      _
    $region10: #{cnn_forward.1} parent=5 // pred_check_branch
      %228 = sbr.rel (%p225) target = $region12
    $region11: #{cnn_forward.1} parent=5 // pred_region
      %s229 = ssub.s32 %s16, 1
      // Predicated region
      $region13: #{cnn_forward.1} parent=11 // pred_check
        %p230 = pneg %p63
      $region14: #{cnn_forward.1} parent=11 // pred_check_branch
        %232 = sbr.rel (%p230) target = $region16
      $region15: #{cnn_forward.1} parent=11 // pred_region
        _
      $region16: #{cnn_forward.1} parent=11 // pred_fallthru
        _
      // Predicated region
      $region17: #{cnn_forward.1} parent=11 // pred_check
        %p233 = pneg %p84
      $region18: #{cnn_forward.1} parent=11 // pred_check_branch
        %235 = sbr.rel (%p233) target = $region20
      $region19: #{cnn_forward.1} parent=11 // pred_region
        _
      $region20: #{cnn_forward.1} parent=11 // pred_fallthru
        _
      // Predicated region
      $region21: #{cnn_forward.1} parent=11 // pred_check
        %p236 = pneg %p105
      $region22: #{cnn_forward.1} parent=11 // pred_check_branch
        %238 = sbr.rel (%p236) target = $region24
      $region23: #{cnn_forward.1} parent=11 // pred_region
        _
      $region24: #{cnn_forward.1} parent=11 // pred_fallthru
        _
      // Predicated region
      $region25: #{cnn_forward.1} parent=11 // pred_check
        %p239 = pneg %p126
      $region26: #{cnn_forward.1} parent=11 // pred_check_branch
        %241 = sbr.rel (%p239) target = $region28
      $region27: #{cnn_forward.1} parent=11 // pred_region
        _
      $region28: #{cnn_forward.1} parent=11 // pred_fallthru
        _
      // Predicated region
      $region29: #{cnn_forward.1} parent=11 // pred_check
        %p242 = pneg %p147
      $region30: #{cnn_forward.1} parent=11 // pred_check_branch
        %244 = sbr.rel (%p242) target = $region32
      $region31: #{cnn_forward.1} parent=11 // pred_region
        _
      $region32: #{cnn_forward.1} parent=11 // pred_fallthru
        _
      // Predicated region
      $region33: #{cnn_forward.1} parent=11 // pred_check
        %p245 = pneg %p168
      $region34: #{cnn_forward.1} parent=11 // pred_check_branch
        %247 = sbr.rel (%p245) target = $region36
      $region35: #{cnn_forward.1} parent=11 // pred_region
        _
      $region36: #{cnn_forward.1} parent=11 // pred_fallthru
        _
      // Predicated region
      $region37: #{cnn_forward.1} parent=11 // pred_check
        %p248 = pneg %p189
      $region38: #{cnn_forward.1} parent=11 // pred_check_branch
        %250 = sbr.rel (%p248) target = $region40
      $region39: #{cnn_forward.1} parent=11 // pred_region
        _
      $region40: #{cnn_forward.1} parent=11 // pred_fallthru
        _
    $region12: #{cnn_forward.1} parent=5 // pred_fallthru
      _
    %p251 = scmp.lt.s32.totalorder %s16, 2
    // Predicated region
    $region41: #{cnn_forward.1} parent=5 // pred_check
      %p252 = pneg %p251
    $region42: #{cnn_forward.1} parent=5 // pred_check_branch
      %254 = sbr.rel (%p252) target = $region44
    $region43: #{cnn_forward.1} parent=5 // pred_region
      // Predicated region
      $region45: #{cnn_forward.1} parent=43 // pred_check
        %p255 = pneg %p36
      $region46: #{cnn_forward.1} parent=43 // pred_check_branch
        %257 = sbr.rel (%p255) target = $region48
      $region47: #{cnn_forward.1} parent=43 // pred_region
        %s258 = smul.u32 8, %s16
        %p259 = scmp.lt.s32.totalorder %s258, 15
        %s260 = scalar_select %p259, %s258, 15
        %s261 = smul.addr %s260, 2
        %s262 = smul.addr %s261, 4
        %s263 = scalar_lea.vmem %s0, %s262
        %s264 = smul.u32 8, %s16
      $region48: #{cnn_forward.1} parent=43 // pred_fallthru
        _
    $region44: #{cnn_forward.1} parent=5 // pred_fallthru
      _
    %p265 = scmp.le.s32.totalorder 1, %s16
    %p266 = scmp.lt.s32.totalorder %s16, 3
    %p267 = pnand %p265, %p266
    %p268 = pneg %p267
    // Predicated region
    $region49: #{cnn_forward.1} parent=5 // pred_check
      _
    $region50: #{cnn_forward.1} parent=5 // pred_check_branch
      %270 = sbr.rel (%p267) target = $region52
    $region51: #{cnn_forward.1} parent=5 // pred_region
      %s271 = ssub.s32 %s16, 1
      %s272 = smul.u32 8, %s21
      %p273 = scmp.lt.s32.totalorder %s272, 15
      %s274 = scalar_select %p273, %s272, 15
      %s275 = smul.addr %s274, 2
      %s276 = smul.addr %s275, 4
      %s277 = scalar_lea.vmem %s0, %s276
      %p278 = pneg %p42
      %p279 = pneg %p39
      %p280 = pneg %p63
      %p281 = pneg %p60
      %p282 = pneg %p84
      %p283 = pneg %p81
      %p284 = pneg %p105
      %p285 = pneg %p102
      %p286 = pneg %p126
      %p287 = pneg %p123
      %p288 = pneg %p147
      %p289 = pneg %p144
      %p290 = pneg %p168
      %p291 = pneg %p165
      %p292 = pneg %p189
      %p293 = pneg %p186
      %p294 = pneg %p215
      %p295 = pneg %p212
      %p296 = scmp.lt.s32.totalorder %s21, 1
      %s297 = scalar_select %p296, %s21, 1
      %s298 = scalar_lea.vmem %s8, %s297
      %s299 = smul.u32 8, %s21
      %p300 = scmp.lt.s32.totalorder %s299, 15
      %s301 = scalar_select %p300, %s299, 15
      %s302 = smul.addr %s301, 2
      %s303 = smul.addr %s302, 4
      %s304 = scalar_lea.vmem %s0, %s303
      %s305 = smul.u32 8, %s21
      %p306 = scmp.lt.s32.totalorder %s21, 1
      %s307 = scalar_select %p306, %s21, 1
      %s308 = scalar_lea.vmem %s8, %s307
      %v310 = vlaneseq
      %v311 = vshrl.u32 %v310, 7
      %v312 = vadd.s32 %v311, 8
      %vm313 = vcmask 519168
      %314 = vst.msk [vmem:[#allocation2 + $0x40] sm:$0xf] %vm313, 0
      %315 = vst [vmem:[#allocation3 + $0xc0] sm:$0xff] 0
      %316 = vst [vmem:[#allocation3 + $0xc8] sm:$0xf] 0
      %317 = vst [vmem:[#allocation4 + $0xc0] sm:$0xff] 0
      %318 = vst [vmem:[#allocation4 + $0xc8] sm:$0xf] 0
      %319 = vst [vmem:[#allocation5 + $0x80] sm:$0xff] 0
      %v320 = vld [vmem:[%s304] sm:$0xf]
      %v321 = vld [vmem:[%s304 + $0x4] sm:$0xf]
      %v322 = vld [vmem:[%s304 + $0x8] sm:$0xf]
      %v323 = vld [vmem:[%s304 + $0xc] sm:$0xf]
      %v324 = vld [vmem:[%s304 + $0x10] sm:$0xf]
      %v325 = vld [vmem:[%s304 + $0x14] sm:$0xf]
      %v326 = vld [vmem:[%s304 + $0x18] sm:$0xf]
      %v327 = vld [vmem:[%s304 + $0x1c] sm:$0xf]
      %v328 = vld [vmem:[%s304 + $0x20] sm:$0xf]
      %v329 = vld [vmem:[%s304 + $0x24] sm:$0xf]
      %v330 = vld [vmem:[%s304 + $0x28] sm:$0xf]
      %v331 = vld [vmem:[%s304 + $0x2c] sm:$0xf]
      %v332 = vld [vmem:[%s304 + $0x30] sm:$0xf]
      %v333 = vld [vmem:[%s304 + $0x34] sm:$0xf]
      %v334 = vld [vmem:[%s304 + $0x38] sm:$0xf]
      %v335 = vld [vmem:[%s304 + $0x3c] sm:$0xf]
      %336 = vst.msk [vmem:[#allocation2] sm:$0xf] %vm313, %v320
      %337 = vst.msk [vmem:[#allocation2 + $0x4] sm:$0xf] %vm313, %v321
      %338 = vst.msk [vmem:[#allocation2 + $0x8] sm:$0xf] %vm313, %v322
      %339 = vst.msk [vmem:[#allocation2 + $0xc] sm:$0xf] %vm313, %v323
      %340 = vst.msk [vmem:[#allocation2 + $0x10] sm:$0xf] %vm313, %v324
      %341 = vst.msk [vmem:[#allocation2 + $0x14] sm:$0xf] %vm313, %v325
      %342 = vst.msk [vmem:[#allocation2 + $0x18] sm:$0xf] %vm313, %v326
      %343 = vst.msk [vmem:[#allocation2 + $0x1c] sm:$0xf] %vm313, %v327
      %344 = vst.msk [vmem:[#allocation2 + $0x20] sm:$0xf] %vm313, %v328
      %345 = vst.msk [vmem:[#allocation2 + $0x24] sm:$0xf] %vm313, %v329
      %346 = vst.msk [vmem:[#allocation2 + $0x28] sm:$0xf] %vm313, %v330
      %347 = vst.msk [vmem:[#allocation2 + $0x2c] sm:$0xf] %vm313, %v331
      %348 = vst.msk [vmem:[#allocation2 + $0x30] sm:$0xf] %vm313, %v332
      %349 = vst.msk [vmem:[#allocation2 + $0x34] sm:$0xf] %vm313, %v333
      %350 = vst.msk [vmem:[#allocation2 + $0x38] sm:$0xf] %vm313, %v334
      %351 = vst.msk [vmem:[#allocation2 + $0x3c] sm:$0xf] %vm313, %v335
      %v352 = vld [vmem:[%s5] ss:$4 sm:$0x7]
      %v353 = vld [vmem:[#allocation2] sm:$0xf]
      %v354 = vld [vmem:[#allocation2 + $0x4] sm:$0xf]
      %v355 = vld [vmem:[#allocation2 + $0x8] sm:$0xf]
      %v356 = vld [vmem:[#allocation2 + $0xc] sm:$0xf]
      %v357 = vld [vmem:[#allocation2 + $0x10] sm:$0xf]
      %v358 = vld [vmem:[#allocation2 + $0x14] sm:$0xf]
      %v359 = vld [vmem:[#allocation2 + $0x18] sm:$0xf]
      %v360 = vld [vmem:[#allocation2 + $0x1c] sm:$0xf]
      %v361 = vld [vmem:[#allocation2 + $0x20] sm:$0xf]
      %v362 = vld [vmem:[#allocation2 + $0x24] sm:$0xf]
      %v363 = vld [vmem:[#allocation2 + $0x28] sm:$0xf]
      %v364 = vld [vmem:[#allocation2 + $0x2c] sm:$0xf]
      %v365 = vld [vmem:[#allocation2 + $0x30] sm:$0xf]
      %v366 = vld [vmem:[#allocation2 + $0x34] sm:$0xf]
      %v367 = vld [vmem:[#allocation2 + $0x38] sm:$0xf]
      %v368 = vld [vmem:[#allocation2 + $0x3c] sm:$0xf]
      %v369 = vld [vmem:[%s1] sm:$0xff]
      %v370 = vld [vmem:[%s1 + $0x8] sm:$0xf]
      %v371 = vld [vmem:[%s1 + $0xc] sm:$0xff]
      %v372 = vld [vmem:[%s1 + $0x14] sm:$0xf]
      %v373 = vld [vmem:[%s1 + $0x18] sm:$0xff]
      %v374 = vld [vmem:[%s1 + $0x20] sm:$0xf]
      %v375 = vld [vmem:[%s1 + $0x24] sm:$0xff]
      %v376 = vld [vmem:[%s1 + $0x2c] sm:$0xf]
      %v377 = vld [vmem:[%s1 + $0x30] sm:$0xff]
      %v378 = vld [vmem:[%s1 + $0x38] sm:$0xf]
      %v379 = vld [vmem:[%s1 + $0x3c] sm:$0xff]
      %v380 = vld [vmem:[%s1 + $0x44] sm:$0xf]
      %v381 = vld [vmem:[%s1 + $0x48] sm:$0xff]
      %v382 = vld [vmem:[%s1 + $0x50] sm:$0xf]
      %v383 = vld [vmem:[%s1 + $0x54] sm:$0xff]
      %v384 = vld [vmem:[%s1 + $0x5c] sm:$0xf]
      %v385 = vld [vmem:[#allocation2 + $0x40] sm:$0x1]
      %s386 = scalar_lea.vmem %s1, 96
      %v387 = vld [vmem:[%s386] sm:$0xff]
      %v388 = vld [vmem:[%s386 + $0x8] sm:$0xf]
      %v389 = vld [vmem:[%s386 + $0xc] sm:$0xff]
      %v390 = vld [vmem:[%s386 + $0x14] sm:$0xf]
      %v391 = vld [vmem:[%s386 + $0x18] sm:$0xff]
      %v392 = vld [vmem:[%s386 + $0x20] sm:$0xf]
      %v393 = vld [vmem:[%s386 + $0x24] sm:$0xff]
      %v394 = vld [vmem:[%s386 + $0x2c] sm:$0xf]
      %v395 = vld [vmem:[%s386 + $0x30] sm:$0xff]
      %v396 = vld [vmem:[%s386 + $0x38] sm:$0xf]
      %v397 = vld [vmem:[%s386 + $0x3c] sm:$0xff]
      %v398 = vld [vmem:[%s386 + $0x44] sm:$0xf]
      %v399 = vld [vmem:[%s386 + $0x48] sm:$0xff]
      %v400 = vld [vmem:[%s386 + $0x50] sm:$0xf]
      %v401 = vld [vmem:[%s386 + $0x54] sm:$0xff]
      %v402 = vld [vmem:[%s386 + $0x5c] sm:$0xf]
      %v420 = vunpack.c.l.b16 %v353
      %v421 = vunpack.c.l.b16 %v354
      %v422 = vunpack.c.l.b16 %v355
      %v423 = vunpack.c.l.b16 %v356
      %v424 = vunpack.c.l.b16 %v357
      %v425 = vunpack.c.l.b16 %v358
      %v426 = vunpack.c.l.b16 %v359
      %v427 = vunpack.c.l.b16 %v360
      %v428 = vunpack.c.l.b16 %v361
      %v429 = vunpack.c.l.b16 %v362
      %v430 = vunpack.c.l.b16 %v363
      %v431 = vunpack.c.l.b16 %v364
      %v432 = vunpack.c.l.b16 %v365
      %v433 = vunpack.c.l.b16 %v366
      %v434 = vunpack.c.l.b16 %v367
      %v435 = vunpack.c.l.b16 %v368
      %v436 = vunpack.c.l.b16 %v385
      %v437 = vpack.c.b16 %v421, %v420
      %v438 = vpack.c.b16 %v423, %v422
      %v439 = vpack.c.b16 %v425, %v424
      %v440 = vpack.c.b16 %v427, %v426
      %v441 = vpack.c.b16 %v429, %v428
      %v442 = vpack.c.b16 %v431, %v430
      %v443 = vpack.c.b16 %v433, %v432
      %v444 = vpack.c.b16 %v435, %v434
      %v445 = vpack.c.b16 %v436, %v436
      %vm446 = vsmask.f32 7424
      %v448 = vshrl.u32 %v437, 16
      %v450 = vshll.u32 %v437, 16
      %v452 = vrot.slane %v450, 1
      %v453 = vor.u32 %v448, %v452
      %v455 = vshll.u32 %v438, 16
      %v457 = vrot.slane %v455, 1
      %v458 = vsel %vm446, %v453, %v457
      %v459 = vshrl.u32 %v438, 16
      %v461 = vor.u32 %v459, %v457
      %v463 = vshll.u32 %v439, 16
      %v465 = vrot.slane %v463, 1
      %v466 = vsel %vm446, %v461, %v465
      %v467 = vshrl.u32 %v439, 16
      %v469 = vor.u32 %v467, %v465
      %v471 = vshll.u32 %v440, 16
      %v473 = vrot.slane %v471, 1
      %v474 = vsel %vm446, %v469, %v473
      %v475 = vshrl.u32 %v440, 16
      %v477 = vor.u32 %v475, %v473
      %v479 = vshll.u32 %v441, 16
      %v481 = vrot.slane %v479, 1
      %v482 = vsel %vm446, %v477, %v481
      %v483 = vshrl.u32 %v441, 16
      %v485 = vor.u32 %v483, %v481
      %v487 = vshll.u32 %v442, 16
      %v489 = vrot.slane %v487, 1
      %v490 = vsel %vm446, %v485, %v489
      %v491 = vshrl.u32 %v442, 16
      %v493 = vor.u32 %v491, %v489
      %v495 = vshll.u32 %v443, 16
      %v497 = vrot.slane %v495, 1
      %v498 = vsel %vm446, %v493, %v497
      %v499 = vshrl.u32 %v443, 16
      %v501 = vor.u32 %v499, %v497
      %v503 = vshll.u32 %v444, 16
      %v505 = vrot.slane %v503, 1
      %v506 = vsel %vm446, %v501, %v505
      %v507 = vshrl.u32 %v444, 16
      %v509 = vor.u32 %v507, %v505
      %v511 = vshll.u32 %v445, 16
      %v513 = vrot.slane %v511, 1
      %v514 = vsel %vm446, %v509, %v513
      %v531 = vunpack.c.l.b16 %v387
      %v532 = vunpack.c.h.b16 %v387
      %v533 = vunpack.c.l.b16 %v388
      %v534 = vunpack.c.l.b16 %v389
      %v535 = vunpack.c.h.b16 %v389
      %v536 = vunpack.c.l.b16 %v390
      %v537 = vunpack.c.l.b16 %v391
      %v538 = vunpack.c.h.b16 %v391
      %v539 = vunpack.c.l.b16 %v392
      %v540 = vunpack.c.l.b16 %v393
      %v541 = vunpack.c.h.b16 %v393
      %v542 = vunpack.c.l.b16 %v394
      %v543 = vunpack.c.l.b16 %v395
      %v544 = vunpack.c.h.b16 %v395
      %v545 = vunpack.c.l.b16 %v396
      %v546 = vunpack.c.l.b16 %v397
      %v547 = vunpack.c.h.b16 %v397
      %v548 = vunpack.c.l.b16 %v398
      %v549 = vunpack.c.l.b16 %v399
      %v550 = vunpack.c.h.b16 %v399
      %v551 = vunpack.c.l.b16 %v400
      %v552 = vunpack.c.l.b16 %v401
      %v553 = vunpack.c.h.b16 %v401
      %v554 = vunpack.c.l.b16 %v402
      %v555 = vpack.c.b16 %v534, %v531
      %v556 = vpack.c.b16 %v535, %v532
      %v557 = vpack.c.b16 %v536, %v533
      %v558 = vpack.c.b16 %v540, %v537
      %v559 = vpack.c.b16 %v541, %v538
      %v560 = vpack.c.b16 %v542, %v539
      %v561 = vpack.c.b16 %v546, %v543
      %v562 = vpack.c.b16 %v547, %v544
      %v563 = vpack.c.b16 %v548, %v545
      %v564 = vpack.c.b16 %v552, %v549
      %v565 = vpack.c.b16 %v553, %v550
      %v566 = vpack.c.b16 %v554, %v551
      %vm579 = vcmask 523264
      %v581 = vsel %vm579, %v458, 0
      %v584 = vsel %vm579, %v466, 0
      %v587 = vsel %vm579, %v474, 0
      %v590 = vsel %vm579, %v482, 0
      %v593 = vsel %vm579, %v490, 0
      %v596 = vsel %vm579, %v498, 0
      %v599 = vsel %vm579, %v506, 0
      %v602 = vsel %vm579, %v514, 0
      %604 = vmatprep.subr.bf16.mxu0 0
      %605 = vmatpush1.bf16.msra.mxu0 0
      %606 = vmatprep.subr.bf16.mxu0 0
      %607 = vmatpush1.bf16.msra.mxu0 0
      %608 = vmatprep.subr.bf16.mxu0 0
      %609 = vmatpush1.bf16.msra.mxu0 0
      %610 = vmatprep.subr.bf16.mxu0 0
      %611 = vmatpush1.bf16.msra.mxu0 0
      %612 = vmatprep.subr.bf16.mxu0 %v565
      %613 = vmatpush1.bf16.msra.mxu0 %v564
      %614 = vmatprep.subr.bf16.mxu0 %v562
      %615 = vmatpush1.bf16.msra.mxu0 %v561
      %616 = vmatprep.subr.bf16.mxu0 %v559
      %617 = vmatpush1.bf16.msra.mxu0 %v558
      %618 = vmatprep.subr.bf16.mxu0 %v556
      %619 = vmatpush1.bf16.msra.mxu0 %v555
      %620 = vmatprep.subr.bf16.mxu0 0
      %621 = vmatpush2.bf16.msra.mxu0 0
      %622 = vmatprep.subr.bf16.mxu0 0
      %623 = vmatpush2.bf16.msra.mxu0 0
      %624 = vmatprep.subr.bf16.mxu0 0
      %625 = vmatpush2.bf16.msra.mxu0 0
      %626 = vmatprep.subr.bf16.mxu0 0
      %627 = vmatpush2.bf16.msra.mxu0 0
      %628 = vmatprep.subr.bf16.mxu0 0
      %629 = vmatpush2.bf16.msra.mxu0 0
      %630 = vmatprep.subr.bf16.mxu0 0
      %631 = vmatpush2.bf16.msra.mxu0 0
      %632 = vmatprep.subr.bf16.mxu0 0
      %633 = vmatpush2.bf16.msra.mxu0 0
      %634 = vmatprep.subr.bf16.mxu0 0
      %635 = vmatpush2.bf16.msra.mxu0 0
      %636 = vmatprep.mubr.bf16.mxu0 0
      %637 = vmatmul.mubr.bf16.gmra.mxu0 %v581
      %v638 = vpop.f32.mrf.mxu0
      %v639 = vadd.f32 0.0, %v638
      %v640 = vpop.f32.mrf.mxu0
      %v641 = vadd.f32 0.0, %v640
      %v642 = vpop.f32.mrf.mxu0
      %v643 = vadd.f32 0.0, %v642
      %v644 = vpop.f32.mrf.mxu0
      %v645 = vadd.f32 0.0, %v644
      %646 = vmatprep.mubr.bf16.mxu0 0
      %647 = vmatmul.mubr.bf16.gmra.mxu0 %v584
      %v648 = vpop.f32.mrf.mxu0
      %v649 = vadd.f32 0.0, %v648
      %v650 = vpop.f32.mrf.mxu0
      %v651 = vadd.f32 0.0, %v650
      %v652 = vpop.f32.mrf.mxu0
      %v653 = vadd.f32 0.0, %v652
      %v654 = vpop.f32.mrf.mxu0
      %v655 = vadd.f32 0.0, %v654
      %656 = vmatprep.mubr.bf16.mxu0 0
      %657 = vmatmul.mubr.bf16.gmra.mxu0 %v587
      %v658 = vpop.f32.mrf.mxu0
      %v659 = vadd.f32 0.0, %v658
      %v660 = vpop.f32.mrf.mxu0
      %v661 = vadd.f32 0.0, %v660
      %v662 = vpop.f32.mrf.mxu0
      %v663 = vadd.f32 0.0, %v662
      %v664 = vpop.f32.mrf.mxu0
      %v665 = vadd.f32 0.0, %v664
      %666 = vmatprep.mubr.bf16.mxu0 0
      %667 = vmatmul.mubr.bf16.gmra.mxu0 %v590
      %v668 = vpop.f32.mrf.mxu0
      %v669 = vadd.f32 0.0, %v668
      %v670 = vpop.f32.mrf.mxu0
      %v671 = vadd.f32 0.0, %v670
      %v672 = vpop.f32.mrf.mxu0
      %v673 = vadd.f32 0.0, %v672
      %v674 = vpop.f32.mrf.mxu0
      %v675 = vadd.f32 0.0, %v674
      %676 = vmatprep.mubr.bf16.mxu0 0
      %677 = vmatmul.mubr.bf16.gmra.mxu0 %v593
      %v678 = vpop.f32.mrf.mxu0
      %v679 = vadd.f32 0.0, %v678
      %v680 = vpop.f32.mrf.mxu0
      %v681 = vadd.f32 0.0, %v680
      %v682 = vpop.f32.mrf.mxu0
      %v683 = vadd.f32 0.0, %v682
      %v684 = vpop.f32.mrf.mxu0
      %v685 = vadd.f32 0.0, %v684
      %686 = vmatprep.mubr.bf16.mxu0 0
      %687 = vmatmul.mubr.bf16.gmra.mxu0 %v596
      %v688 = vpop.f32.mrf.mxu0
      %v689 = vadd.f32 0.0, %v688
      %v690 = vpop.f32.mrf.mxu0
      %v691 = vadd.f32 0.0, %v690
      %v692 = vpop.f32.mrf.mxu0
      %v693 = vadd.f32 0.0, %v692
      %v694 = vpop.f32.mrf.mxu0
      %v695 = vadd.f32 0.0, %v694
      %696 = vmatprep.mubr.bf16.mxu0 0
      %697 = vmatmul.mubr.bf16.gmra.mxu0 %v599
      %v698 = vpop.f32.mrf.mxu0
      %v699 = vadd.f32 0.0, %v698
      %v700 = vpop.f32.mrf.mxu0
      %v701 = vadd.f32 0.0, %v700
      %v702 = vpop.f32.mrf.mxu0
      %v703 = vadd.f32 0.0, %v702
      %v704 = vpop.f32.mrf.mxu0
      %v705 = vadd.f32 0.0, %v704
      %706 = vmatprep.mubr.bf16.mxu0 0
      %707 = vmatmul.mubr.bf16.gmra.mxu0 %v602
      %v708 = vpop.f32.mrf.mxu0
      %v709 = vadd.f32 0.0, %v708
      %v710 = vpop.f32.mrf.mxu0
      %v711 = vadd.f32 0.0, %v710
      %v712 = vpop.f32.mrf.mxu0
      %v713 = vadd.f32 0.0, %v712
      %v714 = vpop.f32.mrf.mxu0
      %v715 = vadd.f32 0.0, %v714
      %716 = vdwg.mxu0
      %717 = vmatprep.subr.bf16.mxu0 0
      %718 = vmatpush1.bf16.msra.mxu0 0
      %719 = vmatprep.subr.bf16.mxu0 0
      %720 = vmatpush1.bf16.msra.mxu0 0
      %721 = vmatprep.subr.bf16.mxu0 0
      %722 = vmatpush1.bf16.msra.mxu0 0
      %723 = vmatprep.subr.bf16.mxu0 0
      %724 = vmatpush1.bf16.msra.mxu0 0
      %725 = vmatprep.subr.bf16.mxu0 0
      %726 = vmatpush1.bf16.msra.mxu0 %v566
      %727 = vmatprep.subr.bf16.mxu0 0
      %728 = vmatpush1.bf16.msra.mxu0 %v563
      %729 = vmatprep.subr.bf16.mxu0 0
      %730 = vmatpush1.bf16.msra.mxu0 %v560
      %731 = vmatprep.subr.bf16.mxu0 0
      %732 = vmatpush1.bf16.msra.mxu0 %v557
      %733 = vmatprep.subr.bf16.mxu0 0
      %734 = vmatpush2.bf16.msra.mxu0 0
      %735 = vmatprep.subr.bf16.mxu0 0
      %736 = vmatpush2.bf16.msra.mxu0 0
      %737 = vmatprep.subr.bf16.mxu0 0
      %738 = vmatpush2.bf16.msra.mxu0 0
      %739 = vmatprep.subr.bf16.mxu0 0
      %740 = vmatpush2.bf16.msra.mxu0 0
      %741 = vmatprep.subr.bf16.mxu0 0
      %742 = vmatpush2.bf16.msra.mxu0 0
      %743 = vmatprep.subr.bf16.mxu0 0
      %744 = vmatpush2.bf16.msra.mxu0 0
      %745 = vmatprep.subr.bf16.mxu0 0
      %746 = vmatpush2.bf16.msra.mxu0 0
      %747 = vmatprep.subr.bf16.mxu0 0
      %748 = vmatpush2.bf16.msra.mxu0 0
      %749 = vmatprep.mubr.bf16.mxu0 0
      %750 = vmatmul.mubr.bf16.gmra.mxu0 %v581
      %v751 = vpop.f32.mrf.mxu0
      %v752 = vadd.f32 0.0, %v751
      %v753 = vpop.f32.mrf.mxu0
      %v754 = vpop.f32.mrf.mxu0
      %v755 = vadd.f32 0.0, %v754
      %v756 = vpop.f32.mrf.mxu0
      %757 = vmatprep.mubr.bf16.mxu0 0
      %758 = vmatmul.mubr.bf16.gmra.mxu0 %v584
      %v759 = vpop.f32.mrf.mxu0
      %v760 = vadd.f32 0.0, %v759
      %v761 = vpop.f32.mrf.mxu0
      %v762 = vpop.f32.mrf.mxu0
      %v763 = vadd.f32 0.0, %v762
      %v764 = vpop.f32.mrf.mxu0
      %765 = vmatprep.mubr.bf16.mxu0 0
      %766 = vmatmul.mubr.bf16.gmra.mxu0 %v587
      %v767 = vpop.f32.mrf.mxu0
      %v768 = vadd.f32 0.0, %v767
      %v769 = vpop.f32.mrf.mxu0
      %v770 = vpop.f32.mrf.mxu0
      %v771 = vadd.f32 0.0, %v770
      %v772 = vpop.f32.mrf.mxu0
      %773 = vmatprep.mubr.bf16.mxu0 0
      %774 = vmatmul.mubr.bf16.gmra.mxu0 %v590
      %v775 = vpop.f32.mrf.mxu0
      %v776 = vadd.f32 0.0, %v775
      %v777 = vpop.f32.mrf.mxu0
      %v778 = vpop.f32.mrf.mxu0
      %v779 = vadd.f32 0.0, %v778
      %v780 = vpop.f32.mrf.mxu0
      %781 = vmatprep.mubr.bf16.mxu0 0
      %782 = vmatmul.mubr.bf16.gmra.mxu0 %v593
      %v783 = vpop.f32.mrf.mxu0
      %v784 = vadd.f32 0.0, %v783
      %v785 = vpop.f32.mrf.mxu0
      %v786 = vpop.f32.mrf.mxu0
      %v787 = vadd.f32 0.0, %v786
      %v788 = vpop.f32.mrf.mxu0
      %789 = vmatprep.mubr.bf16.mxu0 0
      %790 = vmatmul.mubr.bf16.gmra.mxu0 %v596
      %v791 = vpop.f32.mrf.mxu0
      %v792 = vadd.f32 0.0, %v791
      %v793 = vpop.f32.mrf.mxu0
      %v794 = vpop.f32.mrf.mxu0
      %v795 = vadd.f32 0.0, %v794
      %v796 = vpop.f32.mrf.mxu0
      %797 = vmatprep.mubr.bf16.mxu0 0
      %798 = vmatmul.mubr.bf16.gmra.mxu0 %v599
      %v799 = vpop.f32.mrf.mxu0
      %v800 = vadd.f32 0.0, %v799
      %v801 = vpop.f32.mrf.mxu0
      %v802 = vpop.f32.mrf.mxu0
      %v803 = vadd.f32 0.0, %v802
      %v804 = vpop.f32.mrf.mxu0
      %805 = vmatprep.mubr.bf16.mxu0 0
      %806 = vmatmul.mubr.bf16.gmra.mxu0 %v602
      %v807 = vpop.f32.mrf.mxu0
      %v808 = vadd.f32 0.0, %v807
      %v809 = vpop.f32.mrf.mxu0
      %v810 = vpop.f32.mrf.mxu0
      %v811 = vadd.f32 0.0, %v810
      %v812 = vpop.f32.mrf.mxu0
      %813 = vdwg.mxu0
      %v830 = vunpack.c.l.b16 %v369
      %v831 = vunpack.c.h.b16 %v369
      %v832 = vunpack.c.l.b16 %v370
      %v833 = vunpack.c.l.b16 %v371
      %v834 = vunpack.c.h.b16 %v371
      %v835 = vunpack.c.l.b16 %v372
      %v836 = vunpack.c.l.b16 %v373
      %v837 = vunpack.c.h.b16 %v373
      %v838 = vunpack.c.l.b16 %v374
      %v839 = vunpack.c.l.b16 %v375
      %v840 = vunpack.c.h.b16 %v375
      %v841 = vunpack.c.l.b16 %v376
      %v842 = vunpack.c.l.b16 %v377
      %v843 = vunpack.c.h.b16 %v377
      %v844 = vunpack.c.l.b16 %v378
      %v845 = vunpack.c.l.b16 %v379
      %v846 = vunpack.c.h.b16 %v379
      %v847 = vunpack.c.l.b16 %v380
      %v848 = vunpack.c.l.b16 %v381
      %v849 = vunpack.c.h.b16 %v381
      %v850 = vunpack.c.l.b16 %v382
      %v851 = vunpack.c.l.b16 %v383
      %v852 = vunpack.c.h.b16 %v383
      %v853 = vunpack.c.l.b16 %v384
      %v854 = vpack.c.b16 %v833, %v830
      %v855 = vpack.c.b16 %v834, %v831
      %v856 = vpack.c.b16 %v835, %v832
      %v857 = vpack.c.b16 %v839, %v836
      %v858 = vpack.c.b16 %v840, %v837
      %v859 = vpack.c.b16 %v841, %v838
      %v860 = vpack.c.b16 %v845, %v842
      %v861 = vpack.c.b16 %v846, %v843
      %v862 = vpack.c.b16 %v847, %v844
      %v863 = vpack.c.b16 %v851, %v848
      %v864 = vpack.c.b16 %v852, %v849
      %v865 = vpack.c.b16 %v853, %v850
      %v878 = vsel %vm579, %v437, 0
      %v880 = vsel %vm579, %v438, 0
      %v882 = vsel %vm579, %v439, 0
      %v884 = vsel %vm579, %v440, 0
      %v886 = vsel %vm579, %v441, 0
      %v888 = vsel %vm579, %v442, 0
      %v890 = vsel %vm579, %v443, 0
      %v892 = vsel %vm579, %v444, 0
      %894 = vmatprep.subr.bf16.mxu0 0
      %895 = vmatpush1.bf16.msra.mxu0 0
      %896 = vmatprep.subr.bf16.mxu0 0
      %897 = vmatpush1.bf16.msra.mxu0 0
      %898 = vmatprep.subr.bf16.mxu0 0
      %899 = vmatpush1.bf16.msra.mxu0 0
      %900 = vmatprep.subr.bf16.mxu0 0
      %901 = vmatpush1.bf16.msra.mxu0 0
      %902 = vmatprep.subr.bf16.mxu0 %v864
      %903 = vmatpush1.bf16.msra.mxu0 %v863
      %904 = vmatprep.subr.bf16.mxu0 %v861
      %905 = vmatpush1.bf16.msra.mxu0 %v860
      %906 = vmatprep.subr.bf16.mxu0 %v858
      %907 = vmatpush1.bf16.msra.mxu0 %v857
      %908 = vmatprep.subr.bf16.mxu0 %v855
      %909 = vmatpush1.bf16.msra.mxu0 %v854
      %910 = vmatprep.subr.bf16.mxu0 0
      %911 = vmatpush2.bf16.msra.mxu0 0
      %912 = vmatprep.subr.bf16.mxu0 0
      %913 = vmatpush2.bf16.msra.mxu0 0
      %914 = vmatprep.subr.bf16.mxu0 0
      %915 = vmatpush2.bf16.msra.mxu0 0
      %916 = vmatprep.subr.bf16.mxu0 0
      %917 = vmatpush2.bf16.msra.mxu0 0
      %918 = vmatprep.subr.bf16.mxu0 0
      %919 = vmatpush2.bf16.msra.mxu0 0
      %920 = vmatprep.subr.bf16.mxu0 0
      %921 = vmatpush2.bf16.msra.mxu0 0
      %922 = vmatprep.subr.bf16.mxu0 0
      %923 = vmatpush2.bf16.msra.mxu0 0
      %924 = vmatprep.subr.bf16.mxu0 0
      %925 = vmatpush2.bf16.msra.mxu0 0
      %926 = vmatprep.mubr.bf16.mxu0 0
      %927 = vmatmul.mubr.bf16.gmra.mxu0 %v878
      %v928 = vpop.f32.mrf.mxu0
      %v929 = vadd.f32 %v639, %v928
      %v930 = vpop.f32.mrf.mxu0
      %v931 = vadd.f32 %v641, %v930
      %v932 = vpop.f32.mrf.mxu0
      %v933 = vadd.f32 %v643, %v932
      %v934 = vpop.f32.mrf.mxu0
      %v935 = vadd.f32 %v645, %v934
      %936 = vmatprep.mubr.bf16.mxu0 0
      %937 = vmatmul.mubr.bf16.gmra.mxu0 %v880
      %v938 = vpop.f32.mrf.mxu0
      %v939 = vadd.f32 %v649, %v938
      %v940 = vpop.f32.mrf.mxu0
      %v941 = vadd.f32 %v651, %v940
      %v942 = vpop.f32.mrf.mxu0
      %v943 = vadd.f32 %v653, %v942
      %v944 = vpop.f32.mrf.mxu0
      %v945 = vadd.f32 %v655, %v944
      %946 = vmatprep.mubr.bf16.mxu0 0
      %947 = vmatmul.mubr.bf16.gmra.mxu0 %v882
      %v948 = vpop.f32.mrf.mxu0
      %v949 = vadd.f32 %v659, %v948
      %v950 = vpop.f32.mrf.mxu0
      %v951 = vadd.f32 %v661, %v950
      %v952 = vpop.f32.mrf.mxu0
      %v953 = vadd.f32 %v663, %v952
      %v954 = vpop.f32.mrf.mxu0
      %v955 = vadd.f32 %v665, %v954
      %956 = vmatprep.mubr.bf16.mxu0 0
      %957 = vmatmul.mubr.bf16.gmra.mxu0 %v884
      %v958 = vpop.f32.mrf.mxu0
      %v959 = vadd.f32 %v669, %v958
      %v960 = vpop.f32.mrf.mxu0
      %v961 = vadd.f32 %v671, %v960
      %v962 = vpop.f32.mrf.mxu0
      %v963 = vadd.f32 %v673, %v962
      %v964 = vpop.f32.mrf.mxu0
      %v965 = vadd.f32 %v675, %v964
      %966 = vmatprep.mubr.bf16.mxu0 0
      %967 = vmatmul.mubr.bf16.gmra.mxu0 %v886
      %v968 = vpop.f32.mrf.mxu0
      %v969 = vadd.f32 %v679, %v968
      %v970 = vpop.f32.mrf.mxu0
      %v971 = vadd.f32 %v681, %v970
      %v972 = vpop.f32.mrf.mxu0
      %v973 = vadd.f32 %v683, %v972
      %v974 = vpop.f32.mrf.mxu0
      %v975 = vadd.f32 %v685, %v974
      %976 = vmatprep.mubr.bf16.mxu0 0
      %977 = vmatmul.mubr.bf16.gmra.mxu0 %v888
      %v978 = vpop.f32.mrf.mxu0
      %v979 = vadd.f32 %v689, %v978
      %v980 = vpop.f32.mrf.mxu0
      %v981 = vadd.f32 %v691, %v980
      %v982 = vpop.f32.mrf.mxu0
      %v983 = vadd.f32 %v693, %v982
      %v984 = vpop.f32.mrf.mxu0
      %v985 = vadd.f32 %v695, %v984
      %986 = vmatprep.mubr.bf16.mxu0 0
      %987 = vmatmul.mubr.bf16.gmra.mxu0 %v890
      %v988 = vpop.f32.mrf.mxu0
      %v989 = vadd.f32 %v699, %v988
      %v990 = vpop.f32.mrf.mxu0
      %v991 = vadd.f32 %v701, %v990
      %v992 = vpop.f32.mrf.mxu0
      %v993 = vadd.f32 %v703, %v992
      %v994 = vpop.f32.mrf.mxu0
      %v995 = vadd.f32 %v705, %v994
      %996 = vmatprep.mubr.bf16.mxu0 0
      %997 = vmatmul.mubr.bf16.gmra.mxu0 %v892
      %v998 = vpop.f32.mrf.mxu0
      %v999 = vadd.f32 %v709, %v998
      %v1000 = vpop.f32.mrf.mxu0
      %v1001 = vadd.f32 %v711, %v1000
      %v1002 = vpop.f32.mrf.mxu0
      %v1003 = vadd.f32 %v713, %v1002
      %v1004 = vpop.f32.mrf.mxu0
      %v1005 = vadd.f32 %v715, %v1004
      %1006 = vdwg.mxu0
      %1007 = vmatprep.subr.bf16.mxu0 0
      %1008 = vmatpush1.bf16.msra.mxu0 0
      %1009 = vmatprep.subr.bf16.mxu0 0
      %1010 = vmatpush1.bf16.msra.mxu0 0
      %1011 = vmatprep.subr.bf16.mxu0 0
      %1012 = vmatpush1.bf16.msra.mxu0 0
      %1013 = vmatprep.subr.bf16.mxu0 0
      %1014 = vmatpush1.bf16.msra.mxu0 0
      %1015 = vmatprep.subr.bf16.mxu0 0
      %1016 = vmatpush1.bf16.msra.mxu0 %v865
      %1017 = vmatprep.subr.bf16.mxu0 0
      %1018 = vmatpush1.bf16.msra.mxu0 %v862
      %1019 = vmatprep.subr.bf16.mxu0 0
      %1020 = vmatpush1.bf16.msra.mxu0 %v859
      %1021 = vmatprep.subr.bf16.mxu0 0
      %1022 = vmatpush1.bf16.msra.mxu0 %v856
      %1023 = vmatprep.subr.bf16.mxu0 0
      %1024 = vmatpush2.bf16.msra.mxu0 0
      %1025 = vmatprep.subr.bf16.mxu0 0
      %1026 = vmatpush2.bf16.msra.mxu0 0
      %1027 = vmatprep.subr.bf16.mxu0 0
      %1028 = vmatpush2.bf16.msra.mxu0 0
      %1029 = vmatprep.subr.bf16.mxu0 0
      %1030 = vmatpush2.bf16.msra.mxu0 0
      %1031 = vmatprep.subr.bf16.mxu0 0
      %1032 = vmatpush2.bf16.msra.mxu0 0
      %1033 = vmatprep.subr.bf16.mxu0 0
      %1034 = vmatpush2.bf16.msra.mxu0 0
      %1035 = vmatprep.subr.bf16.mxu0 0
      %1036 = vmatpush2.bf16.msra.mxu0 0
      %1037 = vmatprep.subr.bf16.mxu0 0
      %1038 = vmatpush2.bf16.msra.mxu0 0
      %1039 = vmatprep.mubr.bf16.mxu0 0
      %1040 = vmatmul.mubr.bf16.gmra.mxu0 %v878
      %v1041 = vpop.f32.mrf.mxu0
      %v1042 = vadd.f32 %v752, %v1041
      %v1043 = vpop.f32.mrf.mxu0
      %v1044 = vpop.f32.mrf.mxu0
      %v1045 = vadd.f32 %v755, %v1044
      %v1046 = vpop.f32.mrf.mxu0
      %1047 = vmatprep.mubr.bf16.mxu0 0
      %1048 = vmatmul.mubr.bf16.gmra.mxu0 %v880
      %v1049 = vpop.f32.mrf.mxu0
      %v1050 = vadd.f32 %v760, %v1049
      %v1051 = vpop.f32.mrf.mxu0
      %v1052 = vpop.f32.mrf.mxu0
      %v1053 = vadd.f32 %v763, %v1052
      %v1054 = vpop.f32.mrf.mxu0
      %1055 = vmatprep.mubr.bf16.mxu0 0
      %1056 = vmatmul.mubr.bf16.gmra.mxu0 %v882
      %v1057 = vpop.f32.mrf.mxu0
      %v1058 = vadd.f32 %v768, %v1057
      %v1059 = vpop.f32.mrf.mxu0
      %v1060 = vpop.f32.mrf.mxu0
      %v1061 = vadd.f32 %v771, %v1060
      %v1062 = vpop.f32.mrf.mxu0
      %1063 = vmatprep.mubr.bf16.mxu0 0
      %1064 = vmatmul.mubr.bf16.gmra.mxu0 %v884
      %v1065 = vpop.f32.mrf.mxu0
      %v1066 = vadd.f32 %v776, %v1065
      %v1067 = vpop.f32.mrf.mxu0
      %v1068 = vpop.f32.mrf.mxu0
      %v1069 = vadd.f32 %v779, %v1068
      %v1070 = vpop.f32.mrf.mxu0
      %1071 = vmatprep.mubr.bf16.mxu0 0
      %1072 = vmatmul.mubr.bf16.gmra.mxu0 %v886
      %v1073 = vpop.f32.mrf.mxu0
      %v1074 = vadd.f32 %v784, %v1073
      %v1075 = vpop.f32.mrf.mxu0
      %v1076 = vpop.f32.mrf.mxu0
      %v1077 = vadd.f32 %v787, %v1076
      %v1078 = vpop.f32.mrf.mxu0
      %1079 = vmatprep.mubr.bf16.mxu0 0
      %1080 = vmatmul.mubr.bf16.gmra.mxu0 %v888
      %v1081 = vpop.f32.mrf.mxu0
      %v1082 = vadd.f32 %v792, %v1081
      %v1083 = vpop.f32.mrf.mxu0
      %v1084 = vpop.f32.mrf.mxu0
      %v1085 = vadd.f32 %v795, %v1084
      %v1086 = vpop.f32.mrf.mxu0
      %1087 = vmatprep.mubr.bf16.mxu0 0
      %1088 = vmatmul.mubr.bf16.gmra.mxu0 %v890
      %v1089 = vpop.f32.mrf.mxu0
      %v1090 = vadd.f32 %v800, %v1089
      %v1091 = vpop.f32.mrf.mxu0
      %v1092 = vpop.f32.mrf.mxu0
      %v1093 = vadd.f32 %v803, %v1092
      %v1094 = vpop.f32.mrf.mxu0
      %1095 = vmatprep.mubr.bf16.mxu0 0
      %1096 = vmatmul.mubr.bf16.gmra.mxu0 %v892
      %v1097 = vpop.f32.mrf.mxu0
      %v1098 = vadd.f32 %v808, %v1097
      %v1099 = vpop.f32.mrf.mxu0
      %v1100 = vpop.f32.mrf.mxu0
      %v1101 = vadd.f32 %v811, %v1100
      %v1102 = vpop.f32.mrf.mxu0
      %1103 = vdwg.mxu0
      %v1104 = vld [vmem:[#allocation2] sm:$0xe]
      %s1105 = scalar_lea.vmem %s1, 192
      %v1106 = vld [vmem:[%s1105] sm:$0xff]
      %v1107 = vld [vmem:[%s1105 + $0x8] sm:$0xf]
      %v1108 = vld [vmem:[%s1105 + $0xc] sm:$0xff]
      %v1109 = vld [vmem:[%s1105 + $0x14] sm:$0xf]
      %v1110 = vld [vmem:[%s1105 + $0x18] sm:$0xff]
      %v1111 = vld [vmem:[%s1105 + $0x20] sm:$0xf]
      %v1112 = vld [vmem:[%s1105 + $0x24] sm:$0xff]
      %v1113 = vld [vmem:[%s1105 + $0x2c] sm:$0xf]
      %v1114 = vld [vmem:[%s1105 + $0x30] sm:$0xff]
      %v1115 = vld [vmem:[%s1105 + $0x38] sm:$0xf]
      %v1116 = vld [vmem:[%s1105 + $0x3c] sm:$0xff]
      %v1117 = vld [vmem:[%s1105 + $0x44] sm:$0xf]
      %v1118 = vld [vmem:[%s1105 + $0x48] sm:$0xff]
      %v1119 = vld [vmem:[%s1105 + $0x50] sm:$0xf]
      %v1120 = vld [vmem:[%s1105 + $0x54] sm:$0xff]
      %v1121 = vld [vmem:[%s1105 + $0x5c] sm:$0xf]
      %v1123 = vunpack.c.l.b16 %v1104
      %v1124 = vpack.c.b16 %v421, %v1123
      %vm1125 = vcmask 1046528
      %v1126 = vrot.slane %v1124, 1
      %v1127 = vrot.slane %v438, 1
      %v1128 = vsel %vm1125, %v1126, %v1127
      %v1129 = vrot.slane %v439, 1
      %v1130 = vsel %vm1125, %v1127, %v1129
      %v1131 = vrot.slane %v440, 1
      %v1132 = vsel %vm1125, %v1129, %v1131
      %v1133 = vrot.slane %v441, 1
      %v1134 = vsel %vm1125, %v1131, %v1133
      %v1135 = vrot.slane %v442, 1
      %v1136 = vsel %vm1125, %v1133, %v1135
      %v1137 = vrot.slane %v443, 1
      %v1138 = vsel %vm1125, %v1135, %v1137
      %v1139 = vrot.slane %v444, 1
      %v1140 = vsel %vm1125, %v1137, %v1139
      %v1141 = vrot.slane %v445, 1
      %v1142 = vsel %vm1125, %v1139, %v1141
      %v1159 = vunpack.c.l.b16 %v1106
      %v1160 = vunpack.c.h.b16 %v1106
      %v1161 = vunpack.c.l.b16 %v1107
      %v1162 = vunpack.c.l.b16 %v1108
      %v1163 = vunpack.c.h.b16 %v1108
      %v1164 = vunpack.c.l.b16 %v1109
      %v1165 = vunpack.c.l.b16 %v1110
      %v1166 = vunpack.c.h.b16 %v1110
      %v1167 = vunpack.c.l.b16 %v1111
      %v1168 = vunpack.c.l.b16 %v1112
      %v1169 = vunpack.c.h.b16 %v1112
      %v1170 = vunpack.c.l.b16 %v1113
      %v1171 = vunpack.c.l.b16 %v1114
      %v1172 = vunpack.c.h.b16 %v1114
      %v1173 = vunpack.c.l.b16 %v1115
      %v1174 = vunpack.c.l.b16 %v1116
      %v1175 = vunpack.c.h.b16 %v1116
      %v1176 = vunpack.c.l.b16 %v1117
      %v1177 = vunpack.c.l.b16 %v1118
      %v1178 = vunpack.c.h.b16 %v1118
      %v1179 = vunpack.c.l.b16 %v1119
      %v1180 = vunpack.c.l.b16 %v1120
      %v1181 = vunpack.c.h.b16 %v1120
      %v1182 = vunpack.c.l.b16 %v1121
      %v1183 = vpack.c.b16 %v1162, %v1159
      %v1184 = vpack.c.b16 %v1163, %v1160
      %v1185 = vpack.c.b16 %v1164, %v1161
      %v1186 = vpack.c.b16 %v1168, %v1165
      %v1187 = vpack.c.b16 %v1169, %v1166
      %v1188 = vpack.c.b16 %v1170, %v1167
      %v1189 = vpack.c.b16 %v1174, %v1171
      %v1190 = vpack.c.b16 %v1175, %v1172
      %v1191 = vpack.c.b16 %v1176, %v1173
      %v1192 = vpack.c.b16 %v1180, %v1177
      %v1193 = vpack.c.b16 %v1181, %v1178
      %v1194 = vpack.c.b16 %v1182, %v1179
      %v1208 = vsel %vm579, %v1128, 0
      %v1211 = vsel %vm579, %v1130, 0
      %v1214 = vsel %vm579, %v1132, 0
      %v1217 = vsel %vm579, %v1134, 0
      %v1220 = vsel %vm579, %v1136, 0
      %v1223 = vsel %vm579, %v1138, 0
      %v1226 = vsel %vm579, %v1140, 0
      %v1229 = vsel %vm579, %v1142, 0
      %1231 = vmatprep.subr.bf16.mxu0 0
      %1232 = vmatpush1.bf16.msra.mxu0 0
      %1233 = vmatprep.subr.bf16.mxu0 0
      %1234 = vmatpush1.bf16.msra.mxu0 0
      %1235 = vmatprep.subr.bf16.mxu0 0
      %1236 = vmatpush1.bf16.msra.mxu0 0
      %1237 = vmatprep.subr.bf16.mxu0 0
      %1238 = vmatpush1.bf16.msra.mxu0 0
      %1239 = vmatprep.subr.bf16.mxu0 %v1193
      %1240 = vmatpush1.bf16.msra.mxu0 %v1192
      %1241 = vmatprep.subr.bf16.mxu0 %v1190
      %1242 = vmatpush1.bf16.msra.mxu0 %v1189
      %1243 = vmatprep.subr.bf16.mxu0 %v1187
      %1244 = vmatpush1.bf16.msra.mxu0 %v1186
      %1245 = vmatprep.subr.bf16.mxu0 %v1184
      %1246 = vmatpush1.bf16.msra.mxu0 %v1183
      %1247 = vmatprep.subr.bf16.mxu0 0
      %1248 = vmatpush2.bf16.msra.mxu0 0
      %1249 = vmatprep.subr.bf16.mxu0 0
      %1250 = vmatpush2.bf16.msra.mxu0 0
      %1251 = vmatprep.subr.bf16.mxu0 0
      %1252 = vmatpush2.bf16.msra.mxu0 0
      %1253 = vmatprep.subr.bf16.mxu0 0
      %1254 = vmatpush2.bf16.msra.mxu0 0
      %1255 = vmatprep.subr.bf16.mxu0 0
      %1256 = vmatpush2.bf16.msra.mxu0 0
      %1257 = vmatprep.subr.bf16.mxu0 0
      %1258 = vmatpush2.bf16.msra.mxu0 0
      %1259 = vmatprep.subr.bf16.mxu0 0
      %1260 = vmatpush2.bf16.msra.mxu0 0
      %1261 = vmatprep.subr.bf16.mxu0 0
      %1262 = vmatpush2.bf16.msra.mxu0 0
      %1263 = vmatprep.mubr.bf16.mxu0 0
      %1264 = vmatmul.mubr.bf16.gmra.mxu0 %v1208
      %v1265 = vpop.f32.mrf.mxu0
      %v1266 = vadd.f32 0.0, %v1265
      %v1267 = vpop.f32.mrf.mxu0
      %v1268 = vadd.f32 0.0, %v1267
      %v1269 = vpop.f32.mrf.mxu0
      %v1270 = vadd.f32 0.0, %v1269
      %v1271 = vpop.f32.mrf.mxu0
      %v1272 = vadd.f32 0.0, %v1271
      %1273 = vmatprep.mubr.bf16.mxu0 0
      %1274 = vmatmul.mubr.bf16.gmra.mxu0 %v1211
      %v1275 = vpop.f32.mrf.mxu0
      %v1276 = vadd.f32 0.0, %v1275
      %v1277 = vpop.f32.mrf.mxu0
      %v1278 = vadd.f32 0.0, %v1277
      %v1279 = vpop.f32.mrf.mxu0
      %v1280 = vadd.f32 0.0, %v1279
      %v1281 = vpop.f32.mrf.mxu0
      %v1282 = vadd.f32 0.0, %v1281
      %1283 = vmatprep.mubr.bf16.mxu0 0
      %1284 = vmatmul.mubr.bf16.gmra.mxu0 %v1214
      %v1285 = vpop.f32.mrf.mxu0
      %v1286 = vadd.f32 0.0, %v1285
      %v1287 = vpop.f32.mrf.mxu0
      %v1288 = vadd.f32 0.0, %v1287
      %v1289 = vpop.f32.mrf.mxu0
      %v1290 = vadd.f32 0.0, %v1289
      %v1291 = vpop.f32.mrf.mxu0
      %v1292 = vadd.f32 0.0, %v1291
      %1293 = vmatprep.mubr.bf16.mxu0 0
      %1294 = vmatmul.mubr.bf16.gmra.mxu0 %v1217
      %v1295 = vpop.f32.mrf.mxu0
      %v1296 = vadd.f32 0.0, %v1295
      %v1297 = vpop.f32.mrf.mxu0
      %v1298 = vadd.f32 0.0, %v1297
      %v1299 = vpop.f32.mrf.mxu0
      %v1300 = vadd.f32 0.0, %v1299
      %v1301 = vpop.f32.mrf.mxu0
      %v1302 = vadd.f32 0.0, %v1301
      %1303 = vmatprep.mubr.bf16.mxu0 0
      %1304 = vmatmul.mubr.bf16.gmra.mxu0 %v1220
      %v1305 = vpop.f32.mrf.mxu0
      %v1306 = vadd.f32 0.0, %v1305
      %v1307 = vpop.f32.mrf.mxu0
      %v1308 = vadd.f32 0.0, %v1307
      %v1309 = vpop.f32.mrf.mxu0
      %v1310 = vadd.f32 0.0, %v1309
      %v1311 = vpop.f32.mrf.mxu0
      %v1312 = vadd.f32 0.0, %v1311
      %1313 = vmatprep.mubr.bf16.mxu0 0
      %1314 = vmatmul.mubr.bf16.gmra.mxu0 %v1223
      %v1315 = vpop.f32.mrf.mxu0
      %v1316 = vadd.f32 0.0, %v1315
      %v1317 = vpop.f32.mrf.mxu0
      %v1318 = vadd.f32 0.0, %v1317
      %v1319 = vpop.f32.mrf.mxu0
      %v1320 = vadd.f32 0.0, %v1319
      %v1321 = vpop.f32.mrf.mxu0
      %v1322 = vadd.f32 0.0, %v1321
      %1323 = vmatprep.mubr.bf16.mxu0 0
      %1324 = vmatmul.mubr.bf16.gmra.mxu0 %v1226
      %v1325 = vpop.f32.mrf.mxu0
      %v1326 = vadd.f32 0.0, %v1325
      %v1327 = vpop.f32.mrf.mxu0
      %v1328 = vadd.f32 0.0, %v1327
      %v1329 = vpop.f32.mrf.mxu0
      %v1330 = vadd.f32 0.0, %v1329
      %v1331 = vpop.f32.mrf.mxu0
      %v1332 = vadd.f32 0.0, %v1331
      %1333 = vmatprep.mubr.bf16.mxu0 0
      %1334 = vmatmul.mubr.bf16.gmra.mxu0 %v1229
      %v1335 = vpop.f32.mrf.mxu0
      %v1336 = vadd.f32 0.0, %v1335
      %v1337 = vpop.f32.mrf.mxu0
      %v1338 = vadd.f32 0.0, %v1337
      %v1339 = vpop.f32.mrf.mxu0
      %v1340 = vadd.f32 0.0, %v1339
      %v1341 = vpop.f32.mrf.mxu0
      %v1342 = vadd.f32 0.0, %v1341
      %1343 = vdwg.mxu0
      %1344 = vmatprep.subr.bf16.mxu0 0
      %1345 = vmatpush1.bf16.msra.mxu0 0
      %1346 = vmatprep.subr.bf16.mxu0 0
      %1347 = vmatpush1.bf16.msra.mxu0 0
      %1348 = vmatprep.subr.bf16.mxu0 0
      %1349 = vmatpush1.bf16.msra.mxu0 0
      %1350 = vmatprep.subr.bf16.mxu0 0
      %1351 = vmatpush1.bf16.msra.mxu0 0
      %1352 = vmatprep.subr.bf16.mxu0 0
      %1353 = vmatpush1.bf16.msra.mxu0 %v1194
      %1354 = vmatprep.subr.bf16.mxu0 0
      %1355 = vmatpush1.bf16.msra.mxu0 %v1191
      %1356 = vmatprep.subr.bf16.mxu0 0
      %1357 = vmatpush1.bf16.msra.mxu0 %v1188
      %1358 = vmatprep.subr.bf16.mxu0 0
      %1359 = vmatpush1.bf16.msra.mxu0 %v1185
      %1360 = vmatprep.subr.bf16.mxu0 0
      %1361 = vmatpush2.bf16.msra.mxu0 0
      %1362 = vmatprep.subr.bf16.mxu0 0
      %1363 = vmatpush2.bf16.msra.mxu0 0
      %1364 = vmatprep.subr.bf16.mxu0 0
      %1365 = vmatpush2.bf16.msra.mxu0 0
      %1366 = vmatprep.subr.bf16.mxu0 0
      %1367 = vmatpush2.bf16.msra.mxu0 0
      %1368 = vmatprep.subr.bf16.mxu0 0
      %1369 = vmatpush2.bf16.msra.mxu0 0
      %1370 = vmatprep.subr.bf16.mxu0 0
      %1371 = vmatpush2.bf16.msra.mxu0 0
      %1372 = vmatprep.subr.bf16.mxu0 0
      %1373 = vmatpush2.bf16.msra.mxu0 0
      %1374 = vmatprep.subr.bf16.mxu0 0
      %1375 = vmatpush2.bf16.msra.mxu0 0
      %1376 = vmatprep.mubr.bf16.mxu0 0
      %1377 = vmatmul.mubr.bf16.gmra.mxu0 %v1208
      %v1378 = vpop.f32.mrf.mxu0
      %v1379 = vadd.f32 0.0, %v1378
      %v1380 = vpop.f32.mrf.mxu0
      %v1381 = vpop.f32.mrf.mxu0
      %v1382 = vadd.f32 0.0, %v1381
      %v1383 = vpop.f32.mrf.mxu0
      %1384 = vmatprep.mubr.bf16.mxu0 0
      %1385 = vmatmul.mubr.bf16.gmra.mxu0 %v1211
      %v1386 = vpop.f32.mrf.mxu0
      %v1387 = vadd.f32 0.0, %v1386
      %v1388 = vpop.f32.mrf.mxu0
      %v1389 = vpop.f32.mrf.mxu0
      %v1390 = vadd.f32 0.0, %v1389
      %v1391 = vpop.f32.mrf.mxu0
      %1392 = vmatprep.mubr.bf16.mxu0 0
      %1393 = vmatmul.mubr.bf16.gmra.mxu0 %v1214
      %v1394 = vpop.f32.mrf.mxu0
      %v1395 = vadd.f32 0.0, %v1394
      %v1396 = vpop.f32.mrf.mxu0
      %v1397 = vpop.f32.mrf.mxu0
      %v1398 = vadd.f32 0.0, %v1397
      %v1399 = vpop.f32.mrf.mxu0
      %1400 = vmatprep.mubr.bf16.mxu0 0
      %1401 = vmatmul.mubr.bf16.gmra.mxu0 %v1217
      %v1402 = vpop.f32.mrf.mxu0
      %v1403 = vadd.f32 0.0, %v1402
      %v1404 = vpop.f32.mrf.mxu0
      %v1405 = vpop.f32.mrf.mxu0
      %v1406 = vadd.f32 0.0, %v1405
      %v1407 = vpop.f32.mrf.mxu0
      %1408 = vmatprep.mubr.bf16.mxu0 0
      %1409 = vmatmul.mubr.bf16.gmra.mxu0 %v1220
      %v1410 = vpop.f32.mrf.mxu0
      %v1411 = vadd.f32 0.0, %v1410
      %v1412 = vpop.f32.mrf.mxu0
      %v1413 = vpop.f32.mrf.mxu0
      %v1414 = vadd.f32 0.0, %v1413
      %v1415 = vpop.f32.mrf.mxu0
      %1416 = vmatprep.mubr.bf16.mxu0 0
      %1417 = vmatmul.mubr.bf16.gmra.mxu0 %v1223
      %v1418 = vpop.f32.mrf.mxu0
      %v1419 = vadd.f32 0.0, %v1418
      %v1420 = vpop.f32.mrf.mxu0
      %v1421 = vpop.f32.mrf.mxu0
      %v1422 = vadd.f32 0.0, %v1421
      %v1423 = vpop.f32.mrf.mxu0
      %1424 = vmatprep.mubr.bf16.mxu0 0
      %1425 = vmatmul.mubr.bf16.gmra.mxu0 %v1226
      %v1426 = vpop.f32.mrf.mxu0
      %v1427 = vadd.f32 0.0, %v1426
      %v1428 = vpop.f32.mrf.mxu0
      %v1429 = vpop.f32.mrf.mxu0
      %v1430 = vadd.f32 0.0, %v1429
      %v1431 = vpop.f32.mrf.mxu0
      %1432 = vmatprep.mubr.bf16.mxu0 0
      %1433 = vmatmul.mubr.bf16.gmra.mxu0 %v1229
      %v1434 = vpop.f32.mrf.mxu0
      %v1435 = vadd.f32 0.0, %v1434
      %v1436 = vpop.f32.mrf.mxu0
      %v1437 = vpop.f32.mrf.mxu0
      %v1438 = vadd.f32 0.0, %v1437
      %v1439 = vpop.f32.mrf.mxu0
      %1440 = vdwg.mxu0
      %v1441 = vadd.f32 %v929, %v1266
      %v1442 = vadd.f32 %v931, %v1268
      %v1443 = vadd.f32 %v1042, %v1379
      %v1444 = vadd.f32 %v933, %v1270
      %v1445 = vadd.f32 %v935, %v1272
      %v1446 = vadd.f32 %v1045, %v1382
      %v1447 = vadd.f32 %v939, %v1276
      %v1448 = vadd.f32 %v941, %v1278
      %v1449 = vadd.f32 %v1050, %v1387
      %v1450 = vadd.f32 %v943, %v1280
      %v1451 = vadd.f32 %v945, %v1282
      %v1452 = vadd.f32 %v1053, %v1390
      %v1453 = vadd.f32 %v949, %v1286
      %v1454 = vadd.f32 %v951, %v1288
      %v1455 = vadd.f32 %v1058, %v1395
      %v1456 = vadd.f32 %v953, %v1290
      %v1457 = vadd.f32 %v955, %v1292
      %v1458 = vadd.f32 %v1061, %v1398
      %v1459 = vadd.f32 %v959, %v1296
      %v1460 = vadd.f32 %v961, %v1298
      %v1461 = vadd.f32 %v1066, %v1403
      %v1462 = vadd.f32 %v963, %v1300
      %v1463 = vadd.f32 %v965, %v1302
      %v1464 = vadd.f32 %v1069, %v1406
      %v1465 = vadd.f32 %v969, %v1306
      %v1466 = vadd.f32 %v971, %v1308
      %v1467 = vadd.f32 %v1074, %v1411
      %v1468 = vadd.f32 %v973, %v1310
      %v1469 = vadd.f32 %v975, %v1312
      %v1470 = vadd.f32 %v1077, %v1414
      %v1471 = vadd.f32 %v979, %v1316
      %v1472 = vadd.f32 %v981, %v1318
      %v1473 = vadd.f32 %v1082, %v1419
      %v1474 = vadd.f32 %v983, %v1320
      %v1475 = vadd.f32 %v985, %v1322
      %v1476 = vadd.f32 %v1085, %v1422
      %v1477 = vadd.f32 %v989, %v1326
      %v1478 = vadd.f32 %v991, %v1328
      %v1479 = vadd.f32 %v1090, %v1427
      %v1480 = vadd.f32 %v993, %v1330
      %v1481 = vadd.f32 %v995, %v1332
      %v1482 = vadd.f32 %v1093, %v1430
      %v1483 = vadd.f32 %v999, %v1336
      %v1484 = vadd.f32 %v1001, %v1338
      %v1485 = vadd.f32 %v1098, %v1435
      %v1486 = vadd.f32 %v1003, %v1340
      %v1487 = vadd.f32 %v1005, %v1342
      %v1488 = vadd.f32 %v1101, %v1438
      %v1489 = vld [vmem:[#allocation2 + $0x40] sm:$0x3]
      %s1490 = scalar_lea.vmem %s1, 288
      %v1491 = vld [vmem:[%s1490] sm:$0xff]
      %v1492 = vld [vmem:[%s1490 + $0x8] sm:$0xf]
      %v1493 = vld [vmem:[%s1490 + $0xc] sm:$0xff]
      %v1494 = vld [vmem:[%s1490 + $0x14] sm:$0xf]
      %v1495 = vld [vmem:[%s1490 + $0x18] sm:$0xff]
      %v1496 = vld [vmem:[%s1490 + $0x20] sm:$0xf]
      %v1497 = vld [vmem:[%s1490 + $0x24] sm:$0xff]
      %v1498 = vld [vmem:[%s1490 + $0x2c] sm:$0xf]
      %v1499 = vld [vmem:[%s1490 + $0x30] sm:$0xff]
      %v1500 = vld [vmem:[%s1490 + $0x38] sm:$0xf]
      %v1501 = vld [vmem:[%s1490 + $0x3c] sm:$0xff]
      %v1502 = vld [vmem:[%s1490 + $0x44] sm:$0xf]
      %v1503 = vld [vmem:[%s1490 + $0x48] sm:$0xff]
      %v1504 = vld [vmem:[%s1490 + $0x50] sm:$0xf]
      %v1505 = vld [vmem:[%s1490 + $0x54] sm:$0xff]
      %v1506 = vld [vmem:[%s1490 + $0x5c] sm:$0xf]
      %v1508 = vunpack.c.l.b16 %v1489
      %v1509 = vpack.c.b16 %v1508, %v1508
      %vm1510 = vsmask.f32 6400
      %v1512 = vshrl.u32 %v1124, 16
      %v1514 = vrot.slane %v1512, 1
      %v1515 = vshll.u32 %v1124, 16
      %v1517 = vrot.slane %v1515, 2
      %v1518 = vor.u32 %v1514, %v1517
      %v1519 = vrot.slane %v459, 1
      %v1520 = vrot.slane %v455, 2
      %v1521 = vor.u32 %v1519, %v1520
      %v1522 = vsel %vm1510, %v1518, %v1521
      %v1523 = vrot.slane %v467, 1
      %v1524 = vrot.slane %v463, 2
      %v1525 = vor.u32 %v1523, %v1524
      %v1526 = vsel %vm1510, %v1521, %v1525
      %v1527 = vrot.slane %v475, 1
      %v1528 = vrot.slane %v471, 2
      %v1529 = vor.u32 %v1527, %v1528
      %v1530 = vsel %vm1510, %v1525, %v1529
      %v1531 = vrot.slane %v483, 1
      %v1532 = vrot.slane %v479, 2
      %v1533 = vor.u32 %v1531, %v1532
      %v1534 = vsel %vm1510, %v1529, %v1533
      %v1535 = vrot.slane %v491, 1
      %v1536 = vrot.slane %v487, 2
      %v1537 = vor.u32 %v1535, %v1536
      %v1538 = vsel %vm1510, %v1533, %v1537
      %v1539 = vrot.slane %v499, 1
      %v1540 = vrot.slane %v495, 2
      %v1541 = vor.u32 %v1539, %v1540
      %v1542 = vsel %vm1510, %v1537, %v1541
      %v1543 = vrot.slane %v507, 1
      %v1544 = vrot.slane %v503, 2
      %v1545 = vor.u32 %v1543, %v1544
      %v1546 = vsel %vm1510, %v1541, %v1545
      %v1548 = vshrl.u32 %v1509, 16
      %v1550 = vrot.slane %v1548, 1
      %v1551 = vshll.u32 %v1509, 16
      %v1553 = vrot.slane %v1551, 2
      %v1554 = vor.u32 %v1550, %v1553
      %v1555 = vsel %vm1510, %v1545, %v1554
      %v1572 = vunpack.c.l.b16 %v1491
      %v1573 = vunpack.c.h.b16 %v1491
      %v1574 = vunpack.c.l.b16 %v1492
      %v1575 = vunpack.c.l.b16 %v1493
      %v1576 = vunpack.c.h.b16 %v1493
      %v1577 = vunpack.c.l.b16 %v1494
      %v1578 = vunpack.c.l.b16 %v1495
      %v1579 = vunpack.c.h.b16 %v1495
      %v1580 = vunpack.c.l.b16 %v1496
      %v1581 = vunpack.c.l.b16 %v1497
      %v1582 = vunpack.c.h.b16 %v1497
      %v1583 = vunpack.c.l.b16 %v1498
      %v1584 = vunpack.c.l.b16 %v1499
      %v1585 = vunpack.c.h.b16 %v1499
      %v1586 = vunpack.c.l.b16 %v1500
      %v1587 = vunpack.c.l.b16 %v1501
      %v1588 = vunpack.c.h.b16 %v1501
      %v1589 = vunpack.c.l.b16 %v1502
      %v1590 = vunpack.c.l.b16 %v1503
      %v1591 = vunpack.c.h.b16 %v1503
      %v1592 = vunpack.c.l.b16 %v1504
      %v1593 = vunpack.c.l.b16 %v1505
      %v1594 = vunpack.c.h.b16 %v1505
      %v1595 = vunpack.c.l.b16 %v1506
      %v1596 = vpack.c.b16 %v1575, %v1572
      %v1597 = vpack.c.b16 %v1576, %v1573
      %v1598 = vpack.c.b16 %v1577, %v1574
      %v1599 = vpack.c.b16 %v1581, %v1578
      %v1600 = vpack.c.b16 %v1582, %v1579
      %v1601 = vpack.c.b16 %v1583, %v1580
      %v1602 = vpack.c.b16 %v1587, %v1584
      %v1603 = vpack.c.b16 %v1588, %v1585
      %v1604 = vpack.c.b16 %v1589, %v1586
      %v1605 = vpack.c.b16 %v1593, %v1590
      %v1606 = vpack.c.b16 %v1594, %v1591
      %v1607 = vpack.c.b16 %v1595, %v1592
      %v1621 = vsel %vm579, %v1522, 0
      %v1624 = vsel %vm579, %v1526, 0
      %v1627 = vsel %vm579, %v1530, 0
      %v1630 = vsel %vm579, %v1534, 0
      %v1633 = vsel %vm579, %v1538, 0
      %v1636 = vsel %vm579, %v1542, 0
      %v1639 = vsel %vm579, %v1546, 0
      %v1642 = vsel %vm579, %v1555, 0
      %1644 = vmatprep.subr.bf16.mxu0 0
      %1645 = vmatpush1.bf16.msra.mxu0 0
      %1646 = vmatprep.subr.bf16.mxu0 0
      %1647 = vmatpush1.bf16.msra.mxu0 0
      %1648 = vmatprep.subr.bf16.mxu0 0
      %1649 = vmatpush1.bf16.msra.mxu0 0
      %1650 = vmatprep.subr.bf16.mxu0 0
      %1651 = vmatpush1.bf16.msra.mxu0 0
      %1652 = vmatprep.subr.bf16.mxu0 %v1606
      %1653 = vmatpush1.bf16.msra.mxu0 %v1605
      %1654 = vmatprep.subr.bf16.mxu0 %v1603
      %1655 = vmatpush1.bf16.msra.mxu0 %v1602
      %1656 = vmatprep.subr.bf16.mxu0 %v1600
      %1657 = vmatpush1.bf16.msra.mxu0 %v1599
      %1658 = vmatprep.subr.bf16.mxu0 %v1597
      %1659 = vmatpush1.bf16.msra.mxu0 %v1596
      %1660 = vmatprep.subr.bf16.mxu0 0
      %1661 = vmatpush2.bf16.msra.mxu0 0
      %1662 = vmatprep.subr.bf16.mxu0 0
      %1663 = vmatpush2.bf16.msra.mxu0 0
      %1664 = vmatprep.subr.bf16.mxu0 0
      %1665 = vmatpush2.bf16.msra.mxu0 0
      %1666 = vmatprep.subr.bf16.mxu0 0
      %1667 = vmatpush2.bf16.msra.mxu0 0
      %1668 = vmatprep.subr.bf16.mxu0 0
      %1669 = vmatpush2.bf16.msra.mxu0 0
      %1670 = vmatprep.subr.bf16.mxu0 0
      %1671 = vmatpush2.bf16.msra.mxu0 0
      %1672 = vmatprep.subr.bf16.mxu0 0
      %1673 = vmatpush2.bf16.msra.mxu0 0
      %1674 = vmatprep.subr.bf16.mxu0 0
      %1675 = vmatpush2.bf16.msra.mxu0 0
      %1676 = vmatprep.mubr.bf16.mxu0 0
      %1677 = vmatmul.mubr.bf16.gmra.mxu0 %v1621
      %v1678 = vpop.f32.mrf.mxu0
      %v1679 = vadd.f32 0.0, %v1678
      %v1680 = vpop.f32.mrf.mxu0
      %v1681 = vadd.f32 0.0, %v1680
      %v1682 = vpop.f32.mrf.mxu0
      %v1683 = vadd.f32 0.0, %v1682
      %v1684 = vpop.f32.mrf.mxu0
      %v1685 = vadd.f32 0.0, %v1684
      %1686 = vmatprep.mubr.bf16.mxu0 0
      %1687 = vmatmul.mubr.bf16.gmra.mxu0 %v1624
      %v1688 = vpop.f32.mrf.mxu0
      %v1689 = vadd.f32 0.0, %v1688
      %v1690 = vpop.f32.mrf.mxu0
      %v1691 = vadd.f32 0.0, %v1690
      %v1692 = vpop.f32.mrf.mxu0
      %v1693 = vadd.f32 0.0, %v1692
      %v1694 = vpop.f32.mrf.mxu0
      %v1695 = vadd.f32 0.0, %v1694
      %1696 = vmatprep.mubr.bf16.mxu0 0
      %1697 = vmatmul.mubr.bf16.gmra.mxu0 %v1627
      %v1698 = vpop.f32.mrf.mxu0
      %v1699 = vadd.f32 0.0, %v1698
      %v1700 = vpop.f32.mrf.mxu0
      %v1701 = vadd.f32 0.0, %v1700
      %v1702 = vpop.f32.mrf.mxu0
      %v1703 = vadd.f32 0.0, %v1702
      %v1704 = vpop.f32.mrf.mxu0
      %v1705 = vadd.f32 0.0, %v1704
      %1706 = vmatprep.mubr.bf16.mxu0 0
      %1707 = vmatmul.mubr.bf16.gmra.mxu0 %v1630
      %v1708 = vpop.f32.mrf.mxu0
      %v1709 = vadd.f32 0.0, %v1708
      %v1710 = vpop.f32.mrf.mxu0
      %v1711 = vadd.f32 0.0, %v1710
      %v1712 = vpop.f32.mrf.mxu0
      %v1713 = vadd.f32 0.0, %v1712
      %v1714 = vpop.f32.mrf.mxu0
      %v1715 = vadd.f32 0.0, %v1714
      %1716 = vmatprep.mubr.bf16.mxu0 0
      %1717 = vmatmul.mubr.bf16.gmra.mxu0 %v1633
      %v1718 = vpop.f32.mrf.mxu0
      %v1719 = vadd.f32 0.0, %v1718
      %v1720 = vpop.f32.mrf.mxu0
      %v1721 = vadd.f32 0.0, %v1720
      %v1722 = vpop.f32.mrf.mxu0
      %v1723 = vadd.f32 0.0, %v1722
      %v1724 = vpop.f32.mrf.mxu0
      %v1725 = vadd.f32 0.0, %v1724
      %1726 = vmatprep.mubr.bf16.mxu0 0
      %1727 = vmatmul.mubr.bf16.gmra.mxu0 %v1636
      %v1728 = vpop.f32.mrf.mxu0
      %v1729 = vadd.f32 0.0, %v1728
      %v1730 = vpop.f32.mrf.mxu0
      %v1731 = vadd.f32 0.0, %v1730
      %v1732 = vpop.f32.mrf.mxu0
      %v1733 = vadd.f32 0.0, %v1732
      %v1734 = vpop.f32.mrf.mxu0
      %v1735 = vadd.f32 0.0, %v1734
      %1736 = vmatprep.mubr.bf16.mxu0 0
      %1737 = vmatmul.mubr.bf16.gmra.mxu0 %v1639
      %v1738 = vpop.f32.mrf.mxu0
      %v1739 = vadd.f32 0.0, %v1738
      %v1740 = vpop.f32.mrf.mxu0
      %v1741 = vadd.f32 0.0, %v1740
      %v1742 = vpop.f32.mrf.mxu0
      %v1743 = vadd.f32 0.0, %v1742
      %v1744 = vpop.f32.mrf.mxu0
      %v1745 = vadd.f32 0.0, %v1744
      %1746 = vmatprep.mubr.bf16.mxu0 0
      %1747 = vmatmul.mubr.bf16.gmra.mxu0 %v1642
      %v1748 = vpop.f32.mrf.mxu0
      %v1749 = vadd.f32 0.0, %v1748
      %v1750 = vpop.f32.mrf.mxu0
      %v1751 = vadd.f32 0.0, %v1750
      %v1752 = vpop.f32.mrf.mxu0
      %v1753 = vadd.f32 0.0, %v1752
      %v1754 = vpop.f32.mrf.mxu0
      %v1755 = vadd.f32 0.0, %v1754
      %1756 = vdwg.mxu0
      %1757 = vmatprep.subr.bf16.mxu0 0
      %1758 = vmatpush1.bf16.msra.mxu0 0
      %1759 = vmatprep.subr.bf16.mxu0 0
      %1760 = vmatpush1.bf16.msra.mxu0 0
      %1761 = vmatprep.subr.bf16.mxu0 0
      %1762 = vmatpush1.bf16.msra.mxu0 0
      %1763 = vmatprep.subr.bf16.mxu0 0
      %1764 = vmatpush1.bf16.msra.mxu0 0
      %1765 = vmatprep.subr.bf16.mxu0 0
      %1766 = vmatpush1.bf16.msra.mxu0 %v1607
      %1767 = vmatprep.subr.bf16.mxu0 0
      %1768 = vmatpush1.bf16.msra.mxu0 %v1604
      %1769 = vmatprep.subr.bf16.mxu0 0
      %1770 = vmatpush1.bf16.msra.mxu0 %v1601
      %1771 = vmatprep.subr.bf16.mxu0 0
      %1772 = vmatpush1.bf16.msra.mxu0 %v1598
      %1773 = vmatprep.subr.bf16.mxu0 0
      %1774 = vmatpush2.bf16.msra.mxu0 0
      %1775 = vmatprep.subr.bf16.mxu0 0
      %1776 = vmatpush2.bf16.msra.mxu0 0
      %1777 = vmatprep.subr.bf16.mxu0 0
      %1778 = vmatpush2.bf16.msra.mxu0 0
      %1779 = vmatprep.subr.bf16.mxu0 0
      %1780 = vmatpush2.bf16.msra.mxu0 0
      %1781 = vmatprep.subr.bf16.mxu0 0
      %1782 = vmatpush2.bf16.msra.mxu0 0
      %1783 = vmatprep.subr.bf16.mxu0 0
      %1784 = vmatpush2.bf16.msra.mxu0 0
      %1785 = vmatprep.subr.bf16.mxu0 0
      %1786 = vmatpush2.bf16.msra.mxu0 0
      %1787 = vmatprep.subr.bf16.mxu0 0
      %1788 = vmatpush2.bf16.msra.mxu0 0
      %1789 = vmatprep.mubr.bf16.mxu0 0
      %1790 = vmatmul.mubr.bf16.gmra.mxu0 %v1621
      %v1791 = vpop.f32.mrf.mxu0
      %v1792 = vadd.f32 0.0, %v1791
      %v1793 = vpop.f32.mrf.mxu0
      %v1794 = vpop.f32.mrf.mxu0
      %v1795 = vadd.f32 0.0, %v1794
      %v1796 = vpop.f32.mrf.mxu0
      %1797 = vmatprep.mubr.bf16.mxu0 0
      %1798 = vmatmul.mubr.bf16.gmra.mxu0 %v1624
      %v1799 = vpop.f32.mrf.mxu0
      %v1800 = vadd.f32 0.0, %v1799
      %v1801 = vpop.f32.mrf.mxu0
      %v1802 = vpop.f32.mrf.mxu0
      %v1803 = vadd.f32 0.0, %v1802
      %v1804 = vpop.f32.mrf.mxu0
      %1805 = vmatprep.mubr.bf16.mxu0 0
      %1806 = vmatmul.mubr.bf16.gmra.mxu0 %v1627
      %v1807 = vpop.f32.mrf.mxu0
      %v1808 = vadd.f32 0.0, %v1807
      %v1809 = vpop.f32.mrf.mxu0
      %v1810 = vpop.f32.mrf.mxu0
      %v1811 = vadd.f32 0.0, %v1810
      %v1812 = vpop.f32.mrf.mxu0
      %1813 = vmatprep.mubr.bf16.mxu0 0
      %1814 = vmatmul.mubr.bf16.gmra.mxu0 %v1630
      %v1815 = vpop.f32.mrf.mxu0
      %v1816 = vadd.f32 0.0, %v1815
      %v1817 = vpop.f32.mrf.mxu0
      %v1818 = vpop.f32.mrf.mxu0
      %v1819 = vadd.f32 0.0, %v1818
      %v1820 = vpop.f32.mrf.mxu0
      %1821 = vmatprep.mubr.bf16.mxu0 0
      %1822 = vmatmul.mubr.bf16.gmra.mxu0 %v1633
      %v1823 = vpop.f32.mrf.mxu0
      %v1824 = vadd.f32 0.0, %v1823
      %v1825 = vpop.f32.mrf.mxu0
      %v1826 = vpop.f32.mrf.mxu0
      %v1827 = vadd.f32 0.0, %v1826
      %v1828 = vpop.f32.mrf.mxu0
      %1829 = vmatprep.mubr.bf16.mxu0 0
      %1830 = vmatmul.mubr.bf16.gmra.mxu0 %v1636
      %v1831 = vpop.f32.mrf.mxu0
      %v1832 = vadd.f32 0.0, %v1831
      %v1833 = vpop.f32.mrf.mxu0
      %v1834 = vpop.f32.mrf.mxu0
      %v1835 = vadd.f32 0.0, %v1834
      %v1836 = vpop.f32.mrf.mxu0
      %1837 = vmatprep.mubr.bf16.mxu0 0
      %1838 = vmatmul.mubr.bf16.gmra.mxu0 %v1639
      %v1839 = vpop.f32.mrf.mxu0
      %v1840 = vadd.f32 0.0, %v1839
      %v1841 = vpop.f32.mrf.mxu0
      %v1842 = vpop.f32.mrf.mxu0
      %v1843 = vadd.f32 0.0, %v1842
      %v1844 = vpop.f32.mrf.mxu0
      %1845 = vmatprep.mubr.bf16.mxu0 0
      %1846 = vmatmul.mubr.bf16.gmra.mxu0 %v1642
      %v1847 = vpop.f32.mrf.mxu0
      %v1848 = vadd.f32 0.0, %v1847
      %v1849 = vpop.f32.mrf.mxu0
      %v1850 = vpop.f32.mrf.mxu0
      %v1851 = vadd.f32 0.0, %v1850
      %v1852 = vpop.f32.mrf.mxu0
      %1853 = vdwg.mxu0
      %v1854 = vadd.f32 %v1441, %v1679
      %v1855 = vadd.f32 %v1442, %v1681
      %v1856 = vadd.f32 %v1443, %v1792
      %v1857 = vadd.f32 %v1444, %v1683
      %v1858 = vadd.f32 %v1445, %v1685
      %v1859 = vadd.f32 %v1446, %v1795
      %v1860 = vadd.f32 %v1447, %v1689
      %v1861 = vadd.f32 %v1448, %v1691
      %v1862 = vadd.f32 %v1449, %v1800
      %v1863 = vadd.f32 %v1450, %v1693
      %v1864 = vadd.f32 %v1451, %v1695
      %v1865 = vadd.f32 %v1452, %v1803
      %v1866 = vadd.f32 %v1453, %v1699
      %v1867 = vadd.f32 %v1454, %v1701
      %v1868 = vadd.f32 %v1455, %v1808
      %v1869 = vadd.f32 %v1456, %v1703
      %v1870 = vadd.f32 %v1457, %v1705
      %v1871 = vadd.f32 %v1458, %v1811
      %v1872 = vadd.f32 %v1459, %v1709
      %v1873 = vadd.f32 %v1460, %v1711
      %v1874 = vadd.f32 %v1461, %v1816
      %v1875 = vadd.f32 %v1462, %v1713
      %v1876 = vadd.f32 %v1463, %v1715
      %v1877 = vadd.f32 %v1464, %v1819
      %v1878 = vadd.f32 %v1465, %v1719
      %v1879 = vadd.f32 %v1466, %v1721
      %v1880 = vadd.f32 %v1467, %v1824
      %v1881 = vadd.f32 %v1468, %v1723
      %v1882 = vadd.f32 %v1469, %v1725
      %v1883 = vadd.f32 %v1470, %v1827
      %v1884 = vadd.f32 %v1471, %v1729
      %v1885 = vadd.f32 %v1472, %v1731
      %v1886 = vadd.f32 %v1473, %v1832
      %v1887 = vadd.f32 %v1474, %v1733
      %v1888 = vadd.f32 %v1475, %v1735
      %v1889 = vadd.f32 %v1476, %v1835
      %v1890 = vadd.f32 %v1477, %v1739
      %v1891 = vadd.f32 %v1478, %v1741
      %v1892 = vadd.f32 %v1479, %v1840
      %v1893 = vadd.f32 %v1480, %v1743
      %v1894 = vadd.f32 %v1481, %v1745
      %v1895 = vadd.f32 %v1482, %v1843
      %v1896 = vadd.f32 %v1483, %v1749
      %v1897 = vadd.f32 %v1484, %v1751
      %v1898 = vadd.f32 %v1485, %v1848
      %v1899 = vadd.f32 %v1486, %v1753
      %v1900 = vadd.f32 %v1487, %v1755
      %v1901 = vadd.f32 %v1488, %v1851
      %v1902 = vld [vmem:[#allocation2] sm:$0xc]
      %s1903 = scalar_lea.vmem %s1, 384
      %v1904 = vld [vmem:[%s1903] sm:$0xff]
      %v1905 = vld [vmem:[%s1903 + $0x8] sm:$0xf]
      %v1906 = vld [vmem:[%s1903 + $0xc] sm:$0xff]
      %v1907 = vld [vmem:[%s1903 + $0x14] sm:$0xf]
      %v1908 = vld [vmem:[%s1903 + $0x18] sm:$0xff]
      %v1909 = vld [vmem:[%s1903 + $0x20] sm:$0xf]
      %v1910 = vld [vmem:[%s1903 + $0x24] sm:$0xff]
      %v1911 = vld [vmem:[%s1903 + $0x2c] sm:$0xf]
      %v1912 = vld [vmem:[%s1903 + $0x30] sm:$0xff]
      %v1913 = vld [vmem:[%s1903 + $0x38] sm:$0xf]
      %v1914 = vld [vmem:[%s1903 + $0x3c] sm:$0xff]
      %v1915 = vld [vmem:[%s1903 + $0x44] sm:$0xf]
      %v1916 = vld [vmem:[%s1903 + $0x48] sm:$0xff]
      %v1917 = vld [vmem:[%s1903 + $0x50] sm:$0xf]
      %v1918 = vld [vmem:[%s1903 + $0x54] sm:$0xff]
      %v1919 = vld [vmem:[%s1903 + $0x5c] sm:$0xf]
      %v1921 = vunpack.c.l.b16 %v1902
      %v1922 = vpack.c.b16 %v421, %v1921
      %vm1923 = vcmask 1045504
      %v1924 = vrot.slane %v1922, 2
      %v1925 = vrot.slane %v438, 2
      %v1926 = vsel %vm1923, %v1924, %v1925
      %v1927 = vrot.slane %v439, 2
      %v1928 = vsel %vm1923, %v1925, %v1927
      %v1929 = vrot.slane %v440, 2
      %v1930 = vsel %vm1923, %v1927, %v1929
      %v1931 = vrot.slane %v441, 2
      %v1932 = vsel %vm1923, %v1929, %v1931
      %v1933 = vrot.slane %v442, 2
      %v1934 = vsel %vm1923, %v1931, %v1933
      %v1935 = vrot.slane %v443, 2
      %v1936 = vsel %vm1923, %v1933, %v1935
      %v1937 = vrot.slane %v444, 2
      %v1938 = vsel %vm1923, %v1935, %v1937
      %v1939 = vrot.slane %v1509, 2
      %v1940 = vsel %vm1923, %v1937, %v1939
      %v1957 = vunpack.c.l.b16 %v1904
      %v1958 = vunpack.c.h.b16 %v1904
      %v1959 = vunpack.c.l.b16 %v1905
      %v1960 = vunpack.c.l.b16 %v1906
      %v1961 = vunpack.c.h.b16 %v1906
      %v1962 = vunpack.c.l.b16 %v1907
      %v1963 = vunpack.c.l.b16 %v1908
      %v1964 = vunpack.c.h.b16 %v1908
      %v1965 = vunpack.c.l.b16 %v1909
      %v1966 = vunpack.c.l.b16 %v1910
      %v1967 = vunpack.c.h.b16 %v1910
      %v1968 = vunpack.c.l.b16 %v1911
      %v1969 = vunpack.c.l.b16 %v1912
      %v1970 = vunpack.c.h.b16 %v1912
      %v1971 = vunpack.c.l.b16 %v1913
      %v1972 = vunpack.c.l.b16 %v1914
      %v1973 = vunpack.c.h.b16 %v1914
      %v1974 = vunpack.c.l.b16 %v1915
      %v1975 = vunpack.c.l.b16 %v1916
      %v1976 = vunpack.c.h.b16 %v1916
      %v1977 = vunpack.c.l.b16 %v1917
      %v1978 = vunpack.c.l.b16 %v1918
      %v1979 = vunpack.c.h.b16 %v1918
      %v1980 = vunpack.c.l.b16 %v1919
      %v1981 = vpack.c.b16 %v1960, %v1957
      %v1982 = vpack.c.b16 %v1961, %v1958
      %v1983 = vpack.c.b16 %v1962, %v1959
      %v1984 = vpack.c.b16 %v1966, %v1963
      %v1985 = vpack.c.b16 %v1967, %v1964
      %v1986 = vpack.c.b16 %v1968, %v1965
      %v1987 = vpack.c.b16 %v1972, %v1969
      %v1988 = vpack.c.b16 %v1973, %v1970
      %v1989 = vpack.c.b16 %v1974, %v1971
      %v1990 = vpack.c.b16 %v1978, %v1975
      %v1991 = vpack.c.b16 %v1979, %v1976
      %v1992 = vpack.c.b16 %v1980, %v1977
      %v2006 = vsel %vm579, %v1926, 0
      %v2009 = vsel %vm579, %v1928, 0
      %v2012 = vsel %vm579, %v1930, 0
      %v2015 = vsel %vm579, %v1932, 0
      %v2018 = vsel %vm579, %v1934, 0
      %v2021 = vsel %vm579, %v1936, 0
      %v2024 = vsel %vm579, %v1938, 0
      %v2027 = vsel %vm579, %v1940, 0
      %2029 = vmatprep.subr.bf16.mxu0 0
      %2030 = vmatpush1.bf16.msra.mxu0 0
      %2031 = vmatprep.subr.bf16.mxu0 0
      %2032 = vmatpush1.bf16.msra.mxu0 0
      %2033 = vmatprep.subr.bf16.mxu0 0
      %2034 = vmatpush1.bf16.msra.mxu0 0
      %2035 = vmatprep.subr.bf16.mxu0 0
      %2036 = vmatpush1.bf16.msra.mxu0 0
      %2037 = vmatprep.subr.bf16.mxu0 %v1991
      %2038 = vmatpush1.bf16.msra.mxu0 %v1990
      %2039 = vmatprep.subr.bf16.mxu0 %v1988
      %2040 = vmatpush1.bf16.msra.mxu0 %v1987
      %2041 = vmatprep.subr.bf16.mxu0 %v1985
      %2042 = vmatpush1.bf16.msra.mxu0 %v1984
      %2043 = vmatprep.subr.bf16.mxu0 %v1982
      %2044 = vmatpush1.bf16.msra.mxu0 %v1981
      %2045 = vmatprep.subr.bf16.mxu0 0
      %2046 = vmatpush2.bf16.msra.mxu0 0
      %2047 = vmatprep.subr.bf16.mxu0 0
      %2048 = vmatpush2.bf16.msra.mxu0 0
      %2049 = vmatprep.subr.bf16.mxu0 0
      %2050 = vmatpush2.bf16.msra.mxu0 0
      %2051 = vmatprep.subr.bf16.mxu0 0
      %2052 = vmatpush2.bf16.msra.mxu0 0
      %2053 = vmatprep.subr.bf16.mxu0 0
      %2054 = vmatpush2.bf16.msra.mxu0 0
      %2055 = vmatprep.subr.bf16.mxu0 0
      %2056 = vmatpush2.bf16.msra.mxu0 0
      %2057 = vmatprep.subr.bf16.mxu0 0
      %2058 = vmatpush2.bf16.msra.mxu0 0
      %2059 = vmatprep.subr.bf16.mxu0 0
      %2060 = vmatpush2.bf16.msra.mxu0 0
      %2061 = vmatprep.mubr.bf16.mxu0 0
      %2062 = vmatmul.mubr.bf16.gmra.mxu0 %v2006
      %v2063 = vpop.f32.mrf.mxu0
      %v2064 = vadd.f32 0.0, %v2063
      %v2065 = vpop.f32.mrf.mxu0
      %v2066 = vadd.f32 0.0, %v2065
      %v2067 = vpop.f32.mrf.mxu0
      %v2068 = vadd.f32 0.0, %v2067
      %v2069 = vpop.f32.mrf.mxu0
      %v2070 = vadd.f32 0.0, %v2069
      %2071 = vmatprep.mubr.bf16.mxu0 0
      %2072 = vmatmul.mubr.bf16.gmra.mxu0 %v2009
      %v2073 = vpop.f32.mrf.mxu0
      %v2074 = vadd.f32 0.0, %v2073
      %v2075 = vpop.f32.mrf.mxu0
      %v2076 = vadd.f32 0.0, %v2075
      %v2077 = vpop.f32.mrf.mxu0
      %v2078 = vadd.f32 0.0, %v2077
      %v2079 = vpop.f32.mrf.mxu0
      %v2080 = vadd.f32 0.0, %v2079
      %2081 = vmatprep.mubr.bf16.mxu0 0
      %2082 = vmatmul.mubr.bf16.gmra.mxu0 %v2012
      %v2083 = vpop.f32.mrf.mxu0
      %v2084 = vadd.f32 0.0, %v2083
      %v2085 = vpop.f32.mrf.mxu0
      %v2086 = vadd.f32 0.0, %v2085
      %v2087 = vpop.f32.mrf.mxu0
      %v2088 = vadd.f32 0.0, %v2087
      %v2089 = vpop.f32.mrf.mxu0
      %v2090 = vadd.f32 0.0, %v2089
      %2091 = vmatprep.mubr.bf16.mxu0 0
      %2092 = vmatmul.mubr.bf16.gmra.mxu0 %v2015
      %v2093 = vpop.f32.mrf.mxu0
      %v2094 = vadd.f32 0.0, %v2093
      %v2095 = vpop.f32.mrf.mxu0
      %v2096 = vadd.f32 0.0, %v2095
      %v2097 = vpop.f32.mrf.mxu0
      %v2098 = vadd.f32 0.0, %v2097
      %v2099 = vpop.f32.mrf.mxu0
      %v2100 = vadd.f32 0.0, %v2099
      %2101 = vmatprep.mubr.bf16.mxu0 0
      %2102 = vmatmul.mubr.bf16.gmra.mxu0 %v2018
      %v2103 = vpop.f32.mrf.mxu0
      %v2104 = vadd.f32 0.0, %v2103
      %v2105 = vpop.f32.mrf.mxu0
      %v2106 = vadd.f32 0.0, %v2105
      %v2107 = vpop.f32.mrf.mxu0
      %v2108 = vadd.f32 0.0, %v2107
      %v2109 = vpop.f32.mrf.mxu0
      %v2110 = vadd.f32 0.0, %v2109
      %2111 = vmatprep.mubr.bf16.mxu0 0
      %2112 = vmatmul.mubr.bf16.gmra.mxu0 %v2021
      %v2113 = vpop.f32.mrf.mxu0
      %v2114 = vadd.f32 0.0, %v2113
      %v2115 = vpop.f32.mrf.mxu0
      %v2116 = vadd.f32 0.0, %v2115
      %v2117 = vpop.f32.mrf.mxu0
      %v2118 = vadd.f32 0.0, %v2117
      %v2119 = vpop.f32.mrf.mxu0
      %v2120 = vadd.f32 0.0, %v2119
      %2121 = vmatprep.mubr.bf16.mxu0 0
      %2122 = vmatmul.mubr.bf16.gmra.mxu0 %v2024
      %v2123 = vpop.f32.mrf.mxu0
      %v2124 = vadd.f32 0.0, %v2123
      %v2125 = vpop.f32.mrf.mxu0
      %v2126 = vadd.f32 0.0, %v2125
      %v2127 = vpop.f32.mrf.mxu0
      %v2128 = vadd.f32 0.0, %v2127
      %v2129 = vpop.f32.mrf.mxu0
      %v2130 = vadd.f32 0.0, %v2129
      %2131 = vmatprep.mubr.bf16.mxu0 0
      %2132 = vmatmul.mubr.bf16.gmra.mxu0 %v2027
      %v2133 = vpop.f32.mrf.mxu0
      %v2134 = vadd.f32 0.0, %v2133
      %v2135 = vpop.f32.mrf.mxu0
      %v2136 = vadd.f32 0.0, %v2135
      %v2137 = vpop.f32.mrf.mxu0
      %v2138 = vadd.f32 0.0, %v2137
      %v2139 = vpop.f32.mrf.mxu0
      %v2140 = vadd.f32 0.0, %v2139
      %2141 = vdwg.mxu0
      %2142 = vmatprep.subr.bf16.mxu0 0
      %2143 = vmatpush1.bf16.msra.mxu0 0
      %2144 = vmatprep.subr.bf16.mxu0 0
      %2145 = vmatpush1.bf16.msra.mxu0 0
      %2146 = vmatprep.subr.bf16.mxu0 0
      %2147 = vmatpush1.bf16.msra.mxu0 0
      %2148 = vmatprep.subr.bf16.mxu0 0
      %2149 = vmatpush1.bf16.msra.mxu0 0
      %2150 = vmatprep.subr.bf16.mxu0 0
      %2151 = vmatpush1.bf16.msra.mxu0 %v1992
      %2152 = vmatprep.subr.bf16.mxu0 0
      %2153 = vmatpush1.bf16.msra.mxu0 %v1989
      %2154 = vmatprep.subr.bf16.mxu0 0
      %2155 = vmatpush1.bf16.msra.mxu0 %v1986
      %2156 = vmatprep.subr.bf16.mxu0 0
      %2157 = vmatpush1.bf16.msra.mxu0 %v1983
      %2158 = vmatprep.subr.bf16.mxu0 0
      %2159 = vmatpush2.bf16.msra.mxu0 0
      %2160 = vmatprep.subr.bf16.mxu0 0
      %2161 = vmatpush2.bf16.msra.mxu0 0
      %2162 = vmatprep.subr.bf16.mxu0 0
      %2163 = vmatpush2.bf16.msra.mxu0 0
      %2164 = vmatprep.subr.bf16.mxu0 0
      %2165 = vmatpush2.bf16.msra.mxu0 0
      %2166 = vmatprep.subr.bf16.mxu0 0
      %2167 = vmatpush2.bf16.msra.mxu0 0
      %2168 = vmatprep.subr.bf16.mxu0 0
      %2169 = vmatpush2.bf16.msra.mxu0 0
      %2170 = vmatprep.subr.bf16.mxu0 0
      %2171 = vmatpush2.bf16.msra.mxu0 0
      %2172 = vmatprep.subr.bf16.mxu0 0
      %2173 = vmatpush2.bf16.msra.mxu0 0
      %2174 = vmatprep.mubr.bf16.mxu0 0
      %2175 = vmatmul.mubr.bf16.gmra.mxu0 %v2006
      %v2176 = vpop.f32.mrf.mxu0
      %v2177 = vadd.f32 0.0, %v2176
      %v2178 = vpop.f32.mrf.mxu0
      %v2179 = vpop.f32.mrf.mxu0
      %v2180 = vadd.f32 0.0, %v2179
      %v2181 = vpop.f32.mrf.mxu0
      %2182 = vmatprep.mubr.bf16.mxu0 0
      %2183 = vmatmul.mubr.bf16.gmra.mxu0 %v2009
      %v2184 = vpop.f32.mrf.mxu0
      %v2185 = vadd.f32 0.0, %v2184
      %v2186 = vpop.f32.mrf.mxu0
      %v2187 = vpop.f32.mrf.mxu0
      %v2188 = vadd.f32 0.0, %v2187
      %v2189 = vpop.f32.mrf.mxu0
      %2190 = vmatprep.mubr.bf16.mxu0 0
      %2191 = vmatmul.mubr.bf16.gmra.mxu0 %v2012
      %v2192 = vpop.f32.mrf.mxu0
      %v2193 = vadd.f32 0.0, %v2192
      %v2194 = vpop.f32.mrf.mxu0
      %v2195 = vpop.f32.mrf.mxu0
      %v2196 = vadd.f32 0.0, %v2195
      %v2197 = vpop.f32.mrf.mxu0
      %2198 = vmatprep.mubr.bf16.mxu0 0
      %2199 = vmatmul.mubr.bf16.gmra.mxu0 %v2015
      %v2200 = vpop.f32.mrf.mxu0
      %v2201 = vadd.f32 0.0, %v2200
      %v2202 = vpop.f32.mrf.mxu0
      %v2203 = vpop.f32.mrf.mxu0
      %v2204 = vadd.f32 0.0, %v2203
      %v2205 = vpop.f32.mrf.mxu0
      %2206 = vmatprep.mubr.bf16.mxu0 0
      %2207 = vmatmul.mubr.bf16.gmra.mxu0 %v2018
      %v2208 = vpop.f32.mrf.mxu0
      %v2209 = vadd.f32 0.0, %v2208
      %v2210 = vpop.f32.mrf.mxu0
      %v2211 = vpop.f32.mrf.mxu0
      %v2212 = vadd.f32 0.0, %v2211
      %v2213 = vpop.f32.mrf.mxu0
      %2214 = vmatprep.mubr.bf16.mxu0 0
      %2215 = vmatmul.mubr.bf16.gmra.mxu0 %v2021
      %v2216 = vpop.f32.mrf.mxu0
      %v2217 = vadd.f32 0.0, %v2216
      %v2218 = vpop.f32.mrf.mxu0
      %v2219 = vpop.f32.mrf.mxu0
      %v2220 = vadd.f32 0.0, %v2219
      %v2221 = vpop.f32.mrf.mxu0
      %2222 = vmatprep.mubr.bf16.mxu0 0
      %2223 = vmatmul.mubr.bf16.gmra.mxu0 %v2024
      %v2224 = vpop.f32.mrf.mxu0
      %v2225 = vadd.f32 0.0, %v2224
      %v2226 = vpop.f32.mrf.mxu0
      %v2227 = vpop.f32.mrf.mxu0
      %v2228 = vadd.f32 0.0, %v2227
      %v2229 = vpop.f32.mrf.mxu0
      %2230 = vmatprep.mubr.bf16.mxu0 0
      %2231 = vmatmul.mubr.bf16.gmra.mxu0 %v2027
      %v2232 = vpop.f32.mrf.mxu0
      %v2233 = vadd.f32 0.0, %v2232
      %v2234 = vpop.f32.mrf.mxu0
      %v2235 = vpop.f32.mrf.mxu0
      %v2236 = vadd.f32 0.0, %v2235
      %v2237 = vpop.f32.mrf.mxu0
      %2238 = vdwg.mxu0
      %v2239 = vadd.f32 %v1854, %v2064
      %v2240 = vadd.f32 %v1855, %v2066
      %v2241 = vadd.f32 %v1856, %v2177
      %v2242 = vadd.f32 %v1857, %v2068
      %v2243 = vadd.f32 %v1858, %v2070
      %v2244 = vadd.f32 %v1859, %v2180
      %v2245 = vadd.f32 %v1860, %v2074
      %v2246 = vadd.f32 %v1861, %v2076
      %v2247 = vadd.f32 %v1862, %v2185
      %v2248 = vadd.f32 %v1863, %v2078
      %v2249 = vadd.f32 %v1864, %v2080
      %v2250 = vadd.f32 %v1865, %v2188
      %v2251 = vadd.f32 %v1866, %v2084
      %v2252 = vadd.f32 %v1867, %v2086
      %v2253 = vadd.f32 %v1868, %v2193
      %v2254 = vadd.f32 %v1869, %v2088
      %v2255 = vadd.f32 %v1870, %v2090
      %v2256 = vadd.f32 %v1871, %v2196
      %v2257 = vadd.f32 %v1872, %v2094
      %v2258 = vadd.f32 %v1873, %v2096
      %v2259 = vadd.f32 %v1874, %v2201
      %v2260 = vadd.f32 %v1875, %v2098
      %v2261 = vadd.f32 %v1876, %v2100
      %v2262 = vadd.f32 %v1877, %v2204
      %v2263 = vadd.f32 %v1878, %v2104
      %v2264 = vadd.f32 %v1879, %v2106
      %v2265 = vadd.f32 %v1880, %v2209
      %v2266 = vadd.f32 %v1881, %v2108
      %v2267 = vadd.f32 %v1882, %v2110
      %v2268 = vadd.f32 %v1883, %v2212
      %v2269 = vadd.f32 %v1884, %v2114
      %v2270 = vadd.f32 %v1885, %v2116
      %v2271 = vadd.f32 %v1886, %v2217
      %v2272 = vadd.f32 %v1887, %v2118
      %v2273 = vadd.f32 %v1888, %v2120
      %v2274 = vadd.f32 %v1889, %v2220
      %v2275 = vadd.f32 %v1890, %v2124
      %v2276 = vadd.f32 %v1891, %v2126
      %v2277 = vadd.f32 %v1892, %v2225
      %v2278 = vadd.f32 %v1893, %v2128
      %v2279 = vadd.f32 %v1894, %v2130
      %v2280 = vadd.f32 %v1895, %v2228
      %v2281 = vadd.f32 %v1896, %v2134
      %v2282 = vadd.f32 %v1897, %v2136
      %v2283 = vadd.f32 %v1898, %v2233
      %v2284 = vadd.f32 %v1899, %v2138
      %v2285 = vadd.f32 %v1900, %v2140
      %v2286 = vadd.f32 %v1901, %v2236
      %v2288 = vlaneseq
      %v2289 = vshrl.u32 %v2288, 7
      %v2290 = vsub.s32 0, %v2289
      %v2291 = vrot.slane %v352, %v2290
      %v2292 = vlaneseq
      %v2293 = vshrl.u32 %v2292, 7
      %v2294 = vsub.s32 1, %v2293
      %v2295 = vrot.slane %v352, %v2294
      %v2296 = vlaneseq
      %v2297 = vshrl.u32 %v2296, 7
      %v2298 = vsub.s32 2, %v2297
      %v2299 = vrot.slane %v352, %v2298
      %v2303 = vadd.f32 %v2239, %v2291
      %v2304 = vadd.f32 %v2240, %v2295
      %v2305 = vadd.f32 %v2241, %v2299
      %v2306 = vadd.f32 %v2242, %v2291
      %v2307 = vadd.f32 %v2243, %v2295
      %v2308 = vadd.f32 %v2244, %v2299
      %v2309 = vadd.f32 %v2245, %v2291
      %v2310 = vadd.f32 %v2246, %v2295
      %v2311 = vadd.f32 %v2247, %v2299
      %v2312 = vadd.f32 %v2248, %v2291
      %v2313 = vadd.f32 %v2249, %v2295
      %v2314 = vadd.f32 %v2250, %v2299
      %v2315 = vadd.f32 %v2251, %v2291
      %v2316 = vadd.f32 %v2252, %v2295
      %v2317 = vadd.f32 %v2253, %v2299
      %v2318 = vadd.f32 %v2254, %v2291
      %v2319 = vadd.f32 %v2255, %v2295
      %v2320 = vadd.f32 %v2256, %v2299
      %v2321 = vadd.f32 %v2257, %v2291
      %v2322 = vadd.f32 %v2258, %v2295
      %v2323 = vadd.f32 %v2259, %v2299
      %v2324 = vadd.f32 %v2260, %v2291
      %v2325 = vadd.f32 %v2261, %v2295
      %v2326 = vadd.f32 %v2262, %v2299
      %v2327 = vadd.f32 %v2263, %v2291
      %v2328 = vadd.f32 %v2264, %v2295
      %v2329 = vadd.f32 %v2265, %v2299
      %v2330 = vadd.f32 %v2266, %v2291
      %v2331 = vadd.f32 %v2267, %v2295
      %v2332 = vadd.f32 %v2268, %v2299
      %v2333 = vadd.f32 %v2269, %v2291
      %v2334 = vadd.f32 %v2270, %v2295
      %v2335 = vadd.f32 %v2271, %v2299
      %v2336 = vadd.f32 %v2272, %v2291
      %v2337 = vadd.f32 %v2273, %v2295
      %v2338 = vadd.f32 %v2274, %v2299
      %v2339 = vadd.f32 %v2275, %v2291
      %v2340 = vadd.f32 %v2276, %v2295
      %v2341 = vadd.f32 %v2277, %v2299
      %v2342 = vadd.f32 %v2278, %v2291
      %v2343 = vadd.f32 %v2279, %v2295
      %v2344 = vadd.f32 %v2280, %v2299
      %v2345 = vadd.f32 %v2281, %v2291
      %v2346 = vadd.f32 %v2282, %v2295
      %v2347 = vadd.f32 %v2283, %v2299
      %v2348 = vadd.f32 %v2284, %v2291
      %v2349 = vadd.f32 %v2285, %v2295
      %v2350 = vadd.f32 %v2286, %v2299
      %v2351 = vmax.f32 %v2303, 0.0
      %v2352 = vmax.f32 %v2304, 0.0
      %v2353 = vmax.f32 %v2305, 0.0
      %v2354 = vmax.f32 %v2306, 0.0
      %v2355 = vmax.f32 %v2307, 0.0
      %v2356 = vmax.f32 %v2308, 0.0
      %v2357 = vmax.f32 %v2309, 0.0
      %v2358 = vmax.f32 %v2310, 0.0
      %v2359 = vmax.f32 %v2311, 0.0
      %v2360 = vmax.f32 %v2312, 0.0
      %v2361 = vmax.f32 %v2313, 0.0
      %v2362 = vmax.f32 %v2314, 0.0
      %v2363 = vmax.f32 %v2315, 0.0
      %v2364 = vmax.f32 %v2316, 0.0
      %v2365 = vmax.f32 %v2317, 0.0
      %v2366 = vmax.f32 %v2318, 0.0
      %v2367 = vmax.f32 %v2319, 0.0
      %v2368 = vmax.f32 %v2320, 0.0
      %v2369 = vmax.f32 %v2321, 0.0
      %v2370 = vmax.f32 %v2322, 0.0
      %v2371 = vmax.f32 %v2323, 0.0
      %v2372 = vmax.f32 %v2324, 0.0
      %v2373 = vmax.f32 %v2325, 0.0
      %v2374 = vmax.f32 %v2326, 0.0
      %v2375 = vmax.f32 %v2327, 0.0
      %v2376 = vmax.f32 %v2328, 0.0
      %v2377 = vmax.f32 %v2329, 0.0
      %v2378 = vmax.f32 %v2330, 0.0
      %v2379 = vmax.f32 %v2331, 0.0
      %v2380 = vmax.f32 %v2332, 0.0
      %v2381 = vmax.f32 %v2333, 0.0
      %v2382 = vmax.f32 %v2334, 0.0
      %v2383 = vmax.f32 %v2335, 0.0
      %v2384 = vmax.f32 %v2336, 0.0
      %v2385 = vmax.f32 %v2337, 0.0
      %v2386 = vmax.f32 %v2338, 0.0
      %v2387 = vmax.f32 %v2339, 0.0
      %v2388 = vmax.f32 %v2340, 0.0
      %v2389 = vmax.f32 %v2341, 0.0
      %v2390 = vmax.f32 %v2342, 0.0
      %v2391 = vmax.f32 %v2343, 0.0
      %v2392 = vmax.f32 %v2344, 0.0
      %v2393 = vmax.f32 %v2345, 0.0
      %v2394 = vmax.f32 %v2346, 0.0
      %v2395 = vmax.f32 %v2347, 0.0
      %v2396 = vmax.f32 %v2348, 0.0
      %v2397 = vmax.f32 %v2349, 0.0
      %v2398 = vmax.f32 %v2350, 0.0
      %vm2399 = vcmp.lt.s32.totalorder %v311, 12
      %vm2400 = vcmp.lt.s32.totalorder %v312, 12
      %v2401 = vsel %vm2399, 1, 0
      %v2402 = vsel %vm2400, 1, 0
      %vm2403 = vcmp.eq.s32.totalorder %v2401, 1
      %vm2404 = vcmp.eq.s32.totalorder %v2402, 1
      %v2405 = vsel %vm2403, %v2351, 0.0
      %v2406 = vsel %vm2403, %v2352, 0.0
      %v2407 = vsel %vm2403, %v2353, 0.0
      %v2408 = vsel %vm2404, %v2354, 0.0
      %v2409 = vsel %vm2404, %v2355, 0.0
      %v2410 = vsel %vm2404, %v2356, 0.0
      %v2411 = vsel %vm2403, %v2357, 0.0
      %v2412 = vsel %vm2403, %v2358, 0.0
      %v2413 = vsel %vm2403, %v2359, 0.0
      %v2414 = vsel %vm2404, %v2360, 0.0
      %v2415 = vsel %vm2404, %v2361, 0.0
      %v2416 = vsel %vm2404, %v2362, 0.0
      %v2417 = vsel %vm2403, %v2363, 0.0
      %v2418 = vsel %vm2403, %v2364, 0.0
      %v2419 = vsel %vm2403, %v2365, 0.0
      %v2420 = vsel %vm2404, %v2366, 0.0
      %v2421 = vsel %vm2404, %v2367, 0.0
      %v2422 = vsel %vm2404, %v2368, 0.0
      %v2423 = vsel %vm2403, %v2369, 0.0
      %v2424 = vsel %vm2403, %v2370, 0.0
      %v2425 = vsel %vm2403, %v2371, 0.0
      %v2426 = vsel %vm2404, %v2372, 0.0
      %v2427 = vsel %vm2404, %v2373, 0.0
      %v2428 = vsel %vm2404, %v2374, 0.0
      %v2429 = vsel %vm2403, %v2375, 0.0
      %v2430 = vsel %vm2403, %v2376, 0.0
      %v2431 = vsel %vm2403, %v2377, 0.0
      %v2432 = vsel %vm2404, %v2378, 0.0
      %v2433 = vsel %vm2404, %v2379, 0.0
      %v2434 = vsel %vm2404, %v2380, 0.0
      %v2435 = vsel %vm2403, %v2381, 0.0
      %v2436 = vsel %vm2403, %v2382, 0.0
      %v2437 = vsel %vm2403, %v2383, 0.0
      %v2438 = vsel %vm2404, %v2384, 0.0
      %v2439 = vsel %vm2404, %v2385, 0.0
      %v2440 = vsel %vm2404, %v2386, 0.0
      %v2441 = vsel %vm2403, %v2387, 0.0
      %v2442 = vsel %vm2403, %v2388, 0.0
      %v2443 = vsel %vm2403, %v2389, 0.0
      %v2444 = vsel %vm2404, %v2390, 0.0
      %v2445 = vsel %vm2404, %v2391, 0.0
      %v2446 = vsel %vm2404, %v2392, 0.0
      %v2447 = vsel %vm2403, %v2393, 0.0
      %v2448 = vsel %vm2403, %v2394, 0.0
      %v2449 = vsel %vm2403, %v2395, 0.0
      %v2450 = vsel %vm2404, %v2396, 0.0
      %v2451 = vsel %vm2404, %v2397, 0.0
      %v2452 = vsel %vm2404, %v2398, 0.0
      %v2453 = vpack.c.bf16 %v2408, %v2405
      %v2454 = vpack.c.bf16 %v2409, %v2406
      %v2455 = vpack.c.bf16 %v2410, %v2407
      %v2456 = vpack.c.bf16 %v2414, %v2411
      %v2457 = vpack.c.bf16 %v2415, %v2412
      %v2458 = vpack.c.bf16 %v2416, %v2413
      %v2459 = vpack.c.bf16 %v2420, %v2417
      %v2460 = vpack.c.bf16 %v2421, %v2418
      %v2461 = vpack.c.bf16 %v2422, %v2419
      %v2462 = vpack.c.bf16 %v2426, %v2423
      %v2463 = vpack.c.bf16 %v2427, %v2424
      %v2464 = vpack.c.bf16 %v2428, %v2425
      %v2465 = vpack.c.bf16 %v2432, %v2429
      %v2466 = vpack.c.bf16 %v2433, %v2430
      %v2467 = vpack.c.bf16 %v2434, %v2431
      %v2468 = vpack.c.bf16 %v2438, %v2435
      %v2469 = vpack.c.bf16 %v2439, %v2436
      %v2470 = vpack.c.bf16 %v2440, %v2437
      %v2471 = vpack.c.bf16 %v2444, %v2441
      %v2472 = vpack.c.bf16 %v2445, %v2442
      %v2473 = vpack.c.bf16 %v2446, %v2443
      %v2474 = vpack.c.bf16 %v2450, %v2447
      %v2475 = vpack.c.bf16 %v2451, %v2448
      %v2476 = vpack.c.bf16 %v2452, %v2449
      %v2501 = vunpack.c.l.b16 %v2453
      %v2502 = vunpack.c.l.b16 %v2454
      %v2503 = vunpack.c.l.b16 %v2455
      %v2504 = vunpack.c.h.b16 %v2453
      %v2505 = vunpack.c.h.b16 %v2454
      %v2506 = vunpack.c.h.b16 %v2455
      %v2507 = vunpack.c.l.b16 %v2456
      %v2508 = vunpack.c.l.b16 %v2457
      %v2509 = vunpack.c.l.b16 %v2458
      %v2510 = vunpack.c.h.b16 %v2456
      %v2511 = vunpack.c.h.b16 %v2457
      %v2512 = vunpack.c.h.b16 %v2458
      %v2513 = vunpack.c.l.b16 %v2459
      %v2514 = vunpack.c.l.b16 %v2460
      %v2515 = vunpack.c.l.b16 %v2461
      %v2516 = vunpack.c.h.b16 %v2459
      %v2517 = vunpack.c.h.b16 %v2460
      %v2518 = vunpack.c.h.b16 %v2461
      %v2519 = vunpack.c.l.b16 %v2462
      %v2520 = vunpack.c.l.b16 %v2463
      %v2521 = vunpack.c.l.b16 %v2464
      %v2522 = vunpack.c.h.b16 %v2462
      %v2523 = vunpack.c.h.b16 %v2463
      %v2524 = vunpack.c.h.b16 %v2464
      %v2525 = vunpack.c.l.b16 %v2465
      %v2526 = vunpack.c.l.b16 %v2466
      %v2527 = vunpack.c.l.b16 %v2467
      %v2528 = vunpack.c.h.b16 %v2465
      %v2529 = vunpack.c.h.b16 %v2466
      %v2530 = vunpack.c.h.b16 %v2467
      %v2531 = vunpack.c.l.b16 %v2468
      %v2532 = vunpack.c.l.b16 %v2469
      %v2533 = vunpack.c.l.b16 %v2470
      %v2534 = vunpack.c.h.b16 %v2468
      %v2535 = vunpack.c.h.b16 %v2469
      %v2536 = vunpack.c.h.b16 %v2470
      %v2537 = vunpack.c.l.b16 %v2471
      %v2538 = vunpack.c.l.b16 %v2472
      %v2539 = vunpack.c.l.b16 %v2473
      %v2540 = vunpack.c.h.b16 %v2471
      %v2541 = vunpack.c.h.b16 %v2472
      %v2542 = vunpack.c.h.b16 %v2473
      %v2543 = vunpack.c.l.b16 %v2474
      %v2544 = vunpack.c.l.b16 %v2475
      %v2545 = vunpack.c.l.b16 %v2476
      %v2546 = vunpack.c.h.b16 %v2474
      %v2547 = vunpack.c.h.b16 %v2475
      %v2548 = vunpack.c.h.b16 %v2476
      %v2549 = vpack.c.b16 %v2502, %v2501
      %v2550 = vpack.c.b16 %v2503, %v2503
      %v2551 = vpack.c.b16 %v2505, %v2504
      %v2552 = vpack.c.b16 %v2506, %v2506
      %v2553 = vpack.c.b16 %v2508, %v2507
      %v2554 = vpack.c.b16 %v2509, %v2509
      %v2555 = vpack.c.b16 %v2511, %v2510
      %v2556 = vpack.c.b16 %v2512, %v2512
      %v2557 = vpack.c.b16 %v2514, %v2513
      %v2558 = vpack.c.b16 %v2515, %v2515
      %v2559 = vpack.c.b16 %v2517, %v2516
      %v2560 = vpack.c.b16 %v2518, %v2518
      %v2561 = vpack.c.b16 %v2520, %v2519
      %v2562 = vpack.c.b16 %v2521, %v2521
      %v2563 = vpack.c.b16 %v2523, %v2522
      %v2564 = vpack.c.b16 %v2524, %v2524
      %v2565 = vpack.c.b16 %v2526, %v2525
      %v2566 = vpack.c.b16 %v2527, %v2527
      %v2567 = vpack.c.b16 %v2529, %v2528
      %v2568 = vpack.c.b16 %v2530, %v2530
      %v2569 = vpack.c.b16 %v2532, %v2531
      %v2570 = vpack.c.b16 %v2533, %v2533
      %v2571 = vpack.c.b16 %v2535, %v2534
      %v2572 = vpack.c.b16 %v2536, %v2536
      %v2573 = vpack.c.b16 %v2538, %v2537
      %v2574 = vpack.c.b16 %v2539, %v2539
      %v2575 = vpack.c.b16 %v2541, %v2540
      %v2576 = vpack.c.b16 %v2542, %v2542
      %v2577 = vpack.c.b16 %v2544, %v2543
      %v2578 = vpack.c.b16 %v2545, %v2545
      %v2579 = vpack.c.b16 %v2547, %v2546
      %v2580 = vpack.c.b16 %v2548, %v2548
      %2613 = vst [vmem:[#allocation3] sm:$0xff] %v2549
      %2614 = vst [vmem:[#allocation3 + $0x8] sm:$0xf] %v2550
      %2615 = vst [vmem:[#allocation3 + $0xc] sm:$0xff] %v2551
      %2616 = vst [vmem:[#allocation3 + $0x14] sm:$0xf] %v2552
      %2617 = vst [vmem:[#allocation3 + $0x18] sm:$0xff] %v2553
      %2618 = vst [vmem:[#allocation3 + $0x20] sm:$0xf] %v2554
      %2619 = vst [vmem:[#allocation3 + $0x24] sm:$0xff] %v2555
      %2620 = vst [vmem:[#allocation3 + $0x2c] sm:$0xf] %v2556
      %2621 = vst [vmem:[#allocation3 + $0x30] sm:$0xff] %v2557
      %2622 = vst [vmem:[#allocation3 + $0x38] sm:$0xf] %v2558
      %2623 = vst [vmem:[#allocation3 + $0x3c] sm:$0xff] %v2559
      %2624 = vst [vmem:[#allocation3 + $0x44] sm:$0xf] %v2560
      %2625 = vst [vmem:[#allocation3 + $0x48] sm:$0xff] %v2561
      %2626 = vst [vmem:[#allocation3 + $0x50] sm:$0xf] %v2562
      %2627 = vst [vmem:[#allocation3 + $0x54] sm:$0xff] %v2563
      %2628 = vst [vmem:[#allocation3 + $0x5c] sm:$0xf] %v2564
      %2629 = vst [vmem:[#allocation3 + $0x60] sm:$0xff] %v2565
      %2630 = vst [vmem:[#allocation3 + $0x68] sm:$0xf] %v2566
      %2631 = vst [vmem:[#allocation3 + $0x6c] sm:$0xff] %v2567
      %2632 = vst [vmem:[#allocation3 + $0x74] sm:$0xf] %v2568
      %2633 = vst [vmem:[#allocation3 + $0x78] sm:$0xff] %v2569
      %2634 = vst [vmem:[#allocation3 + $0x80] sm:$0xf] %v2570
      %2635 = vst [vmem:[#allocation3 + $0x84] sm:$0xff] %v2571
      %2636 = vst [vmem:[#allocation3 + $0x8c] sm:$0xf] %v2572
      %2637 = vst [vmem:[#allocation3 + $0x90] sm:$0xff] %v2573
      %2638 = vst [vmem:[#allocation3 + $0x98] sm:$0xf] %v2574
      %2639 = vst [vmem:[#allocation3 + $0x9c] sm:$0xff] %v2575
      %2640 = vst [vmem:[#allocation3 + $0xa4] sm:$0xf] %v2576
      %2641 = vst [vmem:[#allocation3 + $0xa8] sm:$0xff] %v2577
      %2642 = vst [vmem:[#allocation3 + $0xb0] sm:$0xf] %v2578
      %2643 = vst [vmem:[#allocation3 + $0xb4] sm:$0xff] %v2579
      %2644 = vst [vmem:[#allocation3 + $0xbc] sm:$0xf] %v2580
      %s2645 = scalar_lea.vmem %s5, 1
      %v2646 = vld [vmem:[%s2645] ss:$4 sm:$0x7]
      %v2647 = vld [vmem:[#allocation3] sm:$0xff]
      %v2648 = vld [vmem:[#allocation3 + $0x8] sm:$0xf]
      %v2649 = vld [vmem:[#allocation3 + $0xc] sm:$0xff]
      %v2650 = vld [vmem:[#allocation3 + $0x14] sm:$0xf]
      %v2651 = vld [vmem:[#allocation3 + $0x18] sm:$0xff]
      %v2652 = vld [vmem:[#allocation3 + $0x20] sm:$0xf]
      %v2653 = vld [vmem:[#allocation3 + $0x24] sm:$0xff]
      %v2654 = vld [vmem:[#allocation3 + $0x2c] sm:$0xf]
      %v2655 = vld [vmem:[#allocation3 + $0x30] sm:$0xff]
      %v2656 = vld [vmem:[#allocation3 + $0x38] sm:$0xf]
      %v2657 = vld [vmem:[#allocation3 + $0x3c] sm:$0xff]
      %v2658 = vld [vmem:[#allocation3 + $0x44] sm:$0xf]
      %v2659 = vld [vmem:[#allocation3 + $0x48] sm:$0xff]
      %v2660 = vld [vmem:[#allocation3 + $0x50] sm:$0xf]
      %v2661 = vld [vmem:[#allocation3 + $0x54] sm:$0xff]
      %v2662 = vld [vmem:[#allocation3 + $0x5c] sm:$0xf]
      %v2663 = vld [vmem:[#allocation3 + $0x60] sm:$0xff]
      %v2664 = vld [vmem:[#allocation3 + $0x68] sm:$0xf]
      %v2665 = vld [vmem:[#allocation3 + $0x6c] sm:$0xff]
      %v2666 = vld [vmem:[#allocation3 + $0x74] sm:$0xf]
      %v2667 = vld [vmem:[#allocation3 + $0x78] sm:$0xff]
      %v2668 = vld [vmem:[#allocation3 + $0x80] sm:$0xf]
      %v2669 = vld [vmem:[#allocation3 + $0x84] sm:$0xff]
      %v2670 = vld [vmem:[#allocation3 + $0x8c] sm:$0xf]
      %v2671 = vld [vmem:[#allocation3 + $0x90] sm:$0xff]
      %v2672 = vld [vmem:[#allocation3 + $0x98] sm:$0xf]
      %v2673 = vld [vmem:[#allocation3 + $0x9c] sm:$0xff]
      %v2674 = vld [vmem:[#allocation3 + $0xa4] sm:$0xf]
      %v2675 = vld [vmem:[#allocation3 + $0xa8] sm:$0xff]
      %v2676 = vld [vmem:[#allocation3 + $0xb0] sm:$0xf]
      %v2677 = vld [vmem:[#allocation3 + $0xb4] sm:$0xff]
      %v2678 = vld [vmem:[#allocation3 + $0xbc] sm:$0xf]
      %v2679 = vld [vmem:[%s2] sm:$0xff]
      %v2680 = vld [vmem:[%s2 + $0x8] sm:$0xf]
      %v2681 = vld [vmem:[%s2 + $0xc] sm:$0xff]
      %v2682 = vld [vmem:[%s2 + $0x14] sm:$0xf]
      %v2683 = vld [vmem:[%s2 + $0x18] sm:$0xff]
      %v2684 = vld [vmem:[%s2 + $0x20] sm:$0xf]
      %v2685 = vld [vmem:[%s2 + $0x24] sm:$0xff]
      %v2686 = vld [vmem:[%s2 + $0x2c] sm:$0xf]
      %v2687 = vld [vmem:[%s2 + $0x30] sm:$0xff]
      %v2688 = vld [vmem:[%s2 + $0x38] sm:$0xf]
      %v2689 = vld [vmem:[%s2 + $0x3c] sm:$0xff]
      %v2690 = vld [vmem:[%s2 + $0x44] sm:$0xf]
      %v2691 = vld [vmem:[%s2 + $0x48] sm:$0xff]
      %v2692 = vld [vmem:[%s2 + $0x50] sm:$0xf]
      %v2693 = vld [vmem:[%s2 + $0x54] sm:$0xff]
      %v2694 = vld [vmem:[%s2 + $0x5c] sm:$0xf]
      %v2695 = vld [vmem:[%s2 + $0x60] sm:$0xff]
      %v2696 = vld [vmem:[%s2 + $0x68] sm:$0xf]
      %v2697 = vld [vmem:[%s2 + $0x6c] sm:$0xff]
      %v2698 = vld [vmem:[%s2 + $0x74] sm:$0xf]
      %v2699 = vld [vmem:[%s2 + $0x78] sm:$0xff]
      %v2700 = vld [vmem:[%s2 + $0x80] sm:$0xf]
      %v2701 = vld [vmem:[%s2 + $0x84] sm:$0xff]
      %v2702 = vld [vmem:[%s2 + $0x8c] sm:$0xf]
      %v2703 = vld [vmem:[%s2 + $0x90] sm:$0xff]
      %v2704 = vld [vmem:[%s2 + $0x98] sm:$0xf]
      %v2705 = vld [vmem:[%s2 + $0x9c] sm:$0xff]
      %v2706 = vld [vmem:[%s2 + $0xa4] sm:$0xf]
      %v2707 = vld [vmem:[%s2 + $0xa8] sm:$0xff]
      %v2708 = vld [vmem:[%s2 + $0xb0] sm:$0xf]
      %v2709 = vld [vmem:[%s2 + $0xb4] sm:$0xff]
      %v2710 = vld [vmem:[%s2 + $0xbc] sm:$0xf]
      %v2711 = vld [vmem:[%s2 + $0xc0] sm:$0xff]
      %v2712 = vld [vmem:[%s2 + $0xc8] sm:$0xf]
      %v2713 = vld [vmem:[%s2 + $0xcc] sm:$0xff]
      %v2714 = vld [vmem:[%s2 + $0xd4] sm:$0xf]
      %v2715 = vld [vmem:[%s2 + $0xd8] sm:$0xff]
      %v2716 = vld [vmem:[%s2 + $0xe0] sm:$0xf]
      %v2717 = vld [vmem:[%s2 + $0xe4] sm:$0xff]
      %v2718 = vld [vmem:[%s2 + $0xec] sm:$0xf]
      %v2719 = vld [vmem:[%s2 + $0xf0] sm:$0xff]
      %v2720 = vld [vmem:[%s2 + $0xf8] sm:$0xf]
      %v2721 = vld [vmem:[%s2 + $0xfc] sm:$0xff]
      %v2722 = vld [vmem:[%s2 + $0x104] sm:$0xf]
      %v2723 = vld [vmem:[%s2 + $0x108] sm:$0xff]
      %v2724 = vld [vmem:[%s2 + $0x110] sm:$0xf]
      %v2725 = vld [vmem:[%s2 + $0x114] sm:$0xff]
      %v2726 = vld [vmem:[%s2 + $0x11c] sm:$0xf]
      %v2727 = vld [vmem:[%s2 + $0x120] sm:$0xff]
      %v2728 = vld [vmem:[%s2 + $0x128] sm:$0xf]
      %v2729 = vld [vmem:[%s2 + $0x12c] sm:$0xff]
      %v2730 = vld [vmem:[%s2 + $0x134] sm:$0xf]
      %v2731 = vld [vmem:[%s2 + $0x138] sm:$0xff]
      %v2732 = vld [vmem:[%s2 + $0x140] sm:$0xf]
      %v2733 = vld [vmem:[%s2 + $0x144] sm:$0xff]
      %v2734 = vld [vmem:[%s2 + $0x14c] sm:$0xf]
      %v2735 = vld [vmem:[%s2 + $0x150] sm:$0xff]
      %v2736 = vld [vmem:[%s2 + $0x158] sm:$0xf]
      %v2737 = vld [vmem:[%s2 + $0x15c] sm:$0xff]
      %v2738 = vld [vmem:[%s2 + $0x164] sm:$0xf]
      %v2739 = vld [vmem:[%s2 + $0x168] sm:$0xff]
      %v2740 = vld [vmem:[%s2 + $0x170] sm:$0xf]
      %v2741 = vld [vmem:[%s2 + $0x174] sm:$0xff]
      %v2742 = vld [vmem:[%s2 + $0x17c] sm:$0xf]
      %v2743 = vld [vmem:[%s2 + $0x180] sm:$0xff]
      %v2744 = vld [vmem:[%s2 + $0x188] sm:$0xf]
      %v2745 = vld [vmem:[%s2 + $0x18c] sm:$0xff]
      %v2746 = vld [vmem:[%s2 + $0x194] sm:$0xf]
      %v2747 = vld [vmem:[%s2 + $0x198] sm:$0xff]
      %v2748 = vld [vmem:[%s2 + $0x1a0] sm:$0xf]
      %v2749 = vld [vmem:[%s2 + $0x1a4] sm:$0xff]
      %v2750 = vld [vmem:[%s2 + $0x1ac] sm:$0xf]
      %v2751 = vld [vmem:[%s2 + $0x1b0] sm:$0xff]
      %v2752 = vld [vmem:[%s2 + $0x1b8] sm:$0xf]
      %v2753 = vld [vmem:[%s2 + $0x1bc] sm:$0xff]
      %v2754 = vld [vmem:[%s2 + $0x1c4] sm:$0xf]
      %v2755 = vld [vmem:[%s2 + $0x1c8] sm:$0xff]
      %v2756 = vld [vmem:[%s2 + $0x1d0] sm:$0xf]
      %v2757 = vld [vmem:[%s2 + $0x1d4] sm:$0xff]
      %v2758 = vld [vmem:[%s2 + $0x1dc] sm:$0xf]
      %v2759 = vld [vmem:[%s2 + $0x1e0] sm:$0xff]
      %v2760 = vld [vmem:[%s2 + $0x1e8] sm:$0xf]
      %v2761 = vld [vmem:[%s2 + $0x1ec] sm:$0xff]
      %v2762 = vld [vmem:[%s2 + $0x1f4] sm:$0xf]
      %v2763 = vld [vmem:[%s2 + $0x1f8] sm:$0xff]
      %v2764 = vld [vmem:[%s2 + $0x200] sm:$0xf]
      %v2765 = vld [vmem:[%s2 + $0x204] sm:$0xff]
      %v2766 = vld [vmem:[%s2 + $0x20c] sm:$0xf]
      %v2767 = vld [vmem:[%s2 + $0x210] sm:$0xff]
      %v2768 = vld [vmem:[%s2 + $0x218] sm:$0xf]
      %v2769 = vld [vmem:[%s2 + $0x21c] sm:$0xff]
      %v2770 = vld [vmem:[%s2 + $0x224] sm:$0xf]
      %v2771 = vld [vmem:[%s2 + $0x228] sm:$0xff]
      %v2772 = vld [vmem:[%s2 + $0x230] sm:$0xf]
      %v2773 = vld [vmem:[%s2 + $0x234] sm:$0xff]
      %v2774 = vld [vmem:[%s2 + $0x23c] sm:$0xf]
      %v2775 = vld [vmem:[#allocation3] sm:$0xff]
      %v2776 = vld [vmem:[#allocation3 + $0x8] sm:$0xf]
      %v2777 = vld [vmem:[#allocation3 + $0xc] sm:$0xff]
      %v2778 = vld [vmem:[#allocation3 + $0x14] sm:$0xf]
      %v2779 = vld [vmem:[#allocation3 + $0x18] sm:$0xff]
      %v2780 = vld [vmem:[#allocation3 + $0x20] sm:$0xf]
      %v2781 = vld [vmem:[#allocation3 + $0x24] sm:$0xff]
      %v2782 = vld [vmem:[#allocation3 + $0x2c] sm:$0xf]
      %v2783 = vld [vmem:[#allocation3 + $0x30] sm:$0xff]
      %v2784 = vld [vmem:[#allocation3 + $0x38] sm:$0xf]
      %v2785 = vld [vmem:[#allocation3 + $0x3c] sm:$0xff]
      %v2786 = vld [vmem:[#allocation3 + $0x44] sm:$0xf]
      %v2787 = vld [vmem:[#allocation3 + $0x48] sm:$0xff]
      %v2788 = vld [vmem:[#allocation3 + $0x50] sm:$0xf]
      %v2789 = vld [vmem:[#allocation3 + $0x54] sm:$0xff]
      %v2790 = vld [vmem:[#allocation3 + $0x5c] sm:$0xf]
      %v2791 = vld [vmem:[#allocation3 + $0x60] sm:$0xff]
      %v2792 = vld [vmem:[#allocation3 + $0x68] sm:$0xf]
      %v2793 = vld [vmem:[#allocation3 + $0x6c] sm:$0xff]
      %v2794 = vld [vmem:[#allocation3 + $0x74] sm:$0xf]
      %v2795 = vld [vmem:[#allocation3 + $0x78] sm:$0xff]
      %v2796 = vld [vmem:[#allocation3 + $0x80] sm:$0xf]
      %v2797 = vld [vmem:[#allocation3 + $0x84] sm:$0xff]
      %v2798 = vld [vmem:[#allocation3 + $0x8c] sm:$0xf]
      %v2799 = vld [vmem:[#allocation3 + $0x90] sm:$0xff]
      %v2800 = vld [vmem:[#allocation3 + $0x98] sm:$0xf]
      %v2801 = vld [vmem:[#allocation3 + $0x9c] sm:$0xff]
      %v2802 = vld [vmem:[#allocation3 + $0xa4] sm:$0xf]
      %v2803 = vld [vmem:[#allocation3 + $0xa8] sm:$0xff]
      %v2804 = vld [vmem:[#allocation3 + $0xb0] sm:$0xf]
      %v2805 = vld [vmem:[#allocation3 + $0xb4] sm:$0xff]
      %v2806 = vld [vmem:[#allocation3 + $0xbc] sm:$0xf]
      %v2807 = vld [vmem:[#allocation3 + $0xc0] sm:$0x11]
      %v2808 = vld [vmem:[#allocation3 + $0xc8] sm:$0x1]
      %s2809 = scalar_lea.vmem %s2, 576
      %v2810 = vld [vmem:[%s2809] sm:$0xff]
      %v2811 = vld [vmem:[%s2809 + $0x8] sm:$0xf]
      %v2812 = vld [vmem:[%s2809 + $0xc] sm:$0xff]
      %v2813 = vld [vmem:[%s2809 + $0x14] sm:$0xf]
      %v2814 = vld [vmem:[%s2809 + $0x18] sm:$0xff]
      %v2815 = vld [vmem:[%s2809 + $0x20] sm:$0xf]
      %v2816 = vld [vmem:[%s2809 + $0x24] sm:$0xff]
      %v2817 = vld [vmem:[%s2809 + $0x2c] sm:$0xf]
      %v2818 = vld [vmem:[%s2809 + $0x30] sm:$0xff]
      %v2819 = vld [vmem:[%s2809 + $0x38] sm:$0xf]
      %v2820 = vld [vmem:[%s2809 + $0x3c] sm:$0xff]
      %v2821 = vld [vmem:[%s2809 + $0x44] sm:$0xf]
      %v2822 = vld [vmem:[%s2809 + $0x48] sm:$0xff]
      %v2823 = vld [vmem:[%s2809 + $0x50] sm:$0xf]
      %v2824 = vld [vmem:[%s2809 + $0x54] sm:$0xff]
      %v2825 = vld [vmem:[%s2809 + $0x5c] sm:$0xf]
      %v2826 = vld [vmem:[%s2809 + $0x60] sm:$0xff]
      %v2827 = vld [vmem:[%s2809 + $0x68] sm:$0xf]
      %v2828 = vld [vmem:[%s2809 + $0x6c] sm:$0xff]
      %v2829 = vld [vmem:[%s2809 + $0x74] sm:$0xf]
      %v2830 = vld [vmem:[%s2809 + $0x78] sm:$0xff]
      %v2831 = vld [vmem:[%s2809 + $0x80] sm:$0xf]
      %v2832 = vld [vmem:[%s2809 + $0x84] sm:$0xff]
      %v2833 = vld [vmem:[%s2809 + $0x8c] sm:$0xf]
      %v2834 = vld [vmem:[%s2809 + $0x90] sm:$0xff]
      %v2835 = vld [vmem:[%s2809 + $0x98] sm:$0xf]
      %v2836 = vld [vmem:[%s2809 + $0x9c] sm:$0xff]
      %v2837 = vld [vmem:[%s2809 + $0xa4] sm:$0xf]
      %v2838 = vld [vmem:[%s2809 + $0xa8] sm:$0xff]
      %v2839 = vld [vmem:[%s2809 + $0xb0] sm:$0xf]
      %v2840 = vld [vmem:[%s2809 + $0xb4] sm:$0xff]
      %v2841 = vld [vmem:[%s2809 + $0xbc] sm:$0xf]
      %v2842 = vld [vmem:[%s2809 + $0xc0] sm:$0xff]
      %v2843 = vld [vmem:[%s2809 + $0xc8] sm:$0xf]
      %v2844 = vld [vmem:[%s2809 + $0xcc] sm:$0xff]
      %v2845 = vld [vmem:[%s2809 + $0xd4] sm:$0xf]
      %v2846 = vld [vmem:[%s2809 + $0xd8] sm:$0xff]
      %v2847 = vld [vmem:[%s2809 + $0xe0] sm:$0xf]
      %v2848 = vld [vmem:[%s2809 + $0xe4] sm:$0xff]
      %v2849 = vld [vmem:[%s2809 + $0xec] sm:$0xf]
      %v2850 = vld [vmem:[%s2809 + $0xf0] sm:$0xff]
      %v2851 = vld [vmem:[%s2809 + $0xf8] sm:$0xf]
      %v2852 = vld [vmem:[%s2809 + $0xfc] sm:$0xff]
      %v2853 = vld [vmem:[%s2809 + $0x104] sm:$0xf]
      %v2854 = vld [vmem:[%s2809 + $0x108] sm:$0xff]
      %v2855 = vld [vmem:[%s2809 + $0x110] sm:$0xf]
      %v2856 = vld [vmem:[%s2809 + $0x114] sm:$0xff]
      %v2857 = vld [vmem:[%s2809 + $0x11c] sm:$0xf]
      %v2858 = vld [vmem:[%s2809 + $0x120] sm:$0xff]
      %v2859 = vld [vmem:[%s2809 + $0x128] sm:$0xf]
      %v2860 = vld [vmem:[%s2809 + $0x12c] sm:$0xff]
      %v2861 = vld [vmem:[%s2809 + $0x134] sm:$0xf]
      %v2862 = vld [vmem:[%s2809 + $0x138] sm:$0xff]
      %v2863 = vld [vmem:[%s2809 + $0x140] sm:$0xf]
      %v2864 = vld [vmem:[%s2809 + $0x144] sm:$0xff]
      %v2865 = vld [vmem:[%s2809 + $0x14c] sm:$0xf]
      %v2866 = vld [vmem:[%s2809 + $0x150] sm:$0xff]
      %v2867 = vld [vmem:[%s2809 + $0x158] sm:$0xf]
      %v2868 = vld [vmem:[%s2809 + $0x15c] sm:$0xff]
      %v2869 = vld [vmem:[%s2809 + $0x164] sm:$0xf]
      %v2870 = vld [vmem:[%s2809 + $0x168] sm:$0xff]
      %v2871 = vld [vmem:[%s2809 + $0x170] sm:$0xf]
      %v2872 = vld [vmem:[%s2809 + $0x174] sm:$0xff]
      %v2873 = vld [vmem:[%s2809 + $0x17c] sm:$0xf]
      %v2874 = vld [vmem:[%s2809 + $0x180] sm:$0xff]
      %v2875 = vld [vmem:[%s2809 + $0x188] sm:$0xf]
      %v2876 = vld [vmem:[%s2809 + $0x18c] sm:$0xff]
      %v2877 = vld [vmem:[%s2809 + $0x194] sm:$0xf]
      %v2878 = vld [vmem:[%s2809 + $0x198] sm:$0xff]
      %v2879 = vld [vmem:[%s2809 + $0x1a0] sm:$0xf]
      %v2880 = vld [vmem:[%s2809 + $0x1a4] sm:$0xff]
      %v2881 = vld [vmem:[%s2809 + $0x1ac] sm:$0xf]
      %v2882 = vld [vmem:[%s2809 + $0x1b0] sm:$0xff]
      %v2883 = vld [vmem:[%s2809 + $0x1b8] sm:$0xf]
      %v2884 = vld [vmem:[%s2809 + $0x1bc] sm:$0xff]
      %v2885 = vld [vmem:[%s2809 + $0x1c4] sm:$0xf]
      %v2886 = vld [vmem:[%s2809 + $0x1c8] sm:$0xff]
      %v2887 = vld [vmem:[%s2809 + $0x1d0] sm:$0xf]
      %v2888 = vld [vmem:[%s2809 + $0x1d4] sm:$0xff]
      %v2889 = vld [vmem:[%s2809 + $0x1dc] sm:$0xf]
      %v2890 = vld [vmem:[%s2809 + $0x1e0] sm:$0xff]
      %v2891 = vld [vmem:[%s2809 + $0x1e8] sm:$0xf]
      %v2892 = vld [vmem:[%s2809 + $0x1ec] sm:$0xff]
      %v2893 = vld [vmem:[%s2809 + $0x1f4] sm:$0xf]
      %v2894 = vld [vmem:[%s2809 + $0x1f8] sm:$0xff]
      %v2895 = vld [vmem:[%s2809 + $0x200] sm:$0xf]
      %v2896 = vld [vmem:[%s2809 + $0x204] sm:$0xff]
      %v2897 = vld [vmem:[%s2809 + $0x20c] sm:$0xf]
      %v2898 = vld [vmem:[%s2809 + $0x210] sm:$0xff]
      %v2899 = vld [vmem:[%s2809 + $0x218] sm:$0xf]
      %v2900 = vld [vmem:[%s2809 + $0x21c] sm:$0xff]
      %v2901 = vld [vmem:[%s2809 + $0x224] sm:$0xf]
      %v2902 = vld [vmem:[%s2809 + $0x228] sm:$0xff]
      %v2903 = vld [vmem:[%s2809 + $0x230] sm:$0xf]
      %v2904 = vld [vmem:[%s2809 + $0x234] sm:$0xff]
      %v2905 = vld [vmem:[%s2809 + $0x23c] sm:$0xf]
      %v2940 = vunpack.c.l.b16 %v2775
      %v2941 = vunpack.c.h.b16 %v2775
      %v2942 = vunpack.c.l.b16 %v2776
      %v2943 = vunpack.c.l.b16 %v2777
      %v2944 = vunpack.c.h.b16 %v2777
      %v2945 = vunpack.c.l.b16 %v2778
      %v2946 = vunpack.c.l.b16 %v2779
      %v2947 = vunpack.c.h.b16 %v2779
      %v2948 = vunpack.c.l.b16 %v2780
      %v2949 = vunpack.c.l.b16 %v2781
      %v2950 = vunpack.c.h.b16 %v2781
      %v2951 = vunpack.c.l.b16 %v2782
      %v2952 = vunpack.c.l.b16 %v2783
      %v2953 = vunpack.c.h.b16 %v2783
      %v2954 = vunpack.c.l.b16 %v2784
      %v2955 = vunpack.c.l.b16 %v2785
      %v2956 = vunpack.c.h.b16 %v2785
      %v2957 = vunpack.c.l.b16 %v2786
      %v2958 = vunpack.c.l.b16 %v2787
      %v2959 = vunpack.c.h.b16 %v2787
      %v2960 = vunpack.c.l.b16 %v2788
      %v2961 = vunpack.c.l.b16 %v2789
      %v2962 = vunpack.c.h.b16 %v2789
      %v2963 = vunpack.c.l.b16 %v2790
      %v2964 = vunpack.c.l.b16 %v2791
      %v2965 = vunpack.c.h.b16 %v2791
      %v2966 = vunpack.c.l.b16 %v2792
      %v2967 = vunpack.c.l.b16 %v2793
      %v2968 = vunpack.c.h.b16 %v2793
      %v2969 = vunpack.c.l.b16 %v2794
      %v2970 = vunpack.c.l.b16 %v2795
      %v2971 = vunpack.c.h.b16 %v2795
      %v2972 = vunpack.c.l.b16 %v2796
      %v2973 = vunpack.c.l.b16 %v2797
      %v2974 = vunpack.c.h.b16 %v2797
      %v2975 = vunpack.c.l.b16 %v2798
      %v2976 = vunpack.c.l.b16 %v2799
      %v2977 = vunpack.c.h.b16 %v2799
      %v2978 = vunpack.c.l.b16 %v2800
      %v2979 = vunpack.c.l.b16 %v2801
      %v2980 = vunpack.c.h.b16 %v2801
      %v2981 = vunpack.c.l.b16 %v2802
      %v2982 = vunpack.c.l.b16 %v2803
      %v2983 = vunpack.c.h.b16 %v2803
      %v2984 = vunpack.c.l.b16 %v2804
      %v2985 = vunpack.c.l.b16 %v2805
      %v2986 = vunpack.c.h.b16 %v2805
      %v2987 = vunpack.c.l.b16 %v2806
      %v2988 = vunpack.c.l.b16 %v2807
      %v2989 = vunpack.c.h.b16 %v2807
      %v2990 = vunpack.c.l.b16 %v2808
      %v2991 = vpack.c.b16 %v2943, %v2940
      %v2992 = vpack.c.b16 %v2944, %v2941
      %v2993 = vpack.c.b16 %v2945, %v2942
      %v2994 = vpack.c.b16 %v2949, %v2946
      %v2995 = vpack.c.b16 %v2950, %v2947
      %v2996 = vpack.c.b16 %v2951, %v2948
      %v2997 = vpack.c.b16 %v2955, %v2952
      %v2998 = vpack.c.b16 %v2956, %v2953
      %v2999 = vpack.c.b16 %v2957, %v2954
      %v3000 = vpack.c.b16 %v2961, %v2958
      %v3001 = vpack.c.b16 %v2962, %v2959
      %v3002 = vpack.c.b16 %v2963, %v2960
      %v3003 = vpack.c.b16 %v2967, %v2964
      %v3004 = vpack.c.b16 %v2968, %v2965
      %v3005 = vpack.c.b16 %v2969, %v2966
      %v3006 = vpack.c.b16 %v2973, %v2970
      %v3007 = vpack.c.b16 %v2974, %v2971
      %v3008 = vpack.c.b16 %v2975, %v2972
      %v3009 = vpack.c.b16 %v2979, %v2976
      %v3010 = vpack.c.b16 %v2980, %v2977
      %v3011 = vpack.c.b16 %v2981, %v2978
      %v3012 = vpack.c.b16 %v2985, %v2982
      %v3013 = vpack.c.b16 %v2986, %v2983
      %v3014 = vpack.c.b16 %v2987, %v2984
      %v3015 = vpack.c.b16 %v2988, %v2988
      %v3016 = vpack.c.b16 %v2989, %v2989
      %v3017 = vpack.c.b16 %v2990, %v2990
      %v3019 = vshrl.u32 %v2991, 16
      %v3021 = vshll.u32 %v2991, 16
      %v3023 = vrot.slane %v3021, 1
      %v3024 = vor.u32 %v3019, %v3023
      %v3026 = vshll.u32 %v2994, 16
      %v3028 = vrot.slane %v3026, 1
      %v3029 = vsel %vm446, %v3024, %v3028
      %v3031 = vshrl.u32 %v2992, 16
      %v3033 = vshll.u32 %v2992, 16
      %v3035 = vrot.slane %v3033, 1
      %v3036 = vor.u32 %v3031, %v3035
      %v3038 = vshll.u32 %v2995, 16
      %v3040 = vrot.slane %v3038, 1
      %v3041 = vsel %vm446, %v3036, %v3040
      %v3043 = vshrl.u32 %v2993, 16
      %v3045 = vshll.u32 %v2993, 16
      %v3047 = vrot.slane %v3045, 1
      %v3048 = vor.u32 %v3043, %v3047
      %v3050 = vshll.u32 %v2996, 16
      %v3052 = vrot.slane %v3050, 1
      %v3053 = vsel %vm446, %v3048, %v3052
      %v3054 = vshrl.u32 %v2994, 16
      %v3056 = vor.u32 %v3054, %v3028
      %v3058 = vshll.u32 %v2997, 16
      %v3060 = vrot.slane %v3058, 1
      %v3061 = vsel %vm446, %v3056, %v3060
      %v3062 = vshrl.u32 %v2995, 16
      %v3064 = vor.u32 %v3062, %v3040
      %v3066 = vshll.u32 %v2998, 16
      %v3068 = vrot.slane %v3066, 1
      %v3069 = vsel %vm446, %v3064, %v3068
      %v3070 = vshrl.u32 %v2996, 16
      %v3072 = vor.u32 %v3070, %v3052
      %v3074 = vshll.u32 %v2999, 16
      %v3076 = vrot.slane %v3074, 1
      %v3077 = vsel %vm446, %v3072, %v3076
      %v3078 = vshrl.u32 %v2997, 16
      %v3080 = vor.u32 %v3078, %v3060
      %v3082 = vshll.u32 %v3000, 16
      %v3084 = vrot.slane %v3082, 1
      %v3085 = vsel %vm446, %v3080, %v3084
      %v3086 = vshrl.u32 %v2998, 16
      %v3088 = vor.u32 %v3086, %v3068
      %v3090 = vshll.u32 %v3001, 16
      %v3092 = vrot.slane %v3090, 1
      %v3093 = vsel %vm446, %v3088, %v3092
      %v3094 = vshrl.u32 %v2999, 16
      %v3096 = vor.u32 %v3094, %v3076
      %v3098 = vshll.u32 %v3002, 16
      %v3100 = vrot.slane %v3098, 1
      %v3101 = vsel %vm446, %v3096, %v3100
      %v3102 = vshrl.u32 %v3000, 16
      %v3104 = vor.u32 %v3102, %v3084
      %v3106 = vshll.u32 %v3003, 16
      %v3108 = vrot.slane %v3106, 1
      %v3109 = vsel %vm446, %v3104, %v3108
      %v3110 = vshrl.u32 %v3001, 16
      %v3112 = vor.u32 %v3110, %v3092
      %v3114 = vshll.u32 %v3004, 16
      %v3116 = vrot.slane %v3114, 1
      %v3117 = vsel %vm446, %v3112, %v3116
      %v3118 = vshrl.u32 %v3002, 16
      %v3120 = vor.u32 %v3118, %v3100
      %v3122 = vshll.u32 %v3005, 16
      %v3124 = vrot.slane %v3122, 1
      %v3125 = vsel %vm446, %v3120, %v3124
      %v3126 = vshrl.u32 %v3003, 16
      %v3128 = vor.u32 %v3126, %v3108
      %v3130 = vshll.u32 %v3006, 16
      %v3132 = vrot.slane %v3130, 1
      %v3133 = vsel %vm446, %v3128, %v3132
      %v3134 = vshrl.u32 %v3004, 16
      %v3136 = vor.u32 %v3134, %v3116
      %v3138 = vshll.u32 %v3007, 16
      %v3140 = vrot.slane %v3138, 1
      %v3141 = vsel %vm446, %v3136, %v3140
      %v3142 = vshrl.u32 %v3005, 16
      %v3144 = vor.u32 %v3142, %v3124
      %v3146 = vshll.u32 %v3008, 16
      %v3148 = vrot.slane %v3146, 1
      %v3149 = vsel %vm446, %v3144, %v3148
      %v3150 = vshrl.u32 %v3006, 16
      %v3152 = vor.u32 %v3150, %v3132
      %v3154 = vshll.u32 %v3009, 16
      %v3156 = vrot.slane %v3154, 1
      %v3157 = vsel %vm446, %v3152, %v3156
      %v3158 = vshrl.u32 %v3007, 16
      %v3160 = vor.u32 %v3158, %v3140
      %v3162 = vshll.u32 %v3010, 16
      %v3164 = vrot.slane %v3162, 1
      %v3165 = vsel %vm446, %v3160, %v3164
      %v3166 = vshrl.u32 %v3008, 16
      %v3168 = vor.u32 %v3166, %v3148
      %v3170 = vshll.u32 %v3011, 16
      %v3172 = vrot.slane %v3170, 1
      %v3173 = vsel %vm446, %v3168, %v3172
      %v3174 = vshrl.u32 %v3009, 16
      %v3176 = vor.u32 %v3174, %v3156
      %v3178 = vshll.u32 %v3012, 16
      %v3180 = vrot.slane %v3178, 1
      %v3181 = vsel %vm446, %v3176, %v3180
      %v3182 = vshrl.u32 %v3010, 16
      %v3184 = vor.u32 %v3182, %v3164
      %v3186 = vshll.u32 %v3013, 16
      %v3188 = vrot.slane %v3186, 1
      %v3189 = vsel %vm446, %v3184, %v3188
      %v3190 = vshrl.u32 %v3011, 16
      %v3192 = vor.u32 %v3190, %v3172
      %v3194 = vshll.u32 %v3014, 16
      %v3196 = vrot.slane %v3194, 1
      %v3197 = vsel %vm446, %v3192, %v3196
      %v3198 = vshrl.u32 %v3012, 16
      %v3200 = vor.u32 %v3198, %v3180
      %v3202 = vshll.u32 %v3015, 16
      %v3204 = vrot.slane %v3202, 1
      %v3205 = vsel %vm446, %v3200, %v3204
      %v3206 = vshrl.u32 %v3013, 16
      %v3208 = vor.u32 %v3206, %v3188
      %v3210 = vshll.u32 %v3016, 16
      %v3212 = vrot.slane %v3210, 1
      %v3213 = vsel %vm446, %v3208, %v3212
      %v3214 = vshrl.u32 %v3014, 16
      %v3216 = vor.u32 %v3214, %v3196
      %v3218 = vshll.u32 %v3017, 16
      %v3220 = vrot.slane %v3218, 1
      %v3221 = vsel %vm446, %v3216, %v3220
      %v3342 = vunpack.c.l.b16 %v2810
      %v3343 = vunpack.c.h.b16 %v2810
      %v3344 = vunpack.c.l.b16 %v2811
      %v3345 = vunpack.c.l.b16 %v2812
      %v3346 = vunpack.c.h.b16 %v2812
      %v3347 = vunpack.c.l.b16 %v2813
      %v3348 = vunpack.c.l.b16 %v2814
      %v3349 = vunpack.c.h.b16 %v2814
      %v3350 = vunpack.c.l.b16 %v2815
      %v3351 = vunpack.c.l.b16 %v2816
      %v3352 = vunpack.c.h.b16 %v2816
      %v3353 = vunpack.c.l.b16 %v2817
      %v3354 = vunpack.c.l.b16 %v2818
      %v3355 = vunpack.c.h.b16 %v2818
      %v3356 = vunpack.c.l.b16 %v2819
      %v3357 = vunpack.c.l.b16 %v2820
      %v3358 = vunpack.c.h.b16 %v2820
      %v3359 = vunpack.c.l.b16 %v2821
      %v3360 = vunpack.c.l.b16 %v2822
      %v3361 = vunpack.c.h.b16 %v2822
      %v3362 = vunpack.c.l.b16 %v2823
      %v3363 = vunpack.c.l.b16 %v2824
      %v3364 = vunpack.c.h.b16 %v2824
      %v3365 = vunpack.c.l.b16 %v2825
      %v3366 = vunpack.c.l.b16 %v2826
      %v3367 = vunpack.c.h.b16 %v2826
      %v3368 = vunpack.c.l.b16 %v2827
      %v3369 = vunpack.c.l.b16 %v2828
      %v3370 = vunpack.c.h.b16 %v2828
      %v3371 = vunpack.c.l.b16 %v2829
      %v3372 = vunpack.c.l.b16 %v2830
      %v3373 = vunpack.c.h.b16 %v2830
      %v3374 = vunpack.c.l.b16 %v2831
      %v3375 = vunpack.c.l.b16 %v2832
      %v3376 = vunpack.c.h.b16 %v2832
      %v3377 = vunpack.c.l.b16 %v2833
      %v3378 = vunpack.c.l.b16 %v2834
      %v3379 = vunpack.c.h.b16 %v2834
      %v3380 = vunpack.c.l.b16 %v2835
      %v3381 = vunpack.c.l.b16 %v2836
      %v3382 = vunpack.c.h.b16 %v2836
      %v3383 = vunpack.c.l.b16 %v2837
      %v3384 = vunpack.c.l.b16 %v2838
      %v3385 = vunpack.c.h.b16 %v2838
      %v3386 = vunpack.c.l.b16 %v2839
      %v3387 = vunpack.c.l.b16 %v2840
      %v3388 = vunpack.c.h.b16 %v2840
      %v3389 = vunpack.c.l.b16 %v2841
      %v3390 = vunpack.c.l.b16 %v2842
      %v3391 = vunpack.c.h.b16 %v2842
      %v3392 = vunpack.c.l.b16 %v2843
      %v3393 = vunpack.c.l.b16 %v2844
      %v3394 = vunpack.c.h.b16 %v2844
      %v3395 = vunpack.c.l.b16 %v2845
      %v3396 = vunpack.c.l.b16 %v2846
      %v3397 = vunpack.c.h.b16 %v2846
      %v3398 = vunpack.c.l.b16 %v2847
      %v3399 = vunpack.c.l.b16 %v2848
      %v3400 = vunpack.c.h.b16 %v2848
      %v3401 = vunpack.c.l.b16 %v2849
      %v3402 = vunpack.c.l.b16 %v2850
      %v3403 = vunpack.c.h.b16 %v2850
      %v3404 = vunpack.c.l.b16 %v2851
      %v3405 = vunpack.c.l.b16 %v2852
      %v3406 = vunpack.c.h.b16 %v2852
      %v3407 = vunpack.c.l.b16 %v2853
      %v3408 = vunpack.c.l.b16 %v2854
      %v3409 = vunpack.c.h.b16 %v2854
      %v3410 = vunpack.c.l.b16 %v2855
      %v3411 = vunpack.c.l.b16 %v2856
      %v3412 = vunpack.c.h.b16 %v2856
      %v3413 = vunpack.c.l.b16 %v2857
      %v3414 = vunpack.c.l.b16 %v2858
      %v3415 = vunpack.c.h.b16 %v2858
      %v3416 = vunpack.c.l.b16 %v2859
      %v3417 = vunpack.c.l.b16 %v2860
      %v3418 = vunpack.c.h.b16 %v2860
      %v3419 = vunpack.c.l.b16 %v2861
      %v3420 = vunpack.c.l.b16 %v2862
      %v3421 = vunpack.c.h.b16 %v2862
      %v3422 = vunpack.c.l.b16 %v2863
      %v3423 = vunpack.c.l.b16 %v2864
      %v3424 = vunpack.c.h.b16 %v2864
      %v3425 = vunpack.c.l.b16 %v2865
      %v3426 = vunpack.c.l.b16 %v2866
      %v3427 = vunpack.c.h.b16 %v2866
      %v3428 = vunpack.c.l.b16 %v2867
      %v3429 = vunpack.c.l.b16 %v2868
      %v3430 = vunpack.c.h.b16 %v2868
      %v3431 = vunpack.c.l.b16 %v2869
      %v3432 = vunpack.c.l.b16 %v2870
      %v3433 = vunpack.c.h.b16 %v2870
      %v3434 = vunpack.c.l.b16 %v2871
      %v3435 = vunpack.c.l.b16 %v2872
      %v3436 = vunpack.c.h.b16 %v2872
      %v3437 = vunpack.c.l.b16 %v2873
      %v3438 = vunpack.c.l.b16 %v2874
      %v3439 = vunpack.c.h.b16 %v2874
      %v3440 = vunpack.c.l.b16 %v2875
      %v3441 = vunpack.c.l.b16 %v2876
      %v3442 = vunpack.c.h.b16 %v2876
      %v3443 = vunpack.c.l.b16 %v2877
      %v3444 = vunpack.c.l.b16 %v2878
      %v3445 = vunpack.c.h.b16 %v2878
      %v3446 = vunpack.c.l.b16 %v2879
      %v3447 = vunpack.c.l.b16 %v2880
      %v3448 = vunpack.c.h.b16 %v2880
      %v3449 = vunpack.c.l.b16 %v2881
      %v3450 = vunpack.c.l.b16 %v2882
      %v3451 = vunpack.c.h.b16 %v2882
      %v3452 = vunpack.c.l.b16 %v2883
      %v3453 = vunpack.c.l.b16 %v2884
      %v3454 = vunpack.c.h.b16 %v2884
      %v3455 = vunpack.c.l.b16 %v2885
      %v3456 = vunpack.c.l.b16 %v2886
      %v3457 = vunpack.c.h.b16 %v2886
      %v3458 = vunpack.c.l.b16 %v2887
      %v3459 = vunpack.c.l.b16 %v2888
      %v3460 = vunpack.c.h.b16 %v2888
      %v3461 = vunpack.c.l.b16 %v2889
      %v3462 = vunpack.c.l.b16 %v2890
      %v3463 = vunpack.c.h.b16 %v2890
      %v3464 = vunpack.c.l.b16 %v2891
      %v3465 = vunpack.c.l.b16 %v2892
      %v3466 = vunpack.c.h.b16 %v2892
      %v3467 = vunpack.c.l.b16 %v2893
      %v3468 = vunpack.c.l.b16 %v2894
      %v3469 = vunpack.c.h.b16 %v2894
      %v3470 = vunpack.c.l.b16 %v2895
      %v3471 = vunpack.c.l.b16 %v2896
      %v3472 = vunpack.c.h.b16 %v2896
      %v3473 = vunpack.c.l.b16 %v2897
      %v3474 = vunpack.c.l.b16 %v2898
      %v3475 = vunpack.c.h.b16 %v2898
      %v3476 = vunpack.c.l.b16 %v2899
      %v3477 = vunpack.c.l.b16 %v2900
      %v3478 = vunpack.c.h.b16 %v2900
      %v3479 = vunpack.c.l.b16 %v2901
      %v3480 = vunpack.c.l.b16 %v2902
      %v3481 = vunpack.c.h.b16 %v2902
      %v3482 = vunpack.c.l.b16 %v2903
      %v3483 = vunpack.c.l.b16 %v2904
      %v3484 = vunpack.c.h.b16 %v2904
      %v3485 = vunpack.c.l.b16 %v2905
      %v3486 = vpack.c.b16 %v3345, %v3342
      %v3487 = vpack.c.b16 %v3346, %v3343
      %v3488 = vpack.c.b16 %v3347, %v3344
      %v3489 = vpack.c.b16 %v3351, %v3348
      %v3490 = vpack.c.b16 %v3352, %v3349
      %v3491 = vpack.c.b16 %v3353, %v3350
      %v3492 = vpack.c.b16 %v3357, %v3354
      %v3493 = vpack.c.b16 %v3358, %v3355
      %v3494 = vpack.c.b16 %v3359, %v3356
      %v3495 = vpack.c.b16 %v3363, %v3360
      %v3496 = vpack.c.b16 %v3364, %v3361
      %v3497 = vpack.c.b16 %v3365, %v3362
      %v3498 = vpack.c.b16 %v3369, %v3366
      %v3499 = vpack.c.b16 %v3370, %v3367
      %v3500 = vpack.c.b16 %v3371, %v3368
      %v3501 = vpack.c.b16 %v3375, %v3372
      %v3502 = vpack.c.b16 %v3376, %v3373
      %v3503 = vpack.c.b16 %v3377, %v3374
      %v3504 = vpack.c.b16 %v3381, %v3378
      %v3505 = vpack.c.b16 %v3382, %v3379
      %v3506 = vpack.c.b16 %v3383, %v3380
      %v3507 = vpack.c.b16 %v3387, %v3384
      %v3508 = vpack.c.b16 %v3388, %v3385
      %v3509 = vpack.c.b16 %v3389, %v3386
      %v3510 = vpack.c.b16 %v3393, %v3390
      %v3511 = vpack.c.b16 %v3394, %v3391
      %v3512 = vpack.c.b16 %v3395, %v3392
      %v3513 = vpack.c.b16 %v3399, %v3396
      %v3514 = vpack.c.b16 %v3400, %v3397
      %v3515 = vpack.c.b16 %v3401, %v3398
      %v3516 = vpack.c.b16 %v3405, %v3402
      %v3517 = vpack.c.b16 %v3406, %v3403
      %v3518 = vpack.c.b16 %v3407, %v3404
      %v3519 = vpack.c.b16 %v3411, %v3408
      %v3520 = vpack.c.b16 %v3412, %v3409
      %v3521 = vpack.c.b16 %v3413, %v3410
      %v3522 = vpack.c.b16 %v3417, %v3414
      %v3523 = vpack.c.b16 %v3418, %v3415
      %v3524 = vpack.c.b16 %v3419, %v3416
      %v3525 = vpack.c.b16 %v3423, %v3420
      %v3526 = vpack.c.b16 %v3424, %v3421
      %v3527 = vpack.c.b16 %v3425, %v3422
      %v3528 = vpack.c.b16 %v3429, %v3426
      %v3529 = vpack.c.b16 %v3430, %v3427
      %v3530 = vpack.c.b16 %v3431, %v3428
      %v3531 = vpack.c.b16 %v3435, %v3432
      %v3532 = vpack.c.b16 %v3436, %v3433
      %v3533 = vpack.c.b16 %v3437, %v3434
      %v3534 = vpack.c.b16 %v3441, %v3438
      %v3535 = vpack.c.b16 %v3442, %v3439
      %v3536 = vpack.c.b16 %v3443, %v3440
      %v3537 = vpack.c.b16 %v3447, %v3444
      %v3538 = vpack.c.b16 %v3448, %v3445
      %v3539 = vpack.c.b16 %v3449, %v3446
      %v3540 = vpack.c.b16 %v3453, %v3450
      %v3541 = vpack.c.b16 %v3454, %v3451
      %v3542 = vpack.c.b16 %v3455, %v3452
      %v3543 = vpack.c.b16 %v3459, %v3456
      %v3544 = vpack.c.b16 %v3460, %v3457
      %v3545 = vpack.c.b16 %v3461, %v3458
      %v3546 = vpack.c.b16 %v3465, %v3462
      %v3547 = vpack.c.b16 %v3466, %v3463
      %v3548 = vpack.c.b16 %v3467, %v3464
      %v3549 = vpack.c.b16 %v3471, %v3468
      %v3550 = vpack.c.b16 %v3472, %v3469
      %v3551 = vpack.c.b16 %v3473, %v3470
      %v3552 = vpack.c.b16 %v3477, %v3474
      %v3553 = vpack.c.b16 %v3478, %v3475
      %v3554 = vpack.c.b16 %v3479, %v3476
      %v3555 = vpack.c.b16 %v3483, %v3480
      %v3556 = vpack.c.b16 %v3484, %v3481
      %v3557 = vpack.c.b16 %v3485, %v3482
      %3630 = vmatprep.subr.bf16.mxu0 %v3508
      %3631 = vmatpush1.bf16.msra.mxu0 %v3507
      %3632 = vmatprep.subr.bf16.mxu0 %v3505
      %3633 = vmatpush1.bf16.msra.mxu0 %v3504
      %3634 = vmatprep.subr.bf16.mxu0 %v3502
      %3635 = vmatpush1.bf16.msra.mxu0 %v3501
      %3636 = vmatprep.subr.bf16.mxu0 %v3499
      %3637 = vmatpush1.bf16.msra.mxu0 %v3498
      %3638 = vmatprep.subr.bf16.mxu0 %v3496
      %3639 = vmatpush1.bf16.msra.mxu0 %v3495
      %3640 = vmatprep.subr.bf16.mxu0 %v3493
      %3641 = vmatpush1.bf16.msra.mxu0 %v3492
      %3642 = vmatprep.subr.bf16.mxu0 %v3490
      %3643 = vmatpush1.bf16.msra.mxu0 %v3489
      %3644 = vmatprep.subr.bf16.mxu0 %v3487
      %3645 = vmatpush1.bf16.msra.mxu0 %v3486
      %3646 = vmatprep.subr.bf16.mxu0 %v3532
      %3647 = vmatpush2.bf16.msra.mxu0 %v3531
      %3648 = vmatprep.subr.bf16.mxu0 %v3529
      %3649 = vmatpush2.bf16.msra.mxu0 %v3528
      %3650 = vmatprep.subr.bf16.mxu0 %v3526
      %3651 = vmatpush2.bf16.msra.mxu0 %v3525
      %3652 = vmatprep.subr.bf16.mxu0 %v3523
      %3653 = vmatpush2.bf16.msra.mxu0 %v3522
      %3654 = vmatprep.subr.bf16.mxu0 %v3520
      %3655 = vmatpush2.bf16.msra.mxu0 %v3519
      %3656 = vmatprep.subr.bf16.mxu0 %v3517
      %3657 = vmatpush2.bf16.msra.mxu0 %v3516
      %3658 = vmatprep.subr.bf16.mxu0 %v3514
      %3659 = vmatpush2.bf16.msra.mxu0 %v3513
      %3660 = vmatprep.subr.bf16.mxu0 %v3511
      %3661 = vmatpush2.bf16.msra.mxu0 %v3510
      %3662 = vmatprep.mubr.bf16.mxu0 %v3041
      %3663 = vmatmul.mubr.bf16.gmra.mxu0 %v3029
      %v3664 = vpop.f32.mrf.mxu0
      %v3665 = vadd.f32 0.0, %v3664
      %v3666 = vpop.f32.mrf.mxu0
      %v3667 = vadd.f32 0.0, %v3666
      %v3668 = vpop.f32.mrf.mxu0
      %v3669 = vadd.f32 0.0, %v3668
      %v3670 = vpop.f32.mrf.mxu0
      %v3671 = vadd.f32 0.0, %v3670
      %3672 = vmatprep.mubr.bf16.mxu0 %v3069
      %3673 = vmatmul.mubr.bf16.gmra.mxu0 %v3061
      %v3674 = vpop.f32.mrf.mxu0
      %v3675 = vadd.f32 0.0, %v3674
      %v3676 = vpop.f32.mrf.mxu0
      %v3677 = vadd.f32 0.0, %v3676
      %v3678 = vpop.f32.mrf.mxu0
      %v3679 = vadd.f32 0.0, %v3678
      %v3680 = vpop.f32.mrf.mxu0
      %v3681 = vadd.f32 0.0, %v3680
      %3682 = vmatprep.mubr.bf16.mxu0 %v3093
      %3683 = vmatmul.mubr.bf16.gmra.mxu0 %v3085
      %v3684 = vpop.f32.mrf.mxu0
      %v3685 = vadd.f32 0.0, %v3684
      %v3686 = vpop.f32.mrf.mxu0
      %v3687 = vadd.f32 0.0, %v3686
      %v3688 = vpop.f32.mrf.mxu0
      %v3689 = vadd.f32 0.0, %v3688
      %v3690 = vpop.f32.mrf.mxu0
      %v3691 = vadd.f32 0.0, %v3690
      %3692 = vmatprep.mubr.bf16.mxu0 %v3117
      %3693 = vmatmul.mubr.bf16.gmra.mxu0 %v3109
      %v3694 = vpop.f32.mrf.mxu0
      %v3695 = vadd.f32 0.0, %v3694
      %v3696 = vpop.f32.mrf.mxu0
      %v3697 = vadd.f32 0.0, %v3696
      %v3698 = vpop.f32.mrf.mxu0
      %v3699 = vadd.f32 0.0, %v3698
      %v3700 = vpop.f32.mrf.mxu0
      %v3701 = vadd.f32 0.0, %v3700
      %3702 = vmatprep.mubr.bf16.mxu0 %v3141
      %3703 = vmatmul.mubr.bf16.gmra.mxu0 %v3133
      %v3704 = vpop.f32.mrf.mxu0
      %v3705 = vadd.f32 0.0, %v3704
      %v3706 = vpop.f32.mrf.mxu0
      %v3707 = vadd.f32 0.0, %v3706
      %v3708 = vpop.f32.mrf.mxu0
      %v3709 = vadd.f32 0.0, %v3708
      %v3710 = vpop.f32.mrf.mxu0
      %v3711 = vadd.f32 0.0, %v3710
      %3712 = vmatprep.mubr.bf16.mxu0 %v3165
      %3713 = vmatmul.mubr.bf16.gmra.mxu0 %v3157
      %v3714 = vpop.f32.mrf.mxu0
      %v3715 = vadd.f32 0.0, %v3714
      %v3716 = vpop.f32.mrf.mxu0
      %v3717 = vadd.f32 0.0, %v3716
      %v3718 = vpop.f32.mrf.mxu0
      %v3719 = vadd.f32 0.0, %v3718
      %v3720 = vpop.f32.mrf.mxu0
      %v3721 = vadd.f32 0.0, %v3720
      %3722 = vmatprep.mubr.bf16.mxu0 %v3189
      %3723 = vmatmul.mubr.bf16.gmra.mxu0 %v3181
      %v3724 = vpop.f32.mrf.mxu0
      %v3725 = vadd.f32 0.0, %v3724
      %v3726 = vpop.f32.mrf.mxu0
      %v3727 = vadd.f32 0.0, %v3726
      %v3728 = vpop.f32.mrf.mxu0
      %v3729 = vadd.f32 0.0, %v3728
      %v3730 = vpop.f32.mrf.mxu0
      %v3731 = vadd.f32 0.0, %v3730
      %3732 = vmatprep.mubr.bf16.mxu0 %v3213
      %3733 = vmatmul.mubr.bf16.gmra.mxu0 %v3205
      %v3734 = vpop.f32.mrf.mxu0
      %v3735 = vadd.f32 0.0, %v3734
      %v3736 = vpop.f32.mrf.mxu0
      %v3737 = vadd.f32 0.0, %v3736
      %v3738 = vpop.f32.mrf.mxu0
      %v3739 = vadd.f32 0.0, %v3738
      %v3740 = vpop.f32.mrf.mxu0
      %v3741 = vadd.f32 0.0, %v3740
      %3742 = vdwg.mxu0
      %3743 = vmatprep.subr.bf16.mxu0 %v3556
      %3744 = vmatpush1.bf16.msra.mxu0 %v3555
      %3745 = vmatprep.subr.bf16.mxu0 %v3553
      %3746 = vmatpush1.bf16.msra.mxu0 %v3552
      %3747 = vmatprep.subr.bf16.mxu0 %v3550
      %3748 = vmatpush1.bf16.msra.mxu0 %v3549
      %3749 = vmatprep.subr.bf16.mxu0 %v3547
      %3750 = vmatpush1.bf16.msra.mxu0 %v3546
      %3751 = vmatprep.subr.bf16.mxu0 %v3544
      %3752 = vmatpush1.bf16.msra.mxu0 %v3543
      %3753 = vmatprep.subr.bf16.mxu0 %v3541
      %3754 = vmatpush1.bf16.msra.mxu0 %v3540
      %3755 = vmatprep.subr.bf16.mxu0 %v3538
      %3756 = vmatpush1.bf16.msra.mxu0 %v3537
      %3757 = vmatprep.subr.bf16.mxu0 %v3535
      %3758 = vmatpush1.bf16.msra.mxu0 %v3534
      %3759 = vmatprep.subr.bf16.mxu0 0
      %3760 = vmatpush2.bf16.msra.mxu0 0
      %3761 = vmatprep.subr.bf16.mxu0 0
      %3762 = vmatpush2.bf16.msra.mxu0 0
      %3763 = vmatprep.subr.bf16.mxu0 0
      %3764 = vmatpush2.bf16.msra.mxu0 0
      %3765 = vmatprep.subr.bf16.mxu0 0
      %3766 = vmatpush2.bf16.msra.mxu0 0
      %3767 = vmatprep.subr.bf16.mxu0 0
      %3768 = vmatpush2.bf16.msra.mxu0 0
      %3769 = vmatprep.subr.bf16.mxu0 0
      %3770 = vmatpush2.bf16.msra.mxu0 0
      %3771 = vmatprep.subr.bf16.mxu0 0
      %3772 = vmatpush2.bf16.msra.mxu0 0
      %3773 = vmatprep.subr.bf16.mxu0 0
      %3774 = vmatpush2.bf16.msra.mxu0 0
      %3775 = vmatprep.mubr.bf16.mxu0 0
      %3776 = vmatmul.mubr.bf16.gmra.mxu0 %v3053
      %v3777 = vpop.f32.mrf.mxu0
      %v3778 = vadd.f32 %v3665, %v3777
      %v3779 = vpop.f32.mrf.mxu0
      %v3780 = vadd.f32 %v3667, %v3779
      %v3781 = vpop.f32.mrf.mxu0
      %v3782 = vadd.f32 %v3669, %v3781
      %v3783 = vpop.f32.mrf.mxu0
      %v3784 = vadd.f32 %v3671, %v3783
      %3785 = vmatprep.mubr.bf16.mxu0 0
      %3786 = vmatmul.mubr.bf16.gmra.mxu0 %v3077
      %v3787 = vpop.f32.mrf.mxu0
      %v3788 = vadd.f32 %v3675, %v3787
      %v3789 = vpop.f32.mrf.mxu0
      %v3790 = vadd.f32 %v3677, %v3789
      %v3791 = vpop.f32.mrf.mxu0
      %v3792 = vadd.f32 %v3679, %v3791
      %v3793 = vpop.f32.mrf.mxu0
      %v3794 = vadd.f32 %v3681, %v3793
      %3795 = vmatprep.mubr.bf16.mxu0 0
      %3796 = vmatmul.mubr.bf16.gmra.mxu0 %v3101
      %v3797 = vpop.f32.mrf.mxu0
      %v3798 = vadd.f32 %v3685, %v3797
      %v3799 = vpop.f32.mrf.mxu0
      %v3800 = vadd.f32 %v3687, %v3799
      %v3801 = vpop.f32.mrf.mxu0
      %v3802 = vadd.f32 %v3689, %v3801
      %v3803 = vpop.f32.mrf.mxu0
      %v3804 = vadd.f32 %v3691, %v3803
      %3805 = vmatprep.mubr.bf16.mxu0 0
      %3806 = vmatmul.mubr.bf16.gmra.mxu0 %v3125
      %v3807 = vpop.f32.mrf.mxu0
      %v3808 = vadd.f32 %v3695, %v3807
      %v3809 = vpop.f32.mrf.mxu0
      %v3810 = vadd.f32 %v3697, %v3809
      %v3811 = vpop.f32.mrf.mxu0
      %v3812 = vadd.f32 %v3699, %v3811
      %v3813 = vpop.f32.mrf.mxu0
      %v3814 = vadd.f32 %v3701, %v3813
      %3815 = vmatprep.mubr.bf16.mxu0 0
      %3816 = vmatmul.mubr.bf16.gmra.mxu0 %v3149
      %v3817 = vpop.f32.mrf.mxu0
      %v3818 = vadd.f32 %v3705, %v3817
      %v3819 = vpop.f32.mrf.mxu0
      %v3820 = vadd.f32 %v3707, %v3819
      %v3821 = vpop.f32.mrf.mxu0
      %v3822 = vadd.f32 %v3709, %v3821
      %v3823 = vpop.f32.mrf.mxu0
      %v3824 = vadd.f32 %v3711, %v3823
      %3825 = vmatprep.mubr.bf16.mxu0 0
      %3826 = vmatmul.mubr.bf16.gmra.mxu0 %v3173
      %v3827 = vpop.f32.mrf.mxu0
      %v3828 = vadd.f32 %v3715, %v3827
      %v3829 = vpop.f32.mrf.mxu0
      %v3830 = vadd.f32 %v3717, %v3829
      %v3831 = vpop.f32.mrf.mxu0
      %v3832 = vadd.f32 %v3719, %v3831
      %v3833 = vpop.f32.mrf.mxu0
      %v3834 = vadd.f32 %v3721, %v3833
      %3835 = vmatprep.mubr.bf16.mxu0 0
      %3836 = vmatmul.mubr.bf16.gmra.mxu0 %v3197
      %v3837 = vpop.f32.mrf.mxu0
      %v3838 = vadd.f32 %v3725, %v3837
      %v3839 = vpop.f32.mrf.mxu0
      %v3840 = vadd.f32 %v3727, %v3839
      %v3841 = vpop.f32.mrf.mxu0
      %v3842 = vadd.f32 %v3729, %v3841
      %v3843 = vpop.f32.mrf.mxu0
      %v3844 = vadd.f32 %v3731, %v3843
      %3845 = vmatprep.mubr.bf16.mxu0 0
      %3846 = vmatmul.mubr.bf16.gmra.mxu0 %v3221
      %v3847 = vpop.f32.mrf.mxu0
      %v3848 = vadd.f32 %v3735, %v3847
      %v3849 = vpop.f32.mrf.mxu0
      %v3850 = vadd.f32 %v3737, %v3849
      %v3851 = vpop.f32.mrf.mxu0
      %v3852 = vadd.f32 %v3739, %v3851
      %v3853 = vpop.f32.mrf.mxu0
      %v3854 = vadd.f32 %v3741, %v3853
      %3855 = vdwg.mxu0
      %3856 = vmatprep.subr.bf16.mxu0 0
      %3857 = vmatpush1.bf16.msra.mxu0 %v3509
      %3858 = vmatprep.subr.bf16.mxu0 0
      %3859 = vmatpush1.bf16.msra.mxu0 %v3506
      %3860 = vmatprep.subr.bf16.mxu0 0
      %3861 = vmatpush1.bf16.msra.mxu0 %v3503
      %3862 = vmatprep.subr.bf16.mxu0 0
      %3863 = vmatpush1.bf16.msra.mxu0 %v3500
      %3864 = vmatprep.subr.bf16.mxu0 0
      %3865 = vmatpush1.bf16.msra.mxu0 %v3497
      %3866 = vmatprep.subr.bf16.mxu0 0
      %3867 = vmatpush1.bf16.msra.mxu0 %v3494
      %3868 = vmatprep.subr.bf16.mxu0 0
      %3869 = vmatpush1.bf16.msra.mxu0 %v3491
      %3870 = vmatprep.subr.bf16.mxu0 0
      %3871 = vmatpush1.bf16.msra.mxu0 %v3488
      %3872 = vmatprep.subr.bf16.mxu0 0
      %3873 = vmatpush2.bf16.msra.mxu0 %v3533
      %3874 = vmatprep.subr.bf16.mxu0 0
      %3875 = vmatpush2.bf16.msra.mxu0 %v3530
      %3876 = vmatprep.subr.bf16.mxu0 0
      %3877 = vmatpush2.bf16.msra.mxu0 %v3527
      %3878 = vmatprep.subr.bf16.mxu0 0
      %3879 = vmatpush2.bf16.msra.mxu0 %v3524
      %3880 = vmatprep.subr.bf16.mxu0 0
      %3881 = vmatpush2.bf16.msra.mxu0 %v3521
      %3882 = vmatprep.subr.bf16.mxu0 0
      %3883 = vmatpush2.bf16.msra.mxu0 %v3518
      %3884 = vmatprep.subr.bf16.mxu0 0
      %3885 = vmatpush2.bf16.msra.mxu0 %v3515
      %3886 = vmatprep.subr.bf16.mxu0 0
      %3887 = vmatpush2.bf16.msra.mxu0 %v3512
      %3888 = vmatprep.mubr.bf16.mxu0 %v3041
      %3889 = vmatmul.mubr.bf16.gmra.mxu0 %v3029
      %v3890 = vpop.f32.mrf.mxu0
      %v3891 = vadd.f32 0.0, %v3890
      %v3892 = vpop.f32.mrf.mxu0
      %v3893 = vpop.f32.mrf.mxu0
      %v3894 = vadd.f32 0.0, %v3893
      %v3895 = vpop.f32.mrf.mxu0
      %3896 = vmatprep.mubr.bf16.mxu0 %v3069
      %3897 = vmatmul.mubr.bf16.gmra.mxu0 %v3061
      %v3898 = vpop.f32.mrf.mxu0
      %v3899 = vadd.f32 0.0, %v3898
      %v3900 = vpop.f32.mrf.mxu0
      %v3901 = vpop.f32.mrf.mxu0
      %v3902 = vadd.f32 0.0, %v3901
      %v3903 = vpop.f32.mrf.mxu0
      %3904 = vmatprep.mubr.bf16.mxu0 %v3093
      %3905 = vmatmul.mubr.bf16.gmra.mxu0 %v3085
      %v3906 = vpop.f32.mrf.mxu0
      %v3907 = vadd.f32 0.0, %v3906
      %v3908 = vpop.f32.mrf.mxu0
      %v3909 = vpop.f32.mrf.mxu0
      %v3910 = vadd.f32 0.0, %v3909
      %v3911 = vpop.f32.mrf.mxu0
      %3912 = vmatprep.mubr.bf16.mxu0 %v3117
      %3913 = vmatmul.mubr.bf16.gmra.mxu0 %v3109
      %v3914 = vpop.f32.mrf.mxu0
      %v3915 = vadd.f32 0.0, %v3914
      %v3916 = vpop.f32.mrf.mxu0
      %v3917 = vpop.f32.mrf.mxu0
      %v3918 = vadd.f32 0.0, %v3917
      %v3919 = vpop.f32.mrf.mxu0
      %3920 = vmatprep.mubr.bf16.mxu0 %v3141
      %3921 = vmatmul.mubr.bf16.gmra.mxu0 %v3133
      %v3922 = vpop.f32.mrf.mxu0
      %v3923 = vadd.f32 0.0, %v3922
      %v3924 = vpop.f32.mrf.mxu0
      %v3925 = vpop.f32.mrf.mxu0
      %v3926 = vadd.f32 0.0, %v3925
      %v3927 = vpop.f32.mrf.mxu0
      %3928 = vmatprep.mubr.bf16.mxu0 %v3165
      %3929 = vmatmul.mubr.bf16.gmra.mxu0 %v3157
      %v3930 = vpop.f32.mrf.mxu0
      %v3931 = vadd.f32 0.0, %v3930
      %v3932 = vpop.f32.mrf.mxu0
      %v3933 = vpop.f32.mrf.mxu0
      %v3934 = vadd.f32 0.0, %v3933
      %v3935 = vpop.f32.mrf.mxu0
      %3936 = vmatprep.mubr.bf16.mxu0 %v3189
      %3937 = vmatmul.mubr.bf16.gmra.mxu0 %v3181
      %v3938 = vpop.f32.mrf.mxu0
      %v3939 = vadd.f32 0.0, %v3938
      %v3940 = vpop.f32.mrf.mxu0
      %v3941 = vpop.f32.mrf.mxu0
      %v3942 = vadd.f32 0.0, %v3941
      %v3943 = vpop.f32.mrf.mxu0
      %3944 = vmatprep.mubr.bf16.mxu0 %v3213
      %3945 = vmatmul.mubr.bf16.gmra.mxu0 %v3205
      %v3946 = vpop.f32.mrf.mxu0
      %v3947 = vadd.f32 0.0, %v3946
      %v3948 = vpop.f32.mrf.mxu0
      %v3949 = vpop.f32.mrf.mxu0
      %v3950 = vadd.f32 0.0, %v3949
      %v3951 = vpop.f32.mrf.mxu0
      %3952 = vdwg.mxu0
      %3953 = vmatprep.subr.bf16.mxu0 0
      %3954 = vmatpush1.bf16.msra.mxu0 %v3557
      %3955 = vmatprep.subr.bf16.mxu0 0
      %3956 = vmatpush1.bf16.msra.mxu0 %v3554
      %3957 = vmatprep.subr.bf16.mxu0 0
      %3958 = vmatpush1.bf16.msra.mxu0 %v3551
      %3959 = vmatprep.subr.bf16.mxu0 0
      %3960 = vmatpush1.bf16.msra.mxu0 %v3548
      %3961 = vmatprep.subr.bf16.mxu0 0
      %3962 = vmatpush1.bf16.msra.mxu0 %v3545
      %3963 = vmatprep.subr.bf16.mxu0 0
      %3964 = vmatpush1.bf16.msra.mxu0 %v3542
      %3965 = vmatprep.subr.bf16.mxu0 0
      %3966 = vmatpush1.bf16.msra.mxu0 %v3539
      %3967 = vmatprep.subr.bf16.mxu0 0
      %3968 = vmatpush1.bf16.msra.mxu0 %v3536
      %3969 = vmatprep.subr.bf16.mxu0 0
      %3970 = vmatpush2.bf16.msra.mxu0 0
      %3971 = vmatprep.subr.bf16.mxu0 0
      %3972 = vmatpush2.bf16.msra.mxu0 0
      %3973 = vmatprep.subr.bf16.mxu0 0
      %3974 = vmatpush2.bf16.msra.mxu0 0
      %3975 = vmatprep.subr.bf16.mxu0 0
      %3976 = vmatpush2.bf16.msra.mxu0 0
      %3977 = vmatprep.subr.bf16.mxu0 0
      %3978 = vmatpush2.bf16.msra.mxu0 0
      %3979 = vmatprep.subr.bf16.mxu0 0
      %3980 = vmatpush2.bf16.msra.mxu0 0
      %3981 = vmatprep.subr.bf16.mxu0 0
      %3982 = vmatpush2.bf16.msra.mxu0 0
      %3983 = vmatprep.subr.bf16.mxu0 0
      %3984 = vmatpush2.bf16.msra.mxu0 0
      %3985 = vmatprep.mubr.bf16.mxu0 0
      %3986 = vmatmul.mubr.bf16.gmra.mxu0 %v3053
      %v3987 = vpop.f32.mrf.mxu0
      %v3988 = vadd.f32 %v3891, %v3987
      %v3989 = vpop.f32.mrf.mxu0
      %v3990 = vpop.f32.mrf.mxu0
      %v3991 = vadd.f32 %v3894, %v3990
      %v3992 = vpop.f32.mrf.mxu0
      %3993 = vmatprep.mubr.bf16.mxu0 0
      %3994 = vmatmul.mubr.bf16.gmra.mxu0 %v3077
      %v3995 = vpop.f32.mrf.mxu0
      %v3996 = vadd.f32 %v3899, %v3995
      %v3997 = vpop.f32.mrf.mxu0
      %v3998 = vpop.f32.mrf.mxu0
      %v3999 = vadd.f32 %v3902, %v3998
      %v4000 = vpop.f32.mrf.mxu0
      %4001 = vmatprep.mubr.bf16.mxu0 0
      %4002 = vmatmul.mubr.bf16.gmra.mxu0 %v3101
      %v4003 = vpop.f32.mrf.mxu0
      %v4004 = vadd.f32 %v3907, %v4003
      %v4005 = vpop.f32.mrf.mxu0
      %v4006 = vpop.f32.mrf.mxu0
      %v4007 = vadd.f32 %v3910, %v4006
      %v4008 = vpop.f32.mrf.mxu0
      %4009 = vmatprep.mubr.bf16.mxu0 0
      %4010 = vmatmul.mubr.bf16.gmra.mxu0 %v3125
      %v4011 = vpop.f32.mrf.mxu0
      %v4012 = vadd.f32 %v3915, %v4011
      %v4013 = vpop.f32.mrf.mxu0
      %v4014 = vpop.f32.mrf.mxu0
      %v4015 = vadd.f32 %v3918, %v4014
      %v4016 = vpop.f32.mrf.mxu0
      %4017 = vmatprep.mubr.bf16.mxu0 0
      %4018 = vmatmul.mubr.bf16.gmra.mxu0 %v3149
      %v4019 = vpop.f32.mrf.mxu0
      %v4020 = vadd.f32 %v3923, %v4019
      %v4021 = vpop.f32.mrf.mxu0
      %v4022 = vpop.f32.mrf.mxu0
      %v4023 = vadd.f32 %v3926, %v4022
      %v4024 = vpop.f32.mrf.mxu0
      %4025 = vmatprep.mubr.bf16.mxu0 0
      %4026 = vmatmul.mubr.bf16.gmra.mxu0 %v3173
      %v4027 = vpop.f32.mrf.mxu0
      %v4028 = vadd.f32 %v3931, %v4027
      %v4029 = vpop.f32.mrf.mxu0
      %v4030 = vpop.f32.mrf.mxu0
      %v4031 = vadd.f32 %v3934, %v4030
      %v4032 = vpop.f32.mrf.mxu0
      %4033 = vmatprep.mubr.bf16.mxu0 0
      %4034 = vmatmul.mubr.bf16.gmra.mxu0 %v3197
      %v4035 = vpop.f32.mrf.mxu0
      %v4036 = vadd.f32 %v3939, %v4035
      %v4037 = vpop.f32.mrf.mxu0
      %v4038 = vpop.f32.mrf.mxu0
      %v4039 = vadd.f32 %v3942, %v4038
      %v4040 = vpop.f32.mrf.mxu0
      %4041 = vmatprep.mubr.bf16.mxu0 0
      %4042 = vmatmul.mubr.bf16.gmra.mxu0 %v3221
      %v4043 = vpop.f32.mrf.mxu0
      %v4044 = vadd.f32 %v3947, %v4043
      %v4045 = vpop.f32.mrf.mxu0
      %v4046 = vpop.f32.mrf.mxu0
      %v4047 = vadd.f32 %v3950, %v4046
      %v4048 = vpop.f32.mrf.mxu0
      %4049 = vdwg.mxu0
      %v4082 = vunpack.c.l.b16 %v2647
      %v4083 = vunpack.c.h.b16 %v2647
      %v4084 = vunpack.c.l.b16 %v2648
      %v4085 = vunpack.c.l.b16 %v2649
      %v4086 = vunpack.c.h.b16 %v2649
      %v4087 = vunpack.c.l.b16 %v2650
      %v4088 = vunpack.c.l.b16 %v2651
      %v4089 = vunpack.c.h.b16 %v2651
      %v4090 = vunpack.c.l.b16 %v2652
      %v4091 = vunpack.c.l.b16 %v2653
      %v4092 = vunpack.c.h.b16 %v2653
      %v4093 = vunpack.c.l.b16 %v2654
      %v4094 = vunpack.c.l.b16 %v2655
      %v4095 = vunpack.c.h.b16 %v2655
      %v4096 = vunpack.c.l.b16 %v2656
      %v4097 = vunpack.c.l.b16 %v2657
      %v4098 = vunpack.c.h.b16 %v2657
      %v4099 = vunpack.c.l.b16 %v2658
      %v4100 = vunpack.c.l.b16 %v2659
      %v4101 = vunpack.c.h.b16 %v2659
      %v4102 = vunpack.c.l.b16 %v2660
      %v4103 = vunpack.c.l.b16 %v2661
      %v4104 = vunpack.c.h.b16 %v2661
      %v4105 = vunpack.c.l.b16 %v2662
      %v4106 = vunpack.c.l.b16 %v2663
      %v4107 = vunpack.c.h.b16 %v2663
      %v4108 = vunpack.c.l.b16 %v2664
      %v4109 = vunpack.c.l.b16 %v2665
      %v4110 = vunpack.c.h.b16 %v2665
      %v4111 = vunpack.c.l.b16 %v2666
      %v4112 = vunpack.c.l.b16 %v2667
      %v4113 = vunpack.c.h.b16 %v2667
      %v4114 = vunpack.c.l.b16 %v2668
      %v4115 = vunpack.c.l.b16 %v2669
      %v4116 = vunpack.c.h.b16 %v2669
      %v4117 = vunpack.c.l.b16 %v2670
      %v4118 = vunpack.c.l.b16 %v2671
      %v4119 = vunpack.c.h.b16 %v2671
      %v4120 = vunpack.c.l.b16 %v2672
      %v4121 = vunpack.c.l.b16 %v2673
      %v4122 = vunpack.c.h.b16 %v2673
      %v4123 = vunpack.c.l.b16 %v2674
      %v4124 = vunpack.c.l.b16 %v2675
      %v4125 = vunpack.c.h.b16 %v2675
      %v4126 = vunpack.c.l.b16 %v2676
      %v4127 = vunpack.c.l.b16 %v2677
      %v4128 = vunpack.c.h.b16 %v2677
      %v4129 = vunpack.c.l.b16 %v2678
      %v4130 = vpack.c.b16 %v4085, %v4082
      %v4131 = vpack.c.b16 %v4086, %v4083
      %v4132 = vpack.c.b16 %v4087, %v4084
      %v4133 = vpack.c.b16 %v4091, %v4088
      %v4134 = vpack.c.b16 %v4092, %v4089
      %v4135 = vpack.c.b16 %v4093, %v4090
      %v4136 = vpack.c.b16 %v4097, %v4094
      %v4137 = vpack.c.b16 %v4098, %v4095
      %v4138 = vpack.c.b16 %v4099, %v4096
      %v4139 = vpack.c.b16 %v4103, %v4100
      %v4140 = vpack.c.b16 %v4104, %v4101
      %v4141 = vpack.c.b16 %v4105, %v4102
      %v4142 = vpack.c.b16 %v4109, %v4106
      %v4143 = vpack.c.b16 %v4110, %v4107
      %v4144 = vpack.c.b16 %v4111, %v4108
      %v4145 = vpack.c.b16 %v4115, %v4112
      %v4146 = vpack.c.b16 %v4116, %v4113
      %v4147 = vpack.c.b16 %v4117, %v4114
      %v4148 = vpack.c.b16 %v4121, %v4118
      %v4149 = vpack.c.b16 %v4122, %v4119
      %v4150 = vpack.c.b16 %v4123, %v4120
      %v4151 = vpack.c.b16 %v4127, %v4124
      %v4152 = vpack.c.b16 %v4128, %v4125
      %v4153 = vpack.c.b16 %v4129, %v4126
      %v4274 = vunpack.c.l.b16 %v2679
      %v4275 = vunpack.c.h.b16 %v2679
      %v4276 = vunpack.c.l.b16 %v2680
      %v4277 = vunpack.c.l.b16 %v2681
      %v4278 = vunpack.c.h.b16 %v2681
      %v4279 = vunpack.c.l.b16 %v2682
      %v4280 = vunpack.c.l.b16 %v2683
      %v4281 = vunpack.c.h.b16 %v2683
      %v4282 = vunpack.c.l.b16 %v2684
      %v4283 = vunpack.c.l.b16 %v2685
      %v4284 = vunpack.c.h.b16 %v2685
      %v4285 = vunpack.c.l.b16 %v2686
      %v4286 = vunpack.c.l.b16 %v2687
      %v4287 = vunpack.c.h.b16 %v2687
      %v4288 = vunpack.c.l.b16 %v2688
      %v4289 = vunpack.c.l.b16 %v2689
      %v4290 = vunpack.c.h.b16 %v2689
      %v4291 = vunpack.c.l.b16 %v2690
      %v4292 = vunpack.c.l.b16 %v2691
      %v4293 = vunpack.c.h.b16 %v2691
      %v4294 = vunpack.c.l.b16 %v2692
      %v4295 = vunpack.c.l.b16 %v2693
      %v4296 = vunpack.c.h.b16 %v2693
      %v4297 = vunpack.c.l.b16 %v2694
      %v4298 = vunpack.c.l.b16 %v2695
      %v4299 = vunpack.c.h.b16 %v2695
      %v4300 = vunpack.c.l.b16 %v2696
      %v4301 = vunpack.c.l.b16 %v2697
      %v4302 = vunpack.c.h.b16 %v2697
      %v4303 = vunpack.c.l.b16 %v2698
      %v4304 = vunpack.c.l.b16 %v2699
      %v4305 = vunpack.c.h.b16 %v2699
      %v4306 = vunpack.c.l.b16 %v2700
      %v4307 = vunpack.c.l.b16 %v2701
      %v4308 = vunpack.c.h.b16 %v2701
      %v4309 = vunpack.c.l.b16 %v2702
      %v4310 = vunpack.c.l.b16 %v2703
      %v4311 = vunpack.c.h.b16 %v2703
      %v4312 = vunpack.c.l.b16 %v2704
      %v4313 = vunpack.c.l.b16 %v2705
      %v4314 = vunpack.c.h.b16 %v2705
      %v4315 = vunpack.c.l.b16 %v2706
      %v4316 = vunpack.c.l.b16 %v2707
      %v4317 = vunpack.c.h.b16 %v2707
      %v4318 = vunpack.c.l.b16 %v2708
      %v4319 = vunpack.c.l.b16 %v2709
      %v4320 = vunpack.c.h.b16 %v2709
      %v4321 = vunpack.c.l.b16 %v2710
      %v4322 = vunpack.c.l.b16 %v2711
      %v4323 = vunpack.c.h.b16 %v2711
      %v4324 = vunpack.c.l.b16 %v2712
      %v4325 = vunpack.c.l.b16 %v2713
      %v4326 = vunpack.c.h.b16 %v2713
      %v4327 = vunpack.c.l.b16 %v2714
      %v4328 = vunpack.c.l.b16 %v2715
      %v4329 = vunpack.c.h.b16 %v2715
      %v4330 = vunpack.c.l.b16 %v2716
      %v4331 = vunpack.c.l.b16 %v2717
      %v4332 = vunpack.c.h.b16 %v2717
      %v4333 = vunpack.c.l.b16 %v2718
      %v4334 = vunpack.c.l.b16 %v2719
      %v4335 = vunpack.c.h.b16 %v2719
      %v4336 = vunpack.c.l.b16 %v2720
      %v4337 = vunpack.c.l.b16 %v2721
      %v4338 = vunpack.c.h.b16 %v2721
      %v4339 = vunpack.c.l.b16 %v2722
      %v4340 = vunpack.c.l.b16 %v2723
      %v4341 = vunpack.c.h.b16 %v2723
      %v4342 = vunpack.c.l.b16 %v2724
      %v4343 = vunpack.c.l.b16 %v2725
      %v4344 = vunpack.c.h.b16 %v2725
      %v4345 = vunpack.c.l.b16 %v2726
      %v4346 = vunpack.c.l.b16 %v2727
      %v4347 = vunpack.c.h.b16 %v2727
      %v4348 = vunpack.c.l.b16 %v2728
      %v4349 = vunpack.c.l.b16 %v2729
      %v4350 = vunpack.c.h.b16 %v2729
      %v4351 = vunpack.c.l.b16 %v2730
      %v4352 = vunpack.c.l.b16 %v2731
      %v4353 = vunpack.c.h.b16 %v2731
      %v4354 = vunpack.c.l.b16 %v2732
      %v4355 = vunpack.c.l.b16 %v2733
      %v4356 = vunpack.c.h.b16 %v2733
      %v4357 = vunpack.c.l.b16 %v2734
      %v4358 = vunpack.c.l.b16 %v2735
      %v4359 = vunpack.c.h.b16 %v2735
      %v4360 = vunpack.c.l.b16 %v2736
      %v4361 = vunpack.c.l.b16 %v2737
      %v4362 = vunpack.c.h.b16 %v2737
      %v4363 = vunpack.c.l.b16 %v2738
      %v4364 = vunpack.c.l.b16 %v2739
      %v4365 = vunpack.c.h.b16 %v2739
      %v4366 = vunpack.c.l.b16 %v2740
      %v4367 = vunpack.c.l.b16 %v2741
      %v4368 = vunpack.c.h.b16 %v2741
      %v4369 = vunpack.c.l.b16 %v2742
      %v4370 = vunpack.c.l.b16 %v2743
      %v4371 = vunpack.c.h.b16 %v2743
      %v4372 = vunpack.c.l.b16 %v2744
      %v4373 = vunpack.c.l.b16 %v2745
      %v4374 = vunpack.c.h.b16 %v2745
      %v4375 = vunpack.c.l.b16 %v2746
      %v4376 = vunpack.c.l.b16 %v2747
      %v4377 = vunpack.c.h.b16 %v2747
      %v4378 = vunpack.c.l.b16 %v2748
      %v4379 = vunpack.c.l.b16 %v2749
      %v4380 = vunpack.c.h.b16 %v2749
      %v4381 = vunpack.c.l.b16 %v2750
      %v4382 = vunpack.c.l.b16 %v2751
      %v4383 = vunpack.c.h.b16 %v2751
      %v4384 = vunpack.c.l.b16 %v2752
      %v4385 = vunpack.c.l.b16 %v2753
      %v4386 = vunpack.c.h.b16 %v2753
      %v4387 = vunpack.c.l.b16 %v2754
      %v4388 = vunpack.c.l.b16 %v2755
      %v4389 = vunpack.c.h.b16 %v2755
      %v4390 = vunpack.c.l.b16 %v2756
      %v4391 = vunpack.c.l.b16 %v2757
      %v4392 = vunpack.c.h.b16 %v2757
      %v4393 = vunpack.c.l.b16 %v2758
      %v4394 = vunpack.c.l.b16 %v2759
      %v4395 = vunpack.c.h.b16 %v2759
      %v4396 = vunpack.c.l.b16 %v2760
      %v4397 = vunpack.c.l.b16 %v2761
      %v4398 = vunpack.c.h.b16 %v2761
      %v4399 = vunpack.c.l.b16 %v2762
      %v4400 = vunpack.c.l.b16 %v2763
      %v4401 = vunpack.c.h.b16 %v2763
      %v4402 = vunpack.c.l.b16 %v2764
      %v4403 = vunpack.c.l.b16 %v2765
      %v4404 = vunpack.c.h.b16 %v2765
      %v4405 = vunpack.c.l.b16 %v2766
      %v4406 = vunpack.c.l.b16 %v2767
      %v4407 = vunpack.c.h.b16 %v2767
      %v4408 = vunpack.c.l.b16 %v2768
      %v4409 = vunpack.c.l.b16 %v2769
      %v4410 = vunpack.c.h.b16 %v2769
      %v4411 = vunpack.c.l.b16 %v2770
      %v4412 = vunpack.c.l.b16 %v2771
      %v4413 = vunpack.c.h.b16 %v2771
      %v4414 = vunpack.c.l.b16 %v2772
      %v4415 = vunpack.c.l.b16 %v2773
      %v4416 = vunpack.c.h.b16 %v2773
      %v4417 = vunpack.c.l.b16 %v2774
      %v4418 = vpack.c.b16 %v4277, %v4274
      %v4419 = vpack.c.b16 %v4278, %v4275
      %v4420 = vpack.c.b16 %v4279, %v4276
      %v4421 = vpack.c.b16 %v4283, %v4280
      %v4422 = vpack.c.b16 %v4284, %v4281
      %v4423 = vpack.c.b16 %v4285, %v4282
      %v4424 = vpack.c.b16 %v4289, %v4286
      %v4425 = vpack.c.b16 %v4290, %v4287
      %v4426 = vpack.c.b16 %v4291, %v4288
      %v4427 = vpack.c.b16 %v4295, %v4292
      %v4428 = vpack.c.b16 %v4296, %v4293
      %v4429 = vpack.c.b16 %v4297, %v4294
      %v4430 = vpack.c.b16 %v4301, %v4298
      %v4431 = vpack.c.b16 %v4302, %v4299
      %v4432 = vpack.c.b16 %v4303, %v4300
      %v4433 = vpack.c.b16 %v4307, %v4304
      %v4434 = vpack.c.b16 %v4308, %v4305
      %v4435 = vpack.c.b16 %v4309, %v4306
      %v4436 = vpack.c.b16 %v4313, %v4310
      %v4437 = vpack.c.b16 %v4314, %v4311
      %v4438 = vpack.c.b16 %v4315, %v4312
      %v4439 = vpack.c.b16 %v4319, %v4316
      %v4440 = vpack.c.b16 %v4320, %v4317
      %v4441 = vpack.c.b16 %v4321, %v4318
      %v4442 = vpack.c.b16 %v4325, %v4322
      %v4443 = vpack.c.b16 %v4326, %v4323
      %v4444 = vpack.c.b16 %v4327, %v4324
      %v4445 = vpack.c.b16 %v4331, %v4328
      %v4446 = vpack.c.b16 %v4332, %v4329
      %v4447 = vpack.c.b16 %v4333, %v4330
      %v4448 = vpack.c.b16 %v4337, %v4334
      %v4449 = vpack.c.b16 %v4338, %v4335
      %v4450 = vpack.c.b16 %v4339, %v4336
      %v4451 = vpack.c.b16 %v4343, %v4340
      %v4452 = vpack.c.b16 %v4344, %v4341
      %v4453 = vpack.c.b16 %v4345, %v4342
      %v4454 = vpack.c.b16 %v4349, %v4346
      %v4455 = vpack.c.b16 %v4350, %v4347
      %v4456 = vpack.c.b16 %v4351, %v4348
      %v4457 = vpack.c.b16 %v4355, %v4352
      %v4458 = vpack.c.b16 %v4356, %v4353
      %v4459 = vpack.c.b16 %v4357, %v4354
      %v4460 = vpack.c.b16 %v4361, %v4358
      %v4461 = vpack.c.b16 %v4362, %v4359
      %v4462 = vpack.c.b16 %v4363, %v4360
      %v4463 = vpack.c.b16 %v4367, %v4364
      %v4464 = vpack.c.b16 %v4368, %v4365
      %v4465 = vpack.c.b16 %v4369, %v4366
      %v4466 = vpack.c.b16 %v4373, %v4370
      %v4467 = vpack.c.b16 %v4374, %v4371
      %v4468 = vpack.c.b16 %v4375, %v4372
      %v4469 = vpack.c.b16 %v4379, %v4376
      %v4470 = vpack.c.b16 %v4380, %v4377
      %v4471 = vpack.c.b16 %v4381, %v4378
      %v4472 = vpack.c.b16 %v4385, %v4382
      %v4473 = vpack.c.b16 %v4386, %v4383
      %v4474 = vpack.c.b16 %v4387, %v4384
      %v4475 = vpack.c.b16 %v4391, %v4388
      %v4476 = vpack.c.b16 %v4392, %v4389
      %v4477 = vpack.c.b16 %v4393, %v4390
      %v4478 = vpack.c.b16 %v4397, %v4394
      %v4479 = vpack.c.b16 %v4398, %v4395
      %v4480 = vpack.c.b16 %v4399, %v4396
      %v4481 = vpack.c.b16 %v4403, %v4400
      %v4482 = vpack.c.b16 %v4404, %v4401
      %v4483 = vpack.c.b16 %v4405, %v4402
      %v4484 = vpack.c.b16 %v4409, %v4406
      %v4485 = vpack.c.b16 %v4410, %v4407
      %v4486 = vpack.c.b16 %v4411, %v4408
      %v4487 = vpack.c.b16 %v4415, %v4412
      %v4488 = vpack.c.b16 %v4416, %v4413
      %v4489 = vpack.c.b16 %v4417, %v4414
      %4562 = vmatprep.subr.bf16.mxu0 %v4440
      %4563 = vmatpush1.bf16.msra.mxu0 %v4439
      %4564 = vmatprep.subr.bf16.mxu0 %v4437
      %4565 = vmatpush1.bf16.msra.mxu0 %v4436
      %4566 = vmatprep.subr.bf16.mxu0 %v4434
      %4567 = vmatpush1.bf16.msra.mxu0 %v4433
      %4568 = vmatprep.subr.bf16.mxu0 %v4431
      %4569 = vmatpush1.bf16.msra.mxu0 %v4430
      %4570 = vmatprep.subr.bf16.mxu0 %v4428
      %4571 = vmatpush1.bf16.msra.mxu0 %v4427
      %4572 = vmatprep.subr.bf16.mxu0 %v4425
      %4573 = vmatpush1.bf16.msra.mxu0 %v4424
      %4574 = vmatprep.subr.bf16.mxu0 %v4422
      %4575 = vmatpush1.bf16.msra.mxu0 %v4421
      %4576 = vmatprep.subr.bf16.mxu0 %v4419
      %4577 = vmatpush1.bf16.msra.mxu0 %v4418
      %4578 = vmatprep.subr.bf16.mxu0 %v4464
      %4579 = vmatpush2.bf16.msra.mxu0 %v4463
      %4580 = vmatprep.subr.bf16.mxu0 %v4461
      %4581 = vmatpush2.bf16.msra.mxu0 %v4460
      %4582 = vmatprep.subr.bf16.mxu0 %v4458
      %4583 = vmatpush2.bf16.msra.mxu0 %v4457
      %4584 = vmatprep.subr.bf16.mxu0 %v4455
      %4585 = vmatpush2.bf16.msra.mxu0 %v4454
      %4586 = vmatprep.subr.bf16.mxu0 %v4452
      %4587 = vmatpush2.bf16.msra.mxu0 %v4451
      %4588 = vmatprep.subr.bf16.mxu0 %v4449
      %4589 = vmatpush2.bf16.msra.mxu0 %v4448
      %4590 = vmatprep.subr.bf16.mxu0 %v4446
      %4591 = vmatpush2.bf16.msra.mxu0 %v4445
      %4592 = vmatprep.subr.bf16.mxu0 %v4443
      %4593 = vmatpush2.bf16.msra.mxu0 %v4442
      %4594 = vmatprep.mubr.bf16.mxu0 %v4131
      %4595 = vmatmul.mubr.bf16.gmra.mxu0 %v4130
      %v4596 = vpop.f32.mrf.mxu0
      %v4597 = vadd.f32 %v3778, %v4596
      %v4598 = vpop.f32.mrf.mxu0
      %v4599 = vadd.f32 %v3780, %v4598
      %v4600 = vpop.f32.mrf.mxu0
      %v4601 = vadd.f32 %v3782, %v4600
      %v4602 = vpop.f32.mrf.mxu0
      %v4603 = vadd.f32 %v3784, %v4602
      %4604 = vmatprep.mubr.bf16.mxu0 %v4134
      %4605 = vmatmul.mubr.bf16.gmra.mxu0 %v4133
      %v4606 = vpop.f32.mrf.mxu0
      %v4607 = vadd.f32 %v3788, %v4606
      %v4608 = vpop.f32.mrf.mxu0
      %v4609 = vadd.f32 %v3790, %v4608
      %v4610 = vpop.f32.mrf.mxu0
      %v4611 = vadd.f32 %v3792, %v4610
      %v4612 = vpop.f32.mrf.mxu0
      %v4613 = vadd.f32 %v3794, %v4612
      %4614 = vmatprep.mubr.bf16.mxu0 %v4137
      %4615 = vmatmul.mubr.bf16.gmra.mxu0 %v4136
      %v4616 = vpop.f32.mrf.mxu0
      %v4617 = vadd.f32 %v3798, %v4616
      %v4618 = vpop.f32.mrf.mxu0
      %v4619 = vadd.f32 %v3800, %v4618
      %v4620 = vpop.f32.mrf.mxu0
      %v4621 = vadd.f32 %v3802, %v4620
      %v4622 = vpop.f32.mrf.mxu0
      %v4623 = vadd.f32 %v3804, %v4622
      %4624 = vmatprep.mubr.bf16.mxu0 %v4140
      %4625 = vmatmul.mubr.bf16.gmra.mxu0 %v4139
      %v4626 = vpop.f32.mrf.mxu0
      %v4627 = vadd.f32 %v3808, %v4626
      %v4628 = vpop.f32.mrf.mxu0
      %v4629 = vadd.f32 %v3810, %v4628
      %v4630 = vpop.f32.mrf.mxu0
      %v4631 = vadd.f32 %v3812, %v4630
      %v4632 = vpop.f32.mrf.mxu0
      %v4633 = vadd.f32 %v3814, %v4632
      %4634 = vmatprep.mubr.bf16.mxu0 %v4143
      %4635 = vmatmul.mubr.bf16.gmra.mxu0 %v4142
      %v4636 = vpop.f32.mrf.mxu0
      %v4637 = vadd.f32 %v3818, %v4636
      %v4638 = vpop.f32.mrf.mxu0
      %v4639 = vadd.f32 %v3820, %v4638
      %v4640 = vpop.f32.mrf.mxu0
      %v4641 = vadd.f32 %v3822, %v4640
      %v4642 = vpop.f32.mrf.mxu0
      %v4643 = vadd.f32 %v3824, %v4642
      %4644 = vmatprep.mubr.bf16.mxu0 %v4146
      %4645 = vmatmul.mubr.bf16.gmra.mxu0 %v4145
      %v4646 = vpop.f32.mrf.mxu0
      %v4647 = vadd.f32 %v3828, %v4646
      %v4648 = vpop.f32.mrf.mxu0
      %v4649 = vadd.f32 %v3830, %v4648
      %v4650 = vpop.f32.mrf.mxu0
      %v4651 = vadd.f32 %v3832, %v4650
      %v4652 = vpop.f32.mrf.mxu0
      %v4653 = vadd.f32 %v3834, %v4652
      %4654 = vmatprep.mubr.bf16.mxu0 %v4149
      %4655 = vmatmul.mubr.bf16.gmra.mxu0 %v4148
      %v4656 = vpop.f32.mrf.mxu0
      %v4657 = vadd.f32 %v3838, %v4656
      %v4658 = vpop.f32.mrf.mxu0
      %v4659 = vadd.f32 %v3840, %v4658
      %v4660 = vpop.f32.mrf.mxu0
      %v4661 = vadd.f32 %v3842, %v4660
      %v4662 = vpop.f32.mrf.mxu0
      %v4663 = vadd.f32 %v3844, %v4662
      %4664 = vmatprep.mubr.bf16.mxu0 %v4152
      %4665 = vmatmul.mubr.bf16.gmra.mxu0 %v4151
      %v4666 = vpop.f32.mrf.mxu0
      %v4667 = vadd.f32 %v3848, %v4666
      %v4668 = vpop.f32.mrf.mxu0
      %v4669 = vadd.f32 %v3850, %v4668
      %v4670 = vpop.f32.mrf.mxu0
      %v4671 = vadd.f32 %v3852, %v4670
      %v4672 = vpop.f32.mrf.mxu0
      %v4673 = vadd.f32 %v3854, %v4672
      %4674 = vdwg.mxu0
      %4675 = vmatprep.subr.bf16.mxu0 %v4488
      %4676 = vmatpush1.bf16.msra.mxu0 %v4487
      %4677 = vmatprep.subr.bf16.mxu0 %v4485
      %4678 = vmatpush1.bf16.msra.mxu0 %v4484
      %4679 = vmatprep.subr.bf16.mxu0 %v4482
      %4680 = vmatpush1.bf16.msra.mxu0 %v4481
      %4681 = vmatprep.subr.bf16.mxu0 %v4479
      %4682 = vmatpush1.bf16.msra.mxu0 %v4478
      %4683 = vmatprep.subr.bf16.mxu0 %v4476
      %4684 = vmatpush1.bf16.msra.mxu0 %v4475
      %4685 = vmatprep.subr.bf16.mxu0 %v4473
      %4686 = vmatpush1.bf16.msra.mxu0 %v4472
      %4687 = vmatprep.subr.bf16.mxu0 %v4470
      %4688 = vmatpush1.bf16.msra.mxu0 %v4469
      %4689 = vmatprep.subr.bf16.mxu0 %v4467
      %4690 = vmatpush1.bf16.msra.mxu0 %v4466
      %4691 = vmatprep.subr.bf16.mxu0 0
      %4692 = vmatpush2.bf16.msra.mxu0 0
      %4693 = vmatprep.subr.bf16.mxu0 0
      %4694 = vmatpush2.bf16.msra.mxu0 0
      %4695 = vmatprep.subr.bf16.mxu0 0
      %4696 = vmatpush2.bf16.msra.mxu0 0
      %4697 = vmatprep.subr.bf16.mxu0 0
      %4698 = vmatpush2.bf16.msra.mxu0 0
      %4699 = vmatprep.subr.bf16.mxu0 0
      %4700 = vmatpush2.bf16.msra.mxu0 0
      %4701 = vmatprep.subr.bf16.mxu0 0
      %4702 = vmatpush2.bf16.msra.mxu0 0
      %4703 = vmatprep.subr.bf16.mxu0 0
      %4704 = vmatpush2.bf16.msra.mxu0 0
      %4705 = vmatprep.subr.bf16.mxu0 0
      %4706 = vmatpush2.bf16.msra.mxu0 0
      %4707 = vmatprep.mubr.bf16.mxu0 0
      %4708 = vmatmul.mubr.bf16.gmra.mxu0 %v4132
      %v4709 = vpop.f32.mrf.mxu0
      %v4710 = vadd.f32 %v4597, %v4709
      %v4711 = vpop.f32.mrf.mxu0
      %v4712 = vadd.f32 %v4599, %v4711
      %v4713 = vpop.f32.mrf.mxu0
      %v4714 = vadd.f32 %v4601, %v4713
      %v4715 = vpop.f32.mrf.mxu0
      %v4716 = vadd.f32 %v4603, %v4715
      %4717 = vmatprep.mubr.bf16.mxu0 0
      %4718 = vmatmul.mubr.bf16.gmra.mxu0 %v4135
      %v4719 = vpop.f32.mrf.mxu0
      %v4720 = vadd.f32 %v4607, %v4719
      %v4721 = vpop.f32.mrf.mxu0
      %v4722 = vadd.f32 %v4609, %v4721
      %v4723 = vpop.f32.mrf.mxu0
      %v4724 = vadd.f32 %v4611, %v4723
      %v4725 = vpop.f32.mrf.mxu0
      %v4726 = vadd.f32 %v4613, %v4725
      %4727 = vmatprep.mubr.bf16.mxu0 0
      %4728 = vmatmul.mubr.bf16.gmra.mxu0 %v4138
      %v4729 = vpop.f32.mrf.mxu0
      %v4730 = vadd.f32 %v4617, %v4729
      %v4731 = vpop.f32.mrf.mxu0
      %v4732 = vadd.f32 %v4619, %v4731
      %v4733 = vpop.f32.mrf.mxu0
      %v4734 = vadd.f32 %v4621, %v4733
      %v4735 = vpop.f32.mrf.mxu0
      %v4736 = vadd.f32 %v4623, %v4735
      %4737 = vmatprep.mubr.bf16.mxu0 0
      %4738 = vmatmul.mubr.bf16.gmra.mxu0 %v4141
      %v4739 = vpop.f32.mrf.mxu0
      %v4740 = vadd.f32 %v4627, %v4739
      %v4741 = vpop.f32.mrf.mxu0
      %v4742 = vadd.f32 %v4629, %v4741
      %v4743 = vpop.f32.mrf.mxu0
      %v4744 = vadd.f32 %v4631, %v4743
      %v4745 = vpop.f32.mrf.mxu0
      %v4746 = vadd.f32 %v4633, %v4745
      %4747 = vmatprep.mubr.bf16.mxu0 0
      %4748 = vmatmul.mubr.bf16.gmra.mxu0 %v4144
      %v4749 = vpop.f32.mrf.mxu0
      %v4750 = vadd.f32 %v4637, %v4749
      %v4751 = vpop.f32.mrf.mxu0
      %v4752 = vadd.f32 %v4639, %v4751
      %v4753 = vpop.f32.mrf.mxu0
      %v4754 = vadd.f32 %v4641, %v4753
      %v4755 = vpop.f32.mrf.mxu0
      %v4756 = vadd.f32 %v4643, %v4755
      %4757 = vmatprep.mubr.bf16.mxu0 0
      %4758 = vmatmul.mubr.bf16.gmra.mxu0 %v4147
      %v4759 = vpop.f32.mrf.mxu0
      %v4760 = vadd.f32 %v4647, %v4759
      %v4761 = vpop.f32.mrf.mxu0
      %v4762 = vadd.f32 %v4649, %v4761
      %v4763 = vpop.f32.mrf.mxu0
      %v4764 = vadd.f32 %v4651, %v4763
      %v4765 = vpop.f32.mrf.mxu0
      %v4766 = vadd.f32 %v4653, %v4765
      %4767 = vmatprep.mubr.bf16.mxu0 0
      %4768 = vmatmul.mubr.bf16.gmra.mxu0 %v4150
      %v4769 = vpop.f32.mrf.mxu0
      %v4770 = vadd.f32 %v4657, %v4769
      %v4771 = vpop.f32.mrf.mxu0
      %v4772 = vadd.f32 %v4659, %v4771
      %v4773 = vpop.f32.mrf.mxu0
      %v4774 = vadd.f32 %v4661, %v4773
      %v4775 = vpop.f32.mrf.mxu0
      %v4776 = vadd.f32 %v4663, %v4775
      %4777 = vmatprep.mubr.bf16.mxu0 0
      %4778 = vmatmul.mubr.bf16.gmra.mxu0 %v4153
      %v4779 = vpop.f32.mrf.mxu0
      %v4780 = vadd.f32 %v4667, %v4779
      %v4781 = vpop.f32.mrf.mxu0
      %v4782 = vadd.f32 %v4669, %v4781
      %v4783 = vpop.f32.mrf.mxu0
      %v4784 = vadd.f32 %v4671, %v4783
      %v4785 = vpop.f32.mrf.mxu0
      %v4786 = vadd.f32 %v4673, %v4785
      %4787 = vdwg.mxu0
      %4788 = vmatprep.subr.bf16.mxu0 0
      %4789 = vmatpush1.bf16.msra.mxu0 %v4441
      %4790 = vmatprep.subr.bf16.mxu0 0
      %4791 = vmatpush1.bf16.msra.mxu0 %v4438
      %4792 = vmatprep.subr.bf16.mxu0 0
      %4793 = vmatpush1.bf16.msra.mxu0 %v4435
      %4794 = vmatprep.subr.bf16.mxu0 0
      %4795 = vmatpush1.bf16.msra.mxu0 %v4432
      %4796 = vmatprep.subr.bf16.mxu0 0
      %4797 = vmatpush1.bf16.msra.mxu0 %v4429
      %4798 = vmatprep.subr.bf16.mxu0 0
      %4799 = vmatpush1.bf16.msra.mxu0 %v4426
      %4800 = vmatprep.subr.bf16.mxu0 0
      %4801 = vmatpush1.bf16.msra.mxu0 %v4423
      %4802 = vmatprep.subr.bf16.mxu0 0
      %4803 = vmatpush1.bf16.msra.mxu0 %v4420
      %4804 = vmatprep.subr.bf16.mxu0 0
      %4805 = vmatpush2.bf16.msra.mxu0 %v4465
      %4806 = vmatprep.subr.bf16.mxu0 0
      %4807 = vmatpush2.bf16.msra.mxu0 %v4462
      %4808 = vmatprep.subr.bf16.mxu0 0
      %4809 = vmatpush2.bf16.msra.mxu0 %v4459
      %4810 = vmatprep.subr.bf16.mxu0 0
      %4811 = vmatpush2.bf16.msra.mxu0 %v4456
      %4812 = vmatprep.subr.bf16.mxu0 0
      %4813 = vmatpush2.bf16.msra.mxu0 %v4453
      %4814 = vmatprep.subr.bf16.mxu0 0
      %4815 = vmatpush2.bf16.msra.mxu0 %v4450
      %4816 = vmatprep.subr.bf16.mxu0 0
      %4817 = vmatpush2.bf16.msra.mxu0 %v4447
      %4818 = vmatprep.subr.bf16.mxu0 0
      %4819 = vmatpush2.bf16.msra.mxu0 %v4444
      %4820 = vmatprep.mubr.bf16.mxu0 %v4131
      %4821 = vmatmul.mubr.bf16.gmra.mxu0 %v4130
      %v4822 = vpop.f32.mrf.mxu0
      %v4823 = vadd.f32 %v3988, %v4822
      %v4824 = vpop.f32.mrf.mxu0
      %v4825 = vpop.f32.mrf.mxu0
      %v4826 = vadd.f32 %v3991, %v4825
      %v4827 = vpop.f32.mrf.mxu0
      %4828 = vmatprep.mubr.bf16.mxu0 %v4134
      %4829 = vmatmul.mubr.bf16.gmra.mxu0 %v4133
      %v4830 = vpop.f32.mrf.mxu0
      %v4831 = vadd.f32 %v3996, %v4830
      %v4832 = vpop.f32.mrf.mxu0
      %v4833 = vpop.f32.mrf.mxu0
      %v4834 = vadd.f32 %v3999, %v4833
      %v4835 = vpop.f32.mrf.mxu0
      %4836 = vmatprep.mubr.bf16.mxu0 %v4137
      %4837 = vmatmul.mubr.bf16.gmra.mxu0 %v4136
      %v4838 = vpop.f32.mrf.mxu0
      %v4839 = vadd.f32 %v4004, %v4838
      %v4840 = vpop.f32.mrf.mxu0
      %v4841 = vpop.f32.mrf.mxu0
      %v4842 = vadd.f32 %v4007, %v4841
      %v4843 = vpop.f32.mrf.mxu0
      %4844 = vmatprep.mubr.bf16.mxu0 %v4140
      %4845 = vmatmul.mubr.bf16.gmra.mxu0 %v4139
      %v4846 = vpop.f32.mrf.mxu0
      %v4847 = vadd.f32 %v4012, %v4846
      %v4848 = vpop.f32.mrf.mxu0
      %v4849 = vpop.f32.mrf.mxu0
      %v4850 = vadd.f32 %v4015, %v4849
      %v4851 = vpop.f32.mrf.mxu0
      %4852 = vmatprep.mubr.bf16.mxu0 %v4143
      %4853 = vmatmul.mubr.bf16.gmra.mxu0 %v4142
      %v4854 = vpop.f32.mrf.mxu0
      %v4855 = vadd.f32 %v4020, %v4854
      %v4856 = vpop.f32.mrf.mxu0
      %v4857 = vpop.f32.mrf.mxu0
      %v4858 = vadd.f32 %v4023, %v4857
      %v4859 = vpop.f32.mrf.mxu0
      %4860 = vmatprep.mubr.bf16.mxu0 %v4146
      %4861 = vmatmul.mubr.bf16.gmra.mxu0 %v4145
      %v4862 = vpop.f32.mrf.mxu0
      %v4863 = vadd.f32 %v4028, %v4862
      %v4864 = vpop.f32.mrf.mxu0
      %v4865 = vpop.f32.mrf.mxu0
      %v4866 = vadd.f32 %v4031, %v4865
      %v4867 = vpop.f32.mrf.mxu0
      %4868 = vmatprep.mubr.bf16.mxu0 %v4149
      %4869 = vmatmul.mubr.bf16.gmra.mxu0 %v4148
      %v4870 = vpop.f32.mrf.mxu0
      %v4871 = vadd.f32 %v4036, %v4870
      %v4872 = vpop.f32.mrf.mxu0
      %v4873 = vpop.f32.mrf.mxu0
      %v4874 = vadd.f32 %v4039, %v4873
      %v4875 = vpop.f32.mrf.mxu0
      %4876 = vmatprep.mubr.bf16.mxu0 %v4152
      %4877 = vmatmul.mubr.bf16.gmra.mxu0 %v4151
      %v4878 = vpop.f32.mrf.mxu0
      %v4879 = vadd.f32 %v4044, %v4878
      %v4880 = vpop.f32.mrf.mxu0
      %v4881 = vpop.f32.mrf.mxu0
      %v4882 = vadd.f32 %v4047, %v4881
      %v4883 = vpop.f32.mrf.mxu0
      %4884 = vdwg.mxu0
      %4885 = vmatprep.subr.bf16.mxu0 0
      %4886 = vmatpush1.bf16.msra.mxu0 %v4489
      %4887 = vmatprep.subr.bf16.mxu0 0
      %4888 = vmatpush1.bf16.msra.mxu0 %v4486
      %4889 = vmatprep.subr.bf16.mxu0 0
      %4890 = vmatpush1.bf16.msra.mxu0 %v4483
      %4891 = vmatprep.subr.bf16.mxu0 0
      %4892 = vmatpush1.bf16.msra.mxu0 %v4480
      %4893 = vmatprep.subr.bf16.mxu0 0
      %4894 = vmatpush1.bf16.msra.mxu0 %v4477
      %4895 = vmatprep.subr.bf16.mxu0 0
      %4896 = vmatpush1.bf16.msra.mxu0 %v4474
      %4897 = vmatprep.subr.bf16.mxu0 0
      %4898 = vmatpush1.bf16.msra.mxu0 %v4471
      %4899 = vmatprep.subr.bf16.mxu0 0
      %4900 = vmatpush1.bf16.msra.mxu0 %v4468
      %4901 = vmatprep.subr.bf16.mxu0 0
      %4902 = vmatpush2.bf16.msra.mxu0 0
      %4903 = vmatprep.subr.bf16.mxu0 0
      %4904 = vmatpush2.bf16.msra.mxu0 0
      %4905 = vmatprep.subr.bf16.mxu0 0
      %4906 = vmatpush2.bf16.msra.mxu0 0
      %4907 = vmatprep.subr.bf16.mxu0 0
      %4908 = vmatpush2.bf16.msra.mxu0 0
      %4909 = vmatprep.subr.bf16.mxu0 0
      %4910 = vmatpush2.bf16.msra.mxu0 0
      %4911 = vmatprep.subr.bf16.mxu0 0
      %4912 = vmatpush2.bf16.msra.mxu0 0
      %4913 = vmatprep.subr.bf16.mxu0 0
      %4914 = vmatpush2.bf16.msra.mxu0 0
      %4915 = vmatprep.subr.bf16.mxu0 0
      %4916 = vmatpush2.bf16.msra.mxu0 0
      %4917 = vmatprep.mubr.bf16.mxu0 0
      %4918 = vmatmul.mubr.bf16.gmra.mxu0 %v4132
      %v4919 = vpop.f32.mrf.mxu0
      %v4920 = vadd.f32 %v4823, %v4919
      %v4921 = vpop.f32.mrf.mxu0
      %v4922 = vpop.f32.mrf.mxu0
      %v4923 = vadd.f32 %v4826, %v4922
      %v4924 = vpop.f32.mrf.mxu0
      %4925 = vmatprep.mubr.bf16.mxu0 0
      %4926 = vmatmul.mubr.bf16.gmra.mxu0 %v4135
      %v4927 = vpop.f32.mrf.mxu0
      %v4928 = vadd.f32 %v4831, %v4927
      %v4929 = vpop.f32.mrf.mxu0
      %v4930 = vpop.f32.mrf.mxu0
      %v4931 = vadd.f32 %v4834, %v4930
      %v4932 = vpop.f32.mrf.mxu0
      %4933 = vmatprep.mubr.bf16.mxu0 0
      %4934 = vmatmul.mubr.bf16.gmra.mxu0 %v4138
      %v4935 = vpop.f32.mrf.mxu0
      %v4936 = vadd.f32 %v4839, %v4935
      %v4937 = vpop.f32.mrf.mxu0
      %v4938 = vpop.f32.mrf.mxu0
      %v4939 = vadd.f32 %v4842, %v4938
      %v4940 = vpop.f32.mrf.mxu0
      %4941 = vmatprep.mubr.bf16.mxu0 0
      %4942 = vmatmul.mubr.bf16.gmra.mxu0 %v4141
      %v4943 = vpop.f32.mrf.mxu0
      %v4944 = vadd.f32 %v4847, %v4943
      %v4945 = vpop.f32.mrf.mxu0
      %v4946 = vpop.f32.mrf.mxu0
      %v4947 = vadd.f32 %v4850, %v4946
      %v4948 = vpop.f32.mrf.mxu0
      %4949 = vmatprep.mubr.bf16.mxu0 0
      %4950 = vmatmul.mubr.bf16.gmra.mxu0 %v4144
      %v4951 = vpop.f32.mrf.mxu0
      %v4952 = vadd.f32 %v4855, %v4951
      %v4953 = vpop.f32.mrf.mxu0
      %v4954 = vpop.f32.mrf.mxu0
      %v4955 = vadd.f32 %v4858, %v4954
      %v4956 = vpop.f32.mrf.mxu0
      %4957 = vmatprep.mubr.bf16.mxu0 0
      %4958 = vmatmul.mubr.bf16.gmra.mxu0 %v4147
      %v4959 = vpop.f32.mrf.mxu0
      %v4960 = vadd.f32 %v4863, %v4959
      %v4961 = vpop.f32.mrf.mxu0
      %v4962 = vpop.f32.mrf.mxu0
      %v4963 = vadd.f32 %v4866, %v4962
      %v4964 = vpop.f32.mrf.mxu0
      %4965 = vmatprep.mubr.bf16.mxu0 0
      %4966 = vmatmul.mubr.bf16.gmra.mxu0 %v4150
      %v4967 = vpop.f32.mrf.mxu0
      %v4968 = vadd.f32 %v4871, %v4967
      %v4969 = vpop.f32.mrf.mxu0
      %v4970 = vpop.f32.mrf.mxu0
      %v4971 = vadd.f32 %v4874, %v4970
      %v4972 = vpop.f32.mrf.mxu0
      %4973 = vmatprep.mubr.bf16.mxu0 0
      %4974 = vmatmul.mubr.bf16.gmra.mxu0 %v4153
      %v4975 = vpop.f32.mrf.mxu0
      %v4976 = vadd.f32 %v4879, %v4975
      %v4977 = vpop.f32.mrf.mxu0
      %v4978 = vpop.f32.mrf.mxu0
      %v4979 = vadd.f32 %v4882, %v4978
      %v4980 = vpop.f32.mrf.mxu0
      %4981 = vdwg.mxu0
      %v4983 = vlaneseq
      %v4984 = vshrl.u32 %v4983, 7
      %v4985 = vsub.s32 0, %v4984
      %v4986 = vrot.slane %v2646, %v4985
      %v4987 = vlaneseq
      %v4988 = vshrl.u32 %v4987, 7
      %v4989 = vsub.s32 1, %v4988
      %v4990 = vrot.slane %v2646, %v4989
      %v4991 = vlaneseq
      %v4992 = vshrl.u32 %v4991, 7
      %v4993 = vsub.s32 2, %v4992
      %v4994 = vrot.slane %v2646, %v4993
      %v4998 = vadd.f32 %v4710, %v4986
      %v4999 = vadd.f32 %v4712, %v4990
      %v5000 = vadd.f32 %v4920, %v4994
      %v5001 = vadd.f32 %v4714, %v4986
      %v5002 = vadd.f32 %v4716, %v4990
      %v5003 = vadd.f32 %v4923, %v4994
      %v5004 = vadd.f32 %v4720, %v4986
      %v5005 = vadd.f32 %v4722, %v4990
      %v5006 = vadd.f32 %v4928, %v4994
      %v5007 = vadd.f32 %v4724, %v4986
      %v5008 = vadd.f32 %v4726, %v4990
      %v5009 = vadd.f32 %v4931, %v4994
      %v5010 = vadd.f32 %v4730, %v4986
      %v5011 = vadd.f32 %v4732, %v4990
      %v5012 = vadd.f32 %v4936, %v4994
      %v5013 = vadd.f32 %v4734, %v4986
      %v5014 = vadd.f32 %v4736, %v4990
      %v5015 = vadd.f32 %v4939, %v4994
      %v5016 = vadd.f32 %v4740, %v4986
      %v5017 = vadd.f32 %v4742, %v4990
      %v5018 = vadd.f32 %v4944, %v4994
      %v5019 = vadd.f32 %v4744, %v4986
      %v5020 = vadd.f32 %v4746, %v4990
      %v5021 = vadd.f32 %v4947, %v4994
      %v5022 = vadd.f32 %v4750, %v4986
      %v5023 = vadd.f32 %v4752, %v4990
      %v5024 = vadd.f32 %v4952, %v4994
      %v5025 = vadd.f32 %v4754, %v4986
      %v5026 = vadd.f32 %v4756, %v4990
      %v5027 = vadd.f32 %v4955, %v4994
      %v5028 = vadd.f32 %v4760, %v4986
      %v5029 = vadd.f32 %v4762, %v4990
      %v5030 = vadd.f32 %v4960, %v4994
      %v5031 = vadd.f32 %v4764, %v4986
      %v5032 = vadd.f32 %v4766, %v4990
      %v5033 = vadd.f32 %v4963, %v4994
      %v5034 = vadd.f32 %v4770, %v4986
      %v5035 = vadd.f32 %v4772, %v4990
      %v5036 = vadd.f32 %v4968, %v4994
      %v5037 = vadd.f32 %v4774, %v4986
      %v5038 = vadd.f32 %v4776, %v4990
      %v5039 = vadd.f32 %v4971, %v4994
      %v5040 = vadd.f32 %v4780, %v4986
      %v5041 = vadd.f32 %v4782, %v4990
      %v5042 = vadd.f32 %v4976, %v4994
      %v5043 = vadd.f32 %v4784, %v4986
      %v5044 = vadd.f32 %v4786, %v4990
      %v5045 = vadd.f32 %v4979, %v4994
      %v5046 = vmax.f32 %v4998, 0.0
      %v5047 = vmax.f32 %v4999, 0.0
      %v5048 = vmax.f32 %v5000, 0.0
      %v5049 = vmax.f32 %v5001, 0.0
      %v5050 = vmax.f32 %v5002, 0.0
      %v5051 = vmax.f32 %v5003, 0.0
      %v5052 = vmax.f32 %v5004, 0.0
      %v5053 = vmax.f32 %v5005, 0.0
      %v5054 = vmax.f32 %v5006, 0.0
      %v5055 = vmax.f32 %v5007, 0.0
      %v5056 = vmax.f32 %v5008, 0.0
      %v5057 = vmax.f32 %v5009, 0.0
      %v5058 = vmax.f32 %v5010, 0.0
      %v5059 = vmax.f32 %v5011, 0.0
      %v5060 = vmax.f32 %v5012, 0.0
      %v5061 = vmax.f32 %v5013, 0.0
      %v5062 = vmax.f32 %v5014, 0.0
      %v5063 = vmax.f32 %v5015, 0.0
      %v5064 = vmax.f32 %v5016, 0.0
      %v5065 = vmax.f32 %v5017, 0.0
      %v5066 = vmax.f32 %v5018, 0.0
      %v5067 = vmax.f32 %v5019, 0.0
      %v5068 = vmax.f32 %v5020, 0.0
      %v5069 = vmax.f32 %v5021, 0.0
      %v5070 = vmax.f32 %v5022, 0.0
      %v5071 = vmax.f32 %v5023, 0.0
      %v5072 = vmax.f32 %v5024, 0.0
      %v5073 = vmax.f32 %v5025, 0.0
      %v5074 = vmax.f32 %v5026, 0.0
      %v5075 = vmax.f32 %v5027, 0.0
      %v5076 = vmax.f32 %v5028, 0.0
      %v5077 = vmax.f32 %v5029, 0.0
      %v5078 = vmax.f32 %v5030, 0.0
      %v5079 = vmax.f32 %v5031, 0.0
      %v5080 = vmax.f32 %v5032, 0.0
      %v5081 = vmax.f32 %v5033, 0.0
      %v5082 = vmax.f32 %v5034, 0.0
      %v5083 = vmax.f32 %v5035, 0.0
      %v5084 = vmax.f32 %v5036, 0.0
      %v5085 = vmax.f32 %v5037, 0.0
      %v5086 = vmax.f32 %v5038, 0.0
      %v5087 = vmax.f32 %v5039, 0.0
      %v5088 = vmax.f32 %v5040, 0.0
      %v5089 = vmax.f32 %v5041, 0.0
      %v5090 = vmax.f32 %v5042, 0.0
      %v5091 = vmax.f32 %v5043, 0.0
      %v5092 = vmax.f32 %v5044, 0.0
      %v5093 = vmax.f32 %v5045, 0.0
      %v5094 = vpack.c.bf16 %v5049, %v5046
      %v5095 = vpack.c.bf16 %v5050, %v5047
      %v5096 = vpack.c.bf16 %v5051, %v5048
      %v5097 = vpack.c.bf16 %v5055, %v5052
      %v5098 = vpack.c.bf16 %v5056, %v5053
      %v5099 = vpack.c.bf16 %v5057, %v5054
      %v5100 = vpack.c.bf16 %v5061, %v5058
      %v5101 = vpack.c.bf16 %v5062, %v5059
      %v5102 = vpack.c.bf16 %v5063, %v5060
      %v5103 = vpack.c.bf16 %v5067, %v5064
      %v5104 = vpack.c.bf16 %v5068, %v5065
      %v5105 = vpack.c.bf16 %v5069, %v5066
      %v5106 = vpack.c.bf16 %v5073, %v5070
      %v5107 = vpack.c.bf16 %v5074, %v5071
      %v5108 = vpack.c.bf16 %v5075, %v5072
      %v5109 = vpack.c.bf16 %v5079, %v5076
      %v5110 = vpack.c.bf16 %v5080, %v5077
      %v5111 = vpack.c.bf16 %v5081, %v5078
      %v5112 = vpack.c.bf16 %v5085, %v5082
      %v5113 = vpack.c.bf16 %v5086, %v5083
      %v5114 = vpack.c.bf16 %v5087, %v5084
      %v5115 = vpack.c.bf16 %v5091, %v5088
      %v5116 = vpack.c.bf16 %v5092, %v5089
      %v5117 = vpack.c.bf16 %v5093, %v5090
      %v5142 = vunpack.c.l.b16 %v5094
      %v5143 = vunpack.c.l.b16 %v5095
      %v5144 = vunpack.c.l.b16 %v5096
      %v5145 = vunpack.c.h.b16 %v5094
      %v5146 = vunpack.c.h.b16 %v5095
      %v5147 = vunpack.c.h.b16 %v5096
      %v5148 = vunpack.c.l.b16 %v5097
      %v5149 = vunpack.c.l.b16 %v5098
      %v5150 = vunpack.c.l.b16 %v5099
      %v5151 = vunpack.c.h.b16 %v5097
      %v5152 = vunpack.c.h.b16 %v5098
      %v5153 = vunpack.c.h.b16 %v5099
      %v5154 = vunpack.c.l.b16 %v5100
      %v5155 = vunpack.c.l.b16 %v5101
      %v5156 = vunpack.c.l.b16 %v5102
      %v5157 = vunpack.c.h.b16 %v5100
      %v5158 = vunpack.c.h.b16 %v5101
      %v5159 = vunpack.c.h.b16 %v5102
      %v5160 = vunpack.c.l.b16 %v5103
      %v5161 = vunpack.c.l.b16 %v5104
      %v5162 = vunpack.c.l.b16 %v5105
      %v5163 = vunpack.c.h.b16 %v5103
      %v5164 = vunpack.c.h.b16 %v5104
      %v5165 = vunpack.c.h.b16 %v5105
      %v5166 = vunpack.c.l.b16 %v5106
      %v5167 = vunpack.c.l.b16 %v5107
      %v5168 = vunpack.c.l.b16 %v5108
      %v5169 = vunpack.c.h.b16 %v5106
      %v5170 = vunpack.c.h.b16 %v5107
      %v5171 = vunpack.c.h.b16 %v5108
      %v5172 = vunpack.c.l.b16 %v5109
      %v5173 = vunpack.c.l.b16 %v5110
      %v5174 = vunpack.c.l.b16 %v5111
      %v5175 = vunpack.c.h.b16 %v5109
      %v5176 = vunpack.c.h.b16 %v5110
      %v5177 = vunpack.c.h.b16 %v5111
      %v5178 = vunpack.c.l.b16 %v5112
      %v5179 = vunpack.c.l.b16 %v5113
      %v5180 = vunpack.c.l.b16 %v5114
      %v5181 = vunpack.c.h.b16 %v5112
      %v5182 = vunpack.c.h.b16 %v5113
      %v5183 = vunpack.c.h.b16 %v5114
      %v5184 = vunpack.c.l.b16 %v5115
      %v5185 = vunpack.c.l.b16 %v5116
      %v5186 = vunpack.c.l.b16 %v5117
      %v5187 = vunpack.c.h.b16 %v5115
      %v5188 = vunpack.c.h.b16 %v5116
      %v5189 = vunpack.c.h.b16 %v5117
      %v5190 = vpack.c.b16 %v5143, %v5142
      %v5191 = vpack.c.b16 %v5144, %v5144
      %v5192 = vpack.c.b16 %v5146, %v5145
      %v5193 = vpack.c.b16 %v5147, %v5147
      %v5194 = vpack.c.b16 %v5149, %v5148
      %v5195 = vpack.c.b16 %v5150, %v5150
      %v5196 = vpack.c.b16 %v5152, %v5151
      %v5197 = vpack.c.b16 %v5153, %v5153
      %v5198 = vpack.c.b16 %v5155, %v5154
      %v5199 = vpack.c.b16 %v5156, %v5156
      %v5200 = vpack.c.b16 %v5158, %v5157
      %v5201 = vpack.c.b16 %v5159, %v5159
      %v5202 = vpack.c.b16 %v5161, %v5160
      %v5203 = vpack.c.b16 %v5162, %v5162
      %v5204 = vpack.c.b16 %v5164, %v5163
      %v5205 = vpack.c.b16 %v5165, %v5165
      %v5206 = vpack.c.b16 %v5167, %v5166
      %v5207 = vpack.c.b16 %v5168, %v5168
      %v5208 = vpack.c.b16 %v5170, %v5169
      %v5209 = vpack.c.b16 %v5171, %v5171
      %v5210 = vpack.c.b16 %v5173, %v5172
      %v5211 = vpack.c.b16 %v5174, %v5174
      %v5212 = vpack.c.b16 %v5176, %v5175
      %v5213 = vpack.c.b16 %v5177, %v5177
      %v5214 = vpack.c.b16 %v5179, %v5178
      %v5215 = vpack.c.b16 %v5180, %v5180
      %v5216 = vpack.c.b16 %v5182, %v5181
      %v5217 = vpack.c.b16 %v5183, %v5183
      %v5218 = vpack.c.b16 %v5185, %v5184
      %v5219 = vpack.c.b16 %v5186, %v5186
      %v5220 = vpack.c.b16 %v5188, %v5187
      %v5221 = vpack.c.b16 %v5189, %v5189
      %5254 = vst [vmem:[#allocation4] sm:$0xff] %v5190
      %5255 = vst [vmem:[#allocation4 + $0x8] sm:$0xf] %v5191
      %5256 = vst [vmem:[#allocation4 + $0xc] sm:$0xff] %v5192
      %5257 = vst [vmem:[#allocation4 + $0x14] sm:$0xf] %v5193
      %5258 = vst [vmem:[#allocation4 + $0x18] sm:$0xff] %v5194
      %5259 = vst [vmem:[#allocation4 + $0x20] sm:$0xf] %v5195
      %5260 = vst [vmem:[#allocation4 + $0x24] sm:$0xff] %v5196
      %5261 = vst [vmem:[#allocation4 + $0x2c] sm:$0xf] %v5197
      %5262 = vst [vmem:[#allocation4 + $0x30] sm:$0xff] %v5198
      %5263 = vst [vmem:[#allocation4 + $0x38] sm:$0xf] %v5199
      %5264 = vst [vmem:[#allocation4 + $0x3c] sm:$0xff] %v5200
      %5265 = vst [vmem:[#allocation4 + $0x44] sm:$0xf] %v5201
      %5266 = vst [vmem:[#allocation4 + $0x48] sm:$0xff] %v5202
      %5267 = vst [vmem:[#allocation4 + $0x50] sm:$0xf] %v5203
      %5268 = vst [vmem:[#allocation4 + $0x54] sm:$0xff] %v5204
      %5269 = vst [vmem:[#allocation4 + $0x5c] sm:$0xf] %v5205
      %5270 = vst [vmem:[#allocation4 + $0x60] sm:$0xff] %v5206
      %5271 = vst [vmem:[#allocation4 + $0x68] sm:$0xf] %v5207
      %5272 = vst [vmem:[#allocation4 + $0x6c] sm:$0xff] %v5208
      %5273 = vst [vmem:[#allocation4 + $0x74] sm:$0xf] %v5209
      %5274 = vst [vmem:[#allocation4 + $0x78] sm:$0xff] %v5210
      %5275 = vst [vmem:[#allocation4 + $0x80] sm:$0xf] %v5211
      %5276 = vst [vmem:[#allocation4 + $0x84] sm:$0xff] %v5212
      %5277 = vst [vmem:[#allocation4 + $0x8c] sm:$0xf] %v5213
      %5278 = vst [vmem:[#allocation4 + $0x90] sm:$0xff] %v5214
      %5279 = vst [vmem:[#allocation4 + $0x98] sm:$0xf] %v5215
      %5280 = vst [vmem:[#allocation4 + $0x9c] sm:$0xff] %v5216
      %5281 = vst [vmem:[#allocation4 + $0xa4] sm:$0xf] %v5217
      %5282 = vst [vmem:[#allocation4 + $0xa8] sm:$0xff] %v5218
      %5283 = vst [vmem:[#allocation4 + $0xb0] sm:$0xf] %v5219
      %5284 = vst [vmem:[#allocation4 + $0xb4] sm:$0xff] %v5220
      %5285 = vst [vmem:[#allocation4 + $0xbc] sm:$0xf] %v5221
      %s5286 = scalar_lea.vmem %s5, 2
      %v5287 = vld [vmem:[%s5286] ss:$4 sm:$0x3]
      %v5288 = vld [vmem:[#allocation4] sm:$0xff]
      %v5289 = vld [vmem:[#allocation4 + $0x8] sm:$0xf]
      %v5290 = vld [vmem:[#allocation4 + $0xc] sm:$0xff]
      %v5291 = vld [vmem:[#allocation4 + $0x14] sm:$0xf]
      %v5292 = vld [vmem:[#allocation4 + $0x18] sm:$0xff]
      %v5293 = vld [vmem:[#allocation4 + $0x20] sm:$0xf]
      %v5294 = vld [vmem:[#allocation4 + $0x24] sm:$0xff]
      %v5295 = vld [vmem:[#allocation4 + $0x2c] sm:$0xf]
      %v5296 = vld [vmem:[#allocation4 + $0x30] sm:$0xff]
      %v5297 = vld [vmem:[#allocation4 + $0x38] sm:$0xf]
      %v5298 = vld [vmem:[#allocation4 + $0x3c] sm:$0xff]
      %v5299 = vld [vmem:[#allocation4 + $0x44] sm:$0xf]
      %v5300 = vld [vmem:[#allocation4 + $0x48] sm:$0xff]
      %v5301 = vld [vmem:[#allocation4 + $0x50] sm:$0xf]
      %v5302 = vld [vmem:[#allocation4 + $0x54] sm:$0xff]
      %v5303 = vld [vmem:[#allocation4 + $0x5c] sm:$0xf]
      %v5304 = vld [vmem:[#allocation4 + $0x60] sm:$0xff]
      %v5305 = vld [vmem:[#allocation4 + $0x68] sm:$0xf]
      %v5306 = vld [vmem:[#allocation4 + $0x6c] sm:$0xff]
      %v5307 = vld [vmem:[#allocation4 + $0x74] sm:$0xf]
      %v5308 = vld [vmem:[#allocation4 + $0x78] sm:$0xff]
      %v5309 = vld [vmem:[#allocation4 + $0x80] sm:$0xf]
      %v5310 = vld [vmem:[#allocation4 + $0x84] sm:$0xff]
      %v5311 = vld [vmem:[#allocation4 + $0x8c] sm:$0xf]
      %v5312 = vld [vmem:[#allocation4 + $0x90] sm:$0xff]
      %v5313 = vld [vmem:[#allocation4 + $0x98] sm:$0xf]
      %v5314 = vld [vmem:[#allocation4 + $0x9c] sm:$0xff]
      %v5315 = vld [vmem:[#allocation4 + $0xa4] sm:$0xf]
      %v5316 = vld [vmem:[#allocation4 + $0xa8] sm:$0xff]
      %v5317 = vld [vmem:[#allocation4 + $0xb0] sm:$0xf]
      %v5318 = vld [vmem:[#allocation4 + $0xb4] sm:$0xff]
      %v5319 = vld [vmem:[#allocation4 + $0xbc] sm:$0xf]
      %v5320 = vld [vmem:[%s3] sm:$0xff]
      %v5321 = vld [vmem:[%s3 + $0x8] sm:$0xff]
      %v5322 = vld [vmem:[%s3 + $0x10] sm:$0xff]
      %v5323 = vld [vmem:[%s3 + $0x18] sm:$0xff]
      %v5324 = vld [vmem:[%s3 + $0x20] sm:$0xff]
      %v5325 = vld [vmem:[%s3 + $0x28] sm:$0xff]
      %v5326 = vld [vmem:[%s3 + $0x30] sm:$0xff]
      %v5327 = vld [vmem:[%s3 + $0x38] sm:$0xff]
      %v5328 = vld [vmem:[%s3 + $0x40] sm:$0xff]
      %v5329 = vld [vmem:[%s3 + $0x48] sm:$0xff]
      %v5330 = vld [vmem:[%s3 + $0x50] sm:$0xff]
      %v5331 = vld [vmem:[%s3 + $0x58] sm:$0xff]
      %v5332 = vld [vmem:[%s3 + $0x60] sm:$0xff]
      %v5333 = vld [vmem:[%s3 + $0x68] sm:$0xff]
      %v5334 = vld [vmem:[%s3 + $0x70] sm:$0xff]
      %v5335 = vld [vmem:[%s3 + $0x78] sm:$0xff]
      %v5336 = vld [vmem:[%s3 + $0x80] sm:$0xff]
      %v5337 = vld [vmem:[%s3 + $0x88] sm:$0xff]
      %v5338 = vld [vmem:[%s3 + $0x90] sm:$0xff]
      %v5339 = vld [vmem:[%s3 + $0x98] sm:$0xff]
      %v5340 = vld [vmem:[%s3 + $0xa0] sm:$0xff]
      %v5341 = vld [vmem:[%s3 + $0xa8] sm:$0xff]
      %v5342 = vld [vmem:[%s3 + $0xb0] sm:$0xff]
      %v5343 = vld [vmem:[%s3 + $0xb8] sm:$0xff]
      %v5344 = vld [vmem:[%s3 + $0xc0] sm:$0xff]
      %v5345 = vld [vmem:[%s3 + $0xc8] sm:$0xff]
      %v5346 = vld [vmem:[%s3 + $0xd0] sm:$0xff]
      %v5347 = vld [vmem:[%s3 + $0xd8] sm:$0xff]
      %v5348 = vld [vmem:[%s3 + $0xe0] sm:$0xff]
      %v5349 = vld [vmem:[%s3 + $0xe8] sm:$0xff]
      %v5350 = vld [vmem:[%s3 + $0xf0] sm:$0xff]
      %v5351 = vld [vmem:[%s3 + $0xf8] sm:$0xff]
      %v5352 = vld [vmem:[%s3 + $0x100] sm:$0xff]
      %v5353 = vld [vmem:[%s3 + $0x108] sm:$0xff]
      %v5354 = vld [vmem:[%s3 + $0x110] sm:$0xff]
      %v5355 = vld [vmem:[%s3 + $0x118] sm:$0xff]
      %v5356 = vld [vmem:[%s3 + $0x120] sm:$0xff]
      %v5357 = vld [vmem:[%s3 + $0x128] sm:$0xff]
      %v5358 = vld [vmem:[%s3 + $0x130] sm:$0xff]
      %v5359 = vld [vmem:[%s3 + $0x138] sm:$0xff]
      %v5360 = vld [vmem:[%s3 + $0x140] sm:$0xff]
      %v5361 = vld [vmem:[%s3 + $0x148] sm:$0xff]
      %v5362 = vld [vmem:[%s3 + $0x150] sm:$0xff]
      %v5363 = vld [vmem:[%s3 + $0x158] sm:$0xff]
      %v5364 = vld [vmem:[%s3 + $0x160] sm:$0xff]
      %v5365 = vld [vmem:[%s3 + $0x168] sm:$0xff]
      %v5366 = vld [vmem:[%s3 + $0x170] sm:$0xff]
      %v5367 = vld [vmem:[%s3 + $0x178] sm:$0xff]
      %v5368 = vld [vmem:[#allocation4] sm:$0xff]
      %v5369 = vld [vmem:[#allocation4 + $0x8] sm:$0xf]
      %v5370 = vld [vmem:[#allocation4 + $0xc] sm:$0xff]
      %v5371 = vld [vmem:[#allocation4 + $0x14] sm:$0xf]
      %v5372 = vld [vmem:[#allocation4 + $0x18] sm:$0xff]
      %v5373 = vld [vmem:[#allocation4 + $0x20] sm:$0xf]
      %v5374 = vld [vmem:[#allocation4 + $0x24] sm:$0xff]
      %v5375 = vld [vmem:[#allocation4 + $0x2c] sm:$0xf]
      %v5376 = vld [vmem:[#allocation4 + $0x30] sm:$0xff]
      %v5377 = vld [vmem:[#allocation4 + $0x38] sm:$0xf]
      %v5378 = vld [vmem:[#allocation4 + $0x3c] sm:$0xff]
      %v5379 = vld [vmem:[#allocation4 + $0x44] sm:$0xf]
      %v5380 = vld [vmem:[#allocation4 + $0x48] sm:$0xff]
      %v5381 = vld [vmem:[#allocation4 + $0x50] sm:$0xf]
      %v5382 = vld [vmem:[#allocation4 + $0x54] sm:$0xff]
      %v5383 = vld [vmem:[#allocation4 + $0x5c] sm:$0xf]
      %v5384 = vld [vmem:[#allocation4 + $0x60] sm:$0xff]
      %v5385 = vld [vmem:[#allocation4 + $0x68] sm:$0xf]
      %v5386 = vld [vmem:[#allocation4 + $0x6c] sm:$0xff]
      %v5387 = vld [vmem:[#allocation4 + $0x74] sm:$0xf]
      %v5388 = vld [vmem:[#allocation4 + $0x78] sm:$0xff]
      %v5389 = vld [vmem:[#allocation4 + $0x80] sm:$0xf]
      %v5390 = vld [vmem:[#allocation4 + $0x84] sm:$0xff]
      %v5391 = vld [vmem:[#allocation4 + $0x8c] sm:$0xf]
      %v5392 = vld [vmem:[#allocation4 + $0x90] sm:$0xff]
      %v5393 = vld [vmem:[#allocation4 + $0x98] sm:$0xf]
      %v5394 = vld [vmem:[#allocation4 + $0x9c] sm:$0xff]
      %v5395 = vld [vmem:[#allocation4 + $0xa4] sm:$0xf]
      %v5396 = vld [vmem:[#allocation4 + $0xa8] sm:$0xff]
      %v5397 = vld [vmem:[#allocation4 + $0xb0] sm:$0xf]
      %v5398 = vld [vmem:[#allocation4 + $0xb4] sm:$0xff]
      %v5399 = vld [vmem:[#allocation4 + $0xbc] sm:$0xf]
      %v5400 = vld [vmem:[#allocation4 + $0xc0] sm:$0x11]
      %v5401 = vld [vmem:[#allocation4 + $0xc8] sm:$0x1]
      %s5402 = scalar_lea.vmem %s3, 384
      %v5403 = vld [vmem:[%s5402] sm:$0xff]
      %v5404 = vld [vmem:[%s5402 + $0x8] sm:$0xff]
      %v5405 = vld [vmem:[%s5402 + $0x10] sm:$0xff]
      %v5406 = vld [vmem:[%s5402 + $0x18] sm:$0xff]
      %v5407 = vld [vmem:[%s5402 + $0x20] sm:$0xff]
      %v5408 = vld [vmem:[%s5402 + $0x28] sm:$0xff]
      %v5409 = vld [vmem:[%s5402 + $0x30] sm:$0xff]
      %v5410 = vld [vmem:[%s5402 + $0x38] sm:$0xff]
      %v5411 = vld [vmem:[%s5402 + $0x40] sm:$0xff]
      %v5412 = vld [vmem:[%s5402 + $0x48] sm:$0xff]
      %v5413 = vld [vmem:[%s5402 + $0x50] sm:$0xff]
      %v5414 = vld [vmem:[%s5402 + $0x58] sm:$0xff]
      %v5415 = vld [vmem:[%s5402 + $0x60] sm:$0xff]
      %v5416 = vld [vmem:[%s5402 + $0x68] sm:$0xff]
      %v5417 = vld [vmem:[%s5402 + $0x70] sm:$0xff]
      %v5418 = vld [vmem:[%s5402 + $0x78] sm:$0xff]
      %v5419 = vld [vmem:[%s5402 + $0x80] sm:$0xff]
      %v5420 = vld [vmem:[%s5402 + $0x88] sm:$0xff]
      %v5421 = vld [vmem:[%s5402 + $0x90] sm:$0xff]
      %v5422 = vld [vmem:[%s5402 + $0x98] sm:$0xff]
      %v5423 = vld [vmem:[%s5402 + $0xa0] sm:$0xff]
      %v5424 = vld [vmem:[%s5402 + $0xa8] sm:$0xff]
      %v5425 = vld [vmem:[%s5402 + $0xb0] sm:$0xff]
      %v5426 = vld [vmem:[%s5402 + $0xb8] sm:$0xff]
      %v5427 = vld [vmem:[%s5402 + $0xc0] sm:$0xff]
      %v5428 = vld [vmem:[%s5402 + $0xc8] sm:$0xff]
      %v5429 = vld [vmem:[%s5402 + $0xd0] sm:$0xff]
      %v5430 = vld [vmem:[%s5402 + $0xd8] sm:$0xff]
      %v5431 = vld [vmem:[%s5402 + $0xe0] sm:$0xff]
      %v5432 = vld [vmem:[%s5402 + $0xe8] sm:$0xff]
      %v5433 = vld [vmem:[%s5402 + $0xf0] sm:$0xff]
      %v5434 = vld [vmem:[%s5402 + $0xf8] sm:$0xff]
      %v5435 = vld [vmem:[%s5402 + $0x100] sm:$0xff]
      %v5436 = vld [vmem:[%s5402 + $0x108] sm:$0xff]
      %v5437 = vld [vmem:[%s5402 + $0x110] sm:$0xff]
      %v5438 = vld [vmem:[%s5402 + $0x118] sm:$0xff]
      %v5439 = vld [vmem:[%s5402 + $0x120] sm:$0xff]
      %v5440 = vld [vmem:[%s5402 + $0x128] sm:$0xff]
      %v5441 = vld [vmem:[%s5402 + $0x130] sm:$0xff]
      %v5442 = vld [vmem:[%s5402 + $0x138] sm:$0xff]
      %v5443 = vld [vmem:[%s5402 + $0x140] sm:$0xff]
      %v5444 = vld [vmem:[%s5402 + $0x148] sm:$0xff]
      %v5445 = vld [vmem:[%s5402 + $0x150] sm:$0xff]
      %v5446 = vld [vmem:[%s5402 + $0x158] sm:$0xff]
      %v5447 = vld [vmem:[%s5402 + $0x160] sm:$0xff]
      %v5448 = vld [vmem:[%s5402 + $0x168] sm:$0xff]
      %v5449 = vld [vmem:[%s5402 + $0x170] sm:$0xff]
      %v5450 = vld [vmem:[%s5402 + $0x178] sm:$0xff]
      %v5485 = vunpack.c.l.b16 %v5368
      %v5486 = vunpack.c.h.b16 %v5368
      %v5487 = vunpack.c.l.b16 %v5369
      %v5488 = vunpack.c.l.b16 %v5370
      %v5489 = vunpack.c.h.b16 %v5370
      %v5490 = vunpack.c.l.b16 %v5371
      %v5491 = vunpack.c.l.b16 %v5372
      %v5492 = vunpack.c.h.b16 %v5372
      %v5493 = vunpack.c.l.b16 %v5373
      %v5494 = vunpack.c.l.b16 %v5374
      %v5495 = vunpack.c.h.b16 %v5374
      %v5496 = vunpack.c.l.b16 %v5375
      %v5497 = vunpack.c.l.b16 %v5376
      %v5498 = vunpack.c.h.b16 %v5376
      %v5499 = vunpack.c.l.b16 %v5377
      %v5500 = vunpack.c.l.b16 %v5378
      %v5501 = vunpack.c.h.b16 %v5378
      %v5502 = vunpack.c.l.b16 %v5379
      %v5503 = vunpack.c.l.b16 %v5380
      %v5504 = vunpack.c.h.b16 %v5380
      %v5505 = vunpack.c.l.b16 %v5381
      %v5506 = vunpack.c.l.b16 %v5382
      %v5507 = vunpack.c.h.b16 %v5382
      %v5508 = vunpack.c.l.b16 %v5383
      %v5509 = vunpack.c.l.b16 %v5384
      %v5510 = vunpack.c.h.b16 %v5384
      %v5511 = vunpack.c.l.b16 %v5385
      %v5512 = vunpack.c.l.b16 %v5386
      %v5513 = vunpack.c.h.b16 %v5386
      %v5514 = vunpack.c.l.b16 %v5387
      %v5515 = vunpack.c.l.b16 %v5388
      %v5516 = vunpack.c.h.b16 %v5388
      %v5517 = vunpack.c.l.b16 %v5389
      %v5518 = vunpack.c.l.b16 %v5390
      %v5519 = vunpack.c.h.b16 %v5390
      %v5520 = vunpack.c.l.b16 %v5391
      %v5521 = vunpack.c.l.b16 %v5392
      %v5522 = vunpack.c.h.b16 %v5392
      %v5523 = vunpack.c.l.b16 %v5393
      %v5524 = vunpack.c.l.b16 %v5394
      %v5525 = vunpack.c.h.b16 %v5394
      %v5526 = vunpack.c.l.b16 %v5395
      %v5527 = vunpack.c.l.b16 %v5396
      %v5528 = vunpack.c.h.b16 %v5396
      %v5529 = vunpack.c.l.b16 %v5397
      %v5530 = vunpack.c.l.b16 %v5398
      %v5531 = vunpack.c.h.b16 %v5398
      %v5532 = vunpack.c.l.b16 %v5399
      %v5533 = vunpack.c.l.b16 %v5400
      %v5534 = vunpack.c.h.b16 %v5400
      %v5535 = vunpack.c.l.b16 %v5401
      %v5536 = vpack.c.b16 %v5488, %v5485
      %v5537 = vpack.c.b16 %v5489, %v5486
      %v5538 = vpack.c.b16 %v5490, %v5487
      %v5539 = vpack.c.b16 %v5494, %v5491
      %v5540 = vpack.c.b16 %v5495, %v5492
      %v5541 = vpack.c.b16 %v5496, %v5493
      %v5542 = vpack.c.b16 %v5500, %v5497
      %v5543 = vpack.c.b16 %v5501, %v5498
      %v5544 = vpack.c.b16 %v5502, %v5499
      %v5545 = vpack.c.b16 %v5506, %v5503
      %v5546 = vpack.c.b16 %v5507, %v5504
      %v5547 = vpack.c.b16 %v5508, %v5505
      %v5548 = vpack.c.b16 %v5512, %v5509
      %v5549 = vpack.c.b16 %v5513, %v5510
      %v5550 = vpack.c.b16 %v5514, %v5511
      %v5551 = vpack.c.b16 %v5518, %v5515
      %v5552 = vpack.c.b16 %v5519, %v5516
      %v5553 = vpack.c.b16 %v5520, %v5517
      %v5554 = vpack.c.b16 %v5524, %v5521
      %v5555 = vpack.c.b16 %v5525, %v5522
      %v5556 = vpack.c.b16 %v5526, %v5523
      %v5557 = vpack.c.b16 %v5530, %v5527
      %v5558 = vpack.c.b16 %v5531, %v5528
      %v5559 = vpack.c.b16 %v5532, %v5529
      %v5560 = vpack.c.b16 %v5533, %v5533
      %v5561 = vpack.c.b16 %v5534, %v5534
      %v5562 = vpack.c.b16 %v5535, %v5535
      %v5564 = vshrl.u32 %v5536, 16
      %v5566 = vshll.u32 %v5536, 16
      %v5568 = vrot.slane %v5566, 1
      %v5569 = vor.u32 %v5564, %v5568
      %v5571 = vshll.u32 %v5539, 16
      %v5573 = vrot.slane %v5571, 1
      %v5574 = vsel %vm446, %v5569, %v5573
      %v5576 = vshrl.u32 %v5537, 16
      %v5578 = vshll.u32 %v5537, 16
      %v5580 = vrot.slane %v5578, 1
      %v5581 = vor.u32 %v5576, %v5580
      %v5583 = vshll.u32 %v5540, 16
      %v5585 = vrot.slane %v5583, 1
      %v5586 = vsel %vm446, %v5581, %v5585
      %v5588 = vshrl.u32 %v5538, 16
      %v5590 = vshll.u32 %v5538, 16
      %v5592 = vrot.slane %v5590, 1
      %v5593 = vor.u32 %v5588, %v5592
      %v5595 = vshll.u32 %v5541, 16
      %v5597 = vrot.slane %v5595, 1
      %v5598 = vsel %vm446, %v5593, %v5597
      %v5599 = vshrl.u32 %v5539, 16
      %v5601 = vor.u32 %v5599, %v5573
      %v5603 = vshll.u32 %v5542, 16
      %v5605 = vrot.slane %v5603, 1
      %v5606 = vsel %vm446, %v5601, %v5605
      %v5607 = vshrl.u32 %v5540, 16
      %v5609 = vor.u32 %v5607, %v5585
      %v5611 = vshll.u32 %v5543, 16
      %v5613 = vrot.slane %v5611, 1
      %v5614 = vsel %vm446, %v5609, %v5613
      %v5615 = vshrl.u32 %v5541, 16
      %v5617 = vor.u32 %v5615, %v5597
      %v5619 = vshll.u32 %v5544, 16
      %v5621 = vrot.slane %v5619, 1
      %v5622 = vsel %vm446, %v5617, %v5621
      %v5623 = vshrl.u32 %v5542, 16
      %v5625 = vor.u32 %v5623, %v5605
      %v5627 = vshll.u32 %v5545, 16
      %v5629 = vrot.slane %v5627, 1
      %v5630 = vsel %vm446, %v5625, %v5629
      %v5631 = vshrl.u32 %v5543, 16
      %v5633 = vor.u32 %v5631, %v5613
      %v5635 = vshll.u32 %v5546, 16
      %v5637 = vrot.slane %v5635, 1
      %v5638 = vsel %vm446, %v5633, %v5637
      %v5639 = vshrl.u32 %v5544, 16
      %v5641 = vor.u32 %v5639, %v5621
      %v5643 = vshll.u32 %v5547, 16
      %v5645 = vrot.slane %v5643, 1
      %v5646 = vsel %vm446, %v5641, %v5645
      %v5647 = vshrl.u32 %v5545, 16
      %v5649 = vor.u32 %v5647, %v5629
      %v5651 = vshll.u32 %v5548, 16
      %v5653 = vrot.slane %v5651, 1
      %v5654 = vsel %vm446, %v5649, %v5653
      %v5655 = vshrl.u32 %v5546, 16
      %v5657 = vor.u32 %v5655, %v5637
      %v5659 = vshll.u32 %v5549, 16
      %v5661 = vrot.slane %v5659, 1
      %v5662 = vsel %vm446, %v5657, %v5661
      %v5663 = vshrl.u32 %v5547, 16
      %v5665 = vor.u32 %v5663, %v5645
      %v5667 = vshll.u32 %v5550, 16
      %v5669 = vrot.slane %v5667, 1
      %v5670 = vsel %vm446, %v5665, %v5669
      %v5671 = vshrl.u32 %v5548, 16
      %v5673 = vor.u32 %v5671, %v5653
      %v5675 = vshll.u32 %v5551, 16
      %v5677 = vrot.slane %v5675, 1
      %v5678 = vsel %vm446, %v5673, %v5677
      %v5679 = vshrl.u32 %v5549, 16
      %v5681 = vor.u32 %v5679, %v5661
      %v5683 = vshll.u32 %v5552, 16
      %v5685 = vrot.slane %v5683, 1
      %v5686 = vsel %vm446, %v5681, %v5685
      %v5687 = vshrl.u32 %v5550, 16
      %v5689 = vor.u32 %v5687, %v5669
      %v5691 = vshll.u32 %v5553, 16
      %v5693 = vrot.slane %v5691, 1
      %v5694 = vsel %vm446, %v5689, %v5693
      %v5695 = vshrl.u32 %v5551, 16
      %v5697 = vor.u32 %v5695, %v5677
      %v5699 = vshll.u32 %v5554, 16
      %v5701 = vrot.slane %v5699, 1
      %v5702 = vsel %vm446, %v5697, %v5701
      %v5703 = vshrl.u32 %v5552, 16
      %v5705 = vor.u32 %v5703, %v5685
      %v5707 = vshll.u32 %v5555, 16
      %v5709 = vrot.slane %v5707, 1
      %v5710 = vsel %vm446, %v5705, %v5709
      %v5711 = vshrl.u32 %v5553, 16
      %v5713 = vor.u32 %v5711, %v5693
      %v5715 = vshll.u32 %v5556, 16
      %v5717 = vrot.slane %v5715, 1
      %v5718 = vsel %vm446, %v5713, %v5717
      %v5719 = vshrl.u32 %v5554, 16
      %v5721 = vor.u32 %v5719, %v5701
      %v5723 = vshll.u32 %v5557, 16
      %v5725 = vrot.slane %v5723, 1
      %v5726 = vsel %vm446, %v5721, %v5725
      %v5727 = vshrl.u32 %v5555, 16
      %v5729 = vor.u32 %v5727, %v5709
      %v5731 = vshll.u32 %v5558, 16
      %v5733 = vrot.slane %v5731, 1
      %v5734 = vsel %vm446, %v5729, %v5733
      %v5735 = vshrl.u32 %v5556, 16
      %v5737 = vor.u32 %v5735, %v5717
      %v5739 = vshll.u32 %v5559, 16
      %v5741 = vrot.slane %v5739, 1
      %v5742 = vsel %vm446, %v5737, %v5741
      %v5743 = vshrl.u32 %v5557, 16
      %v5745 = vor.u32 %v5743, %v5725
      %v5747 = vshll.u32 %v5560, 16
      %v5749 = vrot.slane %v5747, 1
      %v5750 = vsel %vm446, %v5745, %v5749
      %v5751 = vshrl.u32 %v5558, 16
      %v5753 = vor.u32 %v5751, %v5733
      %v5755 = vshll.u32 %v5561, 16
      %v5757 = vrot.slane %v5755, 1
      %v5758 = vsel %vm446, %v5753, %v5757
      %v5759 = vshrl.u32 %v5559, 16
      %v5761 = vor.u32 %v5759, %v5741
      %v5763 = vshll.u32 %v5562, 16
      %v5765 = vrot.slane %v5763, 1
      %v5766 = vsel %vm446, %v5761, %v5765
      %v5839 = vunpack.c.l.b16 %v5403
      %v5840 = vunpack.c.h.b16 %v5403
      %v5841 = vunpack.c.l.b16 %v5404
      %v5842 = vunpack.c.h.b16 %v5404
      %v5843 = vunpack.c.l.b16 %v5405
      %v5844 = vunpack.c.h.b16 %v5405
      %v5845 = vunpack.c.l.b16 %v5406
      %v5846 = vunpack.c.h.b16 %v5406
      %v5847 = vunpack.c.l.b16 %v5407
      %v5848 = vunpack.c.h.b16 %v5407
      %v5849 = vunpack.c.l.b16 %v5408
      %v5850 = vunpack.c.h.b16 %v5408
      %v5851 = vunpack.c.l.b16 %v5409
      %v5852 = vunpack.c.h.b16 %v5409
      %v5853 = vunpack.c.l.b16 %v5410
      %v5854 = vunpack.c.h.b16 %v5410
      %v5855 = vunpack.c.l.b16 %v5411
      %v5856 = vunpack.c.h.b16 %v5411
      %v5857 = vunpack.c.l.b16 %v5412
      %v5858 = vunpack.c.h.b16 %v5412
      %v5859 = vunpack.c.l.b16 %v5413
      %v5860 = vunpack.c.h.b16 %v5413
      %v5861 = vunpack.c.l.b16 %v5414
      %v5862 = vunpack.c.h.b16 %v5414
      %v5863 = vunpack.c.l.b16 %v5415
      %v5864 = vunpack.c.h.b16 %v5415
      %v5865 = vunpack.c.l.b16 %v5416
      %v5866 = vunpack.c.h.b16 %v5416
      %v5867 = vunpack.c.l.b16 %v5417
      %v5868 = vunpack.c.h.b16 %v5417
      %v5869 = vunpack.c.l.b16 %v5418
      %v5870 = vunpack.c.h.b16 %v5418
      %v5871 = vunpack.c.l.b16 %v5419
      %v5872 = vunpack.c.h.b16 %v5419
      %v5873 = vunpack.c.l.b16 %v5420
      %v5874 = vunpack.c.h.b16 %v5420
      %v5875 = vunpack.c.l.b16 %v5421
      %v5876 = vunpack.c.h.b16 %v5421
      %v5877 = vunpack.c.l.b16 %v5422
      %v5878 = vunpack.c.h.b16 %v5422
      %v5879 = vunpack.c.l.b16 %v5423
      %v5880 = vunpack.c.h.b16 %v5423
      %v5881 = vunpack.c.l.b16 %v5424
      %v5882 = vunpack.c.h.b16 %v5424
      %v5883 = vunpack.c.l.b16 %v5425
      %v5884 = vunpack.c.h.b16 %v5425
      %v5885 = vunpack.c.l.b16 %v5426
      %v5886 = vunpack.c.h.b16 %v5426
      %v5887 = vunpack.c.l.b16 %v5427
      %v5888 = vunpack.c.h.b16 %v5427
      %v5889 = vunpack.c.l.b16 %v5428
      %v5890 = vunpack.c.h.b16 %v5428
      %v5891 = vunpack.c.l.b16 %v5429
      %v5892 = vunpack.c.h.b16 %v5429
      %v5893 = vunpack.c.l.b16 %v5430
      %v5894 = vunpack.c.h.b16 %v5430
      %v5895 = vunpack.c.l.b16 %v5431
      %v5896 = vunpack.c.h.b16 %v5431
      %v5897 = vunpack.c.l.b16 %v5432
      %v5898 = vunpack.c.h.b16 %v5432
      %v5899 = vunpack.c.l.b16 %v5433
      %v5900 = vunpack.c.h.b16 %v5433
      %v5901 = vunpack.c.l.b16 %v5434
      %v5902 = vunpack.c.h.b16 %v5434
      %v5903 = vunpack.c.l.b16 %v5435
      %v5904 = vunpack.c.h.b16 %v5435
      %v5905 = vunpack.c.l.b16 %v5436
      %v5906 = vunpack.c.h.b16 %v5436
      %v5907 = vunpack.c.l.b16 %v5437
      %v5908 = vunpack.c.h.b16 %v5437
      %v5909 = vunpack.c.l.b16 %v5438
      %v5910 = vunpack.c.h.b16 %v5438
      %v5911 = vunpack.c.l.b16 %v5439
      %v5912 = vunpack.c.h.b16 %v5439
      %v5913 = vunpack.c.l.b16 %v5440
      %v5914 = vunpack.c.h.b16 %v5440
      %v5915 = vunpack.c.l.b16 %v5441
      %v5916 = vunpack.c.h.b16 %v5441
      %v5917 = vunpack.c.l.b16 %v5442
      %v5918 = vunpack.c.h.b16 %v5442
      %v5919 = vunpack.c.l.b16 %v5443
      %v5920 = vunpack.c.h.b16 %v5443
      %v5921 = vunpack.c.l.b16 %v5444
      %v5922 = vunpack.c.h.b16 %v5444
      %v5923 = vunpack.c.l.b16 %v5445
      %v5924 = vunpack.c.h.b16 %v5445
      %v5925 = vunpack.c.l.b16 %v5446
      %v5926 = vunpack.c.h.b16 %v5446
      %v5927 = vunpack.c.l.b16 %v5447
      %v5928 = vunpack.c.h.b16 %v5447
      %v5929 = vunpack.c.l.b16 %v5448
      %v5930 = vunpack.c.h.b16 %v5448
      %v5931 = vunpack.c.l.b16 %v5449
      %v5932 = vunpack.c.h.b16 %v5449
      %v5933 = vunpack.c.l.b16 %v5450
      %v5934 = vunpack.c.h.b16 %v5450
      %v5935 = vpack.c.b16 %v5841, %v5839
      %v5936 = vpack.c.b16 %v5842, %v5840
      %v5937 = vpack.c.b16 %v5845, %v5843
      %v5938 = vpack.c.b16 %v5846, %v5844
      %v5939 = vpack.c.b16 %v5849, %v5847
      %v5940 = vpack.c.b16 %v5850, %v5848
      %v5941 = vpack.c.b16 %v5853, %v5851
      %v5942 = vpack.c.b16 %v5854, %v5852
      %v5943 = vpack.c.b16 %v5857, %v5855
      %v5944 = vpack.c.b16 %v5858, %v5856
      %v5945 = vpack.c.b16 %v5861, %v5859
      %v5946 = vpack.c.b16 %v5862, %v5860
      %v5947 = vpack.c.b16 %v5865, %v5863
      %v5948 = vpack.c.b16 %v5866, %v5864
      %v5949 = vpack.c.b16 %v5869, %v5867
      %v5950 = vpack.c.b16 %v5870, %v5868
      %v5951 = vpack.c.b16 %v5873, %v5871
      %v5952 = vpack.c.b16 %v5874, %v5872
      %v5953 = vpack.c.b16 %v5877, %v5875
      %v5954 = vpack.c.b16 %v5878, %v5876
      %v5955 = vpack.c.b16 %v5881, %v5879
      %v5956 = vpack.c.b16 %v5882, %v5880
      %v5957 = vpack.c.b16 %v5885, %v5883
      %v5958 = vpack.c.b16 %v5886, %v5884
      %v5959 = vpack.c.b16 %v5889, %v5887
      %v5960 = vpack.c.b16 %v5890, %v5888
      %v5961 = vpack.c.b16 %v5893, %v5891
      %v5962 = vpack.c.b16 %v5894, %v5892
      %v5963 = vpack.c.b16 %v5897, %v5895
      %v5964 = vpack.c.b16 %v5898, %v5896
      %v5965 = vpack.c.b16 %v5901, %v5899
      %v5966 = vpack.c.b16 %v5902, %v5900
      %v5967 = vpack.c.b16 %v5905, %v5903
      %v5968 = vpack.c.b16 %v5906, %v5904
      %v5969 = vpack.c.b16 %v5909, %v5907
      %v5970 = vpack.c.b16 %v5910, %v5908
      %v5971 = vpack.c.b16 %v5913, %v5911
      %v5972 = vpack.c.b16 %v5914, %v5912
      %v5973 = vpack.c.b16 %v5917, %v5915
      %v5974 = vpack.c.b16 %v5918, %v5916
      %v5975 = vpack.c.b16 %v5921, %v5919
      %v5976 = vpack.c.b16 %v5922, %v5920
      %v5977 = vpack.c.b16 %v5925, %v5923
      %v5978 = vpack.c.b16 %v5926, %v5924
      %v5979 = vpack.c.b16 %v5929, %v5927
      %v5980 = vpack.c.b16 %v5930, %v5928
      %v5981 = vpack.c.b16 %v5933, %v5931
      %v5982 = vpack.c.b16 %v5934, %v5932
      %6031 = vmatprep.subr.bf16.mxu0 %v5950
      %6032 = vmatpush1.bf16.msra.mxu0 %v5949
      %6033 = vmatprep.subr.bf16.mxu0 %v5948
      %6034 = vmatpush1.bf16.msra.mxu0 %v5947
      %6035 = vmatprep.subr.bf16.mxu0 %v5946
      %6036 = vmatpush1.bf16.msra.mxu0 %v5945
      %6037 = vmatprep.subr.bf16.mxu0 %v5944
      %6038 = vmatpush1.bf16.msra.mxu0 %v5943
      %6039 = vmatprep.subr.bf16.mxu0 %v5942
      %6040 = vmatpush1.bf16.msra.mxu0 %v5941
      %6041 = vmatprep.subr.bf16.mxu0 %v5940
      %6042 = vmatpush1.bf16.msra.mxu0 %v5939
      %6043 = vmatprep.subr.bf16.mxu0 %v5938
      %6044 = vmatpush1.bf16.msra.mxu0 %v5937
      %6045 = vmatprep.subr.bf16.mxu0 %v5936
      %6046 = vmatpush1.bf16.msra.mxu0 %v5935
      %6047 = vmatprep.subr.bf16.mxu0 %v5966
      %6048 = vmatpush2.bf16.msra.mxu0 %v5965
      %6049 = vmatprep.subr.bf16.mxu0 %v5964
      %6050 = vmatpush2.bf16.msra.mxu0 %v5963
      %6051 = vmatprep.subr.bf16.mxu0 %v5962
      %6052 = vmatpush2.bf16.msra.mxu0 %v5961
      %6053 = vmatprep.subr.bf16.mxu0 %v5960
      %6054 = vmatpush2.bf16.msra.mxu0 %v5959
      %6055 = vmatprep.subr.bf16.mxu0 %v5958
      %6056 = vmatpush2.bf16.msra.mxu0 %v5957
      %6057 = vmatprep.subr.bf16.mxu0 %v5956
      %6058 = vmatpush2.bf16.msra.mxu0 %v5955
      %6059 = vmatprep.subr.bf16.mxu0 %v5954
      %6060 = vmatpush2.bf16.msra.mxu0 %v5953
      %6061 = vmatprep.subr.bf16.mxu0 %v5952
      %6062 = vmatpush2.bf16.msra.mxu0 %v5951
      %6063 = vmatprep.mubr.bf16.mxu0 %v5586
      %6064 = vmatmul.mubr.bf16.gmra.mxu0 %v5574
      %v6065 = vpop.f32.mrf.mxu0
      %v6066 = vadd.f32 0.0, %v6065
      %v6067 = vpop.f32.mrf.mxu0
      %v6068 = vadd.f32 0.0, %v6067
      %v6069 = vpop.f32.mrf.mxu0
      %v6070 = vadd.f32 0.0, %v6069
      %v6071 = vpop.f32.mrf.mxu0
      %v6072 = vadd.f32 0.0, %v6071
      %6073 = vmatprep.mubr.bf16.mxu0 %v5614
      %6074 = vmatmul.mubr.bf16.gmra.mxu0 %v5606
      %v6075 = vpop.f32.mrf.mxu0
      %v6076 = vadd.f32 0.0, %v6075
      %v6077 = vpop.f32.mrf.mxu0
      %v6078 = vadd.f32 0.0, %v6077
      %v6079 = vpop.f32.mrf.mxu0
      %v6080 = vadd.f32 0.0, %v6079
      %v6081 = vpop.f32.mrf.mxu0
      %v6082 = vadd.f32 0.0, %v6081
      %6083 = vmatprep.mubr.bf16.mxu0 %v5638
      %6084 = vmatmul.mubr.bf16.gmra.mxu0 %v5630
      %v6085 = vpop.f32.mrf.mxu0
      %v6086 = vadd.f32 0.0, %v6085
      %v6087 = vpop.f32.mrf.mxu0
      %v6088 = vadd.f32 0.0, %v6087
      %v6089 = vpop.f32.mrf.mxu0
      %v6090 = vadd.f32 0.0, %v6089
      %v6091 = vpop.f32.mrf.mxu0
      %v6092 = vadd.f32 0.0, %v6091
      %6093 = vmatprep.mubr.bf16.mxu0 %v5662
      %6094 = vmatmul.mubr.bf16.gmra.mxu0 %v5654
      %v6095 = vpop.f32.mrf.mxu0
      %v6096 = vadd.f32 0.0, %v6095
      %v6097 = vpop.f32.mrf.mxu0
      %v6098 = vadd.f32 0.0, %v6097
      %v6099 = vpop.f32.mrf.mxu0
      %v6100 = vadd.f32 0.0, %v6099
      %v6101 = vpop.f32.mrf.mxu0
      %v6102 = vadd.f32 0.0, %v6101
      %6103 = vmatprep.mubr.bf16.mxu0 %v5686
      %6104 = vmatmul.mubr.bf16.gmra.mxu0 %v5678
      %v6105 = vpop.f32.mrf.mxu0
      %v6106 = vadd.f32 0.0, %v6105
      %v6107 = vpop.f32.mrf.mxu0
      %v6108 = vadd.f32 0.0, %v6107
      %v6109 = vpop.f32.mrf.mxu0
      %v6110 = vadd.f32 0.0, %v6109
      %v6111 = vpop.f32.mrf.mxu0
      %v6112 = vadd.f32 0.0, %v6111
      %6113 = vmatprep.mubr.bf16.mxu0 %v5710
      %6114 = vmatmul.mubr.bf16.gmra.mxu0 %v5702
      %v6115 = vpop.f32.mrf.mxu0
      %v6116 = vadd.f32 0.0, %v6115
      %v6117 = vpop.f32.mrf.mxu0
      %v6118 = vadd.f32 0.0, %v6117
      %v6119 = vpop.f32.mrf.mxu0
      %v6120 = vadd.f32 0.0, %v6119
      %v6121 = vpop.f32.mrf.mxu0
      %v6122 = vadd.f32 0.0, %v6121
      %6123 = vmatprep.mubr.bf16.mxu0 %v5734
      %6124 = vmatmul.mubr.bf16.gmra.mxu0 %v5726
      %v6125 = vpop.f32.mrf.mxu0
      %v6126 = vadd.f32 0.0, %v6125
      %v6127 = vpop.f32.mrf.mxu0
      %v6128 = vadd.f32 0.0, %v6127
      %v6129 = vpop.f32.mrf.mxu0
      %v6130 = vadd.f32 0.0, %v6129
      %v6131 = vpop.f32.mrf.mxu0
      %v6132 = vadd.f32 0.0, %v6131
      %6133 = vmatprep.mubr.bf16.mxu0 %v5758
      %6134 = vmatmul.mubr.bf16.gmra.mxu0 %v5750
      %v6135 = vpop.f32.mrf.mxu0
      %v6136 = vadd.f32 0.0, %v6135
      %v6137 = vpop.f32.mrf.mxu0
      %v6138 = vadd.f32 0.0, %v6137
      %v6139 = vpop.f32.mrf.mxu0
      %v6140 = vadd.f32 0.0, %v6139
      %v6141 = vpop.f32.mrf.mxu0
      %v6142 = vadd.f32 0.0, %v6141
      %6143 = vdwg.mxu0
      %6144 = vmatprep.subr.bf16.mxu0 %v5982
      %6145 = vmatpush1.bf16.msra.mxu0 %v5981
      %6146 = vmatprep.subr.bf16.mxu0 %v5980
      %6147 = vmatpush1.bf16.msra.mxu0 %v5979
      %6148 = vmatprep.subr.bf16.mxu0 %v5978
      %6149 = vmatpush1.bf16.msra.mxu0 %v5977
      %6150 = vmatprep.subr.bf16.mxu0 %v5976
      %6151 = vmatpush1.bf16.msra.mxu0 %v5975
      %6152 = vmatprep.subr.bf16.mxu0 %v5974
      %6153 = vmatpush1.bf16.msra.mxu0 %v5973
      %6154 = vmatprep.subr.bf16.mxu0 %v5972
      %6155 = vmatpush1.bf16.msra.mxu0 %v5971
      %6156 = vmatprep.subr.bf16.mxu0 %v5970
      %6157 = vmatpush1.bf16.msra.mxu0 %v5969
      %6158 = vmatprep.subr.bf16.mxu0 %v5968
      %6159 = vmatpush1.bf16.msra.mxu0 %v5967
      %6160 = vmatprep.subr.bf16.mxu0 0
      %6161 = vmatpush2.bf16.msra.mxu0 0
      %6162 = vmatprep.subr.bf16.mxu0 0
      %6163 = vmatpush2.bf16.msra.mxu0 0
      %6164 = vmatprep.subr.bf16.mxu0 0
      %6165 = vmatpush2.bf16.msra.mxu0 0
      %6166 = vmatprep.subr.bf16.mxu0 0
      %6167 = vmatpush2.bf16.msra.mxu0 0
      %6168 = vmatprep.subr.bf16.mxu0 0
      %6169 = vmatpush2.bf16.msra.mxu0 0
      %6170 = vmatprep.subr.bf16.mxu0 0
      %6171 = vmatpush2.bf16.msra.mxu0 0
      %6172 = vmatprep.subr.bf16.mxu0 0
      %6173 = vmatpush2.bf16.msra.mxu0 0
      %6174 = vmatprep.subr.bf16.mxu0 0
      %6175 = vmatpush2.bf16.msra.mxu0 0
      %6176 = vmatprep.mubr.bf16.mxu0 0
      %6177 = vmatmul.mubr.bf16.gmra.mxu0 %v5598
      %v6178 = vpop.f32.mrf.mxu0
      %v6179 = vadd.f32 %v6066, %v6178
      %v6180 = vpop.f32.mrf.mxu0
      %v6181 = vadd.f32 %v6068, %v6180
      %v6182 = vpop.f32.mrf.mxu0
      %v6183 = vadd.f32 %v6070, %v6182
      %v6184 = vpop.f32.mrf.mxu0
      %v6185 = vadd.f32 %v6072, %v6184
      %6186 = vmatprep.mubr.bf16.mxu0 0
      %6187 = vmatmul.mubr.bf16.gmra.mxu0 %v5622
      %v6188 = vpop.f32.mrf.mxu0
      %v6189 = vadd.f32 %v6076, %v6188
      %v6190 = vpop.f32.mrf.mxu0
      %v6191 = vadd.f32 %v6078, %v6190
      %v6192 = vpop.f32.mrf.mxu0
      %v6193 = vadd.f32 %v6080, %v6192
      %v6194 = vpop.f32.mrf.mxu0
      %v6195 = vadd.f32 %v6082, %v6194
      %6196 = vmatprep.mubr.bf16.mxu0 0
      %6197 = vmatmul.mubr.bf16.gmra.mxu0 %v5646
      %v6198 = vpop.f32.mrf.mxu0
      %v6199 = vadd.f32 %v6086, %v6198
      %v6200 = vpop.f32.mrf.mxu0
      %v6201 = vadd.f32 %v6088, %v6200
      %v6202 = vpop.f32.mrf.mxu0
      %v6203 = vadd.f32 %v6090, %v6202
      %v6204 = vpop.f32.mrf.mxu0
      %v6205 = vadd.f32 %v6092, %v6204
      %6206 = vmatprep.mubr.bf16.mxu0 0
      %6207 = vmatmul.mubr.bf16.gmra.mxu0 %v5670
      %v6208 = vpop.f32.mrf.mxu0
      %v6209 = vadd.f32 %v6096, %v6208
      %v6210 = vpop.f32.mrf.mxu0
      %v6211 = vadd.f32 %v6098, %v6210
      %v6212 = vpop.f32.mrf.mxu0
      %v6213 = vadd.f32 %v6100, %v6212
      %v6214 = vpop.f32.mrf.mxu0
      %v6215 = vadd.f32 %v6102, %v6214
      %6216 = vmatprep.mubr.bf16.mxu0 0
      %6217 = vmatmul.mubr.bf16.gmra.mxu0 %v5694
      %v6218 = vpop.f32.mrf.mxu0
      %v6219 = vadd.f32 %v6106, %v6218
      %v6220 = vpop.f32.mrf.mxu0
      %v6221 = vadd.f32 %v6108, %v6220
      %v6222 = vpop.f32.mrf.mxu0
      %v6223 = vadd.f32 %v6110, %v6222
      %v6224 = vpop.f32.mrf.mxu0
      %v6225 = vadd.f32 %v6112, %v6224
      %6226 = vmatprep.mubr.bf16.mxu0 0
      %6227 = vmatmul.mubr.bf16.gmra.mxu0 %v5718
      %v6228 = vpop.f32.mrf.mxu0
      %v6229 = vadd.f32 %v6116, %v6228
      %v6230 = vpop.f32.mrf.mxu0
      %v6231 = vadd.f32 %v6118, %v6230
      %v6232 = vpop.f32.mrf.mxu0
      %v6233 = vadd.f32 %v6120, %v6232
      %v6234 = vpop.f32.mrf.mxu0
      %v6235 = vadd.f32 %v6122, %v6234
      %6236 = vmatprep.mubr.bf16.mxu0 0
      %6237 = vmatmul.mubr.bf16.gmra.mxu0 %v5742
      %v6238 = vpop.f32.mrf.mxu0
      %v6239 = vadd.f32 %v6126, %v6238
      %v6240 = vpop.f32.mrf.mxu0
      %v6241 = vadd.f32 %v6128, %v6240
      %v6242 = vpop.f32.mrf.mxu0
      %v6243 = vadd.f32 %v6130, %v6242
      %v6244 = vpop.f32.mrf.mxu0
      %v6245 = vadd.f32 %v6132, %v6244
      %6246 = vmatprep.mubr.bf16.mxu0 0
      %6247 = vmatmul.mubr.bf16.gmra.mxu0 %v5766
      %v6248 = vpop.f32.mrf.mxu0
      %v6249 = vadd.f32 %v6136, %v6248
      %v6250 = vpop.f32.mrf.mxu0
      %v6251 = vadd.f32 %v6138, %v6250
      %v6252 = vpop.f32.mrf.mxu0
      %v6253 = vadd.f32 %v6140, %v6252
      %v6254 = vpop.f32.mrf.mxu0
      %v6255 = vadd.f32 %v6142, %v6254
      %6256 = vdwg.mxu0
      %v6289 = vunpack.c.l.b16 %v5288
      %v6290 = vunpack.c.h.b16 %v5288
      %v6291 = vunpack.c.l.b16 %v5289
      %v6292 = vunpack.c.l.b16 %v5290
      %v6293 = vunpack.c.h.b16 %v5290
      %v6294 = vunpack.c.l.b16 %v5291
      %v6295 = vunpack.c.l.b16 %v5292
      %v6296 = vunpack.c.h.b16 %v5292
      %v6297 = vunpack.c.l.b16 %v5293
      %v6298 = vunpack.c.l.b16 %v5294
      %v6299 = vunpack.c.h.b16 %v5294
      %v6300 = vunpack.c.l.b16 %v5295
      %v6301 = vunpack.c.l.b16 %v5296
      %v6302 = vunpack.c.h.b16 %v5296
      %v6303 = vunpack.c.l.b16 %v5297
      %v6304 = vunpack.c.l.b16 %v5298
      %v6305 = vunpack.c.h.b16 %v5298
      %v6306 = vunpack.c.l.b16 %v5299
      %v6307 = vunpack.c.l.b16 %v5300
      %v6308 = vunpack.c.h.b16 %v5300
      %v6309 = vunpack.c.l.b16 %v5301
      %v6310 = vunpack.c.l.b16 %v5302
      %v6311 = vunpack.c.h.b16 %v5302
      %v6312 = vunpack.c.l.b16 %v5303
      %v6313 = vunpack.c.l.b16 %v5304
      %v6314 = vunpack.c.h.b16 %v5304
      %v6315 = vunpack.c.l.b16 %v5305
      %v6316 = vunpack.c.l.b16 %v5306
      %v6317 = vunpack.c.h.b16 %v5306
      %v6318 = vunpack.c.l.b16 %v5307
      %v6319 = vunpack.c.l.b16 %v5308
      %v6320 = vunpack.c.h.b16 %v5308
      %v6321 = vunpack.c.l.b16 %v5309
      %v6322 = vunpack.c.l.b16 %v5310
      %v6323 = vunpack.c.h.b16 %v5310
      %v6324 = vunpack.c.l.b16 %v5311
      %v6325 = vunpack.c.l.b16 %v5312
      %v6326 = vunpack.c.h.b16 %v5312
      %v6327 = vunpack.c.l.b16 %v5313
      %v6328 = vunpack.c.l.b16 %v5314
      %v6329 = vunpack.c.h.b16 %v5314
      %v6330 = vunpack.c.l.b16 %v5315
      %v6331 = vunpack.c.l.b16 %v5316
      %v6332 = vunpack.c.h.b16 %v5316
      %v6333 = vunpack.c.l.b16 %v5317
      %v6334 = vunpack.c.l.b16 %v5318
      %v6335 = vunpack.c.h.b16 %v5318
      %v6336 = vunpack.c.l.b16 %v5319
      %v6337 = vpack.c.b16 %v6292, %v6289
      %v6338 = vpack.c.b16 %v6293, %v6290
      %v6339 = vpack.c.b16 %v6294, %v6291
      %v6340 = vpack.c.b16 %v6298, %v6295
      %v6341 = vpack.c.b16 %v6299, %v6296
      %v6342 = vpack.c.b16 %v6300, %v6297
      %v6343 = vpack.c.b16 %v6304, %v6301
      %v6344 = vpack.c.b16 %v6305, %v6302
      %v6345 = vpack.c.b16 %v6306, %v6303
      %v6346 = vpack.c.b16 %v6310, %v6307
      %v6347 = vpack.c.b16 %v6311, %v6308
      %v6348 = vpack.c.b16 %v6312, %v6309
      %v6349 = vpack.c.b16 %v6316, %v6313
      %v6350 = vpack.c.b16 %v6317, %v6314
      %v6351 = vpack.c.b16 %v6318, %v6315
      %v6352 = vpack.c.b16 %v6322, %v6319
      %v6353 = vpack.c.b16 %v6323, %v6320
      %v6354 = vpack.c.b16 %v6324, %v6321
      %v6355 = vpack.c.b16 %v6328, %v6325
      %v6356 = vpack.c.b16 %v6329, %v6326
      %v6357 = vpack.c.b16 %v6330, %v6327
      %v6358 = vpack.c.b16 %v6334, %v6331
      %v6359 = vpack.c.b16 %v6335, %v6332
      %v6360 = vpack.c.b16 %v6336, %v6333
      %v6433 = vunpack.c.l.b16 %v5320
      %v6434 = vunpack.c.h.b16 %v5320
      %v6435 = vunpack.c.l.b16 %v5321
      %v6436 = vunpack.c.h.b16 %v5321
      %v6437 = vunpack.c.l.b16 %v5322
      %v6438 = vunpack.c.h.b16 %v5322
      %v6439 = vunpack.c.l.b16 %v5323
      %v6440 = vunpack.c.h.b16 %v5323
      %v6441 = vunpack.c.l.b16 %v5324
      %v6442 = vunpack.c.h.b16 %v5324
      %v6443 = vunpack.c.l.b16 %v5325
      %v6444 = vunpack.c.h.b16 %v5325
      %v6445 = vunpack.c.l.b16 %v5326
      %v6446 = vunpack.c.h.b16 %v5326
      %v6447 = vunpack.c.l.b16 %v5327
      %v6448 = vunpack.c.h.b16 %v5327
      %v6449 = vunpack.c.l.b16 %v5328
      %v6450 = vunpack.c.h.b16 %v5328
      %v6451 = vunpack.c.l.b16 %v5329
      %v6452 = vunpack.c.h.b16 %v5329
      %v6453 = vunpack.c.l.b16 %v5330
      %v6454 = vunpack.c.h.b16 %v5330
      %v6455 = vunpack.c.l.b16 %v5331
      %v6456 = vunpack.c.h.b16 %v5331
      %v6457 = vunpack.c.l.b16 %v5332
      %v6458 = vunpack.c.h.b16 %v5332
      %v6459 = vunpack.c.l.b16 %v5333
      %v6460 = vunpack.c.h.b16 %v5333
      %v6461 = vunpack.c.l.b16 %v5334
      %v6462 = vunpack.c.h.b16 %v5334
      %v6463 = vunpack.c.l.b16 %v5335
      %v6464 = vunpack.c.h.b16 %v5335
      %v6465 = vunpack.c.l.b16 %v5336
      %v6466 = vunpack.c.h.b16 %v5336
      %v6467 = vunpack.c.l.b16 %v5337
      %v6468 = vunpack.c.h.b16 %v5337
      %v6469 = vunpack.c.l.b16 %v5338
      %v6470 = vunpack.c.h.b16 %v5338
      %v6471 = vunpack.c.l.b16 %v5339
      %v6472 = vunpack.c.h.b16 %v5339
      %v6473 = vunpack.c.l.b16 %v5340
      %v6474 = vunpack.c.h.b16 %v5340
      %v6475 = vunpack.c.l.b16 %v5341
      %v6476 = vunpack.c.h.b16 %v5341
      %v6477 = vunpack.c.l.b16 %v5342
      %v6478 = vunpack.c.h.b16 %v5342
      %v6479 = vunpack.c.l.b16 %v5343
      %v6480 = vunpack.c.h.b16 %v5343
      %v6481 = vunpack.c.l.b16 %v5344
      %v6482 = vunpack.c.h.b16 %v5344
      %v6483 = vunpack.c.l.b16 %v5345
      %v6484 = vunpack.c.h.b16 %v5345
      %v6485 = vunpack.c.l.b16 %v5346
      %v6486 = vunpack.c.h.b16 %v5346
      %v6487 = vunpack.c.l.b16 %v5347
      %v6488 = vunpack.c.h.b16 %v5347
      %v6489 = vunpack.c.l.b16 %v5348
      %v6490 = vunpack.c.h.b16 %v5348
      %v6491 = vunpack.c.l.b16 %v5349
      %v6492 = vunpack.c.h.b16 %v5349
      %v6493 = vunpack.c.l.b16 %v5350
      %v6494 = vunpack.c.h.b16 %v5350
      %v6495 = vunpack.c.l.b16 %v5351
      %v6496 = vunpack.c.h.b16 %v5351
      %v6497 = vunpack.c.l.b16 %v5352
      %v6498 = vunpack.c.h.b16 %v5352
      %v6499 = vunpack.c.l.b16 %v5353
      %v6500 = vunpack.c.h.b16 %v5353
      %v6501 = vunpack.c.l.b16 %v5354
      %v6502 = vunpack.c.h.b16 %v5354
      %v6503 = vunpack.c.l.b16 %v5355
      %v6504 = vunpack.c.h.b16 %v5355
      %v6505 = vunpack.c.l.b16 %v5356
      %v6506 = vunpack.c.h.b16 %v5356
      %v6507 = vunpack.c.l.b16 %v5357
      %v6508 = vunpack.c.h.b16 %v5357
      %v6509 = vunpack.c.l.b16 %v5358
      %v6510 = vunpack.c.h.b16 %v5358
      %v6511 = vunpack.c.l.b16 %v5359
      %v6512 = vunpack.c.h.b16 %v5359
      %v6513 = vunpack.c.l.b16 %v5360
      %v6514 = vunpack.c.h.b16 %v5360
      %v6515 = vunpack.c.l.b16 %v5361
      %v6516 = vunpack.c.h.b16 %v5361
      %v6517 = vunpack.c.l.b16 %v5362
      %v6518 = vunpack.c.h.b16 %v5362
      %v6519 = vunpack.c.l.b16 %v5363
      %v6520 = vunpack.c.h.b16 %v5363
      %v6521 = vunpack.c.l.b16 %v5364
      %v6522 = vunpack.c.h.b16 %v5364
      %v6523 = vunpack.c.l.b16 %v5365
      %v6524 = vunpack.c.h.b16 %v5365
      %v6525 = vunpack.c.l.b16 %v5366
      %v6526 = vunpack.c.h.b16 %v5366
      %v6527 = vunpack.c.l.b16 %v5367
      %v6528 = vunpack.c.h.b16 %v5367
      %v6529 = vpack.c.b16 %v6435, %v6433
      %v6530 = vpack.c.b16 %v6436, %v6434
      %v6531 = vpack.c.b16 %v6439, %v6437
      %v6532 = vpack.c.b16 %v6440, %v6438
      %v6533 = vpack.c.b16 %v6443, %v6441
      %v6534 = vpack.c.b16 %v6444, %v6442
      %v6535 = vpack.c.b16 %v6447, %v6445
      %v6536 = vpack.c.b16 %v6448, %v6446
      %v6537 = vpack.c.b16 %v6451, %v6449
      %v6538 = vpack.c.b16 %v6452, %v6450
      %v6539 = vpack.c.b16 %v6455, %v6453
      %v6540 = vpack.c.b16 %v6456, %v6454
      %v6541 = vpack.c.b16 %v6459, %v6457
      %v6542 = vpack.c.b16 %v6460, %v6458
      %v6543 = vpack.c.b16 %v6463, %v6461
      %v6544 = vpack.c.b16 %v6464, %v6462
      %v6545 = vpack.c.b16 %v6467, %v6465
      %v6546 = vpack.c.b16 %v6468, %v6466
      %v6547 = vpack.c.b16 %v6471, %v6469
      %v6548 = vpack.c.b16 %v6472, %v6470
      %v6549 = vpack.c.b16 %v6475, %v6473
      %v6550 = vpack.c.b16 %v6476, %v6474
      %v6551 = vpack.c.b16 %v6479, %v6477
      %v6552 = vpack.c.b16 %v6480, %v6478
      %v6553 = vpack.c.b16 %v6483, %v6481
      %v6554 = vpack.c.b16 %v6484, %v6482
      %v6555 = vpack.c.b16 %v6487, %v6485
      %v6556 = vpack.c.b16 %v6488, %v6486
      %v6557 = vpack.c.b16 %v6491, %v6489
      %v6558 = vpack.c.b16 %v6492, %v6490
      %v6559 = vpack.c.b16 %v6495, %v6493
      %v6560 = vpack.c.b16 %v6496, %v6494
      %v6561 = vpack.c.b16 %v6499, %v6497
      %v6562 = vpack.c.b16 %v6500, %v6498
      %v6563 = vpack.c.b16 %v6503, %v6501
      %v6564 = vpack.c.b16 %v6504, %v6502
      %v6565 = vpack.c.b16 %v6507, %v6505
      %v6566 = vpack.c.b16 %v6508, %v6506
      %v6567 = vpack.c.b16 %v6511, %v6509
      %v6568 = vpack.c.b16 %v6512, %v6510
      %v6569 = vpack.c.b16 %v6515, %v6513
      %v6570 = vpack.c.b16 %v6516, %v6514
      %v6571 = vpack.c.b16 %v6519, %v6517
      %v6572 = vpack.c.b16 %v6520, %v6518
      %v6573 = vpack.c.b16 %v6523, %v6521
      %v6574 = vpack.c.b16 %v6524, %v6522
      %v6575 = vpack.c.b16 %v6527, %v6525
      %v6576 = vpack.c.b16 %v6528, %v6526
      %6625 = vmatprep.subr.bf16.mxu0 %v6544
      %6626 = vmatpush1.bf16.msra.mxu0 %v6543
      %6627 = vmatprep.subr.bf16.mxu0 %v6542
      %6628 = vmatpush1.bf16.msra.mxu0 %v6541
      %6629 = vmatprep.subr.bf16.mxu0 %v6540
      %6630 = vmatpush1.bf16.msra.mxu0 %v6539
      %6631 = vmatprep.subr.bf16.mxu0 %v6538
      %6632 = vmatpush1.bf16.msra.mxu0 %v6537
      %6633 = vmatprep.subr.bf16.mxu0 %v6536
      %6634 = vmatpush1.bf16.msra.mxu0 %v6535
      %6635 = vmatprep.subr.bf16.mxu0 %v6534
      %6636 = vmatpush1.bf16.msra.mxu0 %v6533
      %6637 = vmatprep.subr.bf16.mxu0 %v6532
      %6638 = vmatpush1.bf16.msra.mxu0 %v6531
      %6639 = vmatprep.subr.bf16.mxu0 %v6530
      %6640 = vmatpush1.bf16.msra.mxu0 %v6529
      %6641 = vmatprep.subr.bf16.mxu0 %v6560
      %6642 = vmatpush2.bf16.msra.mxu0 %v6559
      %6643 = vmatprep.subr.bf16.mxu0 %v6558
      %6644 = vmatpush2.bf16.msra.mxu0 %v6557
      %6645 = vmatprep.subr.bf16.mxu0 %v6556
      %6646 = vmatpush2.bf16.msra.mxu0 %v6555
      %6647 = vmatprep.subr.bf16.mxu0 %v6554
      %6648 = vmatpush2.bf16.msra.mxu0 %v6553
      %6649 = vmatprep.subr.bf16.mxu0 %v6552
      %6650 = vmatpush2.bf16.msra.mxu0 %v6551
      %6651 = vmatprep.subr.bf16.mxu0 %v6550
      %6652 = vmatpush2.bf16.msra.mxu0 %v6549
      %6653 = vmatprep.subr.bf16.mxu0 %v6548
      %6654 = vmatpush2.bf16.msra.mxu0 %v6547
      %6655 = vmatprep.subr.bf16.mxu0 %v6546
      %6656 = vmatpush2.bf16.msra.mxu0 %v6545
      %6657 = vmatprep.mubr.bf16.mxu0 %v6338
      %6658 = vmatmul.mubr.bf16.gmra.mxu0 %v6337
      %v6659 = vpop.f32.mrf.mxu0
      %v6660 = vadd.f32 %v6179, %v6659
      %v6661 = vpop.f32.mrf.mxu0
      %v6662 = vadd.f32 %v6181, %v6661
      %v6663 = vpop.f32.mrf.mxu0
      %v6664 = vadd.f32 %v6183, %v6663
      %v6665 = vpop.f32.mrf.mxu0
      %v6666 = vadd.f32 %v6185, %v6665
      %6667 = vmatprep.mubr.bf16.mxu0 %v6341
      %6668 = vmatmul.mubr.bf16.gmra.mxu0 %v6340
      %v6669 = vpop.f32.mrf.mxu0
      %v6670 = vadd.f32 %v6189, %v6669
      %v6671 = vpop.f32.mrf.mxu0
      %v6672 = vadd.f32 %v6191, %v6671
      %v6673 = vpop.f32.mrf.mxu0
      %v6674 = vadd.f32 %v6193, %v6673
      %v6675 = vpop.f32.mrf.mxu0
      %v6676 = vadd.f32 %v6195, %v6675
      %6677 = vmatprep.mubr.bf16.mxu0 %v6344
      %6678 = vmatmul.mubr.bf16.gmra.mxu0 %v6343
      %v6679 = vpop.f32.mrf.mxu0
      %v6680 = vadd.f32 %v6199, %v6679
      %v6681 = vpop.f32.mrf.mxu0
      %v6682 = vadd.f32 %v6201, %v6681
      %v6683 = vpop.f32.mrf.mxu0
      %v6684 = vadd.f32 %v6203, %v6683
      %v6685 = vpop.f32.mrf.mxu0
      %v6686 = vadd.f32 %v6205, %v6685
      %6687 = vmatprep.mubr.bf16.mxu0 %v6347
      %6688 = vmatmul.mubr.bf16.gmra.mxu0 %v6346
      %v6689 = vpop.f32.mrf.mxu0
      %v6690 = vadd.f32 %v6209, %v6689
      %v6691 = vpop.f32.mrf.mxu0
      %v6692 = vadd.f32 %v6211, %v6691
      %v6693 = vpop.f32.mrf.mxu0
      %v6694 = vadd.f32 %v6213, %v6693
      %v6695 = vpop.f32.mrf.mxu0
      %v6696 = vadd.f32 %v6215, %v6695
      %6697 = vmatprep.mubr.bf16.mxu0 %v6350
      %6698 = vmatmul.mubr.bf16.gmra.mxu0 %v6349
      %v6699 = vpop.f32.mrf.mxu0
      %v6700 = vadd.f32 %v6219, %v6699
      %v6701 = vpop.f32.mrf.mxu0
      %v6702 = vadd.f32 %v6221, %v6701
      %v6703 = vpop.f32.mrf.mxu0
      %v6704 = vadd.f32 %v6223, %v6703
      %v6705 = vpop.f32.mrf.mxu0
      %v6706 = vadd.f32 %v6225, %v6705
      %6707 = vmatprep.mubr.bf16.mxu0 %v6353
      %6708 = vmatmul.mubr.bf16.gmra.mxu0 %v6352
      %v6709 = vpop.f32.mrf.mxu0
      %v6710 = vadd.f32 %v6229, %v6709
      %v6711 = vpop.f32.mrf.mxu0
      %v6712 = vadd.f32 %v6231, %v6711
      %v6713 = vpop.f32.mrf.mxu0
      %v6714 = vadd.f32 %v6233, %v6713
      %v6715 = vpop.f32.mrf.mxu0
      %v6716 = vadd.f32 %v6235, %v6715
      %6717 = vmatprep.mubr.bf16.mxu0 %v6356
      %6718 = vmatmul.mubr.bf16.gmra.mxu0 %v6355
      %v6719 = vpop.f32.mrf.mxu0
      %v6720 = vadd.f32 %v6239, %v6719
      %v6721 = vpop.f32.mrf.mxu0
      %v6722 = vadd.f32 %v6241, %v6721
      %v6723 = vpop.f32.mrf.mxu0
      %v6724 = vadd.f32 %v6243, %v6723
      %v6725 = vpop.f32.mrf.mxu0
      %v6726 = vadd.f32 %v6245, %v6725
      %6727 = vmatprep.mubr.bf16.mxu0 %v6359
      %6728 = vmatmul.mubr.bf16.gmra.mxu0 %v6358
      %v6729 = vpop.f32.mrf.mxu0
      %v6730 = vadd.f32 %v6249, %v6729
      %v6731 = vpop.f32.mrf.mxu0
      %v6732 = vadd.f32 %v6251, %v6731
      %v6733 = vpop.f32.mrf.mxu0
      %v6734 = vadd.f32 %v6253, %v6733
      %v6735 = vpop.f32.mrf.mxu0
      %v6736 = vadd.f32 %v6255, %v6735
      %6737 = vdwg.mxu0
      %6738 = vmatprep.subr.bf16.mxu0 %v6576
      %6739 = vmatpush1.bf16.msra.mxu0 %v6575
      %6740 = vmatprep.subr.bf16.mxu0 %v6574
      %6741 = vmatpush1.bf16.msra.mxu0 %v6573
      %6742 = vmatprep.subr.bf16.mxu0 %v6572
      %6743 = vmatpush1.bf16.msra.mxu0 %v6571
      %6744 = vmatprep.subr.bf16.mxu0 %v6570
      %6745 = vmatpush1.bf16.msra.mxu0 %v6569
      %6746 = vmatprep.subr.bf16.mxu0 %v6568
      %6747 = vmatpush1.bf16.msra.mxu0 %v6567
      %6748 = vmatprep.subr.bf16.mxu0 %v6566
      %6749 = vmatpush1.bf16.msra.mxu0 %v6565
      %6750 = vmatprep.subr.bf16.mxu0 %v6564
      %6751 = vmatpush1.bf16.msra.mxu0 %v6563
      %6752 = vmatprep.subr.bf16.mxu0 %v6562
      %6753 = vmatpush1.bf16.msra.mxu0 %v6561
      %6754 = vmatprep.subr.bf16.mxu0 0
      %6755 = vmatpush2.bf16.msra.mxu0 0
      %6756 = vmatprep.subr.bf16.mxu0 0
      %6757 = vmatpush2.bf16.msra.mxu0 0
      %6758 = vmatprep.subr.bf16.mxu0 0
      %6759 = vmatpush2.bf16.msra.mxu0 0
      %6760 = vmatprep.subr.bf16.mxu0 0
      %6761 = vmatpush2.bf16.msra.mxu0 0
      %6762 = vmatprep.subr.bf16.mxu0 0
      %6763 = vmatpush2.bf16.msra.mxu0 0
      %6764 = vmatprep.subr.bf16.mxu0 0
      %6765 = vmatpush2.bf16.msra.mxu0 0
      %6766 = vmatprep.subr.bf16.mxu0 0
      %6767 = vmatpush2.bf16.msra.mxu0 0
      %6768 = vmatprep.subr.bf16.mxu0 0
      %6769 = vmatpush2.bf16.msra.mxu0 0
      %6770 = vmatprep.mubr.bf16.mxu0 0
      %6771 = vmatmul.mubr.bf16.gmra.mxu0 %v6339
      %v6772 = vpop.f32.mrf.mxu0
      %v6773 = vadd.f32 %v6660, %v6772
      %v6774 = vpop.f32.mrf.mxu0
      %v6775 = vadd.f32 %v6662, %v6774
      %v6776 = vpop.f32.mrf.mxu0
      %v6777 = vadd.f32 %v6664, %v6776
      %v6778 = vpop.f32.mrf.mxu0
      %v6779 = vadd.f32 %v6666, %v6778
      %6780 = vmatprep.mubr.bf16.mxu0 0
      %6781 = vmatmul.mubr.bf16.gmra.mxu0 %v6342
      %v6782 = vpop.f32.mrf.mxu0
      %v6783 = vadd.f32 %v6670, %v6782
      %v6784 = vpop.f32.mrf.mxu0
      %v6785 = vadd.f32 %v6672, %v6784
      %v6786 = vpop.f32.mrf.mxu0
      %v6787 = vadd.f32 %v6674, %v6786
      %v6788 = vpop.f32.mrf.mxu0
      %v6789 = vadd.f32 %v6676, %v6788
      %6790 = vmatprep.mubr.bf16.mxu0 0
      %6791 = vmatmul.mubr.bf16.gmra.mxu0 %v6345
      %v6792 = vpop.f32.mrf.mxu0
      %v6793 = vadd.f32 %v6680, %v6792
      %v6794 = vpop.f32.mrf.mxu0
      %v6795 = vadd.f32 %v6682, %v6794
      %v6796 = vpop.f32.mrf.mxu0
      %v6797 = vadd.f32 %v6684, %v6796
      %v6798 = vpop.f32.mrf.mxu0
      %v6799 = vadd.f32 %v6686, %v6798
      %6800 = vmatprep.mubr.bf16.mxu0 0
      %6801 = vmatmul.mubr.bf16.gmra.mxu0 %v6348
      %v6802 = vpop.f32.mrf.mxu0
      %v6803 = vadd.f32 %v6690, %v6802
      %v6804 = vpop.f32.mrf.mxu0
      %v6805 = vadd.f32 %v6692, %v6804
      %v6806 = vpop.f32.mrf.mxu0
      %v6807 = vadd.f32 %v6694, %v6806
      %v6808 = vpop.f32.mrf.mxu0
      %v6809 = vadd.f32 %v6696, %v6808
      %6810 = vmatprep.mubr.bf16.mxu0 0
      %6811 = vmatmul.mubr.bf16.gmra.mxu0 %v6351
      %v6812 = vpop.f32.mrf.mxu0
      %v6813 = vadd.f32 %v6700, %v6812
      %v6814 = vpop.f32.mrf.mxu0
      %v6815 = vadd.f32 %v6702, %v6814
      %v6816 = vpop.f32.mrf.mxu0
      %v6817 = vadd.f32 %v6704, %v6816
      %v6818 = vpop.f32.mrf.mxu0
      %v6819 = vadd.f32 %v6706, %v6818
      %6820 = vmatprep.mubr.bf16.mxu0 0
      %6821 = vmatmul.mubr.bf16.gmra.mxu0 %v6354
      %v6822 = vpop.f32.mrf.mxu0
      %v6823 = vadd.f32 %v6710, %v6822
      %v6824 = vpop.f32.mrf.mxu0
      %v6825 = vadd.f32 %v6712, %v6824
      %v6826 = vpop.f32.mrf.mxu0
      %v6827 = vadd.f32 %v6714, %v6826
      %v6828 = vpop.f32.mrf.mxu0
      %v6829 = vadd.f32 %v6716, %v6828
      %6830 = vmatprep.mubr.bf16.mxu0 0
      %6831 = vmatmul.mubr.bf16.gmra.mxu0 %v6357
      %v6832 = vpop.f32.mrf.mxu0
      %v6833 = vadd.f32 %v6720, %v6832
      %v6834 = vpop.f32.mrf.mxu0
      %v6835 = vadd.f32 %v6722, %v6834
      %v6836 = vpop.f32.mrf.mxu0
      %v6837 = vadd.f32 %v6724, %v6836
      %v6838 = vpop.f32.mrf.mxu0
      %v6839 = vadd.f32 %v6726, %v6838
      %6840 = vmatprep.mubr.bf16.mxu0 0
      %6841 = vmatmul.mubr.bf16.gmra.mxu0 %v6360
      %v6842 = vpop.f32.mrf.mxu0
      %v6843 = vadd.f32 %v6730, %v6842
      %v6844 = vpop.f32.mrf.mxu0
      %v6845 = vadd.f32 %v6732, %v6844
      %v6846 = vpop.f32.mrf.mxu0
      %v6847 = vadd.f32 %v6734, %v6846
      %v6848 = vpop.f32.mrf.mxu0
      %v6849 = vadd.f32 %v6736, %v6848
      %6850 = vdwg.mxu0
      %v6851 = vld [vmem:[#allocation4] sm:$0xee]
      %v6852 = vld [vmem:[#allocation4 + $0x8] sm:$0xe]
      %s6853 = scalar_lea.vmem %s3, 768
      %v6854 = vld [vmem:[%s6853] sm:$0xff]
      %v6855 = vld [vmem:[%s6853 + $0x8] sm:$0xff]
      %v6856 = vld [vmem:[%s6853 + $0x10] sm:$0xff]
      %v6857 = vld [vmem:[%s6853 + $0x18] sm:$0xff]
      %v6858 = vld [vmem:[%s6853 + $0x20] sm:$0xff]
      %v6859 = vld [vmem:[%s6853 + $0x28] sm:$0xff]
      %v6860 = vld [vmem:[%s6853 + $0x30] sm:$0xff]
      %v6861 = vld [vmem:[%s6853 + $0x38] sm:$0xff]
      %v6862 = vld [vmem:[%s6853 + $0x40] sm:$0xff]
      %v6863 = vld [vmem:[%s6853 + $0x48] sm:$0xff]
      %v6864 = vld [vmem:[%s6853 + $0x50] sm:$0xff]
      %v6865 = vld [vmem:[%s6853 + $0x58] sm:$0xff]
      %v6866 = vld [vmem:[%s6853 + $0x60] sm:$0xff]
      %v6867 = vld [vmem:[%s6853 + $0x68] sm:$0xff]
      %v6868 = vld [vmem:[%s6853 + $0x70] sm:$0xff]
      %v6869 = vld [vmem:[%s6853 + $0x78] sm:$0xff]
      %v6870 = vld [vmem:[%s6853 + $0x80] sm:$0xff]
      %v6871 = vld [vmem:[%s6853 + $0x88] sm:$0xff]
      %v6872 = vld [vmem:[%s6853 + $0x90] sm:$0xff]
      %v6873 = vld [vmem:[%s6853 + $0x98] sm:$0xff]
      %v6874 = vld [vmem:[%s6853 + $0xa0] sm:$0xff]
      %v6875 = vld [vmem:[%s6853 + $0xa8] sm:$0xff]
      %v6876 = vld [vmem:[%s6853 + $0xb0] sm:$0xff]
      %v6877 = vld [vmem:[%s6853 + $0xb8] sm:$0xff]
      %v6878 = vld [vmem:[%s6853 + $0xc0] sm:$0xff]
      %v6879 = vld [vmem:[%s6853 + $0xc8] sm:$0xff]
      %v6880 = vld [vmem:[%s6853 + $0xd0] sm:$0xff]
      %v6881 = vld [vmem:[%s6853 + $0xd8] sm:$0xff]
      %v6882 = vld [vmem:[%s6853 + $0xe0] sm:$0xff]
      %v6883 = vld [vmem:[%s6853 + $0xe8] sm:$0xff]
      %v6884 = vld [vmem:[%s6853 + $0xf0] sm:$0xff]
      %v6885 = vld [vmem:[%s6853 + $0xf8] sm:$0xff]
      %v6886 = vld [vmem:[%s6853 + $0x100] sm:$0xff]
      %v6887 = vld [vmem:[%s6853 + $0x108] sm:$0xff]
      %v6888 = vld [vmem:[%s6853 + $0x110] sm:$0xff]
      %v6889 = vld [vmem:[%s6853 + $0x118] sm:$0xff]
      %v6890 = vld [vmem:[%s6853 + $0x120] sm:$0xff]
      %v6891 = vld [vmem:[%s6853 + $0x128] sm:$0xff]
      %v6892 = vld [vmem:[%s6853 + $0x130] sm:$0xff]
      %v6893 = vld [vmem:[%s6853 + $0x138] sm:$0xff]
      %v6894 = vld [vmem:[%s6853 + $0x140] sm:$0xff]
      %v6895 = vld [vmem:[%s6853 + $0x148] sm:$0xff]
      %v6896 = vld [vmem:[%s6853 + $0x150] sm:$0xff]
      %v6897 = vld [vmem:[%s6853 + $0x158] sm:$0xff]
      %v6898 = vld [vmem:[%s6853 + $0x160] sm:$0xff]
      %v6899 = vld [vmem:[%s6853 + $0x168] sm:$0xff]
      %v6900 = vld [vmem:[%s6853 + $0x170] sm:$0xff]
      %v6901 = vld [vmem:[%s6853 + $0x178] sm:$0xff]
      %v6904 = vunpack.c.l.b16 %v6851
      %v6905 = vunpack.c.h.b16 %v6851
      %v6906 = vunpack.c.l.b16 %v6852
      %v6907 = vpack.c.b16 %v5488, %v6904
      %v6908 = vpack.c.b16 %v5489, %v6905
      %v6909 = vpack.c.b16 %v5490, %v6906
      %v6910 = vrot.slane %v6907, 1
      %v6911 = vrot.slane %v5539, 1
      %v6912 = vsel %vm1125, %v6910, %v6911
      %v6913 = vrot.slane %v6908, 1
      %v6914 = vrot.slane %v5540, 1
      %v6915 = vsel %vm1125, %v6913, %v6914
      %v6916 = vrot.slane %v6909, 1
      %v6917 = vrot.slane %v5541, 1
      %v6918 = vsel %vm1125, %v6916, %v6917
      %v6919 = vrot.slane %v5542, 1
      %v6920 = vsel %vm1125, %v6911, %v6919
      %v6921 = vrot.slane %v5543, 1
      %v6922 = vsel %vm1125, %v6914, %v6921
      %v6923 = vrot.slane %v5544, 1
      %v6924 = vsel %vm1125, %v6917, %v6923
      %v6925 = vrot.slane %v5545, 1
      %v6926 = vsel %vm1125, %v6919, %v6925
      %v6927 = vrot.slane %v5546, 1
      %v6928 = vsel %vm1125, %v6921, %v6927
      %v6929 = vrot.slane %v5547, 1
      %v6930 = vsel %vm1125, %v6923, %v6929
      %v6931 = vrot.slane %v5548, 1
      %v6932 = vsel %vm1125, %v6925, %v6931
      %v6933 = vrot.slane %v5549, 1
      %v6934 = vsel %vm1125, %v6927, %v6933
      %v6935 = vrot.slane %v5550, 1
      %v6936 = vsel %vm1125, %v6929, %v6935
      %v6937 = vrot.slane %v5551, 1
      %v6938 = vsel %vm1125, %v6931, %v6937
      %v6939 = vrot.slane %v5552, 1
      %v6940 = vsel %vm1125, %v6933, %v6939
      %v6941 = vrot.slane %v5553, 1
      %v6942 = vsel %vm1125, %v6935, %v6941
      %v6943 = vrot.slane %v5554, 1
      %v6944 = vsel %vm1125, %v6937, %v6943
      %v6945 = vrot.slane %v5555, 1
      %v6946 = vsel %vm1125, %v6939, %v6945
      %v6947 = vrot.slane %v5556, 1
      %v6948 = vsel %vm1125, %v6941, %v6947
      %v6949 = vrot.slane %v5557, 1
      %v6950 = vsel %vm1125, %v6943, %v6949
      %v6951 = vrot.slane %v5558, 1
      %v6952 = vsel %vm1125, %v6945, %v6951
      %v6953 = vrot.slane %v5559, 1
      %v6954 = vsel %vm1125, %v6947, %v6953
      %v6955 = vrot.slane %v5560, 1
      %v6956 = vsel %vm1125, %v6949, %v6955
      %v6957 = vrot.slane %v5561, 1
      %v6958 = vsel %vm1125, %v6951, %v6957
      %v6959 = vrot.slane %v5562, 1
      %v6960 = vsel %vm1125, %v6953, %v6959
      %v7033 = vunpack.c.l.b16 %v6854
      %v7034 = vunpack.c.h.b16 %v6854
      %v7035 = vunpack.c.l.b16 %v6855
      %v7036 = vunpack.c.h.b16 %v6855
      %v7037 = vunpack.c.l.b16 %v6856
      %v7038 = vunpack.c.h.b16 %v6856
      %v7039 = vunpack.c.l.b16 %v6857
      %v7040 = vunpack.c.h.b16 %v6857
      %v7041 = vunpack.c.l.b16 %v6858
      %v7042 = vunpack.c.h.b16 %v6858
      %v7043 = vunpack.c.l.b16 %v6859
      %v7044 = vunpack.c.h.b16 %v6859
      %v7045 = vunpack.c.l.b16 %v6860
      %v7046 = vunpack.c.h.b16 %v6860
      %v7047 = vunpack.c.l.b16 %v6861
      %v7048 = vunpack.c.h.b16 %v6861
      %v7049 = vunpack.c.l.b16 %v6862
      %v7050 = vunpack.c.h.b16 %v6862
      %v7051 = vunpack.c.l.b16 %v6863
      %v7052 = vunpack.c.h.b16 %v6863
      %v7053 = vunpack.c.l.b16 %v6864
      %v7054 = vunpack.c.h.b16 %v6864
      %v7055 = vunpack.c.l.b16 %v6865
      %v7056 = vunpack.c.h.b16 %v6865
      %v7057 = vunpack.c.l.b16 %v6866
      %v7058 = vunpack.c.h.b16 %v6866
      %v7059 = vunpack.c.l.b16 %v6867
      %v7060 = vunpack.c.h.b16 %v6867
      %v7061 = vunpack.c.l.b16 %v6868
      %v7062 = vunpack.c.h.b16 %v6868
      %v7063 = vunpack.c.l.b16 %v6869
      %v7064 = vunpack.c.h.b16 %v6869
      %v7065 = vunpack.c.l.b16 %v6870
      %v7066 = vunpack.c.h.b16 %v6870
      %v7067 = vunpack.c.l.b16 %v6871
      %v7068 = vunpack.c.h.b16 %v6871
      %v7069 = vunpack.c.l.b16 %v6872
      %v7070 = vunpack.c.h.b16 %v6872
      %v7071 = vunpack.c.l.b16 %v6873
      %v7072 = vunpack.c.h.b16 %v6873
      %v7073 = vunpack.c.l.b16 %v6874
      %v7074 = vunpack.c.h.b16 %v6874
      %v7075 = vunpack.c.l.b16 %v6875
      %v7076 = vunpack.c.h.b16 %v6875
      %v7077 = vunpack.c.l.b16 %v6876
      %v7078 = vunpack.c.h.b16 %v6876
      %v7079 = vunpack.c.l.b16 %v6877
      %v7080 = vunpack.c.h.b16 %v6877
      %v7081 = vunpack.c.l.b16 %v6878
      %v7082 = vunpack.c.h.b16 %v6878
      %v7083 = vunpack.c.l.b16 %v6879
      %v7084 = vunpack.c.h.b16 %v6879
      %v7085 = vunpack.c.l.b16 %v6880
      %v7086 = vunpack.c.h.b16 %v6880
      %v7087 = vunpack.c.l.b16 %v6881
      %v7088 = vunpack.c.h.b16 %v6881
      %v7089 = vunpack.c.l.b16 %v6882
      %v7090 = vunpack.c.h.b16 %v6882
      %v7091 = vunpack.c.l.b16 %v6883
      %v7092 = vunpack.c.h.b16 %v6883
      %v7093 = vunpack.c.l.b16 %v6884
      %v7094 = vunpack.c.h.b16 %v6884
      %v7095 = vunpack.c.l.b16 %v6885
      %v7096 = vunpack.c.h.b16 %v6885
      %v7097 = vunpack.c.l.b16 %v6886
      %v7098 = vunpack.c.h.b16 %v6886
      %v7099 = vunpack.c.l.b16 %v6887
      %v7100 = vunpack.c.h.b16 %v6887
      %v7101 = vunpack.c.l.b16 %v6888
      %v7102 = vunpack.c.h.b16 %v6888
      %v7103 = vunpack.c.l.b16 %v6889
      %v7104 = vunpack.c.h.b16 %v6889
      %v7105 = vunpack.c.l.b16 %v6890
      %v7106 = vunpack.c.h.b16 %v6890
      %v7107 = vunpack.c.l.b16 %v6891
      %v7108 = vunpack.c.h.b16 %v6891
      %v7109 = vunpack.c.l.b16 %v6892
      %v7110 = vunpack.c.h.b16 %v6892
      %v7111 = vunpack.c.l.b16 %v6893
      %v7112 = vunpack.c.h.b16 %v6893
      %v7113 = vunpack.c.l.b16 %v6894
      %v7114 = vunpack.c.h.b16 %v6894
      %v7115 = vunpack.c.l.b16 %v6895
      %v7116 = vunpack.c.h.b16 %v6895
      %v7117 = vunpack.c.l.b16 %v6896
      %v7118 = vunpack.c.h.b16 %v6896
      %v7119 = vunpack.c.l.b16 %v6897
      %v7120 = vunpack.c.h.b16 %v6897
      %v7121 = vunpack.c.l.b16 %v6898
      %v7122 = vunpack.c.h.b16 %v6898
      %v7123 = vunpack.c.l.b16 %v6899
      %v7124 = vunpack.c.h.b16 %v6899
      %v7125 = vunpack.c.l.b16 %v6900
      %v7126 = vunpack.c.h.b16 %v6900
      %v7127 = vunpack.c.l.b16 %v6901
      %v7128 = vunpack.c.h.b16 %v6901
      %v7129 = vpack.c.b16 %v7035, %v7033
      %v7130 = vpack.c.b16 %v7036, %v7034
      %v7131 = vpack.c.b16 %v7039, %v7037
      %v7132 = vpack.c.b16 %v7040, %v7038
      %v7133 = vpack.c.b16 %v7043, %v7041
      %v7134 = vpack.c.b16 %v7044, %v7042
      %v7135 = vpack.c.b16 %v7047, %v7045
      %v7136 = vpack.c.b16 %v7048, %v7046
      %v7137 = vpack.c.b16 %v7051, %v7049
      %v7138 = vpack.c.b16 %v7052, %v7050
      %v7139 = vpack.c.b16 %v7055, %v7053
      %v7140 = vpack.c.b16 %v7056, %v7054
      %v7141 = vpack.c.b16 %v7059, %v7057
      %v7142 = vpack.c.b16 %v7060, %v7058
      %v7143 = vpack.c.b16 %v7063, %v7061
      %v7144 = vpack.c.b16 %v7064, %v7062
      %v7145 = vpack.c.b16 %v7067, %v7065
      %v7146 = vpack.c.b16 %v7068, %v7066
      %v7147 = vpack.c.b16 %v7071, %v7069
      %v7148 = vpack.c.b16 %v7072, %v7070
      %v7149 = vpack.c.b16 %v7075, %v7073
      %v7150 = vpack.c.b16 %v7076, %v7074
      %v7151 = vpack.c.b16 %v7079, %v7077
      %v7152 = vpack.c.b16 %v7080, %v7078
      %v7153 = vpack.c.b16 %v7083, %v7081
      %v7154 = vpack.c.b16 %v7084, %v7082
      %v7155 = vpack.c.b16 %v7087, %v7085
      %v7156 = vpack.c.b16 %v7088, %v7086
      %v7157 = vpack.c.b16 %v7091, %v7089
      %v7158 = vpack.c.b16 %v7092, %v7090
      %v7159 = vpack.c.b16 %v7095, %v7093
      %v7160 = vpack.c.b16 %v7096, %v7094
      %v7161 = vpack.c.b16 %v7099, %v7097
      %v7162 = vpack.c.b16 %v7100, %v7098
      %v7163 = vpack.c.b16 %v7103, %v7101
      %v7164 = vpack.c.b16 %v7104, %v7102
      %v7165 = vpack.c.b16 %v7107, %v7105
      %v7166 = vpack.c.b16 %v7108, %v7106
      %v7167 = vpack.c.b16 %v7111, %v7109
      %v7168 = vpack.c.b16 %v7112, %v7110
      %v7169 = vpack.c.b16 %v7115, %v7113
      %v7170 = vpack.c.b16 %v7116, %v7114
      %v7171 = vpack.c.b16 %v7119, %v7117
      %v7172 = vpack.c.b16 %v7120, %v7118
      %v7173 = vpack.c.b16 %v7123, %v7121
      %v7174 = vpack.c.b16 %v7124, %v7122
      %v7175 = vpack.c.b16 %v7127, %v7125
      %v7176 = vpack.c.b16 %v7128, %v7126
      %7225 = vmatprep.subr.bf16.mxu0 %v7144
      %7226 = vmatpush1.bf16.msra.mxu0 %v7143
      %7227 = vmatprep.subr.bf16.mxu0 %v7142
      %7228 = vmatpush1.bf16.msra.mxu0 %v7141
      %7229 = vmatprep.subr.bf16.mxu0 %v7140
      %7230 = vmatpush1.bf16.msra.mxu0 %v7139
      %7231 = vmatprep.subr.bf16.mxu0 %v7138
      %7232 = vmatpush1.bf16.msra.mxu0 %v7137
      %7233 = vmatprep.subr.bf16.mxu0 %v7136
      %7234 = vmatpush1.bf16.msra.mxu0 %v7135
      %7235 = vmatprep.subr.bf16.mxu0 %v7134
      %7236 = vmatpush1.bf16.msra.mxu0 %v7133
      %7237 = vmatprep.subr.bf16.mxu0 %v7132
      %7238 = vmatpush1.bf16.msra.mxu0 %v7131
      %7239 = vmatprep.subr.bf16.mxu0 %v7130
      %7240 = vmatpush1.bf16.msra.mxu0 %v7129
      %7241 = vmatprep.subr.bf16.mxu0 %v7160
      %7242 = vmatpush2.bf16.msra.mxu0 %v7159
      %7243 = vmatprep.subr.bf16.mxu0 %v7158
      %7244 = vmatpush2.bf16.msra.mxu0 %v7157
      %7245 = vmatprep.subr.bf16.mxu0 %v7156
      %7246 = vmatpush2.bf16.msra.mxu0 %v7155
      %7247 = vmatprep.subr.bf16.mxu0 %v7154
      %7248 = vmatpush2.bf16.msra.mxu0 %v7153
      %7249 = vmatprep.subr.bf16.mxu0 %v7152
      %7250 = vmatpush2.bf16.msra.mxu0 %v7151
      %7251 = vmatprep.subr.bf16.mxu0 %v7150
      %7252 = vmatpush2.bf16.msra.mxu0 %v7149
      %7253 = vmatprep.subr.bf16.mxu0 %v7148
      %7254 = vmatpush2.bf16.msra.mxu0 %v7147
      %7255 = vmatprep.subr.bf16.mxu0 %v7146
      %7256 = vmatpush2.bf16.msra.mxu0 %v7145
      %7257 = vmatprep.mubr.bf16.mxu0 %v6915
      %7258 = vmatmul.mubr.bf16.gmra.mxu0 %v6912
      %v7259 = vpop.f32.mrf.mxu0
      %v7260 = vadd.f32 0.0, %v7259
      %v7261 = vpop.f32.mrf.mxu0
      %v7262 = vadd.f32 0.0, %v7261
      %v7263 = vpop.f32.mrf.mxu0
      %v7264 = vadd.f32 0.0, %v7263
      %v7265 = vpop.f32.mrf.mxu0
      %v7266 = vadd.f32 0.0, %v7265
      %7267 = vmatprep.mubr.bf16.mxu0 %v6922
      %7268 = vmatmul.mubr.bf16.gmra.mxu0 %v6920
      %v7269 = vpop.f32.mrf.mxu0
      %v7270 = vadd.f32 0.0, %v7269
      %v7271 = vpop.f32.mrf.mxu0
      %v7272 = vadd.f32 0.0, %v7271
      %v7273 = vpop.f32.mrf.mxu0
      %v7274 = vadd.f32 0.0, %v7273
      %v7275 = vpop.f32.mrf.mxu0
      %v7276 = vadd.f32 0.0, %v7275
      %7277 = vmatprep.mubr.bf16.mxu0 %v6928
      %7278 = vmatmul.mubr.bf16.gmra.mxu0 %v6926
      %v7279 = vpop.f32.mrf.mxu0
      %v7280 = vadd.f32 0.0, %v7279
      %v7281 = vpop.f32.mrf.mxu0
      %v7282 = vadd.f32 0.0, %v7281
      %v7283 = vpop.f32.mrf.mxu0
      %v7284 = vadd.f32 0.0, %v7283
      %v7285 = vpop.f32.mrf.mxu0
      %v7286 = vadd.f32 0.0, %v7285
      %7287 = vmatprep.mubr.bf16.mxu0 %v6934
      %7288 = vmatmul.mubr.bf16.gmra.mxu0 %v6932
      %v7289 = vpop.f32.mrf.mxu0
      %v7290 = vadd.f32 0.0, %v7289
      %v7291 = vpop.f32.mrf.mxu0
      %v7292 = vadd.f32 0.0, %v7291
      %v7293 = vpop.f32.mrf.mxu0
      %v7294 = vadd.f32 0.0, %v7293
      %v7295 = vpop.f32.mrf.mxu0
      %v7296 = vadd.f32 0.0, %v7295
      %7297 = vmatprep.mubr.bf16.mxu0 %v6940
      %7298 = vmatmul.mubr.bf16.gmra.mxu0 %v6938
      %v7299 = vpop.f32.mrf.mxu0
      %v7300 = vadd.f32 0.0, %v7299
      %v7301 = vpop.f32.mrf.mxu0
      %v7302 = vadd.f32 0.0, %v7301
      %v7303 = vpop.f32.mrf.mxu0
      %v7304 = vadd.f32 0.0, %v7303
      %v7305 = vpop.f32.mrf.mxu0
      %v7306 = vadd.f32 0.0, %v7305
      %7307 = vmatprep.mubr.bf16.mxu0 %v6946
      %7308 = vmatmul.mubr.bf16.gmra.mxu0 %v6944
      %v7309 = vpop.f32.mrf.mxu0
      %v7310 = vadd.f32 0.0, %v7309
      %v7311 = vpop.f32.mrf.mxu0
      %v7312 = vadd.f32 0.0, %v7311
      %v7313 = vpop.f32.mrf.mxu0
      %v7314 = vadd.f32 0.0, %v7313
      %v7315 = vpop.f32.mrf.mxu0
      %v7316 = vadd.f32 0.0, %v7315
      %7317 = vmatprep.mubr.bf16.mxu0 %v6952
      %7318 = vmatmul.mubr.bf16.gmra.mxu0 %v6950
      %v7319 = vpop.f32.mrf.mxu0
      %v7320 = vadd.f32 0.0, %v7319
      %v7321 = vpop.f32.mrf.mxu0
      %v7322 = vadd.f32 0.0, %v7321
      %v7323 = vpop.f32.mrf.mxu0
      %v7324 = vadd.f32 0.0, %v7323
      %v7325 = vpop.f32.mrf.mxu0
      %v7326 = vadd.f32 0.0, %v7325
      %7327 = vmatprep.mubr.bf16.mxu0 %v6958
      %7328 = vmatmul.mubr.bf16.gmra.mxu0 %v6956
      %v7329 = vpop.f32.mrf.mxu0
      %v7330 = vadd.f32 0.0, %v7329
      %v7331 = vpop.f32.mrf.mxu0
      %v7332 = vadd.f32 0.0, %v7331
      %v7333 = vpop.f32.mrf.mxu0
      %v7334 = vadd.f32 0.0, %v7333
      %v7335 = vpop.f32.mrf.mxu0
      %v7336 = vadd.f32 0.0, %v7335
      %7337 = vdwg.mxu0
      %7338 = vmatprep.subr.bf16.mxu0 %v7176
      %7339 = vmatpush1.bf16.msra.mxu0 %v7175
      %7340 = vmatprep.subr.bf16.mxu0 %v7174
      %7341 = vmatpush1.bf16.msra.mxu0 %v7173
      %7342 = vmatprep.subr.bf16.mxu0 %v7172
      %7343 = vmatpush1.bf16.msra.mxu0 %v7171
      %7344 = vmatprep.subr.bf16.mxu0 %v7170
      %7345 = vmatpush1.bf16.msra.mxu0 %v7169
      %7346 = vmatprep.subr.bf16.mxu0 %v7168
      %7347 = vmatpush1.bf16.msra.mxu0 %v7167
      %7348 = vmatprep.subr.bf16.mxu0 %v7166
      %7349 = vmatpush1.bf16.msra.mxu0 %v7165
      %7350 = vmatprep.subr.bf16.mxu0 %v7164
      %7351 = vmatpush1.bf16.msra.mxu0 %v7163
      %7352 = vmatprep.subr.bf16.mxu0 %v7162
      %7353 = vmatpush1.bf16.msra.mxu0 %v7161
      %7354 = vmatprep.subr.bf16.mxu0 0
      %7355 = vmatpush2.bf16.msra.mxu0 0
      %7356 = vmatprep.subr.bf16.mxu0 0
      %7357 = vmatpush2.bf16.msra.mxu0 0
      %7358 = vmatprep.subr.bf16.mxu0 0
      %7359 = vmatpush2.bf16.msra.mxu0 0
      %7360 = vmatprep.subr.bf16.mxu0 0
      %7361 = vmatpush2.bf16.msra.mxu0 0
      %7362 = vmatprep.subr.bf16.mxu0 0
      %7363 = vmatpush2.bf16.msra.mxu0 0
      %7364 = vmatprep.subr.bf16.mxu0 0
      %7365 = vmatpush2.bf16.msra.mxu0 0
      %7366 = vmatprep.subr.bf16.mxu0 0
      %7367 = vmatpush2.bf16.msra.mxu0 0
      %7368 = vmatprep.subr.bf16.mxu0 0
      %7369 = vmatpush2.bf16.msra.mxu0 0
      %7370 = vmatprep.mubr.bf16.mxu0 0
      %7371 = vmatmul.mubr.bf16.gmra.mxu0 %v6918
      %v7372 = vpop.f32.mrf.mxu0
      %v7373 = vadd.f32 %v7260, %v7372
      %v7374 = vpop.f32.mrf.mxu0
      %v7375 = vadd.f32 %v7262, %v7374
      %v7376 = vpop.f32.mrf.mxu0
      %v7377 = vadd.f32 %v7264, %v7376
      %v7378 = vpop.f32.mrf.mxu0
      %v7379 = vadd.f32 %v7266, %v7378
      %7380 = vmatprep.mubr.bf16.mxu0 0
      %7381 = vmatmul.mubr.bf16.gmra.mxu0 %v6924
      %v7382 = vpop.f32.mrf.mxu0
      %v7383 = vadd.f32 %v7270, %v7382
      %v7384 = vpop.f32.mrf.mxu0
      %v7385 = vadd.f32 %v7272, %v7384
      %v7386 = vpop.f32.mrf.mxu0
      %v7387 = vadd.f32 %v7274, %v7386
      %v7388 = vpop.f32.mrf.mxu0
      %v7389 = vadd.f32 %v7276, %v7388
      %7390 = vmatprep.mubr.bf16.mxu0 0
      %7391 = vmatmul.mubr.bf16.gmra.mxu0 %v6930
      %v7392 = vpop.f32.mrf.mxu0
      %v7393 = vadd.f32 %v7280, %v7392
      %v7394 = vpop.f32.mrf.mxu0
      %v7395 = vadd.f32 %v7282, %v7394
      %v7396 = vpop.f32.mrf.mxu0
      %v7397 = vadd.f32 %v7284, %v7396
      %v7398 = vpop.f32.mrf.mxu0
      %v7399 = vadd.f32 %v7286, %v7398
      %7400 = vmatprep.mubr.bf16.mxu0 0
      %7401 = vmatmul.mubr.bf16.gmra.mxu0 %v6936
      %v7402 = vpop.f32.mrf.mxu0
      %v7403 = vadd.f32 %v7290, %v7402
      %v7404 = vpop.f32.mrf.mxu0
      %v7405 = vadd.f32 %v7292, %v7404
      %v7406 = vpop.f32.mrf.mxu0
      %v7407 = vadd.f32 %v7294, %v7406
      %v7408 = vpop.f32.mrf.mxu0
      %v7409 = vadd.f32 %v7296, %v7408
      %7410 = vmatprep.mubr.bf16.mxu0 0
      %7411 = vmatmul.mubr.bf16.gmra.mxu0 %v6942
      %v7412 = vpop.f32.mrf.mxu0
      %v7413 = vadd.f32 %v7300, %v7412
      %v7414 = vpop.f32.mrf.mxu0
      %v7415 = vadd.f32 %v7302, %v7414
      %v7416 = vpop.f32.mrf.mxu0
      %v7417 = vadd.f32 %v7304, %v7416
      %v7418 = vpop.f32.mrf.mxu0
      %v7419 = vadd.f32 %v7306, %v7418
      %7420 = vmatprep.mubr.bf16.mxu0 0
      %7421 = vmatmul.mubr.bf16.gmra.mxu0 %v6948
      %v7422 = vpop.f32.mrf.mxu0
      %v7423 = vadd.f32 %v7310, %v7422
      %v7424 = vpop.f32.mrf.mxu0
      %v7425 = vadd.f32 %v7312, %v7424
      %v7426 = vpop.f32.mrf.mxu0
      %v7427 = vadd.f32 %v7314, %v7426
      %v7428 = vpop.f32.mrf.mxu0
      %v7429 = vadd.f32 %v7316, %v7428
      %7430 = vmatprep.mubr.bf16.mxu0 0
      %7431 = vmatmul.mubr.bf16.gmra.mxu0 %v6954
      %v7432 = vpop.f32.mrf.mxu0
      %v7433 = vadd.f32 %v7320, %v7432
      %v7434 = vpop.f32.mrf.mxu0
      %v7435 = vadd.f32 %v7322, %v7434
      %v7436 = vpop.f32.mrf.mxu0
      %v7437 = vadd.f32 %v7324, %v7436
      %v7438 = vpop.f32.mrf.mxu0
      %v7439 = vadd.f32 %v7326, %v7438
      %7440 = vmatprep.mubr.bf16.mxu0 0
      %7441 = vmatmul.mubr.bf16.gmra.mxu0 %v6960
      %v7442 = vpop.f32.mrf.mxu0
      %v7443 = vadd.f32 %v7330, %v7442
      %v7444 = vpop.f32.mrf.mxu0
      %v7445 = vadd.f32 %v7332, %v7444
      %v7446 = vpop.f32.mrf.mxu0
      %v7447 = vadd.f32 %v7334, %v7446
      %v7448 = vpop.f32.mrf.mxu0
      %v7449 = vadd.f32 %v7336, %v7448
      %7450 = vdwg.mxu0
      %v7451 = vadd.f32 %v6773, %v7373
      %v7452 = vadd.f32 %v6775, %v7375
      %v7453 = vadd.f32 %v6777, %v7377
      %v7454 = vadd.f32 %v6779, %v7379
      %v7455 = vadd.f32 %v6783, %v7383
      %v7456 = vadd.f32 %v6785, %v7385
      %v7457 = vadd.f32 %v6787, %v7387
      %v7458 = vadd.f32 %v6789, %v7389
      %v7459 = vadd.f32 %v6793, %v7393
      %v7460 = vadd.f32 %v6795, %v7395
      %v7461 = vadd.f32 %v6797, %v7397
      %v7462 = vadd.f32 %v6799, %v7399
      %v7463 = vadd.f32 %v6803, %v7403
      %v7464 = vadd.f32 %v6805, %v7405
      %v7465 = vadd.f32 %v6807, %v7407
      %v7466 = vadd.f32 %v6809, %v7409
      %v7467 = vadd.f32 %v6813, %v7413
      %v7468 = vadd.f32 %v6815, %v7415
      %v7469 = vadd.f32 %v6817, %v7417
      %v7470 = vadd.f32 %v6819, %v7419
      %v7471 = vadd.f32 %v6823, %v7423
      %v7472 = vadd.f32 %v6825, %v7425
      %v7473 = vadd.f32 %v6827, %v7427
      %v7474 = vadd.f32 %v6829, %v7429
      %v7475 = vadd.f32 %v6833, %v7433
      %v7476 = vadd.f32 %v6835, %v7435
      %v7477 = vadd.f32 %v6837, %v7437
      %v7478 = vadd.f32 %v6839, %v7439
      %v7479 = vadd.f32 %v6843, %v7443
      %v7480 = vadd.f32 %v6845, %v7445
      %v7481 = vadd.f32 %v6847, %v7447
      %v7482 = vadd.f32 %v6849, %v7449
      %v7483 = vld [vmem:[#allocation4 + $0xc0] sm:$0x33]
      %v7484 = vld [vmem:[#allocation4 + $0xc8] sm:$0x3]
      %s7485 = scalar_lea.vmem %s3, 1152
      %v7486 = vld [vmem:[%s7485] sm:$0xff]
      %v7487 = vld [vmem:[%s7485 + $0x8] sm:$0xff]
      %v7488 = vld [vmem:[%s7485 + $0x10] sm:$0xff]
      %v7489 = vld [vmem:[%s7485 + $0x18] sm:$0xff]
      %v7490 = vld [vmem:[%s7485 + $0x20] sm:$0xff]
      %v7491 = vld [vmem:[%s7485 + $0x28] sm:$0xff]
      %v7492 = vld [vmem:[%s7485 + $0x30] sm:$0xff]
      %v7493 = vld [vmem:[%s7485 + $0x38] sm:$0xff]
      %v7494 = vld [vmem:[%s7485 + $0x40] sm:$0xff]
      %v7495 = vld [vmem:[%s7485 + $0x48] sm:$0xff]
      %v7496 = vld [vmem:[%s7485 + $0x50] sm:$0xff]
      %v7497 = vld [vmem:[%s7485 + $0x58] sm:$0xff]
      %v7498 = vld [vmem:[%s7485 + $0x60] sm:$0xff]
      %v7499 = vld [vmem:[%s7485 + $0x68] sm:$0xff]
      %v7500 = vld [vmem:[%s7485 + $0x70] sm:$0xff]
      %v7501 = vld [vmem:[%s7485 + $0x78] sm:$0xff]
      %v7502 = vld [vmem:[%s7485 + $0x80] sm:$0xff]
      %v7503 = vld [vmem:[%s7485 + $0x88] sm:$0xff]
      %v7504 = vld [vmem:[%s7485 + $0x90] sm:$0xff]
      %v7505 = vld [vmem:[%s7485 + $0x98] sm:$0xff]
      %v7506 = vld [vmem:[%s7485 + $0xa0] sm:$0xff]
      %v7507 = vld [vmem:[%s7485 + $0xa8] sm:$0xff]
      %v7508 = vld [vmem:[%s7485 + $0xb0] sm:$0xff]
      %v7509 = vld [vmem:[%s7485 + $0xb8] sm:$0xff]
      %v7510 = vld [vmem:[%s7485 + $0xc0] sm:$0xff]
      %v7511 = vld [vmem:[%s7485 + $0xc8] sm:$0xff]
      %v7512 = vld [vmem:[%s7485 + $0xd0] sm:$0xff]
      %v7513 = vld [vmem:[%s7485 + $0xd8] sm:$0xff]
      %v7514 = vld [vmem:[%s7485 + $0xe0] sm:$0xff]
      %v7515 = vld [vmem:[%s7485 + $0xe8] sm:$0xff]
      %v7516 = vld [vmem:[%s7485 + $0xf0] sm:$0xff]
      %v7517 = vld [vmem:[%s7485 + $0xf8] sm:$0xff]
      %v7518 = vld [vmem:[%s7485 + $0x100] sm:$0xff]
      %v7519 = vld [vmem:[%s7485 + $0x108] sm:$0xff]
      %v7520 = vld [vmem:[%s7485 + $0x110] sm:$0xff]
      %v7521 = vld [vmem:[%s7485 + $0x118] sm:$0xff]
      %v7522 = vld [vmem:[%s7485 + $0x120] sm:$0xff]
      %v7523 = vld [vmem:[%s7485 + $0x128] sm:$0xff]
      %v7524 = vld [vmem:[%s7485 + $0x130] sm:$0xff]
      %v7525 = vld [vmem:[%s7485 + $0x138] sm:$0xff]
      %v7526 = vld [vmem:[%s7485 + $0x140] sm:$0xff]
      %v7527 = vld [vmem:[%s7485 + $0x148] sm:$0xff]
      %v7528 = vld [vmem:[%s7485 + $0x150] sm:$0xff]
      %v7529 = vld [vmem:[%s7485 + $0x158] sm:$0xff]
      %v7530 = vld [vmem:[%s7485 + $0x160] sm:$0xff]
      %v7531 = vld [vmem:[%s7485 + $0x168] sm:$0xff]
      %v7532 = vld [vmem:[%s7485 + $0x170] sm:$0xff]
      %v7533 = vld [vmem:[%s7485 + $0x178] sm:$0xff]
      %v7536 = vunpack.c.l.b16 %v7483
      %v7537 = vunpack.c.h.b16 %v7483
      %v7538 = vunpack.c.l.b16 %v7484
      %v7539 = vpack.c.b16 %v7536, %v7536
      %v7540 = vpack.c.b16 %v7537, %v7537
      %v7541 = vpack.c.b16 %v7538, %v7538
      %v7543 = vshrl.u32 %v6907, 16
      %v7545 = vrot.slane %v7543, 1
      %v7546 = vshll.u32 %v6907, 16
      %v7548 = vrot.slane %v7546, 2
      %v7549 = vor.u32 %v7545, %v7548
      %v7550 = vrot.slane %v5599, 1
      %v7551 = vrot.slane %v5571, 2
      %v7552 = vor.u32 %v7550, %v7551
      %v7553 = vsel %vm1510, %v7549, %v7552
      %v7555 = vshrl.u32 %v6908, 16
      %v7557 = vrot.slane %v7555, 1
      %v7558 = vshll.u32 %v6908, 16
      %v7560 = vrot.slane %v7558, 2
      %v7561 = vor.u32 %v7557, %v7560
      %v7562 = vrot.slane %v5607, 1
      %v7563 = vrot.slane %v5583, 2
      %v7564 = vor.u32 %v7562, %v7563
      %v7565 = vsel %vm1510, %v7561, %v7564
      %v7567 = vshrl.u32 %v6909, 16
      %v7569 = vrot.slane %v7567, 1
      %v7570 = vshll.u32 %v6909, 16
      %v7572 = vrot.slane %v7570, 2
      %v7573 = vor.u32 %v7569, %v7572
      %v7574 = vrot.slane %v5615, 1
      %v7575 = vrot.slane %v5595, 2
      %v7576 = vor.u32 %v7574, %v7575
      %v7577 = vsel %vm1510, %v7573, %v7576
      %v7578 = vrot.slane %v5623, 1
      %v7579 = vrot.slane %v5603, 2
      %v7580 = vor.u32 %v7578, %v7579
      %v7581 = vsel %vm1510, %v7552, %v7580
      %v7582 = vrot.slane %v5631, 1
      %v7583 = vrot.slane %v5611, 2
      %v7584 = vor.u32 %v7582, %v7583
      %v7585 = vsel %vm1510, %v7564, %v7584
      %v7586 = vrot.slane %v5639, 1
      %v7587 = vrot.slane %v5619, 2
      %v7588 = vor.u32 %v7586, %v7587
      %v7589 = vsel %vm1510, %v7576, %v7588
      %v7590 = vrot.slane %v5647, 1
      %v7591 = vrot.slane %v5627, 2
      %v7592 = vor.u32 %v7590, %v7591
      %v7593 = vsel %vm1510, %v7580, %v7592
      %v7594 = vrot.slane %v5655, 1
      %v7595 = vrot.slane %v5635, 2
      %v7596 = vor.u32 %v7594, %v7595
      %v7597 = vsel %vm1510, %v7584, %v7596
      %v7598 = vrot.slane %v5663, 1
      %v7599 = vrot.slane %v5643, 2
      %v7600 = vor.u32 %v7598, %v7599
      %v7601 = vsel %vm1510, %v7588, %v7600
      %v7602 = vrot.slane %v5671, 1
      %v7603 = vrot.slane %v5651, 2
      %v7604 = vor.u32 %v7602, %v7603
      %v7605 = vsel %vm1510, %v7592, %v7604
      %v7606 = vrot.slane %v5679, 1
      %v7607 = vrot.slane %v5659, 2
      %v7608 = vor.u32 %v7606, %v7607
      %v7609 = vsel %vm1510, %v7596, %v7608
      %v7610 = vrot.slane %v5687, 1
      %v7611 = vrot.slane %v5667, 2
      %v7612 = vor.u32 %v7610, %v7611
      %v7613 = vsel %vm1510, %v7600, %v7612
      %v7614 = vrot.slane %v5695, 1
      %v7615 = vrot.slane %v5675, 2
      %v7616 = vor.u32 %v7614, %v7615
      %v7617 = vsel %vm1510, %v7604, %v7616
      %v7618 = vrot.slane %v5703, 1
      %v7619 = vrot.slane %v5683, 2
      %v7620 = vor.u32 %v7618, %v7619
      %v7621 = vsel %vm1510, %v7608, %v7620
      %v7622 = vrot.slane %v5711, 1
      %v7623 = vrot.slane %v5691, 2
      %v7624 = vor.u32 %v7622, %v7623
      %v7625 = vsel %vm1510, %v7612, %v7624
      %v7626 = vrot.slane %v5719, 1
      %v7627 = vrot.slane %v5699, 2
      %v7628 = vor.u32 %v7626, %v7627
      %v7629 = vsel %vm1510, %v7616, %v7628
      %v7630 = vrot.slane %v5727, 1
      %v7631 = vrot.slane %v5707, 2
      %v7632 = vor.u32 %v7630, %v7631
      %v7633 = vsel %vm1510, %v7620, %v7632
      %v7634 = vrot.slane %v5735, 1
      %v7635 = vrot.slane %v5715, 2
      %v7636 = vor.u32 %v7634, %v7635
      %v7637 = vsel %vm1510, %v7624, %v7636
      %v7638 = vrot.slane %v5743, 1
      %v7639 = vrot.slane %v5723, 2
      %v7640 = vor.u32 %v7638, %v7639
      %v7641 = vsel %vm1510, %v7628, %v7640
      %v7642 = vrot.slane %v5751, 1
      %v7643 = vrot.slane %v5731, 2
      %v7644 = vor.u32 %v7642, %v7643
      %v7645 = vsel %vm1510, %v7632, %v7644
      %v7646 = vrot.slane %v5759, 1
      %v7647 = vrot.slane %v5739, 2
      %v7648 = vor.u32 %v7646, %v7647
      %v7649 = vsel %vm1510, %v7636, %v7648
      %v7651 = vshrl.u32 %v7539, 16
      %v7653 = vrot.slane %v7651, 1
      %v7654 = vshll.u32 %v7539, 16
      %v7656 = vrot.slane %v7654, 2
      %v7657 = vor.u32 %v7653, %v7656
      %v7658 = vsel %vm1510, %v7640, %v7657
      %v7660 = vshrl.u32 %v7540, 16
      %v7662 = vrot.slane %v7660, 1
      %v7663 = vshll.u32 %v7540, 16
      %v7665 = vrot.slane %v7663, 2
      %v7666 = vor.u32 %v7662, %v7665
      %v7667 = vsel %vm1510, %v7644, %v7666
      %v7669 = vshrl.u32 %v7541, 16
      %v7671 = vrot.slane %v7669, 1
      %v7672 = vshll.u32 %v7541, 16
      %v7674 = vrot.slane %v7672, 2
      %v7675 = vor.u32 %v7671, %v7674
      %v7676 = vsel %vm1510, %v7648, %v7675
      %v7749 = vunpack.c.l.b16 %v7486
      %v7750 = vunpack.c.h.b16 %v7486
      %v7751 = vunpack.c.l.b16 %v7487
      %v7752 = vunpack.c.h.b16 %v7487
      %v7753 = vunpack.c.l.b16 %v7488
      %v7754 = vunpack.c.h.b16 %v7488
      %v7755 = vunpack.c.l.b16 %v7489
      %v7756 = vunpack.c.h.b16 %v7489
      %v7757 = vunpack.c.l.b16 %v7490
      %v7758 = vunpack.c.h.b16 %v7490
      %v7759 = vunpack.c.l.b16 %v7491
      %v7760 = vunpack.c.h.b16 %v7491
      %v7761 = vunpack.c.l.b16 %v7492
      %v7762 = vunpack.c.h.b16 %v7492
      %v7763 = vunpack.c.l.b16 %v7493
      %v7764 = vunpack.c.h.b16 %v7493
      %v7765 = vunpack.c.l.b16 %v7494
      %v7766 = vunpack.c.h.b16 %v7494
      %v7767 = vunpack.c.l.b16 %v7495
      %v7768 = vunpack.c.h.b16 %v7495
      %v7769 = vunpack.c.l.b16 %v7496
      %v7770 = vunpack.c.h.b16 %v7496
      %v7771 = vunpack.c.l.b16 %v7497
      %v7772 = vunpack.c.h.b16 %v7497
      %v7773 = vunpack.c.l.b16 %v7498
      %v7774 = vunpack.c.h.b16 %v7498
      %v7775 = vunpack.c.l.b16 %v7499
      %v7776 = vunpack.c.h.b16 %v7499
      %v7777 = vunpack.c.l.b16 %v7500
      %v7778 = vunpack.c.h.b16 %v7500
      %v7779 = vunpack.c.l.b16 %v7501
      %v7780 = vunpack.c.h.b16 %v7501
      %v7781 = vunpack.c.l.b16 %v7502
      %v7782 = vunpack.c.h.b16 %v7502
      %v7783 = vunpack.c.l.b16 %v7503
      %v7784 = vunpack.c.h.b16 %v7503
      %v7785 = vunpack.c.l.b16 %v7504
      %v7786 = vunpack.c.h.b16 %v7504
      %v7787 = vunpack.c.l.b16 %v7505
      %v7788 = vunpack.c.h.b16 %v7505
      %v7789 = vunpack.c.l.b16 %v7506
      %v7790 = vunpack.c.h.b16 %v7506
      %v7791 = vunpack.c.l.b16 %v7507
      %v7792 = vunpack.c.h.b16 %v7507
      %v7793 = vunpack.c.l.b16 %v7508
      %v7794 = vunpack.c.h.b16 %v7508
      %v7795 = vunpack.c.l.b16 %v7509
      %v7796 = vunpack.c.h.b16 %v7509
      %v7797 = vunpack.c.l.b16 %v7510
      %v7798 = vunpack.c.h.b16 %v7510
      %v7799 = vunpack.c.l.b16 %v7511
      %v7800 = vunpack.c.h.b16 %v7511
      %v7801 = vunpack.c.l.b16 %v7512
      %v7802 = vunpack.c.h.b16 %v7512
      %v7803 = vunpack.c.l.b16 %v7513
      %v7804 = vunpack.c.h.b16 %v7513
      %v7805 = vunpack.c.l.b16 %v7514
      %v7806 = vunpack.c.h.b16 %v7514
      %v7807 = vunpack.c.l.b16 %v7515
      %v7808 = vunpack.c.h.b16 %v7515
      %v7809 = vunpack.c.l.b16 %v7516
      %v7810 = vunpack.c.h.b16 %v7516
      %v7811 = vunpack.c.l.b16 %v7517
      %v7812 = vunpack.c.h.b16 %v7517
      %v7813 = vunpack.c.l.b16 %v7518
      %v7814 = vunpack.c.h.b16 %v7518
      %v7815 = vunpack.c.l.b16 %v7519
      %v7816 = vunpack.c.h.b16 %v7519
      %v7817 = vunpack.c.l.b16 %v7520
      %v7818 = vunpack.c.h.b16 %v7520
      %v7819 = vunpack.c.l.b16 %v7521
      %v7820 = vunpack.c.h.b16 %v7521
      %v7821 = vunpack.c.l.b16 %v7522
      %v7822 = vunpack.c.h.b16 %v7522
      %v7823 = vunpack.c.l.b16 %v7523
      %v7824 = vunpack.c.h.b16 %v7523
      %v7825 = vunpack.c.l.b16 %v7524
      %v7826 = vunpack.c.h.b16 %v7524
      %v7827 = vunpack.c.l.b16 %v7525
      %v7828 = vunpack.c.h.b16 %v7525
      %v7829 = vunpack.c.l.b16 %v7526
      %v7830 = vunpack.c.h.b16 %v7526
      %v7831 = vunpack.c.l.b16 %v7527
      %v7832 = vunpack.c.h.b16 %v7527
      %v7833 = vunpack.c.l.b16 %v7528
      %v7834 = vunpack.c.h.b16 %v7528
      %v7835 = vunpack.c.l.b16 %v7529
      %v7836 = vunpack.c.h.b16 %v7529
      %v7837 = vunpack.c.l.b16 %v7530
      %v7838 = vunpack.c.h.b16 %v7530
      %v7839 = vunpack.c.l.b16 %v7531
      %v7840 = vunpack.c.h.b16 %v7531
      %v7841 = vunpack.c.l.b16 %v7532
      %v7842 = vunpack.c.h.b16 %v7532
      %v7843 = vunpack.c.l.b16 %v7533
      %v7844 = vunpack.c.h.b16 %v7533
      %v7845 = vpack.c.b16 %v7751, %v7749
      %v7846 = vpack.c.b16 %v7752, %v7750
      %v7847 = vpack.c.b16 %v7755, %v7753
      %v7848 = vpack.c.b16 %v7756, %v7754
      %v7849 = vpack.c.b16 %v7759, %v7757
      %v7850 = vpack.c.b16 %v7760, %v7758
      %v7851 = vpack.c.b16 %v7763, %v7761
      %v7852 = vpack.c.b16 %v7764, %v7762
      %v7853 = vpack.c.b16 %v7767, %v7765
      %v7854 = vpack.c.b16 %v7768, %v7766
      %v7855 = vpack.c.b16 %v7771, %v7769
      %v7856 = vpack.c.b16 %v7772, %v7770
      %v7857 = vpack.c.b16 %v7775, %v7773
      %v7858 = vpack.c.b16 %v7776, %v7774
      %v7859 = vpack.c.b16 %v7779, %v7777
      %v7860 = vpack.c.b16 %v7780, %v7778
      %v7861 = vpack.c.b16 %v7783, %v7781
      %v7862 = vpack.c.b16 %v7784, %v7782
      %v7863 = vpack.c.b16 %v7787, %v7785
      %v7864 = vpack.c.b16 %v7788, %v7786
      %v7865 = vpack.c.b16 %v7791, %v7789
      %v7866 = vpack.c.b16 %v7792, %v7790
      %v7867 = vpack.c.b16 %v7795, %v7793
      %v7868 = vpack.c.b16 %v7796, %v7794
      %v7869 = vpack.c.b16 %v7799, %v7797
      %v7870 = vpack.c.b16 %v7800, %v7798
      %v7871 = vpack.c.b16 %v7803, %v7801
      %v7872 = vpack.c.b16 %v7804, %v7802
      %v7873 = vpack.c.b16 %v7807, %v7805
      %v7874 = vpack.c.b16 %v7808, %v7806
      %v7875 = vpack.c.b16 %v7811, %v7809
      %v7876 = vpack.c.b16 %v7812, %v7810
      %v7877 = vpack.c.b16 %v7815, %v7813
      %v7878 = vpack.c.b16 %v7816, %v7814
      %v7879 = vpack.c.b16 %v7819, %v7817
      %v7880 = vpack.c.b16 %v7820, %v7818
      %v7881 = vpack.c.b16 %v7823, %v7821
      %v7882 = vpack.c.b16 %v7824, %v7822
      %v7883 = vpack.c.b16 %v7827, %v7825
      %v7884 = vpack.c.b16 %v7828, %v7826
      %v7885 = vpack.c.b16 %v7831, %v7829
      %v7886 = vpack.c.b16 %v7832, %v7830
      %v7887 = vpack.c.b16 %v7835, %v7833
      %v7888 = vpack.c.b16 %v7836, %v7834
      %v7889 = vpack.c.b16 %v7839, %v7837
      %v7890 = vpack.c.b16 %v7840, %v7838
      %v7891 = vpack.c.b16 %v7843, %v7841
      %v7892 = vpack.c.b16 %v7844, %v7842
      %7941 = vmatprep.subr.bf16.mxu0 %v7860
      %7942 = vmatpush1.bf16.msra.mxu0 %v7859
      %7943 = vmatprep.subr.bf16.mxu0 %v7858
      %7944 = vmatpush1.bf16.msra.mxu0 %v7857
      %7945 = vmatprep.subr.bf16.mxu0 %v7856
      %7946 = vmatpush1.bf16.msra.mxu0 %v7855
      %7947 = vmatprep.subr.bf16.mxu0 %v7854
      %7948 = vmatpush1.bf16.msra.mxu0 %v7853
      %7949 = vmatprep.subr.bf16.mxu0 %v7852
      %7950 = vmatpush1.bf16.msra.mxu0 %v7851
      %7951 = vmatprep.subr.bf16.mxu0 %v7850
      %7952 = vmatpush1.bf16.msra.mxu0 %v7849
      %7953 = vmatprep.subr.bf16.mxu0 %v7848
      %7954 = vmatpush1.bf16.msra.mxu0 %v7847
      %7955 = vmatprep.subr.bf16.mxu0 %v7846
      %7956 = vmatpush1.bf16.msra.mxu0 %v7845
      %7957 = vmatprep.subr.bf16.mxu0 %v7876
      %7958 = vmatpush2.bf16.msra.mxu0 %v7875
      %7959 = vmatprep.subr.bf16.mxu0 %v7874
      %7960 = vmatpush2.bf16.msra.mxu0 %v7873
      %7961 = vmatprep.subr.bf16.mxu0 %v7872
      %7962 = vmatpush2.bf16.msra.mxu0 %v7871
      %7963 = vmatprep.subr.bf16.mxu0 %v7870
      %7964 = vmatpush2.bf16.msra.mxu0 %v7869
      %7965 = vmatprep.subr.bf16.mxu0 %v7868
      %7966 = vmatpush2.bf16.msra.mxu0 %v7867
      %7967 = vmatprep.subr.bf16.mxu0 %v7866
      %7968 = vmatpush2.bf16.msra.mxu0 %v7865
      %7969 = vmatprep.subr.bf16.mxu0 %v7864
      %7970 = vmatpush2.bf16.msra.mxu0 %v7863
      %7971 = vmatprep.subr.bf16.mxu0 %v7862
      %7972 = vmatpush2.bf16.msra.mxu0 %v7861
      %7973 = vmatprep.mubr.bf16.mxu0 %v7565
      %7974 = vmatmul.mubr.bf16.gmra.mxu0 %v7553
      %v7975 = vpop.f32.mrf.mxu0
      %v7976 = vadd.f32 0.0, %v7975
      %v7977 = vpop.f32.mrf.mxu0
      %v7978 = vadd.f32 0.0, %v7977
      %v7979 = vpop.f32.mrf.mxu0
      %v7980 = vadd.f32 0.0, %v7979
      %v7981 = vpop.f32.mrf.mxu0
      %v7982 = vadd.f32 0.0, %v7981
      %7983 = vmatprep.mubr.bf16.mxu0 %v7585
      %7984 = vmatmul.mubr.bf16.gmra.mxu0 %v7581
      %v7985 = vpop.f32.mrf.mxu0
      %v7986 = vadd.f32 0.0, %v7985
      %v7987 = vpop.f32.mrf.mxu0
      %v7988 = vadd.f32 0.0, %v7987
      %v7989 = vpop.f32.mrf.mxu0
      %v7990 = vadd.f32 0.0, %v7989
      %v7991 = vpop.f32.mrf.mxu0
      %v7992 = vadd.f32 0.0, %v7991
      %7993 = vmatprep.mubr.bf16.mxu0 %v7597
      %7994 = vmatmul.mubr.bf16.gmra.mxu0 %v7593
      %v7995 = vpop.f32.mrf.mxu0
      %v7996 = vadd.f32 0.0, %v7995
      %v7997 = vpop.f32.mrf.mxu0
      %v7998 = vadd.f32 0.0, %v7997
      %v7999 = vpop.f32.mrf.mxu0
      %v8000 = vadd.f32 0.0, %v7999
      %v8001 = vpop.f32.mrf.mxu0
      %v8002 = vadd.f32 0.0, %v8001
      %8003 = vmatprep.mubr.bf16.mxu0 %v7609
      %8004 = vmatmul.mubr.bf16.gmra.mxu0 %v7605
      %v8005 = vpop.f32.mrf.mxu0
      %v8006 = vadd.f32 0.0, %v8005
      %v8007 = vpop.f32.mrf.mxu0
      %v8008 = vadd.f32 0.0, %v8007
      %v8009 = vpop.f32.mrf.mxu0
      %v8010 = vadd.f32 0.0, %v8009
      %v8011 = vpop.f32.mrf.mxu0
      %v8012 = vadd.f32 0.0, %v8011
      %8013 = vmatprep.mubr.bf16.mxu0 %v7621
      %8014 = vmatmul.mubr.bf16.gmra.mxu0 %v7617
      %v8015 = vpop.f32.mrf.mxu0
      %v8016 = vadd.f32 0.0, %v8015
      %v8017 = vpop.f32.mrf.mxu0
      %v8018 = vadd.f32 0.0, %v8017
      %v8019 = vpop.f32.mrf.mxu0
      %v8020 = vadd.f32 0.0, %v8019
      %v8021 = vpop.f32.mrf.mxu0
      %v8022 = vadd.f32 0.0, %v8021
      %8023 = vmatprep.mubr.bf16.mxu0 %v7633
      %8024 = vmatmul.mubr.bf16.gmra.mxu0 %v7629
      %v8025 = vpop.f32.mrf.mxu0
      %v8026 = vadd.f32 0.0, %v8025
      %v8027 = vpop.f32.mrf.mxu0
      %v8028 = vadd.f32 0.0, %v8027
      %v8029 = vpop.f32.mrf.mxu0
      %v8030 = vadd.f32 0.0, %v8029
      %v8031 = vpop.f32.mrf.mxu0
      %v8032 = vadd.f32 0.0, %v8031
      %8033 = vmatprep.mubr.bf16.mxu0 %v7645
      %8034 = vmatmul.mubr.bf16.gmra.mxu0 %v7641
      %v8035 = vpop.f32.mrf.mxu0
      %v8036 = vadd.f32 0.0, %v8035
      %v8037 = vpop.f32.mrf.mxu0
      %v8038 = vadd.f32 0.0, %v8037
      %v8039 = vpop.f32.mrf.mxu0
      %v8040 = vadd.f32 0.0, %v8039
      %v8041 = vpop.f32.mrf.mxu0
      %v8042 = vadd.f32 0.0, %v8041
      %8043 = vmatprep.mubr.bf16.mxu0 %v7667
      %8044 = vmatmul.mubr.bf16.gmra.mxu0 %v7658
      %v8045 = vpop.f32.mrf.mxu0
      %v8046 = vadd.f32 0.0, %v8045
      %v8047 = vpop.f32.mrf.mxu0
      %v8048 = vadd.f32 0.0, %v8047
      %v8049 = vpop.f32.mrf.mxu0
      %v8050 = vadd.f32 0.0, %v8049
      %v8051 = vpop.f32.mrf.mxu0
      %v8052 = vadd.f32 0.0, %v8051
      %8053 = vdwg.mxu0
      %8054 = vmatprep.subr.bf16.mxu0 %v7892
      %8055 = vmatpush1.bf16.msra.mxu0 %v7891
      %8056 = vmatprep.subr.bf16.mxu0 %v7890
      %8057 = vmatpush1.bf16.msra.mxu0 %v7889
      %8058 = vmatprep.subr.bf16.mxu0 %v7888
      %8059 = vmatpush1.bf16.msra.mxu0 %v7887
      %8060 = vmatprep.subr.bf16.mxu0 %v7886
      %8061 = vmatpush1.bf16.msra.mxu0 %v7885
      %8062 = vmatprep.subr.bf16.mxu0 %v7884
      %8063 = vmatpush1.bf16.msra.mxu0 %v7883
      %8064 = vmatprep.subr.bf16.mxu0 %v7882
      %8065 = vmatpush1.bf16.msra.mxu0 %v7881
      %8066 = vmatprep.subr.bf16.mxu0 %v7880
      %8067 = vmatpush1.bf16.msra.mxu0 %v7879
      %8068 = vmatprep.subr.bf16.mxu0 %v7878
      %8069 = vmatpush1.bf16.msra.mxu0 %v7877
      %8070 = vmatprep.subr.bf16.mxu0 0
      %8071 = vmatpush2.bf16.msra.mxu0 0
      %8072 = vmatprep.subr.bf16.mxu0 0
      %8073 = vmatpush2.bf16.msra.mxu0 0
      %8074 = vmatprep.subr.bf16.mxu0 0
      %8075 = vmatpush2.bf16.msra.mxu0 0
      %8076 = vmatprep.subr.bf16.mxu0 0
      %8077 = vmatpush2.bf16.msra.mxu0 0
      %8078 = vmatprep.subr.bf16.mxu0 0
      %8079 = vmatpush2.bf16.msra.mxu0 0
      %8080 = vmatprep.subr.bf16.mxu0 0
      %8081 = vmatpush2.bf16.msra.mxu0 0
      %8082 = vmatprep.subr.bf16.mxu0 0
      %8083 = vmatpush2.bf16.msra.mxu0 0
      %8084 = vmatprep.subr.bf16.mxu0 0
      %8085 = vmatpush2.bf16.msra.mxu0 0
      %8086 = vmatprep.mubr.bf16.mxu0 0
      %8087 = vmatmul.mubr.bf16.gmra.mxu0 %v7577
      %v8088 = vpop.f32.mrf.mxu0
      %v8089 = vadd.f32 %v7976, %v8088
      %v8090 = vpop.f32.mrf.mxu0
      %v8091 = vadd.f32 %v7978, %v8090
      %v8092 = vpop.f32.mrf.mxu0
      %v8093 = vadd.f32 %v7980, %v8092
      %v8094 = vpop.f32.mrf.mxu0
      %v8095 = vadd.f32 %v7982, %v8094
      %8096 = vmatprep.mubr.bf16.mxu0 0
      %8097 = vmatmul.mubr.bf16.gmra.mxu0 %v7589
      %v8098 = vpop.f32.mrf.mxu0
      %v8099 = vadd.f32 %v7986, %v8098
      %v8100 = vpop.f32.mrf.mxu0
      %v8101 = vadd.f32 %v7988, %v8100
      %v8102 = vpop.f32.mrf.mxu0
      %v8103 = vadd.f32 %v7990, %v8102
      %v8104 = vpop.f32.mrf.mxu0
      %v8105 = vadd.f32 %v7992, %v8104
      %8106 = vmatprep.mubr.bf16.mxu0 0
      %8107 = vmatmul.mubr.bf16.gmra.mxu0 %v7601
      %v8108 = vpop.f32.mrf.mxu0
      %v8109 = vadd.f32 %v7996, %v8108
      %v8110 = vpop.f32.mrf.mxu0
      %v8111 = vadd.f32 %v7998, %v8110
      %v8112 = vpop.f32.mrf.mxu0
      %v8113 = vadd.f32 %v8000, %v8112
      %v8114 = vpop.f32.mrf.mxu0
      %v8115 = vadd.f32 %v8002, %v8114
      %8116 = vmatprep.mubr.bf16.mxu0 0
      %8117 = vmatmul.mubr.bf16.gmra.mxu0 %v7613
      %v8118 = vpop.f32.mrf.mxu0
      %v8119 = vadd.f32 %v8006, %v8118
      %v8120 = vpop.f32.mrf.mxu0
      %v8121 = vadd.f32 %v8008, %v8120
      %v8122 = vpop.f32.mrf.mxu0
      %v8123 = vadd.f32 %v8010, %v8122
      %v8124 = vpop.f32.mrf.mxu0
      %v8125 = vadd.f32 %v8012, %v8124
      %8126 = vmatprep.mubr.bf16.mxu0 0
      %8127 = vmatmul.mubr.bf16.gmra.mxu0 %v7625
      %v8128 = vpop.f32.mrf.mxu0
      %v8129 = vadd.f32 %v8016, %v8128
      %v8130 = vpop.f32.mrf.mxu0
      %v8131 = vadd.f32 %v8018, %v8130
      %v8132 = vpop.f32.mrf.mxu0
      %v8133 = vadd.f32 %v8020, %v8132
      %v8134 = vpop.f32.mrf.mxu0
      %v8135 = vadd.f32 %v8022, %v8134
      %8136 = vmatprep.mubr.bf16.mxu0 0
      %8137 = vmatmul.mubr.bf16.gmra.mxu0 %v7637
      %v8138 = vpop.f32.mrf.mxu0
      %v8139 = vadd.f32 %v8026, %v8138
      %v8140 = vpop.f32.mrf.mxu0
      %v8141 = vadd.f32 %v8028, %v8140
      %v8142 = vpop.f32.mrf.mxu0
      %v8143 = vadd.f32 %v8030, %v8142
      %v8144 = vpop.f32.mrf.mxu0
      %v8145 = vadd.f32 %v8032, %v8144
      %8146 = vmatprep.mubr.bf16.mxu0 0
      %8147 = vmatmul.mubr.bf16.gmra.mxu0 %v7649
      %v8148 = vpop.f32.mrf.mxu0
      %v8149 = vadd.f32 %v8036, %v8148
      %v8150 = vpop.f32.mrf.mxu0
      %v8151 = vadd.f32 %v8038, %v8150
      %v8152 = vpop.f32.mrf.mxu0
      %v8153 = vadd.f32 %v8040, %v8152
      %v8154 = vpop.f32.mrf.mxu0
      %v8155 = vadd.f32 %v8042, %v8154
      %8156 = vmatprep.mubr.bf16.mxu0 0
      %8157 = vmatmul.mubr.bf16.gmra.mxu0 %v7676
      %v8158 = vpop.f32.mrf.mxu0
      %v8159 = vadd.f32 %v8046, %v8158
      %v8160 = vpop.f32.mrf.mxu0
      %v8161 = vadd.f32 %v8048, %v8160
      %v8162 = vpop.f32.mrf.mxu0
      %v8163 = vadd.f32 %v8050, %v8162
      %v8164 = vpop.f32.mrf.mxu0
      %v8165 = vadd.f32 %v8052, %v8164
      %8166 = vdwg.mxu0
      %v8167 = vadd.f32 %v7451, %v8089
      %v8168 = vadd.f32 %v7452, %v8091
      %v8169 = vadd.f32 %v7453, %v8093
      %v8170 = vadd.f32 %v7454, %v8095
      %v8171 = vadd.f32 %v7455, %v8099
      %v8172 = vadd.f32 %v7456, %v8101
      %v8173 = vadd.f32 %v7457, %v8103
      %v8174 = vadd.f32 %v7458, %v8105
      %v8175 = vadd.f32 %v7459, %v8109
      %v8176 = vadd.f32 %v7460, %v8111
      %v8177 = vadd.f32 %v7461, %v8113
      %v8178 = vadd.f32 %v7462, %v8115
      %v8179 = vadd.f32 %v7463, %v8119
      %v8180 = vadd.f32 %v7464, %v8121
      %v8181 = vadd.f32 %v7465, %v8123
      %v8182 = vadd.f32 %v7466, %v8125
      %v8183 = vadd.f32 %v7467, %v8129
      %v8184 = vadd.f32 %v7468, %v8131
      %v8185 = vadd.f32 %v7469, %v8133
      %v8186 = vadd.f32 %v7470, %v8135
      %v8187 = vadd.f32 %v7471, %v8139
      %v8188 = vadd.f32 %v7472, %v8141
      %v8189 = vadd.f32 %v7473, %v8143
      %v8190 = vadd.f32 %v7474, %v8145
      %v8191 = vadd.f32 %v7475, %v8149
      %v8192 = vadd.f32 %v7476, %v8151
      %v8193 = vadd.f32 %v7477, %v8153
      %v8194 = vadd.f32 %v7478, %v8155
      %v8195 = vadd.f32 %v7479, %v8159
      %v8196 = vadd.f32 %v7480, %v8161
      %v8197 = vadd.f32 %v7481, %v8163
      %v8198 = vadd.f32 %v7482, %v8165
      %v8199 = vld [vmem:[#allocation4] sm:$0xcc]
      %v8200 = vld [vmem:[#allocation4 + $0x8] sm:$0xc]
      %s8201 = scalar_lea.vmem %s3, 1536
      %v8202 = vld [vmem:[%s8201] sm:$0xff]
      %v8203 = vld [vmem:[%s8201 + $0x8] sm:$0xff]
      %v8204 = vld [vmem:[%s8201 + $0x10] sm:$0xff]
      %v8205 = vld [vmem:[%s8201 + $0x18] sm:$0xff]
      %v8206 = vld [vmem:[%s8201 + $0x20] sm:$0xff]
      %v8207 = vld [vmem:[%s8201 + $0x28] sm:$0xff]
      %v8208 = vld [vmem:[%s8201 + $0x30] sm:$0xff]
      %v8209 = vld [vmem:[%s8201 + $0x38] sm:$0xff]
      %v8210 = vld [vmem:[%s8201 + $0x40] sm:$0xff]
      %v8211 = vld [vmem:[%s8201 + $0x48] sm:$0xff]
      %v8212 = vld [vmem:[%s8201 + $0x50] sm:$0xff]
      %v8213 = vld [vmem:[%s8201 + $0x58] sm:$0xff]
      %v8214 = vld [vmem:[%s8201 + $0x60] sm:$0xff]
      %v8215 = vld [vmem:[%s8201 + $0x68] sm:$0xff]
      %v8216 = vld [vmem:[%s8201 + $0x70] sm:$0xff]
      %v8217 = vld [vmem:[%s8201 + $0x78] sm:$0xff]
      %v8218 = vld [vmem:[%s8201 + $0x80] sm:$0xff]
      %v8219 = vld [vmem:[%s8201 + $0x88] sm:$0xff]
      %v8220 = vld [vmem:[%s8201 + $0x90] sm:$0xff]
      %v8221 = vld [vmem:[%s8201 + $0x98] sm:$0xff]
      %v8222 = vld [vmem:[%s8201 + $0xa0] sm:$0xff]
      %v8223 = vld [vmem:[%s8201 + $0xa8] sm:$0xff]
      %v8224 = vld [vmem:[%s8201 + $0xb0] sm:$0xff]
      %v8225 = vld [vmem:[%s8201 + $0xb8] sm:$0xff]
      %v8226 = vld [vmem:[%s8201 + $0xc0] sm:$0xff]
      %v8227 = vld [vmem:[%s8201 + $0xc8] sm:$0xff]
      %v8228 = vld [vmem:[%s8201 + $0xd0] sm:$0xff]
      %v8229 = vld [vmem:[%s8201 + $0xd8] sm:$0xff]
      %v8230 = vld [vmem:[%s8201 + $0xe0] sm:$0xff]
      %v8231 = vld [vmem:[%s8201 + $0xe8] sm:$0xff]
      %v8232 = vld [vmem:[%s8201 + $0xf0] sm:$0xff]
      %v8233 = vld [vmem:[%s8201 + $0xf8] sm:$0xff]
      %v8234 = vld [vmem:[%s8201 + $0x100] sm:$0xff]
      %v8235 = vld [vmem:[%s8201 + $0x108] sm:$0xff]
      %v8236 = vld [vmem:[%s8201 + $0x110] sm:$0xff]
      %v8237 = vld [vmem:[%s8201 + $0x118] sm:$0xff]
      %v8238 = vld [vmem:[%s8201 + $0x120] sm:$0xff]
      %v8239 = vld [vmem:[%s8201 + $0x128] sm:$0xff]
      %v8240 = vld [vmem:[%s8201 + $0x130] sm:$0xff]
      %v8241 = vld [vmem:[%s8201 + $0x138] sm:$0xff]
      %v8242 = vld [vmem:[%s8201 + $0x140] sm:$0xff]
      %v8243 = vld [vmem:[%s8201 + $0x148] sm:$0xff]
      %v8244 = vld [vmem:[%s8201 + $0x150] sm:$0xff]
      %v8245 = vld [vmem:[%s8201 + $0x158] sm:$0xff]
      %v8246 = vld [vmem:[%s8201 + $0x160] sm:$0xff]
      %v8247 = vld [vmem:[%s8201 + $0x168] sm:$0xff]
      %v8248 = vld [vmem:[%s8201 + $0x170] sm:$0xff]
      %v8249 = vld [vmem:[%s8201 + $0x178] sm:$0xff]
      %v8252 = vunpack.c.l.b16 %v8199
      %v8253 = vunpack.c.h.b16 %v8199
      %v8254 = vunpack.c.l.b16 %v8200
      %v8255 = vpack.c.b16 %v5488, %v8252
      %v8256 = vpack.c.b16 %v5489, %v8253
      %v8257 = vpack.c.b16 %v5490, %v8254
      %v8258 = vrot.slane %v8255, 2
      %v8259 = vrot.slane %v5539, 2
      %v8260 = vsel %vm1923, %v8258, %v8259
      %v8261 = vrot.slane %v8256, 2
      %v8262 = vrot.slane %v5540, 2
      %v8263 = vsel %vm1923, %v8261, %v8262
      %v8264 = vrot.slane %v8257, 2
      %v8265 = vrot.slane %v5541, 2
      %v8266 = vsel %vm1923, %v8264, %v8265
      %v8267 = vrot.slane %v5542, 2
      %v8268 = vsel %vm1923, %v8259, %v8267
      %v8269 = vrot.slane %v5543, 2
      %v8270 = vsel %vm1923, %v8262, %v8269
      %v8271 = vrot.slane %v5544, 2
      %v8272 = vsel %vm1923, %v8265, %v8271
      %v8273 = vrot.slane %v5545, 2
      %v8274 = vsel %vm1923, %v8267, %v8273
      %v8275 = vrot.slane %v5546, 2
      %v8276 = vsel %vm1923, %v8269, %v8275
      %v8277 = vrot.slane %v5547, 2
      %v8278 = vsel %vm1923, %v8271, %v8277
      %v8279 = vrot.slane %v5548, 2
      %v8280 = vsel %vm1923, %v8273, %v8279
      %v8281 = vrot.slane %v5549, 2
      %v8282 = vsel %vm1923, %v8275, %v8281
      %v8283 = vrot.slane %v5550, 2
      %v8284 = vsel %vm1923, %v8277, %v8283
      %v8285 = vrot.slane %v5551, 2
      %v8286 = vsel %vm1923, %v8279, %v8285
      %v8287 = vrot.slane %v5552, 2
      %v8288 = vsel %vm1923, %v8281, %v8287
      %v8289 = vrot.slane %v5553, 2
      %v8290 = vsel %vm1923, %v8283, %v8289
      %v8291 = vrot.slane %v5554, 2
      %v8292 = vsel %vm1923, %v8285, %v8291
      %v8293 = vrot.slane %v5555, 2
      %v8294 = vsel %vm1923, %v8287, %v8293
      %v8295 = vrot.slane %v5556, 2
      %v8296 = vsel %vm1923, %v8289, %v8295
      %v8297 = vrot.slane %v5557, 2
      %v8298 = vsel %vm1923, %v8291, %v8297
      %v8299 = vrot.slane %v5558, 2
      %v8300 = vsel %vm1923, %v8293, %v8299
      %v8301 = vrot.slane %v5559, 2
      %v8302 = vsel %vm1923, %v8295, %v8301
      %v8303 = vrot.slane %v7539, 2
      %v8304 = vsel %vm1923, %v8297, %v8303
      %v8305 = vrot.slane %v7540, 2
      %v8306 = vsel %vm1923, %v8299, %v8305
      %v8307 = vrot.slane %v7541, 2
      %v8308 = vsel %vm1923, %v8301, %v8307
      %v8381 = vunpack.c.l.b16 %v8202
      %v8382 = vunpack.c.h.b16 %v8202
      %v8383 = vunpack.c.l.b16 %v8203
      %v8384 = vunpack.c.h.b16 %v8203
      %v8385 = vunpack.c.l.b16 %v8204
      %v8386 = vunpack.c.h.b16 %v8204
      %v8387 = vunpack.c.l.b16 %v8205
      %v8388 = vunpack.c.h.b16 %v8205
      %v8389 = vunpack.c.l.b16 %v8206
      %v8390 = vunpack.c.h.b16 %v8206
      %v8391 = vunpack.c.l.b16 %v8207
      %v8392 = vunpack.c.h.b16 %v8207
      %v8393 = vunpack.c.l.b16 %v8208
      %v8394 = vunpack.c.h.b16 %v8208
      %v8395 = vunpack.c.l.b16 %v8209
      %v8396 = vunpack.c.h.b16 %v8209
      %v8397 = vunpack.c.l.b16 %v8210
      %v8398 = vunpack.c.h.b16 %v8210
      %v8399 = vunpack.c.l.b16 %v8211
      %v8400 = vunpack.c.h.b16 %v8211
      %v8401 = vunpack.c.l.b16 %v8212
      %v8402 = vunpack.c.h.b16 %v8212
      %v8403 = vunpack.c.l.b16 %v8213
      %v8404 = vunpack.c.h.b16 %v8213
      %v8405 = vunpack.c.l.b16 %v8214
      %v8406 = vunpack.c.h.b16 %v8214
      %v8407 = vunpack.c.l.b16 %v8215
      %v8408 = vunpack.c.h.b16 %v8215
      %v8409 = vunpack.c.l.b16 %v8216
      %v8410 = vunpack.c.h.b16 %v8216
      %v8411 = vunpack.c.l.b16 %v8217
      %v8412 = vunpack.c.h.b16 %v8217
      %v8413 = vunpack.c.l.b16 %v8218
      %v8414 = vunpack.c.h.b16 %v8218
      %v8415 = vunpack.c.l.b16 %v8219
      %v8416 = vunpack.c.h.b16 %v8219
      %v8417 = vunpack.c.l.b16 %v8220
      %v8418 = vunpack.c.h.b16 %v8220
      %v8419 = vunpack.c.l.b16 %v8221
      %v8420 = vunpack.c.h.b16 %v8221
      %v8421 = vunpack.c.l.b16 %v8222
      %v8422 = vunpack.c.h.b16 %v8222
      %v8423 = vunpack.c.l.b16 %v8223
      %v8424 = vunpack.c.h.b16 %v8223
      %v8425 = vunpack.c.l.b16 %v8224
      %v8426 = vunpack.c.h.b16 %v8224
      %v8427 = vunpack.c.l.b16 %v8225
      %v8428 = vunpack.c.h.b16 %v8225
      %v8429 = vunpack.c.l.b16 %v8226
      %v8430 = vunpack.c.h.b16 %v8226
      %v8431 = vunpack.c.l.b16 %v8227
      %v8432 = vunpack.c.h.b16 %v8227
      %v8433 = vunpack.c.l.b16 %v8228
      %v8434 = vunpack.c.h.b16 %v8228
      %v8435 = vunpack.c.l.b16 %v8229
      %v8436 = vunpack.c.h.b16 %v8229
      %v8437 = vunpack.c.l.b16 %v8230
      %v8438 = vunpack.c.h.b16 %v8230
      %v8439 = vunpack.c.l.b16 %v8231
      %v8440 = vunpack.c.h.b16 %v8231
      %v8441 = vunpack.c.l.b16 %v8232
      %v8442 = vunpack.c.h.b16 %v8232
      %v8443 = vunpack.c.l.b16 %v8233
      %v8444 = vunpack.c.h.b16 %v8233
      %v8445 = vunpack.c.l.b16 %v8234
      %v8446 = vunpack.c.h.b16 %v8234
      %v8447 = vunpack.c.l.b16 %v8235
      %v8448 = vunpack.c.h.b16 %v8235
      %v8449 = vunpack.c.l.b16 %v8236
      %v8450 = vunpack.c.h.b16 %v8236
      %v8451 = vunpack.c.l.b16 %v8237
      %v8452 = vunpack.c.h.b16 %v8237
      %v8453 = vunpack.c.l.b16 %v8238
      %v8454 = vunpack.c.h.b16 %v8238
      %v8455 = vunpack.c.l.b16 %v8239
      %v8456 = vunpack.c.h.b16 %v8239
      %v8457 = vunpack.c.l.b16 %v8240
      %v8458 = vunpack.c.h.b16 %v8240
      %v8459 = vunpack.c.l.b16 %v8241
      %v8460 = vunpack.c.h.b16 %v8241
      %v8461 = vunpack.c.l.b16 %v8242
      %v8462 = vunpack.c.h.b16 %v8242
      %v8463 = vunpack.c.l.b16 %v8243
      %v8464 = vunpack.c.h.b16 %v8243
      %v8465 = vunpack.c.l.b16 %v8244
      %v8466 = vunpack.c.h.b16 %v8244
      %v8467 = vunpack.c.l.b16 %v8245
      %v8468 = vunpack.c.h.b16 %v8245
      %v8469 = vunpack.c.l.b16 %v8246
      %v8470 = vunpack.c.h.b16 %v8246
      %v8471 = vunpack.c.l.b16 %v8247
      %v8472 = vunpack.c.h.b16 %v8247
      %v8473 = vunpack.c.l.b16 %v8248
      %v8474 = vunpack.c.h.b16 %v8248
      %v8475 = vunpack.c.l.b16 %v8249
      %v8476 = vunpack.c.h.b16 %v8249
      %v8477 = vpack.c.b16 %v8383, %v8381
      %v8478 = vpack.c.b16 %v8384, %v8382
      %v8479 = vpack.c.b16 %v8387, %v8385
      %v8480 = vpack.c.b16 %v8388, %v8386
      %v8481 = vpack.c.b16 %v8391, %v8389
      %v8482 = vpack.c.b16 %v8392, %v8390
      %v8483 = vpack.c.b16 %v8395, %v8393
      %v8484 = vpack.c.b16 %v8396, %v8394
      %v8485 = vpack.c.b16 %v8399, %v8397
      %v8486 = vpack.c.b16 %v8400, %v8398
      %v8487 = vpack.c.b16 %v8403, %v8401
      %v8488 = vpack.c.b16 %v8404, %v8402
      %v8489 = vpack.c.b16 %v8407, %v8405
      %v8490 = vpack.c.b16 %v8408, %v8406
      %v8491 = vpack.c.b16 %v8411, %v8409
      %v8492 = vpack.c.b16 %v8412, %v8410
      %v8493 = vpack.c.b16 %v8415, %v8413
      %v8494 = vpack.c.b16 %v8416, %v8414
      %v8495 = vpack.c.b16 %v8419, %v8417
      %v8496 = vpack.c.b16 %v8420, %v8418
      %v8497 = vpack.c.b16 %v8423, %v8421
      %v8498 = vpack.c.b16 %v8424, %v8422
      %v8499 = vpack.c.b16 %v8427, %v8425
      %v8500 = vpack.c.b16 %v8428, %v8426
      %v8501 = vpack.c.b16 %v8431, %v8429
      %v8502 = vpack.c.b16 %v8432, %v8430
      %v8503 = vpack.c.b16 %v8435, %v8433
      %v8504 = vpack.c.b16 %v8436, %v8434
      %v8505 = vpack.c.b16 %v8439, %v8437
      %v8506 = vpack.c.b16 %v8440, %v8438
      %v8507 = vpack.c.b16 %v8443, %v8441
      %v8508 = vpack.c.b16 %v8444, %v8442
      %v8509 = vpack.c.b16 %v8447, %v8445
      %v8510 = vpack.c.b16 %v8448, %v8446
      %v8511 = vpack.c.b16 %v8451, %v8449
      %v8512 = vpack.c.b16 %v8452, %v8450
      %v8513 = vpack.c.b16 %v8455, %v8453
      %v8514 = vpack.c.b16 %v8456, %v8454
      %v8515 = vpack.c.b16 %v8459, %v8457
      %v8516 = vpack.c.b16 %v8460, %v8458
      %v8517 = vpack.c.b16 %v8463, %v8461
      %v8518 = vpack.c.b16 %v8464, %v8462
      %v8519 = vpack.c.b16 %v8467, %v8465
      %v8520 = vpack.c.b16 %v8468, %v8466
      %v8521 = vpack.c.b16 %v8471, %v8469
      %v8522 = vpack.c.b16 %v8472, %v8470
      %v8523 = vpack.c.b16 %v8475, %v8473
      %v8524 = vpack.c.b16 %v8476, %v8474
      %8573 = vmatprep.subr.bf16.mxu0 %v8492
      %8574 = vmatpush1.bf16.msra.mxu0 %v8491
      %8575 = vmatprep.subr.bf16.mxu0 %v8490
      %8576 = vmatpush1.bf16.msra.mxu0 %v8489
      %8577 = vmatprep.subr.bf16.mxu0 %v8488
      %8578 = vmatpush1.bf16.msra.mxu0 %v8487
      %8579 = vmatprep.subr.bf16.mxu0 %v8486
      %8580 = vmatpush1.bf16.msra.mxu0 %v8485
      %8581 = vmatprep.subr.bf16.mxu0 %v8484
      %8582 = vmatpush1.bf16.msra.mxu0 %v8483
      %8583 = vmatprep.subr.bf16.mxu0 %v8482
      %8584 = vmatpush1.bf16.msra.mxu0 %v8481
      %8585 = vmatprep.subr.bf16.mxu0 %v8480
      %8586 = vmatpush1.bf16.msra.mxu0 %v8479
      %8587 = vmatprep.subr.bf16.mxu0 %v8478
      %8588 = vmatpush1.bf16.msra.mxu0 %v8477
      %8589 = vmatprep.subr.bf16.mxu0 %v8508
      %8590 = vmatpush2.bf16.msra.mxu0 %v8507
      %8591 = vmatprep.subr.bf16.mxu0 %v8506
      %8592 = vmatpush2.bf16.msra.mxu0 %v8505
      %8593 = vmatprep.subr.bf16.mxu0 %v8504
      %8594 = vmatpush2.bf16.msra.mxu0 %v8503
      %8595 = vmatprep.subr.bf16.mxu0 %v8502
      %8596 = vmatpush2.bf16.msra.mxu0 %v8501
      %8597 = vmatprep.subr.bf16.mxu0 %v8500
      %8598 = vmatpush2.bf16.msra.mxu0 %v8499
      %8599 = vmatprep.subr.bf16.mxu0 %v8498
      %8600 = vmatpush2.bf16.msra.mxu0 %v8497
      %8601 = vmatprep.subr.bf16.mxu0 %v8496
      %8602 = vmatpush2.bf16.msra.mxu0 %v8495
      %8603 = vmatprep.subr.bf16.mxu0 %v8494
      %8604 = vmatpush2.bf16.msra.mxu0 %v8493
      %8605 = vmatprep.mubr.bf16.mxu0 %v8263
      %8606 = vmatmul.mubr.bf16.gmra.mxu0 %v8260
      %v8607 = vpop.f32.mrf.mxu0
      %v8608 = vadd.f32 0.0, %v8607
      %v8609 = vpop.f32.mrf.mxu0
      %v8610 = vadd.f32 0.0, %v8609
      %v8611 = vpop.f32.mrf.mxu0
      %v8612 = vadd.f32 0.0, %v8611
      %v8613 = vpop.f32.mrf.mxu0
      %v8614 = vadd.f32 0.0, %v8613
      %8615 = vmatprep.mubr.bf16.mxu0 %v8270
      %8616 = vmatmul.mubr.bf16.gmra.mxu0 %v8268
      %v8617 = vpop.f32.mrf.mxu0
      %v8618 = vadd.f32 0.0, %v8617
      %v8619 = vpop.f32.mrf.mxu0
      %v8620 = vadd.f32 0.0, %v8619
      %v8621 = vpop.f32.mrf.mxu0
      %v8622 = vadd.f32 0.0, %v8621
      %v8623 = vpop.f32.mrf.mxu0
      %v8624 = vadd.f32 0.0, %v8623
      %8625 = vmatprep.mubr.bf16.mxu0 %v8276
      %8626 = vmatmul.mubr.bf16.gmra.mxu0 %v8274
      %v8627 = vpop.f32.mrf.mxu0
      %v8628 = vadd.f32 0.0, %v8627
      %v8629 = vpop.f32.mrf.mxu0
      %v8630 = vadd.f32 0.0, %v8629
      %v8631 = vpop.f32.mrf.mxu0
      %v8632 = vadd.f32 0.0, %v8631
      %v8633 = vpop.f32.mrf.mxu0
      %v8634 = vadd.f32 0.0, %v8633
      %8635 = vmatprep.mubr.bf16.mxu0 %v8282
      %8636 = vmatmul.mubr.bf16.gmra.mxu0 %v8280
      %v8637 = vpop.f32.mrf.mxu0
      %v8638 = vadd.f32 0.0, %v8637
      %v8639 = vpop.f32.mrf.mxu0
      %v8640 = vadd.f32 0.0, %v8639
      %v8641 = vpop.f32.mrf.mxu0
      %v8642 = vadd.f32 0.0, %v8641
      %v8643 = vpop.f32.mrf.mxu0
      %v8644 = vadd.f32 0.0, %v8643
      %8645 = vmatprep.mubr.bf16.mxu0 %v8288
      %8646 = vmatmul.mubr.bf16.gmra.mxu0 %v8286
      %v8647 = vpop.f32.mrf.mxu0
      %v8648 = vadd.f32 0.0, %v8647
      %v8649 = vpop.f32.mrf.mxu0
      %v8650 = vadd.f32 0.0, %v8649
      %v8651 = vpop.f32.mrf.mxu0
      %v8652 = vadd.f32 0.0, %v8651
      %v8653 = vpop.f32.mrf.mxu0
      %v8654 = vadd.f32 0.0, %v8653
      %8655 = vmatprep.mubr.bf16.mxu0 %v8294
      %8656 = vmatmul.mubr.bf16.gmra.mxu0 %v8292
      %v8657 = vpop.f32.mrf.mxu0
      %v8658 = vadd.f32 0.0, %v8657
      %v8659 = vpop.f32.mrf.mxu0
      %v8660 = vadd.f32 0.0, %v8659
      %v8661 = vpop.f32.mrf.mxu0
      %v8662 = vadd.f32 0.0, %v8661
      %v8663 = vpop.f32.mrf.mxu0
      %v8664 = vadd.f32 0.0, %v8663
      %8665 = vmatprep.mubr.bf16.mxu0 %v8300
      %8666 = vmatmul.mubr.bf16.gmra.mxu0 %v8298
      %v8667 = vpop.f32.mrf.mxu0
      %v8668 = vadd.f32 0.0, %v8667
      %v8669 = vpop.f32.mrf.mxu0
      %v8670 = vadd.f32 0.0, %v8669
      %v8671 = vpop.f32.mrf.mxu0
      %v8672 = vadd.f32 0.0, %v8671
      %v8673 = vpop.f32.mrf.mxu0
      %v8674 = vadd.f32 0.0, %v8673
      %8675 = vmatprep.mubr.bf16.mxu0 %v8306
      %8676 = vmatmul.mubr.bf16.gmra.mxu0 %v8304
      %v8677 = vpop.f32.mrf.mxu0
      %v8678 = vadd.f32 0.0, %v8677
      %v8679 = vpop.f32.mrf.mxu0
      %v8680 = vadd.f32 0.0, %v8679
      %v8681 = vpop.f32.mrf.mxu0
      %v8682 = vadd.f32 0.0, %v8681
      %v8683 = vpop.f32.mrf.mxu0
      %v8684 = vadd.f32 0.0, %v8683
      %8685 = vdwg.mxu0
      %8686 = vmatprep.subr.bf16.mxu0 %v8524
      %8687 = vmatpush1.bf16.msra.mxu0 %v8523
      %8688 = vmatprep.subr.bf16.mxu0 %v8522
      %8689 = vmatpush1.bf16.msra.mxu0 %v8521
      %8690 = vmatprep.subr.bf16.mxu0 %v8520
      %8691 = vmatpush1.bf16.msra.mxu0 %v8519
      %8692 = vmatprep.subr.bf16.mxu0 %v8518
      %8693 = vmatpush1.bf16.msra.mxu0 %v8517
      %8694 = vmatprep.subr.bf16.mxu0 %v8516
      %8695 = vmatpush1.bf16.msra.mxu0 %v8515
      %8696 = vmatprep.subr.bf16.mxu0 %v8514
      %8697 = vmatpush1.bf16.msra.mxu0 %v8513
      %8698 = vmatprep.subr.bf16.mxu0 %v8512
      %8699 = vmatpush1.bf16.msra.mxu0 %v8511
      %8700 = vmatprep.subr.bf16.mxu0 %v8510
      %8701 = vmatpush1.bf16.msra.mxu0 %v8509
      %8702 = vmatprep.subr.bf16.mxu0 0
      %8703 = vmatpush2.bf16.msra.mxu0 0
      %8704 = vmatprep.subr.bf16.mxu0 0
      %8705 = vmatpush2.bf16.msra.mxu0 0
      %8706 = vmatprep.subr.bf16.mxu0 0
      %8707 = vmatpush2.bf16.msra.mxu0 0
      %8708 = vmatprep.subr.bf16.mxu0 0
      %8709 = vmatpush2.bf16.msra.mxu0 0
      %8710 = vmatprep.subr.bf16.mxu0 0
      %8711 = vmatpush2.bf16.msra.mxu0 0
      %8712 = vmatprep.subr.bf16.mxu0 0
      %8713 = vmatpush2.bf16.msra.mxu0 0
      %8714 = vmatprep.subr.bf16.mxu0 0
      %8715 = vmatpush2.bf16.msra.mxu0 0
      %8716 = vmatprep.subr.bf16.mxu0 0
      %8717 = vmatpush2.bf16.msra.mxu0 0
      %8718 = vmatprep.mubr.bf16.mxu0 0
      %8719 = vmatmul.mubr.bf16.gmra.mxu0 %v8266
      %v8720 = vpop.f32.mrf.mxu0
      %v8721 = vadd.f32 %v8608, %v8720
      %v8722 = vpop.f32.mrf.mxu0
      %v8723 = vadd.f32 %v8610, %v8722
      %v8724 = vpop.f32.mrf.mxu0
      %v8725 = vadd.f32 %v8612, %v8724
      %v8726 = vpop.f32.mrf.mxu0
      %v8727 = vadd.f32 %v8614, %v8726
      %8728 = vmatprep.mubr.bf16.mxu0 0
      %8729 = vmatmul.mubr.bf16.gmra.mxu0 %v8272
      %v8730 = vpop.f32.mrf.mxu0
      %v8731 = vadd.f32 %v8618, %v8730
      %v8732 = vpop.f32.mrf.mxu0
      %v8733 = vadd.f32 %v8620, %v8732
      %v8734 = vpop.f32.mrf.mxu0
      %v8735 = vadd.f32 %v8622, %v8734
      %v8736 = vpop.f32.mrf.mxu0
      %v8737 = vadd.f32 %v8624, %v8736
      %8738 = vmatprep.mubr.bf16.mxu0 0
      %8739 = vmatmul.mubr.bf16.gmra.mxu0 %v8278
      %v8740 = vpop.f32.mrf.mxu0
      %v8741 = vadd.f32 %v8628, %v8740
      %v8742 = vpop.f32.mrf.mxu0
      %v8743 = vadd.f32 %v8630, %v8742
      %v8744 = vpop.f32.mrf.mxu0
      %v8745 = vadd.f32 %v8632, %v8744
      %v8746 = vpop.f32.mrf.mxu0
      %v8747 = vadd.f32 %v8634, %v8746
      %8748 = vmatprep.mubr.bf16.mxu0 0
      %8749 = vmatmul.mubr.bf16.gmra.mxu0 %v8284
      %v8750 = vpop.f32.mrf.mxu0
      %v8751 = vadd.f32 %v8638, %v8750
      %v8752 = vpop.f32.mrf.mxu0
      %v8753 = vadd.f32 %v8640, %v8752
      %v8754 = vpop.f32.mrf.mxu0
      %v8755 = vadd.f32 %v8642, %v8754
      %v8756 = vpop.f32.mrf.mxu0
      %v8757 = vadd.f32 %v8644, %v8756
      %8758 = vmatprep.mubr.bf16.mxu0 0
      %8759 = vmatmul.mubr.bf16.gmra.mxu0 %v8290
      %v8760 = vpop.f32.mrf.mxu0
      %v8761 = vadd.f32 %v8648, %v8760
      %v8762 = vpop.f32.mrf.mxu0
      %v8763 = vadd.f32 %v8650, %v8762
      %v8764 = vpop.f32.mrf.mxu0
      %v8765 = vadd.f32 %v8652, %v8764
      %v8766 = vpop.f32.mrf.mxu0
      %v8767 = vadd.f32 %v8654, %v8766
      %8768 = vmatprep.mubr.bf16.mxu0 0
      %8769 = vmatmul.mubr.bf16.gmra.mxu0 %v8296
      %v8770 = vpop.f32.mrf.mxu0
      %v8771 = vadd.f32 %v8658, %v8770
      %v8772 = vpop.f32.mrf.mxu0
      %v8773 = vadd.f32 %v8660, %v8772
      %v8774 = vpop.f32.mrf.mxu0
      %v8775 = vadd.f32 %v8662, %v8774
      %v8776 = vpop.f32.mrf.mxu0
      %v8777 = vadd.f32 %v8664, %v8776
      %8778 = vmatprep.mubr.bf16.mxu0 0
      %8779 = vmatmul.mubr.bf16.gmra.mxu0 %v8302
      %v8780 = vpop.f32.mrf.mxu0
      %v8781 = vadd.f32 %v8668, %v8780
      %v8782 = vpop.f32.mrf.mxu0
      %v8783 = vadd.f32 %v8670, %v8782
      %v8784 = vpop.f32.mrf.mxu0
      %v8785 = vadd.f32 %v8672, %v8784
      %v8786 = vpop.f32.mrf.mxu0
      %v8787 = vadd.f32 %v8674, %v8786
      %8788 = vmatprep.mubr.bf16.mxu0 0
      %8789 = vmatmul.mubr.bf16.gmra.mxu0 %v8308
      %v8790 = vpop.f32.mrf.mxu0
      %v8791 = vadd.f32 %v8678, %v8790
      %v8792 = vpop.f32.mrf.mxu0
      %v8793 = vadd.f32 %v8680, %v8792
      %v8794 = vpop.f32.mrf.mxu0
      %v8795 = vadd.f32 %v8682, %v8794
      %v8796 = vpop.f32.mrf.mxu0
      %v8797 = vadd.f32 %v8684, %v8796
      %8798 = vdwg.mxu0
      %v8799 = vadd.f32 %v8167, %v8721
      %v8800 = vadd.f32 %v8168, %v8723
      %v8801 = vadd.f32 %v8169, %v8725
      %v8802 = vadd.f32 %v8170, %v8727
      %v8803 = vadd.f32 %v8171, %v8731
      %v8804 = vadd.f32 %v8172, %v8733
      %v8805 = vadd.f32 %v8173, %v8735
      %v8806 = vadd.f32 %v8174, %v8737
      %v8807 = vadd.f32 %v8175, %v8741
      %v8808 = vadd.f32 %v8176, %v8743
      %v8809 = vadd.f32 %v8177, %v8745
      %v8810 = vadd.f32 %v8178, %v8747
      %v8811 = vadd.f32 %v8179, %v8751
      %v8812 = vadd.f32 %v8180, %v8753
      %v8813 = vadd.f32 %v8181, %v8755
      %v8814 = vadd.f32 %v8182, %v8757
      %v8815 = vadd.f32 %v8183, %v8761
      %v8816 = vadd.f32 %v8184, %v8763
      %v8817 = vadd.f32 %v8185, %v8765
      %v8818 = vadd.f32 %v8186, %v8767
      %v8819 = vadd.f32 %v8187, %v8771
      %v8820 = vadd.f32 %v8188, %v8773
      %v8821 = vadd.f32 %v8189, %v8775
      %v8822 = vadd.f32 %v8190, %v8777
      %v8823 = vadd.f32 %v8191, %v8781
      %v8824 = vadd.f32 %v8192, %v8783
      %v8825 = vadd.f32 %v8193, %v8785
      %v8826 = vadd.f32 %v8194, %v8787
      %v8827 = vadd.f32 %v8195, %v8791
      %v8828 = vadd.f32 %v8196, %v8793
      %v8829 = vadd.f32 %v8197, %v8795
      %v8830 = vadd.f32 %v8198, %v8797
      %v8832 = vlaneseq
      %v8833 = vshrl.u32 %v8832, 7
      %v8834 = vsub.s32 0, %v8833
      %v8835 = vrot.slane %v5287, %v8834
      %v8836 = vlaneseq
      %v8837 = vshrl.u32 %v8836, 7
      %v8838 = vsub.s32 1, %v8837
      %v8839 = vrot.slane %v5287, %v8838
      %v8842 = vadd.f32 %v8799, %v8835
      %v8843 = vadd.f32 %v8800, %v8839
      %v8844 = vadd.f32 %v8801, %v8835
      %v8845 = vadd.f32 %v8802, %v8839
      %v8846 = vadd.f32 %v8803, %v8835
      %v8847 = vadd.f32 %v8804, %v8839
      %v8848 = vadd.f32 %v8805, %v8835
      %v8849 = vadd.f32 %v8806, %v8839
      %v8850 = vadd.f32 %v8807, %v8835
      %v8851 = vadd.f32 %v8808, %v8839
      %v8852 = vadd.f32 %v8809, %v8835
      %v8853 = vadd.f32 %v8810, %v8839
      %v8854 = vadd.f32 %v8811, %v8835
      %v8855 = vadd.f32 %v8812, %v8839
      %v8856 = vadd.f32 %v8813, %v8835
      %v8857 = vadd.f32 %v8814, %v8839
      %v8858 = vadd.f32 %v8815, %v8835
      %v8859 = vadd.f32 %v8816, %v8839
      %v8860 = vadd.f32 %v8817, %v8835
      %v8861 = vadd.f32 %v8818, %v8839
      %v8862 = vadd.f32 %v8819, %v8835
      %v8863 = vadd.f32 %v8820, %v8839
      %v8864 = vadd.f32 %v8821, %v8835
      %v8865 = vadd.f32 %v8822, %v8839
      %v8866 = vadd.f32 %v8823, %v8835
      %v8867 = vadd.f32 %v8824, %v8839
      %v8868 = vadd.f32 %v8825, %v8835
      %v8869 = vadd.f32 %v8826, %v8839
      %v8870 = vadd.f32 %v8827, %v8835
      %v8871 = vadd.f32 %v8828, %v8839
      %v8872 = vadd.f32 %v8829, %v8835
      %v8873 = vadd.f32 %v8830, %v8839
      %v8874 = vmax.f32 %v8842, 0.0
      %v8875 = vmax.f32 %v8843, 0.0
      %v8876 = vmax.f32 %v8844, 0.0
      %v8877 = vmax.f32 %v8845, 0.0
      %v8878 = vmax.f32 %v8846, 0.0
      %v8879 = vmax.f32 %v8847, 0.0
      %v8880 = vmax.f32 %v8848, 0.0
      %v8881 = vmax.f32 %v8849, 0.0
      %v8882 = vmax.f32 %v8850, 0.0
      %v8883 = vmax.f32 %v8851, 0.0
      %v8884 = vmax.f32 %v8852, 0.0
      %v8885 = vmax.f32 %v8853, 0.0
      %v8886 = vmax.f32 %v8854, 0.0
      %v8887 = vmax.f32 %v8855, 0.0
      %v8888 = vmax.f32 %v8856, 0.0
      %v8889 = vmax.f32 %v8857, 0.0
      %v8890 = vmax.f32 %v8858, 0.0
      %v8891 = vmax.f32 %v8859, 0.0
      %v8892 = vmax.f32 %v8860, 0.0
      %v8893 = vmax.f32 %v8861, 0.0
      %v8894 = vmax.f32 %v8862, 0.0
      %v8895 = vmax.f32 %v8863, 0.0
      %v8896 = vmax.f32 %v8864, 0.0
      %v8897 = vmax.f32 %v8865, 0.0
      %v8898 = vmax.f32 %v8866, 0.0
      %v8899 = vmax.f32 %v8867, 0.0
      %v8900 = vmax.f32 %v8868, 0.0
      %v8901 = vmax.f32 %v8869, 0.0
      %v8902 = vmax.f32 %v8870, 0.0
      %v8903 = vmax.f32 %v8871, 0.0
      %v8904 = vmax.f32 %v8872, 0.0
      %v8905 = vmax.f32 %v8873, 0.0
      %vm8906 = vcmp.lt.s32.totalorder %v311, 8
      %vm8907 = vcmp.lt.s32.totalorder %v312, 8
      %v8908 = vsel %vm8906, 1, 0
      %v8909 = vsel %vm8907, 1, 0
      %vm8910 = vcmp.eq.s32.totalorder %v8908, 1
      %vm8911 = vcmp.eq.s32.totalorder %v8909, 1
      %v8912 = vsel %vm8910, %v8874, 0.0
      %v8913 = vsel %vm8910, %v8875, 0.0
      %v8914 = vsel %vm8911, %v8876, 0.0
      %v8915 = vsel %vm8911, %v8877, 0.0
      %v8916 = vsel %vm8910, %v8878, 0.0
      %v8917 = vsel %vm8910, %v8879, 0.0
      %v8918 = vsel %vm8911, %v8880, 0.0
      %v8919 = vsel %vm8911, %v8881, 0.0
      %v8920 = vsel %vm8910, %v8882, 0.0
      %v8921 = vsel %vm8910, %v8883, 0.0
      %v8922 = vsel %vm8911, %v8884, 0.0
      %v8923 = vsel %vm8911, %v8885, 0.0
      %v8924 = vsel %vm8910, %v8886, 0.0
      %v8925 = vsel %vm8910, %v8887, 0.0
      %v8926 = vsel %vm8911, %v8888, 0.0
      %v8927 = vsel %vm8911, %v8889, 0.0
      %v8928 = vsel %vm8910, %v8890, 0.0
      %v8929 = vsel %vm8910, %v8891, 0.0
      %v8930 = vsel %vm8911, %v8892, 0.0
      %v8931 = vsel %vm8911, %v8893, 0.0
      %v8932 = vsel %vm8910, %v8894, 0.0
      %v8933 = vsel %vm8910, %v8895, 0.0
      %v8934 = vsel %vm8911, %v8896, 0.0
      %v8935 = vsel %vm8911, %v8897, 0.0
      %v8936 = vsel %vm8910, %v8898, 0.0
      %v8937 = vsel %vm8910, %v8899, 0.0
      %v8938 = vsel %vm8911, %v8900, 0.0
      %v8939 = vsel %vm8911, %v8901, 0.0
      %v8940 = vsel %vm8910, %v8902, 0.0
      %v8941 = vsel %vm8910, %v8903, 0.0
      %v8942 = vsel %vm8911, %v8904, 0.0
      %v8943 = vsel %vm8911, %v8905, 0.0
      %v8944 = vpack.c.bf16 %v8914, %v8912
      %v8945 = vpack.c.bf16 %v8915, %v8913
      %v8946 = vpack.c.bf16 %v8918, %v8916
      %v8947 = vpack.c.bf16 %v8919, %v8917
      %v8948 = vpack.c.bf16 %v8922, %v8920
      %v8949 = vpack.c.bf16 %v8923, %v8921
      %v8950 = vpack.c.bf16 %v8926, %v8924
      %v8951 = vpack.c.bf16 %v8927, %v8925
      %v8952 = vpack.c.bf16 %v8930, %v8928
      %v8953 = vpack.c.bf16 %v8931, %v8929
      %v8954 = vpack.c.bf16 %v8934, %v8932
      %v8955 = vpack.c.bf16 %v8935, %v8933
      %v8956 = vpack.c.bf16 %v8938, %v8936
      %v8957 = vpack.c.bf16 %v8939, %v8937
      %v8958 = vpack.c.bf16 %v8942, %v8940
      %v8959 = vpack.c.bf16 %v8943, %v8941
      %v8976 = vunpack.c.l.b16 %v8944
      %v8977 = vunpack.c.l.b16 %v8945
      %v8978 = vunpack.c.h.b16 %v8944
      %v8979 = vunpack.c.h.b16 %v8945
      %v8980 = vunpack.c.l.b16 %v8946
      %v8981 = vunpack.c.l.b16 %v8947
      %v8982 = vunpack.c.h.b16 %v8946
      %v8983 = vunpack.c.h.b16 %v8947
      %v8984 = vunpack.c.l.b16 %v8948
      %v8985 = vunpack.c.l.b16 %v8949
      %v8986 = vunpack.c.h.b16 %v8948
      %v8987 = vunpack.c.h.b16 %v8949
      %v8988 = vunpack.c.l.b16 %v8950
      %v8989 = vunpack.c.l.b16 %v8951
      %v8990 = vunpack.c.h.b16 %v8950
      %v8991 = vunpack.c.h.b16 %v8951
      %v8992 = vunpack.c.l.b16 %v8952
      %v8993 = vunpack.c.l.b16 %v8953
      %v8994 = vunpack.c.h.b16 %v8952
      %v8995 = vunpack.c.h.b16 %v8953
      %v8996 = vunpack.c.l.b16 %v8954
      %v8997 = vunpack.c.l.b16 %v8955
      %v8998 = vunpack.c.h.b16 %v8954
      %v8999 = vunpack.c.h.b16 %v8955
      %v9000 = vunpack.c.l.b16 %v8956
      %v9001 = vunpack.c.l.b16 %v8957
      %v9002 = vunpack.c.h.b16 %v8956
      %v9003 = vunpack.c.h.b16 %v8957
      %v9004 = vunpack.c.l.b16 %v8958
      %v9005 = vunpack.c.l.b16 %v8959
      %v9006 = vunpack.c.h.b16 %v8958
      %v9007 = vunpack.c.h.b16 %v8959
      %v9008 = vpack.c.b16 %v8977, %v8976
      %v9009 = vpack.c.b16 %v8979, %v8978
      %v9010 = vpack.c.b16 %v8981, %v8980
      %v9011 = vpack.c.b16 %v8983, %v8982
      %v9012 = vpack.c.b16 %v8985, %v8984
      %v9013 = vpack.c.b16 %v8987, %v8986
      %v9014 = vpack.c.b16 %v8989, %v8988
      %v9015 = vpack.c.b16 %v8991, %v8990
      %v9016 = vpack.c.b16 %v8993, %v8992
      %v9017 = vpack.c.b16 %v8995, %v8994
      %v9018 = vpack.c.b16 %v8997, %v8996
      %v9019 = vpack.c.b16 %v8999, %v8998
      %v9020 = vpack.c.b16 %v9001, %v9000
      %v9021 = vpack.c.b16 %v9003, %v9002
      %v9022 = vpack.c.b16 %v9005, %v9004
      %v9023 = vpack.c.b16 %v9007, %v9006
      %9040 = vst [vmem:[#allocation5] sm:$0xff] %v9008
      %9041 = vst [vmem:[#allocation5 + $0x8] sm:$0xff] %v9009
      %9042 = vst [vmem:[#allocation5 + $0x10] sm:$0xff] %v9010
      %9043 = vst [vmem:[#allocation5 + $0x18] sm:$0xff] %v9011
      %9044 = vst [vmem:[#allocation5 + $0x20] sm:$0xff] %v9012
      %9045 = vst [vmem:[#allocation5 + $0x28] sm:$0xff] %v9013
      %9046 = vst [vmem:[#allocation5 + $0x30] sm:$0xff] %v9014
      %9047 = vst [vmem:[#allocation5 + $0x38] sm:$0xff] %v9015
      %9048 = vst [vmem:[#allocation5 + $0x40] sm:$0xff] %v9016
      %9049 = vst [vmem:[#allocation5 + $0x48] sm:$0xff] %v9017
      %9050 = vst [vmem:[#allocation5 + $0x50] sm:$0xff] %v9018
      %9051 = vst [vmem:[#allocation5 + $0x58] sm:$0xff] %v9019
      %9052 = vst [vmem:[#allocation5 + $0x60] sm:$0xff] %v9020
      %9053 = vst [vmem:[#allocation5 + $0x68] sm:$0xff] %v9021
      %9054 = vst [vmem:[#allocation5 + $0x70] sm:$0xff] %v9022
      %9055 = vst [vmem:[#allocation5 + $0x78] sm:$0xff] %v9023
      %s9056 = scalar_lea.vmem %s5, 3
      %v9057 = vld [vmem:[%s9056] ss:$4 sm:$0x3]
      %v9058 = vld [vmem:[#allocation5] sm:$0xff]
      %v9059 = vld [vmem:[#allocation5 + $0x8] sm:$0xff]
      %v9060 = vld [vmem:[#allocation5 + $0x10] sm:$0xff]
      %v9061 = vld [vmem:[#allocation5 + $0x18] sm:$0xff]
      %v9062 = vld [vmem:[#allocation5 + $0x20] sm:$0xff]
      %v9063 = vld [vmem:[#allocation5 + $0x28] sm:$0xff]
      %v9064 = vld [vmem:[#allocation5 + $0x30] sm:$0xff]
      %v9065 = vld [vmem:[#allocation5 + $0x38] sm:$0xff]
      %v9066 = vld [vmem:[#allocation5 + $0x40] sm:$0xff]
      %v9067 = vld [vmem:[#allocation5 + $0x48] sm:$0xff]
      %v9068 = vld [vmem:[#allocation5 + $0x50] sm:$0xff]
      %v9069 = vld [vmem:[#allocation5 + $0x58] sm:$0xff]
      %v9070 = vld [vmem:[#allocation5 + $0x60] sm:$0xff]
      %v9071 = vld [vmem:[#allocation5 + $0x68] sm:$0xff]
      %v9072 = vld [vmem:[#allocation5 + $0x70] sm:$0xff]
      %v9073 = vld [vmem:[#allocation5 + $0x78] sm:$0xff]
      %v9074 = vld [vmem:[%s4] sm:$0xff]
      %v9075 = vld [vmem:[%s4 + $0x8] sm:$0xff]
      %v9076 = vld [vmem:[%s4 + $0x10] sm:$0xff]
      %v9077 = vld [vmem:[%s4 + $0x18] sm:$0xff]
      %v9078 = vld [vmem:[%s4 + $0x20] sm:$0xff]
      %v9079 = vld [vmem:[%s4 + $0x28] sm:$0xff]
      %v9080 = vld [vmem:[%s4 + $0x30] sm:$0xff]
      %v9081 = vld [vmem:[%s4 + $0x38] sm:$0xff]
      %v9082 = vld [vmem:[%s4 + $0x40] sm:$0xff]
      %v9083 = vld [vmem:[%s4 + $0x48] sm:$0xff]
      %v9084 = vld [vmem:[%s4 + $0x50] sm:$0xff]
      %v9085 = vld [vmem:[%s4 + $0x58] sm:$0xff]
      %v9086 = vld [vmem:[%s4 + $0x60] sm:$0xff]
      %v9087 = vld [vmem:[%s4 + $0x68] sm:$0xff]
      %v9088 = vld [vmem:[%s4 + $0x70] sm:$0xff]
      %v9089 = vld [vmem:[%s4 + $0x78] sm:$0xff]
      %v9090 = vld [vmem:[%s4 + $0x80] sm:$0xff]
      %v9091 = vld [vmem:[%s4 + $0x88] sm:$0xff]
      %v9092 = vld [vmem:[%s4 + $0x90] sm:$0xff]
      %v9093 = vld [vmem:[%s4 + $0x98] sm:$0xff]
      %v9094 = vld [vmem:[%s4 + $0xa0] sm:$0xff]
      %v9095 = vld [vmem:[%s4 + $0xa8] sm:$0xff]
      %v9096 = vld [vmem:[%s4 + $0xb0] sm:$0xff]
      %v9097 = vld [vmem:[%s4 + $0xb8] sm:$0xff]
      %v9098 = vld [vmem:[%s4 + $0xc0] sm:$0xff]
      %v9099 = vld [vmem:[%s4 + $0xc8] sm:$0xff]
      %v9100 = vld [vmem:[%s4 + $0xd0] sm:$0xff]
      %v9101 = vld [vmem:[%s4 + $0xd8] sm:$0xff]
      %v9102 = vld [vmem:[%s4 + $0xe0] sm:$0xff]
      %v9103 = vld [vmem:[%s4 + $0xe8] sm:$0xff]
      %v9104 = vld [vmem:[%s4 + $0xf0] sm:$0xff]
      %v9105 = vld [vmem:[%s4 + $0xf8] sm:$0xff]
      %v9106 = vld [vmem:[#allocation5] sm:$0xff]
      %v9107 = vld [vmem:[#allocation5 + $0x8] sm:$0xff]
      %v9108 = vld [vmem:[#allocation5 + $0x10] sm:$0xff]
      %v9109 = vld [vmem:[#allocation5 + $0x18] sm:$0xff]
      %v9110 = vld [vmem:[#allocation5 + $0x20] sm:$0xff]
      %v9111 = vld [vmem:[#allocation5 + $0x28] sm:$0xff]
      %v9112 = vld [vmem:[#allocation5 + $0x30] sm:$0xff]
      %v9113 = vld [vmem:[#allocation5 + $0x38] sm:$0xff]
      %v9114 = vld [vmem:[#allocation5 + $0x40] sm:$0xff]
      %v9115 = vld [vmem:[#allocation5 + $0x48] sm:$0xff]
      %v9116 = vld [vmem:[#allocation5 + $0x50] sm:$0xff]
      %v9117 = vld [vmem:[#allocation5 + $0x58] sm:$0xff]
      %v9118 = vld [vmem:[#allocation5 + $0x60] sm:$0xff]
      %v9119 = vld [vmem:[#allocation5 + $0x68] sm:$0xff]
      %v9120 = vld [vmem:[#allocation5 + $0x70] sm:$0xff]
      %v9121 = vld [vmem:[#allocation5 + $0x78] sm:$0xff]
      %v9122 = vld [vmem:[#allocation5 + $0x80] sm:$0x11]
      %s9123 = scalar_lea.vmem %s4, 256
      %v9124 = vld [vmem:[%s9123] sm:$0xff]
      %v9125 = vld [vmem:[%s9123 + $0x8] sm:$0xff]
      %v9126 = vld [vmem:[%s9123 + $0x10] sm:$0xff]
      %v9127 = vld [vmem:[%s9123 + $0x18] sm:$0xff]
      %v9128 = vld [vmem:[%s9123 + $0x20] sm:$0xff]
      %v9129 = vld [vmem:[%s9123 + $0x28] sm:$0xff]
      %v9130 = vld [vmem:[%s9123 + $0x30] sm:$0xff]
      %v9131 = vld [vmem:[%s9123 + $0x38] sm:$0xff]
      %v9132 = vld [vmem:[%s9123 + $0x40] sm:$0xff]
      %v9133 = vld [vmem:[%s9123 + $0x48] sm:$0xff]
      %v9134 = vld [vmem:[%s9123 + $0x50] sm:$0xff]
      %v9135 = vld [vmem:[%s9123 + $0x58] sm:$0xff]
      %v9136 = vld [vmem:[%s9123 + $0x60] sm:$0xff]
      %v9137 = vld [vmem:[%s9123 + $0x68] sm:$0xff]
      %v9138 = vld [vmem:[%s9123 + $0x70] sm:$0xff]
      %v9139 = vld [vmem:[%s9123 + $0x78] sm:$0xff]
      %v9140 = vld [vmem:[%s9123 + $0x80] sm:$0xff]
      %v9141 = vld [vmem:[%s9123 + $0x88] sm:$0xff]
      %v9142 = vld [vmem:[%s9123 + $0x90] sm:$0xff]
      %v9143 = vld [vmem:[%s9123 + $0x98] sm:$0xff]
      %v9144 = vld [vmem:[%s9123 + $0xa0] sm:$0xff]
      %v9145 = vld [vmem:[%s9123 + $0xa8] sm:$0xff]
      %v9146 = vld [vmem:[%s9123 + $0xb0] sm:$0xff]
      %v9147 = vld [vmem:[%s9123 + $0xb8] sm:$0xff]
      %v9148 = vld [vmem:[%s9123 + $0xc0] sm:$0xff]
      %v9149 = vld [vmem:[%s9123 + $0xc8] sm:$0xff]
      %v9150 = vld [vmem:[%s9123 + $0xd0] sm:$0xff]
      %v9151 = vld [vmem:[%s9123 + $0xd8] sm:$0xff]
      %v9152 = vld [vmem:[%s9123 + $0xe0] sm:$0xff]
      %v9153 = vld [vmem:[%s9123 + $0xe8] sm:$0xff]
      %v9154 = vld [vmem:[%s9123 + $0xf0] sm:$0xff]
      %v9155 = vld [vmem:[%s9123 + $0xf8] sm:$0xff]
      %v9173 = vunpack.c.l.b16 %v9106
      %v9174 = vunpack.c.h.b16 %v9106
      %v9175 = vunpack.c.l.b16 %v9107
      %v9176 = vunpack.c.h.b16 %v9107
      %v9177 = vunpack.c.l.b16 %v9108
      %v9178 = vunpack.c.h.b16 %v9108
      %v9179 = vunpack.c.l.b16 %v9109
      %v9180 = vunpack.c.h.b16 %v9109
      %v9181 = vunpack.c.l.b16 %v9110
      %v9182 = vunpack.c.h.b16 %v9110
      %v9183 = vunpack.c.l.b16 %v9111
      %v9184 = vunpack.c.h.b16 %v9111
      %v9185 = vunpack.c.l.b16 %v9112
      %v9186 = vunpack.c.h.b16 %v9112
      %v9187 = vunpack.c.l.b16 %v9113
      %v9188 = vunpack.c.h.b16 %v9113
      %v9189 = vunpack.c.l.b16 %v9114
      %v9190 = vunpack.c.h.b16 %v9114
      %v9191 = vunpack.c.l.b16 %v9115
      %v9192 = vunpack.c.h.b16 %v9115
      %v9193 = vunpack.c.l.b16 %v9116
      %v9194 = vunpack.c.h.b16 %v9116
      %v9195 = vunpack.c.l.b16 %v9117
      %v9196 = vunpack.c.h.b16 %v9117
      %v9197 = vunpack.c.l.b16 %v9118
      %v9198 = vunpack.c.h.b16 %v9118
      %v9199 = vunpack.c.l.b16 %v9119
      %v9200 = vunpack.c.h.b16 %v9119
      %v9201 = vunpack.c.l.b16 %v9120
      %v9202 = vunpack.c.h.b16 %v9120
      %v9203 = vunpack.c.l.b16 %v9121
      %v9204 = vunpack.c.h.b16 %v9121
      %v9205 = vunpack.c.l.b16 %v9122
      %v9206 = vunpack.c.h.b16 %v9122
      %v9207 = vpack.c.b16 %v9175, %v9173
      %v9208 = vpack.c.b16 %v9176, %v9174
      %v9209 = vpack.c.b16 %v9179, %v9177
      %v9210 = vpack.c.b16 %v9180, %v9178
      %v9211 = vpack.c.b16 %v9183, %v9181
      %v9212 = vpack.c.b16 %v9184, %v9182
      %v9213 = vpack.c.b16 %v9187, %v9185
      %v9214 = vpack.c.b16 %v9188, %v9186
      %v9215 = vpack.c.b16 %v9191, %v9189
      %v9216 = vpack.c.b16 %v9192, %v9190
      %v9217 = vpack.c.b16 %v9195, %v9193
      %v9218 = vpack.c.b16 %v9196, %v9194
      %v9219 = vpack.c.b16 %v9199, %v9197
      %v9220 = vpack.c.b16 %v9200, %v9198
      %v9221 = vpack.c.b16 %v9203, %v9201
      %v9222 = vpack.c.b16 %v9204, %v9202
      %v9223 = vpack.c.b16 %v9205, %v9205
      %v9224 = vpack.c.b16 %v9206, %v9206
      %v9226 = vshrl.u32 %v9207, 16
      %v9228 = vshll.u32 %v9207, 16
      %v9230 = vrot.slane %v9228, 1
      %v9231 = vor.u32 %v9226, %v9230
      %v9233 = vshll.u32 %v9209, 16
      %v9235 = vrot.slane %v9233, 1
      %v9236 = vsel %vm446, %v9231, %v9235
      %v9238 = vshrl.u32 %v9208, 16
      %v9240 = vshll.u32 %v9208, 16
      %v9242 = vrot.slane %v9240, 1
      %v9243 = vor.u32 %v9238, %v9242
      %v9245 = vshll.u32 %v9210, 16
      %v9247 = vrot.slane %v9245, 1
      %v9248 = vsel %vm446, %v9243, %v9247
      %v9249 = vshrl.u32 %v9209, 16
      %v9251 = vor.u32 %v9249, %v9235
      %v9253 = vshll.u32 %v9211, 16
      %v9255 = vrot.slane %v9253, 1
      %v9256 = vsel %vm446, %v9251, %v9255
      %v9257 = vshrl.u32 %v9210, 16
      %v9259 = vor.u32 %v9257, %v9247
      %v9261 = vshll.u32 %v9212, 16
      %v9263 = vrot.slane %v9261, 1
      %v9264 = vsel %vm446, %v9259, %v9263
      %v9265 = vshrl.u32 %v9211, 16
      %v9267 = vor.u32 %v9265, %v9255
      %v9269 = vshll.u32 %v9213, 16
      %v9271 = vrot.slane %v9269, 1
      %v9272 = vsel %vm446, %v9267, %v9271
      %v9273 = vshrl.u32 %v9212, 16
      %v9275 = vor.u32 %v9273, %v9263
      %v9277 = vshll.u32 %v9214, 16
      %v9279 = vrot.slane %v9277, 1
      %v9280 = vsel %vm446, %v9275, %v9279
      %v9281 = vshrl.u32 %v9213, 16
      %v9283 = vor.u32 %v9281, %v9271
      %v9285 = vshll.u32 %v9215, 16
      %v9287 = vrot.slane %v9285, 1
      %v9288 = vsel %vm446, %v9283, %v9287
      %v9289 = vshrl.u32 %v9214, 16
      %v9291 = vor.u32 %v9289, %v9279
      %v9293 = vshll.u32 %v9216, 16
      %v9295 = vrot.slane %v9293, 1
      %v9296 = vsel %vm446, %v9291, %v9295
      %v9297 = vshrl.u32 %v9215, 16
      %v9299 = vor.u32 %v9297, %v9287
      %v9301 = vshll.u32 %v9217, 16
      %v9303 = vrot.slane %v9301, 1
      %v9304 = vsel %vm446, %v9299, %v9303
      %v9305 = vshrl.u32 %v9216, 16
      %v9307 = vor.u32 %v9305, %v9295
      %v9309 = vshll.u32 %v9218, 16
      %v9311 = vrot.slane %v9309, 1
      %v9312 = vsel %vm446, %v9307, %v9311
      %v9313 = vshrl.u32 %v9217, 16
      %v9315 = vor.u32 %v9313, %v9303
      %v9317 = vshll.u32 %v9219, 16
      %v9319 = vrot.slane %v9317, 1
      %v9320 = vsel %vm446, %v9315, %v9319
      %v9321 = vshrl.u32 %v9218, 16
      %v9323 = vor.u32 %v9321, %v9311
      %v9325 = vshll.u32 %v9220, 16
      %v9327 = vrot.slane %v9325, 1
      %v9328 = vsel %vm446, %v9323, %v9327
      %v9329 = vshrl.u32 %v9219, 16
      %v9331 = vor.u32 %v9329, %v9319
      %v9333 = vshll.u32 %v9221, 16
      %v9335 = vrot.slane %v9333, 1
      %v9336 = vsel %vm446, %v9331, %v9335
      %v9337 = vshrl.u32 %v9220, 16
      %v9339 = vor.u32 %v9337, %v9327
      %v9341 = vshll.u32 %v9222, 16
      %v9343 = vrot.slane %v9341, 1
      %v9344 = vsel %vm446, %v9339, %v9343
      %v9345 = vshrl.u32 %v9221, 16
      %v9347 = vor.u32 %v9345, %v9335
      %v9349 = vshll.u32 %v9223, 16
      %v9351 = vrot.slane %v9349, 1
      %v9352 = vsel %vm446, %v9347, %v9351
      %v9353 = vshrl.u32 %v9222, 16
      %v9355 = vor.u32 %v9353, %v9343
      %v9357 = vshll.u32 %v9224, 16
      %v9359 = vrot.slane %v9357, 1
      %v9360 = vsel %vm446, %v9355, %v9359
      %v9409 = vunpack.c.l.b16 %v9124
      %v9410 = vunpack.c.h.b16 %v9124
      %v9411 = vunpack.c.l.b16 %v9125
      %v9412 = vunpack.c.h.b16 %v9125
      %v9413 = vunpack.c.l.b16 %v9126
      %v9414 = vunpack.c.h.b16 %v9126
      %v9415 = vunpack.c.l.b16 %v9127
      %v9416 = vunpack.c.h.b16 %v9127
      %v9417 = vunpack.c.l.b16 %v9128
      %v9418 = vunpack.c.h.b16 %v9128
      %v9419 = vunpack.c.l.b16 %v9129
      %v9420 = vunpack.c.h.b16 %v9129
      %v9421 = vunpack.c.l.b16 %v9130
      %v9422 = vunpack.c.h.b16 %v9130
      %v9423 = vunpack.c.l.b16 %v9131
      %v9424 = vunpack.c.h.b16 %v9131
      %v9425 = vunpack.c.l.b16 %v9132
      %v9426 = vunpack.c.h.b16 %v9132
      %v9427 = vunpack.c.l.b16 %v9133
      %v9428 = vunpack.c.h.b16 %v9133
      %v9429 = vunpack.c.l.b16 %v9134
      %v9430 = vunpack.c.h.b16 %v9134
      %v9431 = vunpack.c.l.b16 %v9135
      %v9432 = vunpack.c.h.b16 %v9135
      %v9433 = vunpack.c.l.b16 %v9136
      %v9434 = vunpack.c.h.b16 %v9136
      %v9435 = vunpack.c.l.b16 %v9137
      %v9436 = vunpack.c.h.b16 %v9137
      %v9437 = vunpack.c.l.b16 %v9138
      %v9438 = vunpack.c.h.b16 %v9138
      %v9439 = vunpack.c.l.b16 %v9139
      %v9440 = vunpack.c.h.b16 %v9139
      %v9441 = vunpack.c.l.b16 %v9140
      %v9442 = vunpack.c.h.b16 %v9140
      %v9443 = vunpack.c.l.b16 %v9141
      %v9444 = vunpack.c.h.b16 %v9141
      %v9445 = vunpack.c.l.b16 %v9142
      %v9446 = vunpack.c.h.b16 %v9142
      %v9447 = vunpack.c.l.b16 %v9143
      %v9448 = vunpack.c.h.b16 %v9143
      %v9449 = vunpack.c.l.b16 %v9144
      %v9450 = vunpack.c.h.b16 %v9144
      %v9451 = vunpack.c.l.b16 %v9145
      %v9452 = vunpack.c.h.b16 %v9145
      %v9453 = vunpack.c.l.b16 %v9146
      %v9454 = vunpack.c.h.b16 %v9146
      %v9455 = vunpack.c.l.b16 %v9147
      %v9456 = vunpack.c.h.b16 %v9147
      %v9457 = vunpack.c.l.b16 %v9148
      %v9458 = vunpack.c.h.b16 %v9148
      %v9459 = vunpack.c.l.b16 %v9149
      %v9460 = vunpack.c.h.b16 %v9149
      %v9461 = vunpack.c.l.b16 %v9150
      %v9462 = vunpack.c.h.b16 %v9150
      %v9463 = vunpack.c.l.b16 %v9151
      %v9464 = vunpack.c.h.b16 %v9151
      %v9465 = vunpack.c.l.b16 %v9152
      %v9466 = vunpack.c.h.b16 %v9152
      %v9467 = vunpack.c.l.b16 %v9153
      %v9468 = vunpack.c.h.b16 %v9153
      %v9469 = vunpack.c.l.b16 %v9154
      %v9470 = vunpack.c.h.b16 %v9154
      %v9471 = vunpack.c.l.b16 %v9155
      %v9472 = vunpack.c.h.b16 %v9155
      %v9473 = vpack.c.b16 %v9411, %v9409
      %v9474 = vpack.c.b16 %v9412, %v9410
      %v9475 = vpack.c.b16 %v9415, %v9413
      %v9476 = vpack.c.b16 %v9416, %v9414
      %v9477 = vpack.c.b16 %v9419, %v9417
      %v9478 = vpack.c.b16 %v9420, %v9418
      %v9479 = vpack.c.b16 %v9423, %v9421
      %v9480 = vpack.c.b16 %v9424, %v9422
      %v9481 = vpack.c.b16 %v9427, %v9425
      %v9482 = vpack.c.b16 %v9428, %v9426
      %v9483 = vpack.c.b16 %v9431, %v9429
      %v9484 = vpack.c.b16 %v9432, %v9430
      %v9485 = vpack.c.b16 %v9435, %v9433
      %v9486 = vpack.c.b16 %v9436, %v9434
      %v9487 = vpack.c.b16 %v9439, %v9437
      %v9488 = vpack.c.b16 %v9440, %v9438
      %v9489 = vpack.c.b16 %v9443, %v9441
      %v9490 = vpack.c.b16 %v9444, %v9442
      %v9491 = vpack.c.b16 %v9447, %v9445
      %v9492 = vpack.c.b16 %v9448, %v9446
      %v9493 = vpack.c.b16 %v9451, %v9449
      %v9494 = vpack.c.b16 %v9452, %v9450
      %v9495 = vpack.c.b16 %v9455, %v9453
      %v9496 = vpack.c.b16 %v9456, %v9454
      %v9497 = vpack.c.b16 %v9459, %v9457
      %v9498 = vpack.c.b16 %v9460, %v9458
      %v9499 = vpack.c.b16 %v9463, %v9461
      %v9500 = vpack.c.b16 %v9464, %v9462
      %v9501 = vpack.c.b16 %v9467, %v9465
      %v9502 = vpack.c.b16 %v9468, %v9466
      %v9503 = vpack.c.b16 %v9471, %v9469
      %v9504 = vpack.c.b16 %v9472, %v9470
      %9537 = vmatprep.subr.bf16.mxu0 %v9488
      %9538 = vmatpush1.bf16.msra.mxu0 %v9487
      %9539 = vmatprep.subr.bf16.mxu0 %v9486
      %9540 = vmatpush1.bf16.msra.mxu0 %v9485
      %9541 = vmatprep.subr.bf16.mxu0 %v9484
      %9542 = vmatpush1.bf16.msra.mxu0 %v9483
      %9543 = vmatprep.subr.bf16.mxu0 %v9482
      %9544 = vmatpush1.bf16.msra.mxu0 %v9481
      %9545 = vmatprep.subr.bf16.mxu0 %v9480
      %9546 = vmatpush1.bf16.msra.mxu0 %v9479
      %9547 = vmatprep.subr.bf16.mxu0 %v9478
      %9548 = vmatpush1.bf16.msra.mxu0 %v9477
      %9549 = vmatprep.subr.bf16.mxu0 %v9476
      %9550 = vmatpush1.bf16.msra.mxu0 %v9475
      %9551 = vmatprep.subr.bf16.mxu0 %v9474
      %9552 = vmatpush1.bf16.msra.mxu0 %v9473
      %9553 = vmatprep.subr.bf16.mxu0 %v9504
      %9554 = vmatpush2.bf16.msra.mxu0 %v9503
      %9555 = vmatprep.subr.bf16.mxu0 %v9502
      %9556 = vmatpush2.bf16.msra.mxu0 %v9501
      %9557 = vmatprep.subr.bf16.mxu0 %v9500
      %9558 = vmatpush2.bf16.msra.mxu0 %v9499
      %9559 = vmatprep.subr.bf16.mxu0 %v9498
      %9560 = vmatpush2.bf16.msra.mxu0 %v9497
      %9561 = vmatprep.subr.bf16.mxu0 %v9496
      %9562 = vmatpush2.bf16.msra.mxu0 %v9495
      %9563 = vmatprep.subr.bf16.mxu0 %v9494
      %9564 = vmatpush2.bf16.msra.mxu0 %v9493
      %9565 = vmatprep.subr.bf16.mxu0 %v9492
      %9566 = vmatpush2.bf16.msra.mxu0 %v9491
      %9567 = vmatprep.subr.bf16.mxu0 %v9490
      %9568 = vmatpush2.bf16.msra.mxu0 %v9489
      %9569 = vmatprep.mubr.bf16.mxu0 %v9248
      %9570 = vmatmul.mubr.bf16.gmra.mxu0 %v9236
      %v9571 = vpop.f32.mrf.mxu0
      %v9572 = vadd.f32 0.0, %v9571
      %v9573 = vpop.f32.mrf.mxu0
      %v9574 = vadd.f32 0.0, %v9573
      %v9575 = vpop.f32.mrf.mxu0
      %v9576 = vadd.f32 0.0, %v9575
      %v9577 = vpop.f32.mrf.mxu0
      %v9578 = vadd.f32 0.0, %v9577
      %9579 = vmatprep.mubr.bf16.mxu0 %v9264
      %9580 = vmatmul.mubr.bf16.gmra.mxu0 %v9256
      %v9581 = vpop.f32.mrf.mxu0
      %v9582 = vadd.f32 0.0, %v9581
      %v9583 = vpop.f32.mrf.mxu0
      %v9584 = vadd.f32 0.0, %v9583
      %v9585 = vpop.f32.mrf.mxu0
      %v9586 = vadd.f32 0.0, %v9585
      %v9587 = vpop.f32.mrf.mxu0
      %v9588 = vadd.f32 0.0, %v9587
      %9589 = vmatprep.mubr.bf16.mxu0 %v9280
      %9590 = vmatmul.mubr.bf16.gmra.mxu0 %v9272
      %v9591 = vpop.f32.mrf.mxu0
      %v9592 = vadd.f32 0.0, %v9591
      %v9593 = vpop.f32.mrf.mxu0
      %v9594 = vadd.f32 0.0, %v9593
      %v9595 = vpop.f32.mrf.mxu0
      %v9596 = vadd.f32 0.0, %v9595
      %v9597 = vpop.f32.mrf.mxu0
      %v9598 = vadd.f32 0.0, %v9597
      %9599 = vmatprep.mubr.bf16.mxu0 %v9296
      %9600 = vmatmul.mubr.bf16.gmra.mxu0 %v9288
      %v9601 = vpop.f32.mrf.mxu0
      %v9602 = vadd.f32 0.0, %v9601
      %v9603 = vpop.f32.mrf.mxu0
      %v9604 = vadd.f32 0.0, %v9603
      %v9605 = vpop.f32.mrf.mxu0
      %v9606 = vadd.f32 0.0, %v9605
      %v9607 = vpop.f32.mrf.mxu0
      %v9608 = vadd.f32 0.0, %v9607
      %9609 = vmatprep.mubr.bf16.mxu0 %v9312
      %9610 = vmatmul.mubr.bf16.gmra.mxu0 %v9304
      %v9611 = vpop.f32.mrf.mxu0
      %v9612 = vadd.f32 0.0, %v9611
      %v9613 = vpop.f32.mrf.mxu0
      %v9614 = vadd.f32 0.0, %v9613
      %v9615 = vpop.f32.mrf.mxu0
      %v9616 = vadd.f32 0.0, %v9615
      %v9617 = vpop.f32.mrf.mxu0
      %v9618 = vadd.f32 0.0, %v9617
      %9619 = vmatprep.mubr.bf16.mxu0 %v9328
      %9620 = vmatmul.mubr.bf16.gmra.mxu0 %v9320
      %v9621 = vpop.f32.mrf.mxu0
      %v9622 = vadd.f32 0.0, %v9621
      %v9623 = vpop.f32.mrf.mxu0
      %v9624 = vadd.f32 0.0, %v9623
      %v9625 = vpop.f32.mrf.mxu0
      %v9626 = vadd.f32 0.0, %v9625
      %v9627 = vpop.f32.mrf.mxu0
      %v9628 = vadd.f32 0.0, %v9627
      %9629 = vmatprep.mubr.bf16.mxu0 %v9344
      %9630 = vmatmul.mubr.bf16.gmra.mxu0 %v9336
      %v9631 = vpop.f32.mrf.mxu0
      %v9632 = vadd.f32 0.0, %v9631
      %v9633 = vpop.f32.mrf.mxu0
      %v9634 = vadd.f32 0.0, %v9633
      %v9635 = vpop.f32.mrf.mxu0
      %v9636 = vadd.f32 0.0, %v9635
      %v9637 = vpop.f32.mrf.mxu0
      %v9638 = vadd.f32 0.0, %v9637
      %9639 = vmatprep.mubr.bf16.mxu0 %v9360
      %9640 = vmatmul.mubr.bf16.gmra.mxu0 %v9352
      %v9641 = vpop.f32.mrf.mxu0
      %v9642 = vadd.f32 0.0, %v9641
      %v9643 = vpop.f32.mrf.mxu0
      %v9644 = vadd.f32 0.0, %v9643
      %v9645 = vpop.f32.mrf.mxu0
      %v9646 = vadd.f32 0.0, %v9645
      %v9647 = vpop.f32.mrf.mxu0
      %v9648 = vadd.f32 0.0, %v9647
      %9649 = vdwg.mxu0
      %v9666 = vunpack.c.l.b16 %v9058
      %v9667 = vunpack.c.h.b16 %v9058
      %v9668 = vunpack.c.l.b16 %v9059
      %v9669 = vunpack.c.h.b16 %v9059
      %v9670 = vunpack.c.l.b16 %v9060
      %v9671 = vunpack.c.h.b16 %v9060
      %v9672 = vunpack.c.l.b16 %v9061
      %v9673 = vunpack.c.h.b16 %v9061
      %v9674 = vunpack.c.l.b16 %v9062
      %v9675 = vunpack.c.h.b16 %v9062
      %v9676 = vunpack.c.l.b16 %v9063
      %v9677 = vunpack.c.h.b16 %v9063
      %v9678 = vunpack.c.l.b16 %v9064
      %v9679 = vunpack.c.h.b16 %v9064
      %v9680 = vunpack.c.l.b16 %v9065
      %v9681 = vunpack.c.h.b16 %v9065
      %v9682 = vunpack.c.l.b16 %v9066
      %v9683 = vunpack.c.h.b16 %v9066
      %v9684 = vunpack.c.l.b16 %v9067
      %v9685 = vunpack.c.h.b16 %v9067
      %v9686 = vunpack.c.l.b16 %v9068
      %v9687 = vunpack.c.h.b16 %v9068
      %v9688 = vunpack.c.l.b16 %v9069
      %v9689 = vunpack.c.h.b16 %v9069
      %v9690 = vunpack.c.l.b16 %v9070
      %v9691 = vunpack.c.h.b16 %v9070
      %v9692 = vunpack.c.l.b16 %v9071
      %v9693 = vunpack.c.h.b16 %v9071
      %v9694 = vunpack.c.l.b16 %v9072
      %v9695 = vunpack.c.h.b16 %v9072
      %v9696 = vunpack.c.l.b16 %v9073
      %v9697 = vunpack.c.h.b16 %v9073
      %v9698 = vpack.c.b16 %v9668, %v9666
      %v9699 = vpack.c.b16 %v9669, %v9667
      %v9700 = vpack.c.b16 %v9672, %v9670
      %v9701 = vpack.c.b16 %v9673, %v9671
      %v9702 = vpack.c.b16 %v9676, %v9674
      %v9703 = vpack.c.b16 %v9677, %v9675
      %v9704 = vpack.c.b16 %v9680, %v9678
      %v9705 = vpack.c.b16 %v9681, %v9679
      %v9706 = vpack.c.b16 %v9684, %v9682
      %v9707 = vpack.c.b16 %v9685, %v9683
      %v9708 = vpack.c.b16 %v9688, %v9686
      %v9709 = vpack.c.b16 %v9689, %v9687
      %v9710 = vpack.c.b16 %v9692, %v9690
      %v9711 = vpack.c.b16 %v9693, %v9691
      %v9712 = vpack.c.b16 %v9696, %v9694
      %v9713 = vpack.c.b16 %v9697, %v9695
      %v9762 = vunpack.c.l.b16 %v9074
      %v9763 = vunpack.c.h.b16 %v9074
      %v9764 = vunpack.c.l.b16 %v9075
      %v9765 = vunpack.c.h.b16 %v9075
      %v9766 = vunpack.c.l.b16 %v9076
      %v9767 = vunpack.c.h.b16 %v9076
      %v9768 = vunpack.c.l.b16 %v9077
      %v9769 = vunpack.c.h.b16 %v9077
      %v9770 = vunpack.c.l.b16 %v9078
      %v9771 = vunpack.c.h.b16 %v9078
      %v9772 = vunpack.c.l.b16 %v9079
      %v9773 = vunpack.c.h.b16 %v9079
      %v9774 = vunpack.c.l.b16 %v9080
      %v9775 = vunpack.c.h.b16 %v9080
      %v9776 = vunpack.c.l.b16 %v9081
      %v9777 = vunpack.c.h.b16 %v9081
      %v9778 = vunpack.c.l.b16 %v9082
      %v9779 = vunpack.c.h.b16 %v9082
      %v9780 = vunpack.c.l.b16 %v9083
      %v9781 = vunpack.c.h.b16 %v9083
      %v9782 = vunpack.c.l.b16 %v9084
      %v9783 = vunpack.c.h.b16 %v9084
      %v9784 = vunpack.c.l.b16 %v9085
      %v9785 = vunpack.c.h.b16 %v9085
      %v9786 = vunpack.c.l.b16 %v9086
      %v9787 = vunpack.c.h.b16 %v9086
      %v9788 = vunpack.c.l.b16 %v9087
      %v9789 = vunpack.c.h.b16 %v9087
      %v9790 = vunpack.c.l.b16 %v9088
      %v9791 = vunpack.c.h.b16 %v9088
      %v9792 = vunpack.c.l.b16 %v9089
      %v9793 = vunpack.c.h.b16 %v9089
      %v9794 = vunpack.c.l.b16 %v9090
      %v9795 = vunpack.c.h.b16 %v9090
      %v9796 = vunpack.c.l.b16 %v9091
      %v9797 = vunpack.c.h.b16 %v9091
      %v9798 = vunpack.c.l.b16 %v9092
      %v9799 = vunpack.c.h.b16 %v9092
      %v9800 = vunpack.c.l.b16 %v9093
      %v9801 = vunpack.c.h.b16 %v9093
      %v9802 = vunpack.c.l.b16 %v9094
      %v9803 = vunpack.c.h.b16 %v9094
      %v9804 = vunpack.c.l.b16 %v9095
      %v9805 = vunpack.c.h.b16 %v9095
      %v9806 = vunpack.c.l.b16 %v9096
      %v9807 = vunpack.c.h.b16 %v9096
      %v9808 = vunpack.c.l.b16 %v9097
      %v9809 = vunpack.c.h.b16 %v9097
      %v9810 = vunpack.c.l.b16 %v9098
      %v9811 = vunpack.c.h.b16 %v9098
      %v9812 = vunpack.c.l.b16 %v9099
      %v9813 = vunpack.c.h.b16 %v9099
      %v9814 = vunpack.c.l.b16 %v9100
      %v9815 = vunpack.c.h.b16 %v9100
      %v9816 = vunpack.c.l.b16 %v9101
      %v9817 = vunpack.c.h.b16 %v9101
      %v9818 = vunpack.c.l.b16 %v9102
      %v9819 = vunpack.c.h.b16 %v9102
      %v9820 = vunpack.c.l.b16 %v9103
      %v9821 = vunpack.c.h.b16 %v9103
      %v9822 = vunpack.c.l.b16 %v9104
      %v9823 = vunpack.c.h.b16 %v9104
      %v9824 = vunpack.c.l.b16 %v9105
      %v9825 = vunpack.c.h.b16 %v9105
      %v9826 = vpack.c.b16 %v9764, %v9762
      %v9827 = vpack.c.b16 %v9765, %v9763
      %v9828 = vpack.c.b16 %v9768, %v9766
      %v9829 = vpack.c.b16 %v9769, %v9767
      %v9830 = vpack.c.b16 %v9772, %v9770
      %v9831 = vpack.c.b16 %v9773, %v9771
      %v9832 = vpack.c.b16 %v9776, %v9774
      %v9833 = vpack.c.b16 %v9777, %v9775
      %v9834 = vpack.c.b16 %v9780, %v9778
      %v9835 = vpack.c.b16 %v9781, %v9779
      %v9836 = vpack.c.b16 %v9784, %v9782
      %v9837 = vpack.c.b16 %v9785, %v9783
      %v9838 = vpack.c.b16 %v9788, %v9786
      %v9839 = vpack.c.b16 %v9789, %v9787
      %v9840 = vpack.c.b16 %v9792, %v9790
      %v9841 = vpack.c.b16 %v9793, %v9791
      %v9842 = vpack.c.b16 %v9796, %v9794
      %v9843 = vpack.c.b16 %v9797, %v9795
      %v9844 = vpack.c.b16 %v9800, %v9798
      %v9845 = vpack.c.b16 %v9801, %v9799
      %v9846 = vpack.c.b16 %v9804, %v9802
      %v9847 = vpack.c.b16 %v9805, %v9803
      %v9848 = vpack.c.b16 %v9808, %v9806
      %v9849 = vpack.c.b16 %v9809, %v9807
      %v9850 = vpack.c.b16 %v9812, %v9810
      %v9851 = vpack.c.b16 %v9813, %v9811
      %v9852 = vpack.c.b16 %v9816, %v9814
      %v9853 = vpack.c.b16 %v9817, %v9815
      %v9854 = vpack.c.b16 %v9820, %v9818
      %v9855 = vpack.c.b16 %v9821, %v9819
      %v9856 = vpack.c.b16 %v9824, %v9822
      %v9857 = vpack.c.b16 %v9825, %v9823
      %9890 = vmatprep.subr.bf16.mxu0 %v9841
      %9891 = vmatpush1.bf16.msra.mxu0 %v9840
      %9892 = vmatprep.subr.bf16.mxu0 %v9839
      %9893 = vmatpush1.bf16.msra.mxu0 %v9838
      %9894 = vmatprep.subr.bf16.mxu0 %v9837
      %9895 = vmatpush1.bf16.msra.mxu0 %v9836
      %9896 = vmatprep.subr.bf16.mxu0 %v9835
      %9897 = vmatpush1.bf16.msra.mxu0 %v9834
      %9898 = vmatprep.subr.bf16.mxu0 %v9833
      %9899 = vmatpush1.bf16.msra.mxu0 %v9832
      %9900 = vmatprep.subr.bf16.mxu0 %v9831
      %9901 = vmatpush1.bf16.msra.mxu0 %v9830
      %9902 = vmatprep.subr.bf16.mxu0 %v9829
      %9903 = vmatpush1.bf16.msra.mxu0 %v9828
      %9904 = vmatprep.subr.bf16.mxu0 %v9827
      %9905 = vmatpush1.bf16.msra.mxu0 %v9826
      %9906 = vmatprep.subr.bf16.mxu0 %v9857
      %9907 = vmatpush2.bf16.msra.mxu0 %v9856
      %9908 = vmatprep.subr.bf16.mxu0 %v9855
      %9909 = vmatpush2.bf16.msra.mxu0 %v9854
      %9910 = vmatprep.subr.bf16.mxu0 %v9853
      %9911 = vmatpush2.bf16.msra.mxu0 %v9852
      %9912 = vmatprep.subr.bf16.mxu0 %v9851
      %9913 = vmatpush2.bf16.msra.mxu0 %v9850
      %9914 = vmatprep.subr.bf16.mxu0 %v9849
      %9915 = vmatpush2.bf16.msra.mxu0 %v9848
      %9916 = vmatprep.subr.bf16.mxu0 %v9847
      %9917 = vmatpush2.bf16.msra.mxu0 %v9846
      %9918 = vmatprep.subr.bf16.mxu0 %v9845
      %9919 = vmatpush2.bf16.msra.mxu0 %v9844
      %9920 = vmatprep.subr.bf16.mxu0 %v9843
      %9921 = vmatpush2.bf16.msra.mxu0 %v9842
      %9922 = vmatprep.mubr.bf16.mxu0 %v9699
      %9923 = vmatmul.mubr.bf16.gmra.mxu0 %v9698
      %v9924 = vpop.f32.mrf.mxu0
      %v9925 = vadd.f32 %v9572, %v9924
      %v9926 = vpop.f32.mrf.mxu0
      %v9927 = vadd.f32 %v9574, %v9926
      %v9928 = vpop.f32.mrf.mxu0
      %v9929 = vadd.f32 %v9576, %v9928
      %v9930 = vpop.f32.mrf.mxu0
      %v9931 = vadd.f32 %v9578, %v9930
      %9932 = vmatprep.mubr.bf16.mxu0 %v9701
      %9933 = vmatmul.mubr.bf16.gmra.mxu0 %v9700
      %v9934 = vpop.f32.mrf.mxu0
      %v9935 = vadd.f32 %v9582, %v9934
      %v9936 = vpop.f32.mrf.mxu0
      %v9937 = vadd.f32 %v9584, %v9936
      %v9938 = vpop.f32.mrf.mxu0
      %v9939 = vadd.f32 %v9586, %v9938
      %v9940 = vpop.f32.mrf.mxu0
      %v9941 = vadd.f32 %v9588, %v9940
      %9942 = vmatprep.mubr.bf16.mxu0 %v9703
      %9943 = vmatmul.mubr.bf16.gmra.mxu0 %v9702
      %v9944 = vpop.f32.mrf.mxu0
      %v9945 = vadd.f32 %v9592, %v9944
      %v9946 = vpop.f32.mrf.mxu0
      %v9947 = vadd.f32 %v9594, %v9946
      %v9948 = vpop.f32.mrf.mxu0
      %v9949 = vadd.f32 %v9596, %v9948
      %v9950 = vpop.f32.mrf.mxu0
      %v9951 = vadd.f32 %v9598, %v9950
      %9952 = vmatprep.mubr.bf16.mxu0 %v9705
      %9953 = vmatmul.mubr.bf16.gmra.mxu0 %v9704
      %v9954 = vpop.f32.mrf.mxu0
      %v9955 = vadd.f32 %v9602, %v9954
      %v9956 = vpop.f32.mrf.mxu0
      %v9957 = vadd.f32 %v9604, %v9956
      %v9958 = vpop.f32.mrf.mxu0
      %v9959 = vadd.f32 %v9606, %v9958
      %v9960 = vpop.f32.mrf.mxu0
      %v9961 = vadd.f32 %v9608, %v9960
      %9962 = vmatprep.mubr.bf16.mxu0 %v9707
      %9963 = vmatmul.mubr.bf16.gmra.mxu0 %v9706
      %v9964 = vpop.f32.mrf.mxu0
      %v9965 = vadd.f32 %v9612, %v9964
      %v9966 = vpop.f32.mrf.mxu0
      %v9967 = vadd.f32 %v9614, %v9966
      %v9968 = vpop.f32.mrf.mxu0
      %v9969 = vadd.f32 %v9616, %v9968
      %v9970 = vpop.f32.mrf.mxu0
      %v9971 = vadd.f32 %v9618, %v9970
      %9972 = vmatprep.mubr.bf16.mxu0 %v9709
      %9973 = vmatmul.mubr.bf16.gmra.mxu0 %v9708
      %v9974 = vpop.f32.mrf.mxu0
      %v9975 = vadd.f32 %v9622, %v9974
      %v9976 = vpop.f32.mrf.mxu0
      %v9977 = vadd.f32 %v9624, %v9976
      %v9978 = vpop.f32.mrf.mxu0
      %v9979 = vadd.f32 %v9626, %v9978
      %v9980 = vpop.f32.mrf.mxu0
      %v9981 = vadd.f32 %v9628, %v9980
      %9982 = vmatprep.mubr.bf16.mxu0 %v9711
      %9983 = vmatmul.mubr.bf16.gmra.mxu0 %v9710
      %v9984 = vpop.f32.mrf.mxu0
      %v9985 = vadd.f32 %v9632, %v9984
      %v9986 = vpop.f32.mrf.mxu0
      %v9987 = vadd.f32 %v9634, %v9986
      %v9988 = vpop.f32.mrf.mxu0
      %v9989 = vadd.f32 %v9636, %v9988
      %v9990 = vpop.f32.mrf.mxu0
      %v9991 = vadd.f32 %v9638, %v9990
      %9992 = vmatprep.mubr.bf16.mxu0 %v9713
      %9993 = vmatmul.mubr.bf16.gmra.mxu0 %v9712
      %v9994 = vpop.f32.mrf.mxu0
      %v9995 = vadd.f32 %v9642, %v9994
      %v9996 = vpop.f32.mrf.mxu0
      %v9997 = vadd.f32 %v9644, %v9996
      %v9998 = vpop.f32.mrf.mxu0
      %v9999 = vadd.f32 %v9646, %v9998
      %v10000 = vpop.f32.mrf.mxu0
      %v10001 = vadd.f32 %v9648, %v10000
      %10002 = vdwg.mxu0
      %v10004 = vlaneseq
      %v10005 = vshrl.u32 %v10004, 7
      %v10006 = vsub.s32 0, %v10005
      %v10007 = vrot.slane %v9057, %v10006
      %v10008 = vlaneseq
      %v10009 = vshrl.u32 %v10008, 7
      %v10010 = vsub.s32 1, %v10009
      %v10011 = vrot.slane %v9057, %v10010
      %v10014 = vadd.f32 %v9925, %v10007
      %v10015 = vadd.f32 %v9927, %v10011
      %v10016 = vadd.f32 %v9929, %v10007
      %v10017 = vadd.f32 %v9931, %v10011
      %v10018 = vadd.f32 %v9935, %v10007
      %v10019 = vadd.f32 %v9937, %v10011
      %v10020 = vadd.f32 %v9939, %v10007
      %v10021 = vadd.f32 %v9941, %v10011
      %v10022 = vadd.f32 %v9945, %v10007
      %v10023 = vadd.f32 %v9947, %v10011
      %v10024 = vadd.f32 %v9949, %v10007
      %v10025 = vadd.f32 %v9951, %v10011
      %v10026 = vadd.f32 %v9955, %v10007
      %v10027 = vadd.f32 %v9957, %v10011
      %v10028 = vadd.f32 %v9959, %v10007
      %v10029 = vadd.f32 %v9961, %v10011
      %v10030 = vadd.f32 %v9965, %v10007
      %v10031 = vadd.f32 %v9967, %v10011
      %v10032 = vadd.f32 %v9969, %v10007
      %v10033 = vadd.f32 %v9971, %v10011
      %v10034 = vadd.f32 %v9975, %v10007
      %v10035 = vadd.f32 %v9977, %v10011
      %v10036 = vadd.f32 %v9979, %v10007
      %v10037 = vadd.f32 %v9981, %v10011
      %v10038 = vadd.f32 %v9985, %v10007
      %v10039 = vadd.f32 %v9987, %v10011
      %v10040 = vadd.f32 %v9989, %v10007
      %v10041 = vadd.f32 %v9991, %v10011
      %v10042 = vadd.f32 %v9995, %v10007
      %v10043 = vadd.f32 %v9997, %v10011
      %v10044 = vadd.f32 %v9999, %v10007
      %v10045 = vadd.f32 %v10001, %v10011
      %v10046 = vmax.f32 %v10014, 0.0
      %v10047 = vmax.f32 %v10015, 0.0
      %v10048 = vmax.f32 %v10016, 0.0
      %v10049 = vmax.f32 %v10017, 0.0
      %v10050 = vmax.f32 %v10018, 0.0
      %v10051 = vmax.f32 %v10019, 0.0
      %v10052 = vmax.f32 %v10020, 0.0
      %v10053 = vmax.f32 %v10021, 0.0
      %v10054 = vmax.f32 %v10022, 0.0
      %v10055 = vmax.f32 %v10023, 0.0
      %v10056 = vmax.f32 %v10024, 0.0
      %v10057 = vmax.f32 %v10025, 0.0
      %v10058 = vmax.f32 %v10026, 0.0
      %v10059 = vmax.f32 %v10027, 0.0
      %v10060 = vmax.f32 %v10028, 0.0
      %v10061 = vmax.f32 %v10029, 0.0
      %v10062 = vmax.f32 %v10030, 0.0
      %v10063 = vmax.f32 %v10031, 0.0
      %v10064 = vmax.f32 %v10032, 0.0
      %v10065 = vmax.f32 %v10033, 0.0
      %v10066 = vmax.f32 %v10034, 0.0
      %v10067 = vmax.f32 %v10035, 0.0
      %v10068 = vmax.f32 %v10036, 0.0
      %v10069 = vmax.f32 %v10037, 0.0
      %v10070 = vmax.f32 %v10038, 0.0
      %v10071 = vmax.f32 %v10039, 0.0
      %v10072 = vmax.f32 %v10040, 0.0
      %v10073 = vmax.f32 %v10041, 0.0
      %v10074 = vmax.f32 %v10042, 0.0
      %v10075 = vmax.f32 %v10043, 0.0
      %v10076 = vmax.f32 %v10044, 0.0
      %v10077 = vmax.f32 %v10045, 0.0
      %v10078 = vsel %vm8910, %v10046, 0.0
      %v10079 = vsel %vm8910, %v10047, 0.0
      %v10080 = vsel %vm8911, %v10048, 0.0
      %v10081 = vsel %vm8911, %v10049, 0.0
      %v10082 = vsel %vm8910, %v10050, 0.0
      %v10083 = vsel %vm8910, %v10051, 0.0
      %v10084 = vsel %vm8911, %v10052, 0.0
      %v10085 = vsel %vm8911, %v10053, 0.0
      %v10086 = vsel %vm8910, %v10054, 0.0
      %v10087 = vsel %vm8910, %v10055, 0.0
      %v10088 = vsel %vm8911, %v10056, 0.0
      %v10089 = vsel %vm8911, %v10057, 0.0
      %v10090 = vsel %vm8910, %v10058, 0.0
      %v10091 = vsel %vm8910, %v10059, 0.0
      %v10092 = vsel %vm8911, %v10060, 0.0
      %v10093 = vsel %vm8911, %v10061, 0.0
      %v10094 = vsel %vm8910, %v10062, 0.0
      %v10095 = vsel %vm8910, %v10063, 0.0
      %v10096 = vsel %vm8911, %v10064, 0.0
      %v10097 = vsel %vm8911, %v10065, 0.0
      %v10098 = vsel %vm8910, %v10066, 0.0
      %v10099 = vsel %vm8910, %v10067, 0.0
      %v10100 = vsel %vm8911, %v10068, 0.0
      %v10101 = vsel %vm8911, %v10069, 0.0
      %v10102 = vsel %vm8910, %v10070, 0.0
      %v10103 = vsel %vm8910, %v10071, 0.0
      %v10104 = vsel %vm8911, %v10072, 0.0
      %v10105 = vsel %vm8911, %v10073, 0.0
      %v10106 = vsel %vm8910, %v10074, 0.0
      %v10107 = vsel %vm8910, %v10075, 0.0
      %v10108 = vsel %vm8911, %v10076, 0.0
      %v10109 = vsel %vm8911, %v10077, 0.0
      %v10110 = vld [vmem:[%s6] sm:$0xff]
      %v10111 = vld [vmem:[%s6 + $0x8] sm:$0xff]
      %v10112 = vld [vmem:[%s6 + $0x10] sm:$0xff]
      %v10113 = vld [vmem:[%s6 + $0x18] sm:$0xff]
      %v10114 = vld [vmem:[%s6 + $0x20] sm:$0xff]
      %v10115 = vld [vmem:[%s6 + $0x28] sm:$0xff]
      %v10116 = vld [vmem:[%s6 + $0x30] sm:$0xff]
      %v10117 = vld [vmem:[%s6 + $0x38] sm:$0xff]
      %v10118 = vld [vmem:[%s6 + $0x40] sm:$0xff]
      %v10119 = vld [vmem:[%s6 + $0x48] sm:$0xff]
      %v10120 = vld [vmem:[%s6 + $0x50] sm:$0xff]
      %v10121 = vld [vmem:[%s6 + $0x58] sm:$0xff]
      %v10122 = vld [vmem:[%s6 + $0x60] sm:$0xff]
      %v10123 = vld [vmem:[%s6 + $0x68] sm:$0xff]
      %v10124 = vld [vmem:[%s6 + $0x70] sm:$0xff]
      %v10125 = vld [vmem:[%s6 + $0x78] sm:$0xff]
      %v10126 = vld [vmem:[%s6 + $0x80] sm:$0xff]
      %v10127 = vld [vmem:[%s6 + $0x88] sm:$0xff]
      %v10128 = vld [vmem:[%s6 + $0x90] sm:$0xff]
      %v10129 = vld [vmem:[%s6 + $0x98] sm:$0xff]
      %v10130 = vld [vmem:[%s6 + $0xa0] sm:$0xff]
      %v10131 = vld [vmem:[%s6 + $0xa8] sm:$0xff]
      %v10132 = vld [vmem:[%s6 + $0xb0] sm:$0xff]
      %v10133 = vld [vmem:[%s6 + $0xb8] sm:$0xff]
      %v10134 = vld [vmem:[%s6 + $0xc0] sm:$0xff]
      %v10135 = vld [vmem:[%s6 + $0xc8] sm:$0xff]
      %v10136 = vld [vmem:[%s6 + $0xd0] sm:$0xff]
      %v10137 = vld [vmem:[%s6 + $0xd8] sm:$0xff]
      %v10138 = vld [vmem:[%s6 + $0xe0] sm:$0xff]
      %v10139 = vld [vmem:[%s6 + $0xe8] sm:$0xff]
      %v10140 = vld [vmem:[%s6 + $0xf0] sm:$0xff]
      %v10141 = vld [vmem:[%s6 + $0xf8] sm:$0xff]
      %v10142 = vmul.f32 %v10078, %v10110
      %v10143 = vmul.f32 %v10079, %v10111
      %v10144 = vmul.f32 %v10080, %v10112
      %v10145 = vmul.f32 %v10081, %v10113
      %v10146 = vmul.f32 %v10082, %v10114
      %v10147 = vmul.f32 %v10083, %v10115
      %v10148 = vmul.f32 %v10084, %v10116
      %v10149 = vmul.f32 %v10085, %v10117
      %v10150 = vmul.f32 %v10086, %v10118
      %v10151 = vmul.f32 %v10087, %v10119
      %v10152 = vmul.f32 %v10088, %v10120
      %v10153 = vmul.f32 %v10089, %v10121
      %v10154 = vmul.f32 %v10090, %v10122
      %v10155 = vmul.f32 %v10091, %v10123
      %v10156 = vmul.f32 %v10092, %v10124
      %v10157 = vmul.f32 %v10093, %v10125
      %v10158 = vmul.f32 %v10094, %v10126
      %v10159 = vmul.f32 %v10095, %v10127
      %v10160 = vmul.f32 %v10096, %v10128
      %v10161 = vmul.f32 %v10097, %v10129
      %v10162 = vmul.f32 %v10098, %v10130
      %v10163 = vmul.f32 %v10099, %v10131
      %v10164 = vmul.f32 %v10100, %v10132
      %v10165 = vmul.f32 %v10101, %v10133
      %v10166 = vmul.f32 %v10102, %v10134
      %v10167 = vmul.f32 %v10103, %v10135
      %v10168 = vmul.f32 %v10104, %v10136
      %v10169 = vmul.f32 %v10105, %v10137
      %v10170 = vmul.f32 %v10106, %v10138
      %v10171 = vmul.f32 %v10107, %v10139
      %v10172 = vmul.f32 %v10108, %v10140
      %v10173 = vmul.f32 %v10109, %v10141
      %v10174 = vadd.f32 %v10142, %v10143
      %10175 = vadd.xlane.f32.xlu0 %v10174
      %v10176 = vpop.xlane.xlu0 %10175
      %v10177 = vadd.f32 %v10144, %v10145
      %10178 = vadd.xlane.f32.xlu0 %v10177
      %v10179 = vpop.xlane.xlu0 %10178
      %v10180 = vadd.f32 %v10146, %v10147
      %10181 = vadd.xlane.f32.xlu0 %v10180
      %v10182 = vpop.xlane.xlu0 %10181
      %v10183 = vadd.f32 %v10148, %v10149
      %10184 = vadd.xlane.f32.xlu0 %v10183
      %v10185 = vpop.xlane.xlu0 %10184
      %v10186 = vadd.f32 %v10150, %v10151
      %10187 = vadd.xlane.f32.xlu0 %v10186
      %v10188 = vpop.xlane.xlu0 %10187
      %v10189 = vadd.f32 %v10152, %v10153
      %10190 = vadd.xlane.f32.xlu0 %v10189
      %v10191 = vpop.xlane.xlu0 %10190
      %v10192 = vadd.f32 %v10154, %v10155
      %10193 = vadd.xlane.f32.xlu0 %v10192
      %v10194 = vpop.xlane.xlu0 %10193
      %v10195 = vadd.f32 %v10156, %v10157
      %10196 = vadd.xlane.f32.xlu0 %v10195
      %v10197 = vpop.xlane.xlu0 %10196
      %v10198 = vadd.f32 %v10158, %v10159
      %10199 = vadd.xlane.f32.xlu0 %v10198
      %v10200 = vpop.xlane.xlu0 %10199
      %v10201 = vadd.f32 %v10160, %v10161
      %10202 = vadd.xlane.f32.xlu0 %v10201
      %v10203 = vpop.xlane.xlu0 %10202
      %v10204 = vadd.f32 %v10162, %v10163
      %10205 = vadd.xlane.f32.xlu0 %v10204
      %v10206 = vpop.xlane.xlu0 %10205
      %v10207 = vadd.f32 %v10164, %v10165
      %10208 = vadd.xlane.f32.xlu0 %v10207
      %v10209 = vpop.xlane.xlu0 %10208
      %v10210 = vadd.f32 %v10166, %v10167
      %10211 = vadd.xlane.f32.xlu0 %v10210
      %v10212 = vpop.xlane.xlu0 %10211
      %v10213 = vadd.f32 %v10168, %v10169
      %10214 = vadd.xlane.f32.xlu0 %v10213
      %v10215 = vpop.xlane.xlu0 %10214
      %v10216 = vadd.f32 %v10170, %v10171
      %10217 = vadd.xlane.f32.xlu0 %v10216
      %v10218 = vpop.xlane.xlu0 %10217
      %v10219 = vadd.f32 %v10172, %v10173
      %10220 = vadd.xlane.f32.xlu0 %v10219
      %v10221 = vpop.xlane.xlu0 %10220
      %v10238 = vlaneseq
      %v10239 = vand.u32 %v10238, 127
      %v10240 = vlaneseq
      %v10241 = vshrl.u32 %v10240, 7
      %v10242 = vsub.s32 %v10239, %v10241
      %v10243 = vrot.slane %v10176, %v10242
      %v10244 = vadd.s32 %v10239, 4294967288
      %v10245 = vlaneseq
      %v10246 = vshrl.u32 %v10245, 7
      %v10247 = vsub.s32 %v10244, %v10246
      %v10248 = vrot.slane %v10179, %v10247
      %vm10249 = vcmask 130112
      %v10250 = vsel %vm10249, %v10248, %v10243
      %v10251 = vlaneseq
      %v10252 = vshrl.u32 %v10251, 7
      %v10253 = vsub.s32 %v10239, %v10252
      %v10254 = vrot.slane %v10182, %v10253
      %v10255 = vlaneseq
      %v10256 = vshrl.u32 %v10255, 7
      %v10257 = vsub.s32 %v10244, %v10256
      %v10258 = vrot.slane %v10185, %v10257
      %v10259 = vsel %vm10249, %v10258, %v10254
      %v10260 = vlaneseq
      %v10261 = vshrl.u32 %v10260, 7
      %v10262 = vsub.s32 %v10239, %v10261
      %v10263 = vrot.slane %v10188, %v10262
      %v10264 = vlaneseq
      %v10265 = vshrl.u32 %v10264, 7
      %v10266 = vsub.s32 %v10244, %v10265
      %v10267 = vrot.slane %v10191, %v10266
      %v10268 = vsel %vm10249, %v10267, %v10263
      %v10269 = vlaneseq
      %v10270 = vshrl.u32 %v10269, 7
      %v10271 = vsub.s32 %v10239, %v10270
      %v10272 = vrot.slane %v10194, %v10271
      %v10273 = vlaneseq
      %v10274 = vshrl.u32 %v10273, 7
      %v10275 = vsub.s32 %v10244, %v10274
      %v10276 = vrot.slane %v10197, %v10275
      %v10277 = vsel %vm10249, %v10276, %v10272
      %v10278 = vlaneseq
      %v10279 = vshrl.u32 %v10278, 7
      %v10280 = vsub.s32 %v10239, %v10279
      %v10281 = vrot.slane %v10200, %v10280
      %v10282 = vlaneseq
      %v10283 = vshrl.u32 %v10282, 7
      %v10284 = vsub.s32 %v10244, %v10283
      %v10285 = vrot.slane %v10203, %v10284
      %v10286 = vsel %vm10249, %v10285, %v10281
      %v10287 = vlaneseq
      %v10288 = vshrl.u32 %v10287, 7
      %v10289 = vsub.s32 %v10239, %v10288
      %v10290 = vrot.slane %v10206, %v10289
      %v10291 = vlaneseq
      %v10292 = vshrl.u32 %v10291, 7
      %v10293 = vsub.s32 %v10244, %v10292
      %v10294 = vrot.slane %v10209, %v10293
      %v10295 = vsel %vm10249, %v10294, %v10290
      %v10296 = vlaneseq
      %v10297 = vshrl.u32 %v10296, 7
      %v10298 = vsub.s32 %v10239, %v10297
      %v10299 = vrot.slane %v10212, %v10298
      %v10300 = vlaneseq
      %v10301 = vshrl.u32 %v10300, 7
      %v10302 = vsub.s32 %v10244, %v10301
      %v10303 = vrot.slane %v10215, %v10302
      %v10304 = vsel %vm10249, %v10303, %v10299
      %v10305 = vlaneseq
      %v10306 = vshrl.u32 %v10305, 7
      %v10307 = vsub.s32 %v10239, %v10306
      %v10308 = vrot.slane %v10218, %v10307
      %v10309 = vlaneseq
      %v10310 = vshrl.u32 %v10309, 7
      %v10311 = vsub.s32 %v10244, %v10310
      %v10312 = vrot.slane %v10221, %v10311
      %v10313 = vsel %vm10249, %v10312, %v10308
      %vm10314 = vcmask 1041409
      %v10315 = vsel %vm10314, %v10259, %v10250
      %vm10316 = vcmask 1042434
      %v10317 = vsel %vm10316, %v10268, %v10315
      %vm10318 = vcmask 1043459
      %v10319 = vsel %vm10318, %v10277, %v10317
      %vm10320 = vcmask 1044484
      %v10321 = vsel %vm10320, %v10286, %v10319
      %vm10322 = vcmask 1045509
      %v10323 = vsel %vm10322, %v10295, %v10321
      %vm10324 = vcmask 1046534
      %v10325 = vsel %vm10324, %v10304, %v10323
      %vm10326 = vcmask 1047559
      %v10327 = vsel %vm10326, %v10313, %v10325
      %vm10329 = vcmask 130048
      %v10330 = vsel %vm10329, %v10327, 0.0
      %10331 = vadd.xlane.f32.xlu0 %v10330
      %v10332 = vpop.xlane.xlu0 %10331
      %v10333 = vld [vmem:[#allocation6] sm:$0x1]
      %10335 = vset.pattern.permute.xlu0 0
      %10336 = vperm.xlu0 %10335, %v10333
      %v10337 = vpop.permute.xlu0 %10336
      %v10339 = vlaneseq
      %v10340 = vshrl.u32 %v10339, 7
      %v10341 = vsub.s32 0, %v10340
      %v10342 = vrot.slane %v10337, %v10341
      %v10343 = vadd.f32 %v10332, %v10342
      %v10345 = vlaneseq
      %v10346 = vshrl.u32 %v10345, 7
      %v10347 = vsub.s32 %v10239, %v10346
      %v10348 = vrot.slane %v10343, %v10347
      %vm10350 = vcmask 57344
      %10351 = vst.msk [vmem:[%s308] sm:$0x1] %vm10350, %v10348
      %p10352 = scmp.lt.s32.totalorder %s21, 1
      %s10353 = scalar_select %p10352, %s21, 1
      %s10354 = scalar_lea.vmem %s8, %s10353
      // Predicated region
      $region53: #{cnn_forward.1} parent=51 // pred_check
        %p10355 = pneg %p212
      $region54: #{cnn_forward.1} parent=51 // pred_check_branch
        %10357 = sbr.rel (%p10355) target = $region56
      $region55: #{cnn_forward.1} parent=51 // pred_region
        _
      $region56: #{cnn_forward.1} parent=51 // pred_fallthru
        _
    $region52: #{cnn_forward.1} parent=5 // pred_fallthru
      _
    %p10358 = scmp.le.s32.totalorder 2, %s16
    // Predicated region
    $region57: #{cnn_forward.1} parent=5 // pred_check
      %p10359 = pneg %p10358
    $region58: #{cnn_forward.1} parent=5 // pred_check_branch
      %10361 = sbr.rel (%p10359) target = $region60
    $region59: #{cnn_forward.1} parent=5 // pred_region
      %s10362 = ssub.s32 %s16, 2
      // Predicated region
      $region61: #{cnn_forward.1} parent=59 // pred_check
        %p10363 = pneg %p218
      $region62: #{cnn_forward.1} parent=59 // pred_check_branch
        %10365 = sbr.rel (%p10363) target = $region64
      $region63: #{cnn_forward.1} parent=59 // pred_region
        %p10366 = scmp.lt.s32.totalorder %s22, 1
        %s10367 = scalar_select %p10366, %s22, 1
        %s10368 = scalar_lea.vmem %s8, %s10367
      $region64: #{cnn_forward.1} parent=59 // pred_fallthru
        _
    $region60: #{cnn_forward.1} parent=5 // pred_fallthru
      _
  $region6: #{cnn_forward.1} parent=0 // loop_footer
    %s20 = sadd.s32 1, %s16
  $region7: #{cnn_forward.1} parent=0 // loop_footer_branch
    %15 = sbr.rel target = $region3
  $region8: #{cnn_forward.1} parent=0 // loop_exit
    _

</llo_original>
